<compile_context>
chip_gen: v5e
topology: v5e:2x2
jax: 0.10.0
libtpu: 0.0.40
codegen_flags: <defaults>
</compile_context>

<pallas_src>
import functools

import numpy as np
import jax
import jax.numpy as jnp
from jax.experimental import pallas as pl
from jax.experimental.pallas import tpu as pltpu

CPAD = 128  # lane-dense channel padding (one full lane tile)


# ----------------------------------------------------------------------------
# Constant 0/1 selection / scatter matrices (exact in bf16)
# ----------------------------------------------------------------------------
def _pool_scatter_matrix(h_in, h_out):
    """Select 2x2-pooled values from the shifted-max plane of an h_in x h_in conv
    (extended width wi_in = h_in+2) and place them into the next stage's
    zero-padded flat buffer (wi_out = h_out+2, +2 tail rows)."""
    wi_in, wi_out = h_in + 2, h_out + 2
    src = (h_in - 1) * wi_in - 1
    dst = wi_out * wi_out + 2
    m = np.zeros((dst, src), np.float32)
    for r in range(h_out):
        for c in range(h_out):
            m[(r + 1) * wi_out + (c + 1), 2 * r * wi_in + 2 * c] = 1.0
    return jnp.asarray(m, jnp.bfloat16)


def _copy_scatter_matrix(h):
    """Place an h x h conv output (extended wi = h+2, garbage cols dropped)
    into a zero-padded flat buffer of the same spatial size."""
    wi = h + 2
    src = h * wi
    dst = wi * wi + 2
    m = np.zeros((dst, src), np.float32)
    for y in range(h):
        for x in range(h):
            m[(y + 1) * wi + (x + 1), y * wi + x] = 1.0
    return jnp.asarray(m, jnp.bfloat16)


def _up_scatter_matrix(h_in, padded_out):
    """Nearest-2x upsample of an h_in x h_in conv output (extended wi_in=h_in+2)
    into either a zero-padded flat buffer (for a 3x3 consumer) or a plain flat
    buffer (for the final 1x1 conv)."""
    wi_in = h_in + 2
    h_out = 2 * h_in
    src = h_in * wi_in
    if padded_out:
        wi_out = h_out + 2
        dst = wi_out * wi_out + 2
        dpos = lambda yy, xx: (yy + 1) * wi_out + (xx + 1)
    else:
        dst = h_out * h_out
        dpos = lambda yy, xx: yy * h_out + xx
    m = np.zeros((dst, src), np.float32)
    for yy in range(h_out):
        for xx in range(h_out):
            m[dpos(yy, xx), (yy // 2) * wi_in + (xx // 2)] = 1.0
    return jnp.asarray(m, jnp.bfloat16)


# ----------------------------------------------------------------------------
# Fully fused CNN kernel (one grid step == one image through the whole network)
# ----------------------------------------------------------------------------
def _cnn_kernel(x_ref, w_ref, b_ref, s1_ref, s2_ref, s3_ref, s4_ref, s5_ref,
                o_ref, p1, p2, p3, p4, p5, p6, *, img):
    f32 = jnp.float32
    bf16 = jnp.bfloat16

    def bias(l):
        return b_ref[l:l + 1, :]                       # (1, CPAD) f32

    def conv(src_ref, base, h, k):
        """Conv over an h x h plane stored as a zero-padded flat (rows, CPAD)
        buffer.  Returns the extended conv sums (h*wi, CPAD) f32, wi = h+2*(k//2).
        Columns x >= h of each row are garbage and never selected downstream."""
        wi = h + 2 * (k // 2)
        m = h * wi
        acc = None
        t = 0
        for dy in range(k):
            for dx in range(k):
                off = dy * wi + dx
                xs = src_ref[off:off + m, :]           # (m, CPAD) bf16
                part = jnp.dot(xs, w_ref[base + t], preferred_element_type=f32)
                acc = part if acc is None else acc + part
                t += 1
        return acc

    def pool_relu_scatter(acc, s_ref, l, h):
        """bias + ReLU + MaxPool(2,2) fused via two shifted maxima on the raw
        conv sums (max commutes with +bias/ReLU), then an exact 0/1 matmul that
        selects the pooled positions and writes the next padded buffer."""
        wi = h + 2
        n1 = (h - 1) * wi
        hm = jnp.maximum(acc[:n1, :], acc[wi:wi + n1, :])      # row-pair max
        pm = jnp.maximum(hm[:n1 - 1, :], hm[1:n1, :])          # col-pair max
        y = jnp.maximum(pm + bias(l), 0.0).astype(bf16)
        return jnp.dot(s_ref[...], y, preferred_element_type=f32).astype(bf16)

    def relu_scatter(acc, s_ref, l):
        """bias + ReLU, then scatter-matmul placement (padding / upsample)."""
        y = jnp.maximum(acc + bias(l), 0.0).astype(bf16)
        return jnp.dot(s_ref[...], y, preferred_element_type=f32).astype(bf16)

    h0, h1, h2 = img, img // 2, img // 4

    # conv1 (3x3) + ReLU + MaxPool(2,2):  img   -> img/2
    p1[...] = pool_relu_scatter(conv(x_ref, 0, h0, 3), s1_ref, 0, h0)
    # conv2 (3x3) + ReLU + MaxPool(2,2):  img/2 -> img/4
    p2[...] = pool_relu_scatter(conv(p1, 9, h1, 3), s2_ref, 1, h1)
    # conv3a (3x3) + ReLU
    p3[...] = relu_scatter(conv(p2, 18, h2, 3), s3_ref, 2)
    # conv3b (3x3) + ReLU
    p4[...] = relu_scatter(conv(p3, 27, h2, 3), s3_ref, 3)
    # conv4 (3x3) + ReLU + Upsample(2x):  img/4 -> img/2
    p5[...] = relu_scatter(conv(p4, 36, h2, 3), s4_ref, 4)
    # conv5 (3x3) + ReLU + Upsample(2x):  img/2 -> img
    p6[...] = relu_scatter(conv(p5, 45, h1, 3), s5_ref, 5)
    # conv6 (1x1) + Sigmoid
    o_ref[...] = jax.nn.sigmoid(conv(p6, 54, h0, 1) + bias(6))


def cnn_forward(x_nchw, params):
    """Input/output are NCHW (PyTorch convention)."""
    N, cin, img, img_w = x_nchw.shape
    assert img == img_w and img % 4 == 0
    out_channels = params[-1][0].shape[-1]

    # ---- pack weights (HWIO, channels padded to CPAD, bf16) and biases (f32)
    taps, biases = [], []
    for (w, b) in params:
        k = w.shape[0]
        ci, co = w.shape[2], w.shape[3]
        wp = jnp.zeros((k * k, CPAD, CPAD), jnp.bfloat16)
        wp = wp.at[:, :ci, :co].set(w.reshape(k * k, ci, co).astype(jnp.bfloat16))
        taps.append(wp)
        bp = jnp.zeros((CPAD,), jnp.float32).at[:co].set(b.astype(jnp.float32))
        biases.append(bp)
    w_all = jnp.concatenate(taps, axis=0)                       # (55, CPAD, CPAD)
    b_all = jnp.zeros((8, CPAD), jnp.float32).at[:7, :].set(jnp.stack(biases))

    # ---- input image: NCHW -> zero-padded, lane-dense, flattened NHWC (bf16)
    x = jnp.transpose(x_nchw, (0, 2, 3, 1)).astype(jnp.bfloat16)
    x = jnp.pad(x, ((0, 0), (1, 1), (1, 1), (0, CPAD - cin)))
    x = x.reshape(N, (img + 2) * (img + 2), CPAD)
    x = jnp.pad(x, ((0, 0), (0, 2), (0, 0)))                    # tail for last taps
    r0 = x.shape[1]

    # ---- constant selection / scatter matrices (exact 0/1 in bf16)
    s1 = _pool_scatter_matrix(img, img // 2)
    s2 = _pool_scatter_matrix(img // 2, img // 4)
    s3 = _copy_scatter_matrix(img // 4)
    s4 = _up_scatter_matrix(img // 4, padded_out=True)
    s5 = _up_scatter_matrix(img // 2, padded_out=False)

    pb1 = (img // 2 + 2) ** 2 + 2     # padded flat buffer rows, img/2 planes
    pb2 = (img // 4 + 2) ** 2 + 2     # padded flat buffer rows, img/4 planes
    pb6 = img * img                   # plain flat buffer for the 1x1 conv

    kernel = functools.partial(_cnn_kernel, img=img)
    y = pl.pallas_call(
        kernel,
        out_shape=jax.ShapeDtypeStruct((N, img * img, CPAD), jnp.float32),
        grid=(N,),
        in_specs=[
            pl.BlockSpec((None, r0, CPAD), lambda n: (n, 0, 0)),     # image
            pl.BlockSpec(w_all.shape, lambda n: (0, 0, 0)),          # weights (resident)
            pl.BlockSpec(b_all.shape, lambda n: (0, 0)),             # biases  (resident)
            pl.BlockSpec(s1.shape, lambda n: (0, 0)),
            pl.BlockSpec(s2.shape, lambda n: (0, 0)),
            pl.BlockSpec(s3.shape, lambda n: (0, 0)),
            pl.BlockSpec(s4.shape, lambda n: (0, 0)),
            pl.BlockSpec(s5.shape, lambda n: (0, 0)),
        ],
        out_specs=pl.BlockSpec((None, img * img, CPAD), lambda n: (n, 0, 0)),
        scratch_shapes=[
            pltpu.VMEM((pb1, CPAD), jnp.bfloat16),   # after conv1+pool (padded)
            pltpu.VMEM((pb2, CPAD), jnp.bfloat16),   # after conv2+pool (padded)
            pltpu.VMEM((pb2, CPAD), jnp.bfloat16),   # after conv3a     (padded)
            pltpu.VMEM((pb2, CPAD), jnp.bfloat16),   # after conv3b     (padded)
            pltpu.VMEM((pb1, CPAD), jnp.bfloat16),   # after conv4+up   (padded)
            pltpu.VMEM((pb6, CPAD), jnp.bfloat16),   # after conv5+up   (plain)
        ],
        compiler_params=pltpu.CompilerParams(
            dimension_semantics=("parallel",),
            vmem_limit_bytes=32 * 1024 * 1024),
    )(x, w_all, b_all, s1, s2, s3, s4, s5)

    y = y.reshape(N, img, img, CPAD)[:, :, :, :out_channels]
    return jnp.transpose(y, (0, 3, 1, 2))                      # back to NCHW


# ----------------------------------------------------------------------------
# Parameters (HWIO layout) and a pure-JAX f32 reference for validation
# ----------------------------------------------------------------------------
def init_params(key, in_channels, out_channels):
    f = [10, 20, 30, 20, 10, out_channels]
    specs = [
        (3, in_channels, f[0]),  # conv1
        (3, f[0], f[1]),         # conv2
        (3, f[1], f[2]),         # conv3a
        (3, f[2], f[2]),         # conv3b
        (3, f[2], f[3]),         # conv4
        (3, f[3], f[4]),         # conv5
        (1, f[4], f[5]),         # conv6 (1x1)
    ]
    params = []
    for idx, (k, cin, cout) in enumerate(specs):
        kw_key, kb_key = jax.random.split(jax.random.fold_in(key, idx))
        fan_in = k * k * cin
        w = jax.random.normal(kw_key, (k, k, cin, cout), jnp.float32)
        w = w * (1.0 / jnp.sqrt(jnp.float32(fan_in)))
        b = 0.01 * jax.random.normal(kb_key, (cout,), jnp.float32)
        params.append((w, b))
    return params


def _reference_forward(x_nchw, params):
    def conv(x, w, b, pad):
        y = jax.lax.conv_general_dilated(
            x, w, window_strides=(1, 1),
            padding=((pad, pad), (pad, pad)),
            dimension_numbers=("NHWC", "HWIO", "NHWC"))
        return y + b

    def pool(x):
        return jax.lax.reduce_window(x, -jnp.inf, jax.lax.max,
                                     (1, 2, 2, 1), (1, 2, 2, 1), "VALID")

    def up(x):
        return jnp.repeat(jnp.repeat(x, 2, axis=1), 2, axis=2)

    (w1, b1), (w2, b2), (w3a, b3a), (w3b, b3b), (w4, b4), (w5, b5), (w6, b6) = params
    x = jnp.transpose(x_nchw, (0, 2, 3, 1)).astype(jnp.float32)
    x = pool(jax.nn.relu(conv(x, w1, b1, 1)))
    x = pool(jax.nn.relu(conv(x, w2, b2, 1)))
    x = jax.nn.relu(conv(x, w3a, b3a, 1))
    x = jax.nn.relu(conv(x, w3b, b3b, 1))
    x = up(jax.nn.relu(conv(x, w4, b4, 1)))
    x = up(jax.nn.relu(conv(x, w5, b5, 1)))
    x = jax.nn.sigmoid(conv(x, w6, b6, 0))
    return jnp.transpose(x, (0, 3, 1, 2))


# ----------------------------------------------------------------------------
if __name__ == "__main__":
    key = jax.random.PRNGKey(0)
    batch, in_channels, out_channels, img_size = 2, 4, 4, 16

    x = jax.random.normal(jax.random.fold_in(key, 1000),
                          (batch, in_channels, img_size, img_size), jnp.float32)
    params = init_params(key, in_channels, out_channels)

    fwd = jax.jit(cnn_forward)
    out = jax.block_until_ready(fwd(x, params))

    assert out.shape == (batch, out_channels, img_size, img_size), out.shape
    assert bool(jnp.all(jnp.isfinite(out)))
    assert bool(jnp.all((out >= 0.0) & (out <= 1.0)))   # sigmoid output range

    # bf16 activations/weights (f32 accumulation) -> small drift vs f32 reference
    ref = _reference_forward(x, params)
    max_err = float(jnp.max(jnp.abs(out - ref)))
    assert max_err < 5e-2, max_err

    print("KERNEL_OK")
</pallas_src>

<mosaic_0001>
module attributes {stable_mosaic.version = 11 : i64} {
  func.func @_cnn_kernel(%arg0: i32, %arg1: memref<1x326x128xbf16, #tpu.memory_space<vmem>>, %arg2: memref<55x128x128xbf16, #tpu.memory_space<vmem>>, %arg3: memref<8x128xf32, #tpu.memory_space<vmem>>, %arg4: memref<102x269xbf16, #tpu.memory_space<vmem>>, %arg5: memref<38x69xbf16, #tpu.memory_space<vmem>>, %arg6: memref<38x24xbf16, #tpu.memory_space<vmem>>, %arg7: memref<102x24xbf16, #tpu.memory_space<vmem>>, %arg8: memref<256x80xbf16, #tpu.memory_space<vmem>>, %arg9: memref<1x256x128xf32, #tpu.memory_space<vmem>>, %arg10: memref<102x128xbf16, #tpu.memory_space<vmem>>, %arg11: memref<38x128xbf16, #tpu.memory_space<vmem>>, %arg12: memref<38x128xbf16, #tpu.memory_space<vmem>>, %arg13: memref<38x128xbf16, #tpu.memory_space<vmem>>, %arg14: memref<102x128xbf16, #tpu.memory_space<vmem>>, %arg15: memref<256x128xbf16, #tpu.memory_space<vmem>>) attributes {dimension_semantics = [#tpu.dimension_semantics<parallel>], iteration_bounds = array<i64: 2>, scalar_prefetch = 0 : i64, scratch_operands = 6 : i64, tpu.core_type = #tpu.core_type<tc>, window_params = [{transform_indices = @transform_0, window_bounds = array<i64: 1, 326, 128>}, {pipeline_mode = #tpu.pipeline_mode<synchronous>, transform_indices = @transform_1, window_bounds = array<i64: 55, 128, 128>}, {pipeline_mode = #tpu.pipeline_mode<synchronous>, transform_indices = @transform_2, window_bounds = array<i64: 8, 128>}, {pipeline_mode = #tpu.pipeline_mode<synchronous>, transform_indices = @transform_3, window_bounds = array<i64: 102, 269>}, {pipeline_mode = #tpu.pipeline_mode<synchronous>, transform_indices = @transform_4, window_bounds = array<i64: 38, 69>}, {pipeline_mode = #tpu.pipeline_mode<synchronous>, transform_indices = @transform_5, window_bounds = array<i64: 38, 24>}, {pipeline_mode = #tpu.pipeline_mode<synchronous>, transform_indices = @transform_6, window_bounds = array<i64: 102, 24>}, {pipeline_mode = #tpu.pipeline_mode<synchronous>, transform_indices = @transform_7, window_bounds = array<i64: 256, 80>}, {transform_indices = @transform_8, window_bounds = array<i64: 1, 256, 128>}]} {
    %c0 = arith.constant 0 : index
    %c0_0 = arith.constant 0 : index
    %c0_1 = arith.constant 0 : index
    %0 = vector.load %arg1[%c0, %c0_0, %c0_1] : memref<1x326x128xbf16, #tpu.memory_space<vmem>>, vector<1x288x128xbf16>
    %1 = vector.shape_cast %0 : vector<1x288x128xbf16> to vector<288x128xbf16>
    %c0_2 = arith.constant 0 : index
    %c0_3 = arith.constant 0 : index
    %c0_4 = arith.constant 0 : index
    %2 = vector.load %arg2[%c0_2, %c0_3, %c0_4] : memref<55x128x128xbf16, #tpu.memory_space<vmem>>, vector<1x128x128xbf16>
    %3 = vector.shape_cast %2 : vector<1x128x128xbf16> to vector<128x128xbf16>
    %cst = arith.constant dense<0.000000e+00> : vector<288x128xf32>
    %4 = tpu.matmul %1, %3, %cst {dimension_numbers = #tpu.dot_dimension_numbers<[1], [0], [0], [1], [0, 0, 1, 1], [], []>} : vector<288x128xbf16>, vector<128x128xbf16>, vector<288x128xf32> -> vector<288x128xf32>
    %c0_5 = arith.constant 0 : index
    %c1 = arith.constant 1 : index
    %c0_6 = arith.constant 0 : index
    %5 = vector.load %arg1[%c0_5, %c1, %c0_6] : memref<1x326x128xbf16, #tpu.memory_space<vmem>>, vector<1x288x128xbf16>
    %6 = vector.shape_cast %5 : vector<1x288x128xbf16> to vector<288x128xbf16>
    %c1_7 = arith.constant 1 : index
    %c0_8 = arith.constant 0 : index
    %c0_9 = arith.constant 0 : index
    %7 = vector.load %arg2[%c1_7, %c0_8, %c0_9] : memref<55x128x128xbf16, #tpu.memory_space<vmem>>, vector<1x128x128xbf16>
    %8 = vector.shape_cast %7 : vector<1x128x128xbf16> to vector<128x128xbf16>
    %cst_10 = arith.constant dense<0.000000e+00> : vector<288x128xf32>
    %9 = tpu.matmul %6, %8, %cst_10 {dimension_numbers = #tpu.dot_dimension_numbers<[1], [0], [0], [1], [0, 0, 1, 1], [], []>} : vector<288x128xbf16>, vector<128x128xbf16>, vector<288x128xf32> -> vector<288x128xf32>
    %10 = arith.addf %4, %9 : vector<288x128xf32>
    %c0_11 = arith.constant 0 : index
    %c2 = arith.constant 2 : index
    %c0_12 = arith.constant 0 : index
    %11 = vector.load %arg1[%c0_11, %c2, %c0_12] : memref<1x326x128xbf16, #tpu.memory_space<vmem>>, vector<1x288x128xbf16>
    %12 = vector.shape_cast %11 : vector<1x288x128xbf16> to vector<288x128xbf16>
    %c2_13 = arith.constant 2 : index
    %c0_14 = arith.constant 0 : index
    %c0_15 = arith.constant 0 : index
    %13 = vector.load %arg2[%c2_13, %c0_14, %c0_15] : memref<55x128x128xbf16, #tpu.memory_space<vmem>>, vector<1x128x128xbf16>
    %14 = vector.shape_cast %13 : vector<1x128x128xbf16> to vector<128x128xbf16>
    %cst_16 = arith.constant dense<0.000000e+00> : vector<288x128xf32>
    %15 = tpu.matmul %12, %14, %cst_16 {dimension_numbers = #tpu.dot_dimension_numbers<[1], [0], [0], [1], [0, 0, 1, 1], [], []>} : vector<288x128xbf16>, vector<128x128xbf16>, vector<288x128xf32> -> vector<288x128xf32>
    %16 = arith.addf %10, %15 : vector<288x128xf32>
    %c0_17 = arith.constant 0 : index
    %c18 = arith.constant 18 : index
    %c0_18 = arith.constant 0 : index
    %17 = vector.load %arg1[%c0_17, %c18, %c0_18] : memref<1x326x128xbf16, #tpu.memory_space<vmem>>, vector<1x288x128xbf16>
    %18 = vector.shape_cast %17 : vector<1x288x128xbf16> to vector<288x128xbf16>
    %c3 = arith.constant 3 : index
    %c0_19 = arith.constant 0 : index
    %c0_20 = arith.constant 0 : index
    %19 = vector.load %arg2[%c3, %c0_19, %c0_20] : memref<55x128x128xbf16, #tpu.memory_space<vmem>>, vector<1x128x128xbf16>
    %20 = vector.shape_cast %19 : vector<1x128x128xbf16> to vector<128x128xbf16>
    %cst_21 = arith.constant dense<0.000000e+00> : vector<288x128xf32>
    %21 = tpu.matmul %18, %20, %cst_21 {dimension_numbers = #tpu.dot_dimension_numbers<[1], [0], [0], [1], [0, 0, 1, 1], [], []>} : vector<288x128xbf16>, vector<128x128xbf16>, vector<288x128xf32> -> vector<288x128xf32>
    %22 = arith.addf %16, %21 : vector<288x128xf32>
    %c0_22 = arith.constant 0 : index
    %c19 = arith.constant 19 : index
    %c0_23 = arith.constant 0 : index
    %23 = vector.load %arg1[%c0_22, %c19, %c0_23] : memref<1x326x128xbf16, #tpu.memory_space<vmem>>, vector<1x288x128xbf16>
    %24 = vector.shape_cast %23 : vector<1x288x128xbf16> to vector<288x128xbf16>
    %c4 = arith.constant 4 : index
    %c0_24 = arith.constant 0 : index
    %c0_25 = arith.constant 0 : index
    %25 = vector.load %arg2[%c4, %c0_24, %c0_25] : memref<55x128x128xbf16, #tpu.memory_space<vmem>>, vector<1x128x128xbf16>
    %26 = vector.shape_cast %25 : vector<1x128x128xbf16> to vector<128x128xbf16>
    %cst_26 = arith.constant dense<0.000000e+00> : vector<288x128xf32>
    %27 = tpu.matmul %24, %26, %cst_26 {dimension_numbers = #tpu.dot_dimension_numbers<[1], [0], [0], [1], [0, 0, 1, 1], [], []>} : vector<288x128xbf16>, vector<128x128xbf16>, vector<288x128xf32> -> vector<288x128xf32>
    %28 = arith.addf %22, %27 : vector<288x128xf32>
    %c0_27 = arith.constant 0 : index
    %c20 = arith.constant 20 : index
    %c0_28 = arith.constant 0 : index
    %29 = vector.load %arg1[%c0_27, %c20, %c0_28] : memref<1x326x128xbf16, #tpu.memory_space<vmem>>, vector<1x288x128xbf16>
    %30 = vector.shape_cast %29 : vector<1x288x128xbf16> to vector<288x128xbf16>
    %c5 = arith.constant 5 : index
    %c0_29 = arith.constant 0 : index
    %c0_30 = arith.constant 0 : index
    %31 = vector.load %arg2[%c5, %c0_29, %c0_30] : memref<55x128x128xbf16, #tpu.memory_space<vmem>>, vector<1x128x128xbf16>
    %32 = vector.shape_cast %31 : vector<1x128x128xbf16> to vector<128x128xbf16>
    %cst_31 = arith.constant dense<0.000000e+00> : vector<288x128xf32>
    %33 = tpu.matmul %30, %32, %cst_31 {dimension_numbers = #tpu.dot_dimension_numbers<[1], [0], [0], [1], [0, 0, 1, 1], [], []>} : vector<288x128xbf16>, vector<128x128xbf16>, vector<288x128xf32> -> vector<288x128xf32>
    %34 = arith.addf %28, %33 : vector<288x128xf32>
    %c0_32 = arith.constant 0 : index
    %c36 = arith.constant 36 : index
    %c0_33 = arith.constant 0 : index
    %35 = vector.load %arg1[%c0_32, %c36, %c0_33] : memref<1x326x128xbf16, #tpu.memory_space<vmem>>, vector<1x288x128xbf16>
    %36 = vector.shape_cast %35 : vector<1x288x128xbf16> to vector<288x128xbf16>
    %c6 = arith.constant 6 : index
    %c0_34 = arith.constant 0 : index
    %c0_35 = arith.constant 0 : index
    %37 = vector.load %arg2[%c6, %c0_34, %c0_35] : memref<55x128x128xbf16, #tpu.memory_space<vmem>>, vector<1x128x128xbf16>
    %38 = vector.shape_cast %37 : vector<1x128x128xbf16> to vector<128x128xbf16>
    %cst_36 = arith.constant dense<0.000000e+00> : vector<288x128xf32>
    %39 = tpu.matmul %36, %38, %cst_36 {dimension_numbers = #tpu.dot_dimension_numbers<[1], [0], [0], [1], [0, 0, 1, 1], [], []>} : vector<288x128xbf16>, vector<128x128xbf16>, vector<288x128xf32> -> vector<288x128xf32>
    %40 = arith.addf %34, %39 : vector<288x128xf32>
    %c0_37 = arith.constant 0 : index
    %c37 = arith.constant 37 : index
    %c0_38 = arith.constant 0 : index
    %41 = vector.load %arg1[%c0_37, %c37, %c0_38] : memref<1x326x128xbf16, #tpu.memory_space<vmem>>, vector<1x288x128xbf16>
    %42 = vector.shape_cast %41 : vector<1x288x128xbf16> to vector<288x128xbf16>
    %c7 = arith.constant 7 : index
    %c0_39 = arith.constant 0 : index
    %c0_40 = arith.constant 0 : index
    %43 = vector.load %arg2[%c7, %c0_39, %c0_40] : memref<55x128x128xbf16, #tpu.memory_space<vmem>>, vector<1x128x128xbf16>
    %44 = vector.shape_cast %43 : vector<1x128x128xbf16> to vector<128x128xbf16>
    %cst_41 = arith.constant dense<0.000000e+00> : vector<288x128xf32>
    %45 = tpu.matmul %42, %44, %cst_41 {dimension_numbers = #tpu.dot_dimension_numbers<[1], [0], [0], [1], [0, 0, 1, 1], [], []>} : vector<288x128xbf16>, vector<128x128xbf16>, vector<288x128xf32> -> vector<288x128xf32>
    %46 = arith.addf %40, %45 : vector<288x128xf32>
    %c0_42 = arith.constant 0 : index
    %c38 = arith.constant 38 : index
    %c0_43 = arith.constant 0 : index
    %47 = vector.load %arg1[%c0_42, %c38, %c0_43] : memref<1x326x128xbf16, #tpu.memory_space<vmem>>, vector<1x288x128xbf16>
    %48 = vector.shape_cast %47 : vector<1x288x128xbf16> to vector<288x128xbf16>
    %c8 = arith.constant 8 : index
    %c0_44 = arith.constant 0 : index
    %c0_45 = arith.constant 0 : index
    %49 = vector.load %arg2[%c8, %c0_44, %c0_45] : memref<55x128x128xbf16, #tpu.memory_space<vmem>>, vector<1x128x128xbf16>
    %50 = vector.shape_cast %49 : vector<1x128x128xbf16> to vector<128x128xbf16>
    %cst_46 = arith.constant dense<0.000000e+00> : vector<288x128xf32>
    %51 = tpu.matmul %48, %50, %cst_46 {dimension_numbers = #tpu.dot_dimension_numbers<[1], [0], [0], [1], [0, 0, 1, 1], [], []>} : vector<288x128xbf16>, vector<128x128xbf16>, vector<288x128xf32> -> vector<288x128xf32>
    %52 = arith.addf %46, %51 : vector<288x128xf32>
    %53 = vector.extract_strided_slice %52 {offsets = [0, 0], sizes = [270, 128], strides = [1, 1]} : vector<288x128xf32> to vector<270x128xf32>
    %54 = vector.extract_strided_slice %52 {offsets = [18, 0], sizes = [270, 128], strides = [1, 1]} : vector<288x128xf32> to vector<270x128xf32>
    %55 = arith.maximumf %53, %54 : vector<270x128xf32>
    %56 = vector.extract_strided_slice %55 {offsets = [0, 0], sizes = [269, 128], strides = [1, 1]} : vector<270x128xf32> to vector<269x128xf32>
    %57 = vector.extract_strided_slice %55 {offsets = [1, 0], sizes = [269, 128], strides = [1, 1]} : vector<270x128xf32> to vector<269x128xf32>
    %58 = arith.maximumf %56, %57 : vector<269x128xf32>
    %c0_47 = arith.constant 0 : index
    %c0_48 = arith.constant 0 : index
    %59 = vector.load %arg3[%c0_47, %c0_48] : memref<8x128xf32, #tpu.memory_space<vmem>>, vector<1x128xf32>
    %60 = vector.broadcast %59 : vector<1x128xf32> to vector<269x128xf32>
    %61 = arith.addf %58, %60 : vector<269x128xf32>
    %cst_49 = arith.constant 0.000000e+00 : f32
    %62 = vector.broadcast %cst_49 : f32 to vector<269x128xf32>
    %63 = arith.maximumf %61, %62 : vector<269x128xf32>
    %64 = arith.truncf %63 : vector<269x128xf32> to vector<269x128xbf16>
    %c0_50 = arith.constant 0 : index
    %c0_51 = arith.constant 0 : index
    %65 = vector.load %arg4[%c0_50, %c0_51] : memref<102x269xbf16, #tpu.memory_space<vmem>>, vector<102x269xbf16>
    %cst_52 = arith.constant dense<0.000000e+00> : vector<102x128xf32>
    %66 = tpu.matmul %65, %64, %cst_52 {dimension_numbers = #tpu.dot_dimension_numbers<[1], [0], [0], [1], [0, 0, 1, 1], [], []>} : vector<102x269xbf16>, vector<269x128xbf16>, vector<102x128xf32> -> vector<102x128xf32>
    %67 = arith.truncf %66 : vector<102x128xf32> to vector<102x128xbf16>
    %c0_53 = arith.constant 0 : index
    %c0_54 = arith.constant 0 : index
    %68 = vector.load %arg10[%c0_53, %c0_54] : memref<102x128xbf16, #tpu.memory_space<vmem>>, vector<102x128xbf16>
    tpu.vector_store %arg10[%c0_53, %c0_54], %67 {strides = array<i32>} : memref<102x128xbf16, #tpu.memory_space<vmem>>, vector<102x128xbf16>,
    %c0_55 = arith.constant 0 : index
    %c0_56 = arith.constant 0 : index
    %69 = vector.load %arg10[%c0_55, %c0_56] : memref<102x128xbf16, #tpu.memory_space<vmem>>, vector<80x128xbf16>
    %c9 = arith.constant 9 : index
    %c0_57 = arith.constant 0 : index
    %c0_58 = arith.constant 0 : index
    %70 = vector.load %arg2[%c9, %c0_57, %c0_58] : memref<55x128x128xbf16, #tpu.memory_space<vmem>>, vector<1x128x128xbf16>
    %71 = vector.shape_cast %70 : vector<1x128x128xbf16> to vector<128x128xbf16>
    %cst_59 = arith.constant dense<0.000000e+00> : vector<80x128xf32>
    %72 = tpu.matmul %69, %71, %cst_59 {dimension_numbers = #tpu.dot_dimension_numbers<[1], [0], [0], [1], [0, 0, 1, 1], [], []>} : vector<80x128xbf16>, vector<128x128xbf16>, vector<80x128xf32> -> vector<80x128xf32>
    %c1_60 = arith.constant 1 : index
    %c0_61 = arith.constant 0 : index
    %73 = vector.load %arg10[%c1_60, %c0_61] : memref<102x128xbf16, #tpu.memory_space<vmem>>, vector<80x128xbf16>
    %c10 = arith.constant 10 : index
    %c0_62 = arith.constant 0 : index
    %c0_63 = arith.constant 0 : index
    %74 = vector.load %arg2[%c10, %c0_62, %c0_63] : memref<55x128x128xbf16, #tpu.memory_space<vmem>>, vector<1x128x128xbf16>
    %75 = vector.shape_cast %74 : vector<1x128x128xbf16> to vector<128x128xbf16>
    %cst_64 = arith.constant dense<0.000000e+00> : vector<80x128xf32>
    %76 = tpu.matmul %73, %75, %cst_64 {dimension_numbers = #tpu.dot_dimension_numbers<[1], [0], [0], [1], [0, 0, 1, 1], [], []>} : vector<80x128xbf16>, vector<128x128xbf16>, vector<80x128xf32> -> vector<80x128xf32>
    %77 = arith.addf %72, %76 : vector<80x128xf32>
    %c2_65 = arith.constant 2 : index
    %c0_66 = arith.constant 0 : index
    %78 = vector.load %arg10[%c2_65, %c0_66] : memref<102x128xbf16, #tpu.memory_space<vmem>>, vector<80x128xbf16>
    %c11 = arith.constant 11 : index
    %c0_67 = arith.constant 0 : index
    %c0_68 = arith.constant 0 : index
    %79 = vector.load %arg2[%c11, %c0_67, %c0_68] : memref<55x128x128xbf16, #tpu.memory_space<vmem>>, vector<1x128x128xbf16>
    %80 = vector.shape_cast %79 : vector<1x128x128xbf16> to vector<128x128xbf16>
    %cst_69 = arith.constant dense<0.000000e+00> : vector<80x128xf32>
    %81 = tpu.matmul %78, %80, %cst_69 {dimension_numbers = #tpu.dot_dimension_numbers<[1], [0], [0], [1], [0, 0, 1, 1], [], []>} : vector<80x128xbf16>, vector<128x128xbf16>, vector<80x128xf32> -> vector<80x128xf32>
    %82 = arith.addf %77, %81 : vector<80x128xf32>
    %c10_70 = arith.constant 10 : index
    %c0_71 = arith.constant 0 : index
    %83 = vector.load %arg10[%c10_70, %c0_71] : memref<102x128xbf16, #tpu.memory_space<vmem>>, vector<80x128xbf16>
    %c12 = arith.constant 12 : index
    %c0_72 = arith.constant 0 : index
    %c0_73 = arith.constant 0 : index
    %84 = vector.load %arg2[%c12, %c0_72, %c0_73] : memref<55x128x128xbf16, #tpu.memory_space<vmem>>, vector<1x128x128xbf16>
    %85 = vector.shape_cast %84 : vector<1x128x128xbf16> to vector<128x128xbf16>
    %cst_74 = arith.constant dense<0.000000e+00> : vector<80x128xf32>
    %86 = tpu.matmul %83, %85, %cst_74 {dimension_numbers = #tpu.dot_dimension_numbers<[1], [0], [0], [1], [0, 0, 1, 1], [], []>} : vector<80x128xbf16>, vector<128x128xbf16>, vector<80x128xf32> -> vector<80x128xf32>
    %87 = arith.addf %82, %86 : vector<80x128xf32>
    %c11_75 = arith.constant 11 : index
    %c0_76 = arith.constant 0 : index
    %88 = vector.load %arg10[%c11_75, %c0_76] : memref<102x128xbf16, #tpu.memory_space<vmem>>, vector<80x128xbf16>
    %c13 = arith.constant 13 : index
    %c0_77 = arith.constant 0 : index
    %c0_78 = arith.constant 0 : index
    %89 = vector.load %arg2[%c13, %c0_77, %c0_78] : memref<55x128x128xbf16, #tpu.memory_space<vmem>>, vector<1x128x128xbf16>
    %90 = vector.shape_cast %89 : vector<1x128x128xbf16> to vector<128x128xbf16>
    %cst_79 = arith.constant dense<0.000000e+00> : vector<80x128xf32>
    %91 = tpu.matmul %88, %90, %cst_79 {dimension_numbers = #tpu.dot_dimension_numbers<[1], [0], [0], [1], [0, 0, 1, 1], [], []>} : vector<80x128xbf16>, vector<128x128xbf16>, vector<80x128xf32> -> vector<80x128xf32>
    %92 = arith.addf %87, %91 : vector<80x128xf32>
    %c12_80 = arith.constant 12 : index
    %c0_81 = arith.constant 0 : index
    %93 = vector.load %arg10[%c12_80, %c0_81] : memref<102x128xbf16, #tpu.memory_space<vmem>>, vector<80x128xbf16>
    %c14 = arith.constant 14 : index
    %c0_82 = arith.constant 0 : index
    %c0_83 = arith.constant 0 : index
    %94 = vector.load %arg2[%c14, %c0_82, %c0_83] : memref<55x128x128xbf16, #tpu.memory_space<vmem>>, vector<1x128x128xbf16>
    %95 = vector.shape_cast %94 : vector<1x128x128xbf16> to vector<128x128xbf16>
    %cst_84 = arith.constant dense<0.000000e+00> : vector<80x128xf32>
    %96 = tpu.matmul %93, %95, %cst_84 {dimension_numbers = #tpu.dot_dimension_numbers<[1], [0], [0], [1], [0, 0, 1, 1], [], []>} : vector<80x128xbf16>, vector<128x128xbf16>, vector<80x128xf32> -> vector<80x128xf32>
    %97 = arith.addf %92, %96 : vector<80x128xf32>
    %c20_85 = arith.constant 20 : index
    %c0_86 = arith.constant 0 : index
    %98 = vector.load %arg10[%c20_85, %c0_86] : memref<102x128xbf16, #tpu.memory_space<vmem>>, vector<80x128xbf16>
    %c15 = arith.constant 15 : index
    %c0_87 = arith.constant 0 : index
    %c0_88 = arith.constant 0 : index
    %99 = vector.load %arg2[%c15, %c0_87, %c0_88] : memref<55x128x128xbf16, #tpu.memory_space<vmem>>, vector<1x128x128xbf16>
    %100 = vector.shape_cast %99 : vector<1x128x128xbf16> to vector<128x128xbf16>
    %cst_89 = arith.constant dense<0.000000e+00> : vector<80x128xf32>
    %101 = tpu.matmul %98, %100, %cst_89 {dimension_numbers = #tpu.dot_dimension_numbers<[1], [0], [0], [1], [0, 0, 1, 1], [], []>} : vector<80x128xbf16>, vector<128x128xbf16>, vector<80x128xf32> -> vector<80x128xf32>
    %102 = arith.addf %97, %101 : vector<80x128xf32>
    %c21 = arith.constant 21 : index
    %c0_90 = arith.constant 0 : index
    %103 = vector.load %arg10[%c21, %c0_90] : memref<102x128xbf16, #tpu.memory_space<vmem>>, vector<80x128xbf16>
    %c16 = arith.constant 16 : index
    %c0_91 = arith.constant 0 : index
    %c0_92 = arith.constant 0 : index
    %104 = vector.load %arg2[%c16, %c0_91, %c0_92] : memref<55x128x128xbf16, #tpu.memory_space<vmem>>, vector<1x128x128xbf16>
    %105 = vector.shape_cast %104 : vector<1x128x128xbf16> to vector<128x128xbf16>
    %cst_93 = arith.constant dense<0.000000e+00> : vector<80x128xf32>
    %106 = tpu.matmul %103, %105, %cst_93 {dimension_numbers = #tpu.dot_dimension_numbers<[1], [0], [0], [1], [0, 0, 1, 1], [], []>} : vector<80x128xbf16>, vector<128x128xbf16>, vector<80x128xf32> -> vector<80x128xf32>
    %107 = arith.addf %102, %106 : vector<80x128xf32>
    %c22 = arith.constant 22 : index
    %c0_94 = arith.constant 0 : index
    %108 = vector.load %arg10[%c22, %c0_94] : memref<102x128xbf16, #tpu.memory_space<vmem>>, vector<80x128xbf16>
    %c17 = arith.constant 17 : index
    %c0_95 = arith.constant 0 : index
    %c0_96 = arith.constant 0 : index
    %109 = vector.load %arg2[%c17, %c0_95, %c0_96] : memref<55x128x128xbf16, #tpu.memory_space<vmem>>, vector<1x128x128xbf16>
    %110 = vector.shape_cast %109 : vector<1x128x128xbf16> to vector<128x128xbf16>
    %cst_97 = arith.constant dense<0.000000e+00> : vector<80x128xf32>
    %111 = tpu.matmul %108, %110, %cst_97 {dimension_numbers = #tpu.dot_dimension_numbers<[1], [0], [0], [1], [0, 0, 1, 1], [], []>} : vector<80x128xbf16>, vector<128x128xbf16>, vector<80x128xf32> -> vector<80x128xf32>
    %112 = arith.addf %107, %111 : vector<80x128xf32>
    %113 = vector.extract_strided_slice %112 {offsets = [0, 0], sizes = [70, 128], strides = [1, 1]} : vector<80x128xf32> to vector<70x128xf32>
    %114 = vector.extract_strided_slice %112 {offsets = [10, 0], sizes = [70, 128], strides = [1, 1]} : vector<80x128xf32> to vector<70x128xf32>
    %115 = arith.maximumf %113, %114 : vector<70x128xf32>
    %116 = vector.extract_strided_slice %115 {offsets = [0, 0], sizes = [69, 128], strides = [1, 1]} : vector<70x128xf32> to vector<69x128xf32>
    %117 = vector.extract_strided_slice %115 {offsets = [1, 0], sizes = [69, 128], strides = [1, 1]} : vector<70x128xf32> to vector<69x128xf32>
    %118 = arith.maximumf %116, %117 : vector<69x128xf32>
    %c1_98 = arith.constant 1 : index
    %c0_99 = arith.constant 0 : index
    %119 = vector.load %arg3[%c1_98, %c0_99] : memref<8x128xf32, #tpu.memory_space<vmem>>, vector<1x128xf32>
    %120 = vector.broadcast %119 : vector<1x128xf32> to vector<69x128xf32>
    %121 = arith.addf %118, %120 : vector<69x128xf32>
    %cst_100 = arith.constant 0.000000e+00 : f32
    %122 = vector.broadcast %cst_100 : f32 to vector<69x128xf32>
    %123 = arith.maximumf %121, %122 : vector<69x128xf32>
    %124 = arith.truncf %123 : vector<69x128xf32> to vector<69x128xbf16>
    %c0_101 = arith.constant 0 : index
    %c0_102 = arith.constant 0 : index
    %125 = vector.load %arg5[%c0_101, %c0_102] : memref<38x69xbf16, #tpu.memory_space<vmem>>, vector<38x69xbf16>
    %cst_103 = arith.constant dense<0.000000e+00> : vector<38x128xf32>
    %126 = tpu.matmul %125, %124, %cst_103 {dimension_numbers = #tpu.dot_dimension_numbers<[1], [0], [0], [1], [0, 0, 1, 1], [], []>} : vector<38x69xbf16>, vector<69x128xbf16>, vector<38x128xf32> -> vector<38x128xf32>
    %127 = arith.truncf %126 : vector<38x128xf32> to vector<38x128xbf16>
    %c0_104 = arith.constant 0 : index
    %c0_105 = arith.constant 0 : index
    %128 = vector.load %arg11[%c0_104, %c0_105] : memref<38x128xbf16, #tpu.memory_space<vmem>>, vector<38x128xbf16>
    tpu.vector_store %arg11[%c0_104, %c0_105], %127 {strides = array<i32>} : memref<38x128xbf16, #tpu.memory_space<vmem>>, vector<38x128xbf16>,
    %c0_106 = arith.constant 0 : index
    %c0_107 = arith.constant 0 : index
    %129 = vector.load %arg11[%c0_106, %c0_107] : memref<38x128xbf16, #tpu.memory_space<vmem>>, vector<24x128xbf16>
    %c18_108 = arith.constant 18 : index
    %c0_109 = arith.constant 0 : index
    %c0_110 = arith.constant 0 : index
    %130 = vector.load %arg2[%c18_108, %c0_109, %c0_110] : memref<55x128x128xbf16, #tpu.memory_space<vmem>>, vector<1x128x128xbf16>
    %131 = vector.shape_cast %130 : vector<1x128x128xbf16> to vector<128x128xbf16>
    %cst_111 = arith.constant dense<0.000000e+00> : vector<24x128xf32>
    %132 = tpu.matmul %129, %131, %cst_111 {dimension_numbers = #tpu.dot_dimension_numbers<[1], [0], [0], [1], [0, 0, 1, 1], [], []>} : vector<24x128xbf16>, vector<128x128xbf16>, vector<24x128xf32> -> vector<24x128xf32>
    %c1_112 = arith.constant 1 : index
    %c0_113 = arith.constant 0 : index
    %133 = vector.load %arg11[%c1_112, %c0_113] : memref<38x128xbf16, #tpu.memory_space<vmem>>, vector<24x128xbf16>
    %c19_114 = arith.constant 19 : index
    %c0_115 = arith.constant 0 : index
    %c0_116 = arith.constant 0 : index
    %134 = vector.load %arg2[%c19_114, %c0_115, %c0_116] : memref<55x128x128xbf16, #tpu.memory_space<vmem>>, vector<1x128x128xbf16>
    %135 = vector.shape_cast %134 : vector<1x128x128xbf16> to vector<128x128xbf16>
    %cst_117 = arith.constant dense<0.000000e+00> : vector<24x128xf32>
    %136 = tpu.matmul %133, %135, %cst_117 {dimension_numbers = #tpu.dot_dimension_numbers<[1], [0], [0], [1], [0, 0, 1, 1], [], []>} : vector<24x128xbf16>, vector<128x128xbf16>, vector<24x128xf32> -> vector<24x128xf32>
    %137 = arith.addf %132, %136 : vector<24x128xf32>
    %c2_118 = arith.constant 2 : index
    %c0_119 = arith.constant 0 : index
    %138 = vector.load %arg11[%c2_118, %c0_119] : memref<38x128xbf16, #tpu.memory_space<vmem>>, vector<24x128xbf16>
    %c20_120 = arith.constant 20 : index
    %c0_121 = arith.constant 0 : index
    %c0_122 = arith.constant 0 : index
    %139 = vector.load %arg2[%c20_120, %c0_121, %c0_122] : memref<55x128x128xbf16, #tpu.memory_space<vmem>>, vector<1x128x128xbf16>
    %140 = vector.shape_cast %139 : vector<1x128x128xbf16> to vector<128x128xbf16>
    %cst_123 = arith.constant dense<0.000000e+00> : vector<24x128xf32>
    %141 = tpu.matmul %138, %140, %cst_123 {dimension_numbers = #tpu.dot_dimension_numbers<[1], [0], [0], [1], [0, 0, 1, 1], [], []>} : vector<24x128xbf16>, vector<128x128xbf16>, vector<24x128xf32> -> vector<24x128xf32>
    %142 = arith.addf %137, %141 : vector<24x128xf32>
    %c6_124 = arith.constant 6 : index
    %c0_125 = arith.constant 0 : index
    %143 = vector.load %arg11[%c6_124, %c0_125] : memref<38x128xbf16, #tpu.memory_space<vmem>>, vector<24x128xbf16>
    %c21_126 = arith.constant 21 : index
    %c0_127 = arith.constant 0 : index
    %c0_128 = arith.constant 0 : index
    %144 = vector.load %arg2[%c21_126, %c0_127, %c0_128] : memref<55x128x128xbf16, #tpu.memory_space<vmem>>, vector<1x128x128xbf16>
    %145 = vector.shape_cast %144 : vector<1x128x128xbf16> to vector<128x128xbf16>
    %cst_129 = arith.constant dense<0.000000e+00> : vector<24x128xf32>
    %146 = tpu.matmul %143, %145, %cst_129 {dimension_numbers = #tpu.dot_dimension_numbers<[1], [0], [0], [1], [0, 0, 1, 1], [], []>} : vector<24x128xbf16>, vector<128x128xbf16>, vector<24x128xf32> -> vector<24x128xf32>
    %147 = arith.addf %142, %146 : vector<24x128xf32>
    %c7_130 = arith.constant 7 : index
    %c0_131 = arith.constant 0 : index
    %148 = vector.load %arg11[%c7_130, %c0_131] : memref<38x128xbf16, #tpu.memory_space<vmem>>, vector<24x128xbf16>
    %c22_132 = arith.constant 22 : index
    %c0_133 = arith.constant 0 : index
    %c0_134 = arith.constant 0 : index
    %149 = vector.load %arg2[%c22_132, %c0_133, %c0_134] : memref<55x128x128xbf16, #tpu.memory_space<vmem>>, vector<1x128x128xbf16>
    %150 = vector.shape_cast %149 : vector<1x128x128xbf16> to vector<128x128xbf16>
    %cst_135 = arith.constant dense<0.000000e+00> : vector<24x128xf32>
    %151 = tpu.matmul %148, %150, %cst_135 {dimension_numbers = #tpu.dot_dimension_numbers<[1], [0], [0], [1], [0, 0, 1, 1], [], []>} : vector<24x128xbf16>, vector<128x128xbf16>, vector<24x128xf32> -> vector<24x128xf32>
    %152 = arith.addf %147, %151 : vector<24x128xf32>
    %c8_136 = arith.constant 8 : index
    %c0_137 = arith.constant 0 : index
    %153 = vector.load %arg11[%c8_136, %c0_137] : memref<38x128xbf16, #tpu.memory_space<vmem>>, vector<24x128xbf16>
    %c23 = arith.constant 23 : index
    %c0_138 = arith.constant 0 : index
    %c0_139 = arith.constant 0 : index
    %154 = vector.load %arg2[%c23, %c0_138, %c0_139] : memref<55x128x128xbf16, #tpu.memory_space<vmem>>, vector<1x128x128xbf16>
    %155 = vector.shape_cast %154 : vector<1x128x128xbf16> to vector<128x128xbf16>
    %cst_140 = arith.constant dense<0.000000e+00> : vector<24x128xf32>
    %156 = tpu.matmul %153, %155, %cst_140 {dimension_numbers = #tpu.dot_dimension_numbers<[1], [0], [0], [1], [0, 0, 1, 1], [], []>} : vector<24x128xbf16>, vector<128x128xbf16>, vector<24x128xf32> -> vector<24x128xf32>
    %157 = arith.addf %152, %156 : vector<24x128xf32>
    %c12_141 = arith.constant 12 : index
    %c0_142 = arith.constant 0 : index
    %158 = vector.load %arg11[%c12_141, %c0_142] : memref<38x128xbf16, #tpu.memory_space<vmem>>, vector<24x128xbf16>
    %c24 = arith.constant 24 : index
    %c0_143 = arith.constant 0 : index
    %c0_144 = arith.constant 0 : index
    %159 = vector.load %arg2[%c24, %c0_143, %c0_144] : memref<55x128x128xbf16, #tpu.memory_space<vmem>>, vector<1x128x128xbf16>
    %160 = vector.shape_cast %159 : vector<1x128x128xbf16> to vector<128x128xbf16>
    %cst_145 = arith.constant dense<0.000000e+00> : vector<24x128xf32>
    %161 = tpu.matmul %158, %160, %cst_145 {dimension_numbers = #tpu.dot_dimension_numbers<[1], [0], [0], [1], [0, 0, 1, 1], [], []>} : vector<24x128xbf16>, vector<128x128xbf16>, vector<24x128xf32> -> vector<24x128xf32>
    %162 = arith.addf %157, %161 : vector<24x128xf32>
    %c13_146 = arith.constant 13 : index
    %c0_147 = arith.constant 0 : index
    %163 = vector.load %arg11[%c13_146, %c0_147] : memref<38x128xbf16, #tpu.memory_space<vmem>>, vector<24x128xbf16>
    %c25 = arith.constant 25 : index
    %c0_148 = arith.constant 0 : index
    %c0_149 = arith.constant 0 : index
    %164 = vector.load %arg2[%c25, %c0_148, %c0_149] : memref<55x128x128xbf16, #tpu.memory_space<vmem>>, vector<1x128x128xbf16>
    %165 = vector.shape_cast %164 : vector<1x128x128xbf16> to vector<128x128xbf16>
    %cst_150 = arith.constant dense<0.000000e+00> : vector<24x128xf32>
    %166 = tpu.matmul %163, %165, %cst_150 {dimension_numbers = #tpu.dot_dimension_numbers<[1], [0], [0], [1], [0, 0, 1, 1], [], []>} : vector<24x128xbf16>, vector<128x128xbf16>, vector<24x128xf32> -> vector<24x128xf32>
    %167 = arith.addf %162, %166 : vector<24x128xf32>
    %c14_151 = arith.constant 14 : index
    %c0_152 = arith.constant 0 : index
    %168 = vector.load %arg11[%c14_151, %c0_152] : memref<38x128xbf16, #tpu.memory_space<vmem>>, vector<24x128xbf16>
    %c26 = arith.constant 26 : index
    %c0_153 = arith.constant 0 : index
    %c0_154 = arith.constant 0 : index
    %169 = vector.load %arg2[%c26, %c0_153, %c0_154] : memref<55x128x128xbf16, #tpu.memory_space<vmem>>, vector<1x128x128xbf16>
    %170 = vector.shape_cast %169 : vector<1x128x128xbf16> to vector<128x128xbf16>
    %cst_155 = arith.constant dense<0.000000e+00> : vector<24x128xf32>
    %171 = tpu.matmul %168, %170, %cst_155 {dimension_numbers = #tpu.dot_dimension_numbers<[1], [0], [0], [1], [0, 0, 1, 1], [], []>} : vector<24x128xbf16>, vector<128x128xbf16>, vector<24x128xf32> -> vector<24x128xf32>
    %172 = arith.addf %167, %171 : vector<24x128xf32>
    %c2_156 = arith.constant 2 : index
    %c0_157 = arith.constant 0 : index
    %173 = vector.load %arg3[%c2_156, %c0_157] : memref<8x128xf32, #tpu.memory_space<vmem>>, vector<1x128xf32>
    %174 = vector.broadcast %173 : vector<1x128xf32> to vector<24x128xf32>
    %175 = arith.addf %172, %174 : vector<24x128xf32>
    %cst_158 = arith.constant 0.000000e+00 : f32
    %176 = vector.broadcast %cst_158 : f32 to vector<24x128xf32>
    %177 = arith.maximumf %175, %176 : vector<24x128xf32>
    %178 = arith.truncf %177 : vector<24x128xf32> to vector<24x128xbf16>
    %c0_159 = arith.constant 0 : index
    %c0_160 = arith.constant 0 : index
    %179 = vector.load %arg6[%c0_159, %c0_160] : memref<38x24xbf16, #tpu.memory_space<vmem>>, vector<38x24xbf16>
    %cst_161 = arith.constant dense<0.000000e+00> : vector<38x128xf32>
    %180 = tpu.matmul %179, %178, %cst_161 {dimension_numbers = #tpu.dot_dimension_numbers<[1], [0], [0], [1], [0, 0, 1, 1], [], []>} : vector<38x24xbf16>, vector<24x128xbf16>, vector<38x128xf32> -> vector<38x128xf32>
    %181 = arith.truncf %180 : vector<38x128xf32> to vector<38x128xbf16>
    %c0_162 = arith.constant 0 : index
    %c0_163 = arith.constant 0 : index
    %182 = vector.load %arg12[%c0_162, %c0_163] : memref<38x128xbf16, #tpu.memory_space<vmem>>, vector<38x128xbf16>
    tpu.vector_store %arg12[%c0_162, %c0_163], %181 {strides = array<i32>} : memref<38x128xbf16, #tpu.memory_space<vmem>>, vector<38x128xbf16>,
    %c0_164 = arith.constant 0 : index
    %c0_165 = arith.constant 0 : index
    %183 = vector.load %arg12[%c0_164, %c0_165] : memref<38x128xbf16, #tpu.memory_space<vmem>>, vector<24x128xbf16>
    %c27 = arith.constant 27 : index
    %c0_166 = arith.constant 0 : index
    %c0_167 = arith.constant 0 : index
    %184 = vector.load %arg2[%c27, %c0_166, %c0_167] : memref<55x128x128xbf16, #tpu.memory_space<vmem>>, vector<1x128x128xbf16>
    %185 = vector.shape_cast %184 : vector<1x128x128xbf16> to vector<128x128xbf16>
    %cst_168 = arith.constant dense<0.000000e+00> : vector<24x128xf32>
    %186 = tpu.matmul %183, %185, %cst_168 {dimension_numbers = #tpu.dot_dimension_numbers<[1], [0], [0], [1], [0, 0, 1, 1], [], []>} : vector<24x128xbf16>, vector<128x128xbf16>, vector<24x128xf32> -> vector<24x128xf32>
    %c1_169 = arith.constant 1 : index
    %c0_170 = arith.constant 0 : index
    %187 = vector.load %arg12[%c1_169, %c0_170] : memref<38x128xbf16, #tpu.memory_space<vmem>>, vector<24x128xbf16>
    %c28 = arith.constant 28 : index
    %c0_171 = arith.constant 0 : index
    %c0_172 = arith.constant 0 : index
    %188 = vector.load %arg2[%c28, %c0_171, %c0_172] : memref<55x128x128xbf16, #tpu.memory_space<vmem>>, vector<1x128x128xbf16>
    %189 = vector.shape_cast %188 : vector<1x128x128xbf16> to vector<128x128xbf16>
    %cst_173 = arith.constant dense<0.000000e+00> : vector<24x128xf32>
    %190 = tpu.matmul %187, %189, %cst_173 {dimension_numbers = #tpu.dot_dimension_numbers<[1], [0], [0], [1], [0, 0, 1, 1], [], []>} : vector<24x128xbf16>, vector<128x128xbf16>, vector<24x128xf32> -> vector<24x128xf32>
    %191 = arith.addf %186, %190 : vector<24x128xf32>
    %c2_174 = arith.constant 2 : index
    %c0_175 = arith.constant 0 : index
    %192 = vector.load %arg12[%c2_174, %c0_175] : memref<38x128xbf16, #tpu.memory_space<vmem>>, vector<24x128xbf16>
    %c29 = arith.constant 29 : index
    %c0_176 = arith.constant 0 : index
    %c0_177 = arith.constant 0 : index
    %193 = vector.load %arg2[%c29, %c0_176, %c0_177] : memref<55x128x128xbf16, #tpu.memory_space<vmem>>, vector<1x128x128xbf16>
    %194 = vector.shape_cast %193 : vector<1x128x128xbf16> to vector<128x128xbf16>
    %cst_178 = arith.constant dense<0.000000e+00> : vector<24x128xf32>
    %195 = tpu.matmul %192, %194, %cst_178 {dimension_numbers = #tpu.dot_dimension_numbers<[1], [0], [0], [1], [0, 0, 1, 1], [], []>} : vector<24x128xbf16>, vector<128x128xbf16>, vector<24x128xf32> -> vector<24x128xf32>
    %196 = arith.addf %191, %195 : vector<24x128xf32>
    %c6_179 = arith.constant 6 : index
    %c0_180 = arith.constant 0 : index
    %197 = vector.load %arg12[%c6_179, %c0_180] : memref<38x128xbf16, #tpu.memory_space<vmem>>, vector<24x128xbf16>
    %c30 = arith.constant 30 : index
    %c0_181 = arith.constant 0 : index
    %c0_182 = arith.constant 0 : index
    %198 = vector.load %arg2[%c30, %c0_181, %c0_182] : memref<55x128x128xbf16, #tpu.memory_space<vmem>>, vector<1x128x128xbf16>
    %199 = vector.shape_cast %198 : vector<1x128x128xbf16> to vector<128x128xbf16>
    %cst_183 = arith.constant dense<0.000000e+00> : vector<24x128xf32>
    %200 = tpu.matmul %197, %199, %cst_183 {dimension_numbers = #tpu.dot_dimension_numbers<[1], [0], [0], [1], [0, 0, 1, 1], [], []>} : vector<24x128xbf16>, vector<128x128xbf16>, vector<24x128xf32> -> vector<24x128xf32>
    %201 = arith.addf %196, %200 : vector<24x128xf32>
    %c7_184 = arith.constant 7 : index
    %c0_185 = arith.constant 0 : index
    %202 = vector.load %arg12[%c7_184, %c0_185] : memref<38x128xbf16, #tpu.memory_space<vmem>>, vector<24x128xbf16>
    %c31 = arith.constant 31 : index
    %c0_186 = arith.constant 0 : index
    %c0_187 = arith.constant 0 : index
    %203 = vector.load %arg2[%c31, %c0_186, %c0_187] : memref<55x128x128xbf16, #tpu.memory_space<vmem>>, vector<1x128x128xbf16>
    %204 = vector.shape_cast %203 : vector<1x128x128xbf16> to vector<128x128xbf16>
    %cst_188 = arith.constant dense<0.000000e+00> : vector<24x128xf32>
    %205 = tpu.matmul %202, %204, %cst_188 {dimension_numbers = #tpu.dot_dimension_numbers<[1], [0], [0], [1], [0, 0, 1, 1], [], []>} : vector<24x128xbf16>, vector<128x128xbf16>, vector<24x128xf32> -> vector<24x128xf32>
    %206 = arith.addf %201, %205 : vector<24x128xf32>
    %c8_189 = arith.constant 8 : index
    %c0_190 = arith.constant 0 : index
    %207 = vector.load %arg12[%c8_189, %c0_190] : memref<38x128xbf16, #tpu.memory_space<vmem>>, vector<24x128xbf16>
    %c32 = arith.constant 32 : index
    %c0_191 = arith.constant 0 : index
    %c0_192 = arith.constant 0 : index
    %208 = vector.load %arg2[%c32, %c0_191, %c0_192] : memref<55x128x128xbf16, #tpu.memory_space<vmem>>, vector<1x128x128xbf16>
    %209 = vector.shape_cast %208 : vector<1x128x128xbf16> to vector<128x128xbf16>
    %cst_193 = arith.constant dense<0.000000e+00> : vector<24x128xf32>
    %210 = tpu.matmul %207, %209, %cst_193 {dimension_numbers = #tpu.dot_dimension_numbers<[1], [0], [0], [1], [0, 0, 1, 1], [], []>} : vector<24x128xbf16>, vector<128x128xbf16>, vector<24x128xf32> -> vector<24x128xf32>
    %211 = arith.addf %206, %210 : vector<24x128xf32>
    %c12_194 = arith.constant 12 : index
    %c0_195 = arith.constant 0 : index
    %212 = vector.load %arg12[%c12_194, %c0_195] : memref<38x128xbf16, #tpu.memory_space<vmem>>, vector<24x128xbf16>
    %c33 = arith.constant 33 : index
    %c0_196 = arith.constant 0 : index
    %c0_197 = arith.constant 0 : index
    %213 = vector.load %arg2[%c33, %c0_196, %c0_197] : memref<55x128x128xbf16, #tpu.memory_space<vmem>>, vector<1x128x128xbf16>
    %214 = vector.shape_cast %213 : vector<1x128x128xbf16> to vector<128x128xbf16>
    %cst_198 = arith.constant dense<0.000000e+00> : vector<24x128xf32>
    %215 = tpu.matmul %212, %214, %cst_198 {dimension_numbers = #tpu.dot_dimension_numbers<[1], [0], [0], [1], [0, 0, 1, 1], [], []>} : vector<24x128xbf16>, vector<128x128xbf16>, vector<24x128xf32> -> vector<24x128xf32>
    %216 = arith.addf %211, %215 : vector<24x128xf32>
    %c13_199 = arith.constant 13 : index
    %c0_200 = arith.constant 0 : index
    %217 = vector.load %arg12[%c13_199, %c0_200] : memref<38x128xbf16, #tpu.memory_space<vmem>>, vector<24x128xbf16>
    %c34 = arith.constant 34 : index
    %c0_201 = arith.constant 0 : index
    %c0_202 = arith.constant 0 : index
    %218 = vector.load %arg2[%c34, %c0_201, %c0_202] : memref<55x128x128xbf16, #tpu.memory_space<vmem>>, vector<1x128x128xbf16>
    %219 = vector.shape_cast %218 : vector<1x128x128xbf16> to vector<128x128xbf16>
    %cst_203 = arith.constant dense<0.000000e+00> : vector<24x128xf32>
    %220 = tpu.matmul %217, %219, %cst_203 {dimension_numbers = #tpu.dot_dimension_numbers<[1], [0], [0], [1], [0, 0, 1, 1], [], []>} : vector<24x128xbf16>, vector<128x128xbf16>, vector<24x128xf32> -> vector<24x128xf32>
    %221 = arith.addf %216, %220 : vector<24x128xf32>
    %c14_204 = arith.constant 14 : index
    %c0_205 = arith.constant 0 : index
    %222 = vector.load %arg12[%c14_204, %c0_205] : memref<38x128xbf16, #tpu.memory_space<vmem>>, vector<24x128xbf16>
    %c35 = arith.constant 35 : index
    %c0_206 = arith.constant 0 : index
    %c0_207 = arith.constant 0 : index
    %223 = vector.load %arg2[%c35, %c0_206, %c0_207] : memref<55x128x128xbf16, #tpu.memory_space<vmem>>, vector<1x128x128xbf16>
    %224 = vector.shape_cast %223 : vector<1x128x128xbf16> to vector<128x128xbf16>
    %cst_208 = arith.constant dense<0.000000e+00> : vector<24x128xf32>
    %225 = tpu.matmul %222, %224, %cst_208 {dimension_numbers = #tpu.dot_dimension_numbers<[1], [0], [0], [1], [0, 0, 1, 1], [], []>} : vector<24x128xbf16>, vector<128x128xbf16>, vector<24x128xf32> -> vector<24x128xf32>
    %226 = arith.addf %221, %225 : vector<24x128xf32>
    %c3_209 = arith.constant 3 : index
    %c0_210 = arith.constant 0 : index
    %227 = vector.load %arg3[%c3_209, %c0_210] : memref<8x128xf32, #tpu.memory_space<vmem>>, vector<1x128xf32>
    %228 = vector.broadcast %227 : vector<1x128xf32> to vector<24x128xf32>
    %229 = arith.addf %226, %228 : vector<24x128xf32>
    %cst_211 = arith.constant 0.000000e+00 : f32
    %230 = vector.broadcast %cst_211 : f32 to vector<24x128xf32>
    %231 = arith.maximumf %229, %230 : vector<24x128xf32>
    %232 = arith.truncf %231 : vector<24x128xf32> to vector<24x128xbf16>
    %c0_212 = arith.constant 0 : index
    %c0_213 = arith.constant 0 : index
    %233 = vector.load %arg6[%c0_212, %c0_213] : memref<38x24xbf16, #tpu.memory_space<vmem>>, vector<38x24xbf16>
    %cst_214 = arith.constant dense<0.000000e+00> : vector<38x128xf32>
    %234 = tpu.matmul %233, %232, %cst_214 {dimension_numbers = #tpu.dot_dimension_numbers<[1], [0], [0], [1], [0, 0, 1, 1], [], []>} : vector<38x24xbf16>, vector<24x128xbf16>, vector<38x128xf32> -> vector<38x128xf32>
    %235 = arith.truncf %234 : vector<38x128xf32> to vector<38x128xbf16>
    %c0_215 = arith.constant 0 : index
    %c0_216 = arith.constant 0 : index
    %236 = vector.load %arg13[%c0_215, %c0_216] : memref<38x128xbf16, #tpu.memory_space<vmem>>, vector<38x128xbf16>
    tpu.vector_store %arg13[%c0_215, %c0_216], %235 {strides = array<i32>} : memref<38x128xbf16, #tpu.memory_space<vmem>>, vector<38x128xbf16>,
    %c0_217 = arith.constant 0 : index
    %c0_218 = arith.constant 0 : index
    %237 = vector.load %arg13[%c0_217, %c0_218] : memref<38x128xbf16, #tpu.memory_space<vmem>>, vector<24x128xbf16>
    %c36_219 = arith.constant 36 : index
    %c0_220 = arith.constant 0 : index
    %c0_221 = arith.constant 0 : index
    %238 = vector.load %arg2[%c36_219, %c0_220, %c0_221] : memref<55x128x128xbf16, #tpu.memory_space<vmem>>, vector<1x128x128xbf16>
    %239 = vector.shape_cast %238 : vector<1x128x128xbf16> to vector<128x128xbf16>
    %cst_222 = arith.constant dense<0.000000e+00> : vector<24x128xf32>
    %240 = tpu.matmul %237, %239, %cst_222 {dimension_numbers = #tpu.dot_dimension_numbers<[1], [0], [0], [1], [0, 0, 1, 1], [], []>} : vector<24x128xbf16>, vector<128x128xbf16>, vector<24x128xf32> -> vector<24x128xf32>
    %c1_223 = arith.constant 1 : index
    %c0_224 = arith.constant 0 : index
    %241 = vector.load %arg13[%c1_223, %c0_224] : memref<38x128xbf16, #tpu.memory_space<vmem>>, vector<24x128xbf16>
    %c37_225 = arith.constant 37 : index
    %c0_226 = arith.constant 0 : index
    %c0_227 = arith.constant 0 : index
    %242 = vector.load %arg2[%c37_225, %c0_226, %c0_227] : memref<55x128x128xbf16, #tpu.memory_space<vmem>>, vector<1x128x128xbf16>
    %243 = vector.shape_cast %242 : vector<1x128x128xbf16> to vector<128x128xbf16>
    %cst_228 = arith.constant dense<0.000000e+00> : vector<24x128xf32>
    %244 = tpu.matmul %241, %243, %cst_228 {dimension_numbers = #tpu.dot_dimension_numbers<[1], [0], [0], [1], [0, 0, 1, 1], [], []>} : vector<24x128xbf16>, vector<128x128xbf16>, vector<24x128xf32> -> vector<24x128xf32>
    %245 = arith.addf %240, %244 : vector<24x128xf32>
    %c2_229 = arith.constant 2 : index
    %c0_230 = arith.constant 0 : index
    %246 = vector.load %arg13[%c2_229, %c0_230] : memref<38x128xbf16, #tpu.memory_space<vmem>>, vector<24x128xbf16>
    %c38_231 = arith.constant 38 : index
    %c0_232 = arith.constant 0 : index
    %c0_233 = arith.constant 0 : index
    %247 = vector.load %arg2[%c38_231, %c0_232, %c0_233] : memref<55x128x128xbf16, #tpu.memory_space<vmem>>, vector<1x128x128xbf16>
    %248 = vector.shape_cast %247 : vector<1x128x128xbf16> to vector<128x128xbf16>
    %cst_234 = arith.constant dense<0.000000e+00> : vector<24x128xf32>
    %249 = tpu.matmul %246, %248, %cst_234 {dimension_numbers = #tpu.dot_dimension_numbers<[1], [0], [0], [1], [0, 0, 1, 1], [], []>} : vector<24x128xbf16>, vector<128x128xbf16>, vector<24x128xf32> -> vector<24x128xf32>
    %250 = arith.addf %245, %249 : vector<24x128xf32>
    %c6_235 = arith.constant 6 : index
    %c0_236 = arith.constant 0 : index
    %251 = vector.load %arg13[%c6_235, %c0_236] : memref<38x128xbf16, #tpu.memory_space<vmem>>, vector<24x128xbf16>
    %c39 = arith.constant 39 : index
    %c0_237 = arith.constant 0 : index
    %c0_238 = arith.constant 0 : index
    %252 = vector.load %arg2[%c39, %c0_237, %c0_238] : memref<55x128x128xbf16, #tpu.memory_space<vmem>>, vector<1x128x128xbf16>
    %253 = vector.shape_cast %252 : vector<1x128x128xbf16> to vector<128x128xbf16>
    %cst_239 = arith.constant dense<0.000000e+00> : vector<24x128xf32>
    %254 = tpu.matmul %251, %253, %cst_239 {dimension_numbers = #tpu.dot_dimension_numbers<[1], [0], [0], [1], [0, 0, 1, 1], [], []>} : vector<24x128xbf16>, vector<128x128xbf16>, vector<24x128xf32> -> vector<24x128xf32>
    %255 = arith.addf %250, %254 : vector<24x128xf32>
    %c7_240 = arith.constant 7 : index
    %c0_241 = arith.constant 0 : index
    %256 = vector.load %arg13[%c7_240, %c0_241] : memref<38x128xbf16, #tpu.memory_space<vmem>>, vector<24x128xbf16>
    %c40 = arith.constant 40 : index
    %c0_242 = arith.constant 0 : index
    %c0_243 = arith.constant 0 : index
    %257 = vector.load %arg2[%c40, %c0_242, %c0_243] : memref<55x128x128xbf16, #tpu.memory_space<vmem>>, vector<1x128x128xbf16>
    %258 = vector.shape_cast %257 : vector<1x128x128xbf16> to vector<128x128xbf16>
    %cst_244 = arith.constant dense<0.000000e+00> : vector<24x128xf32>
    %259 = tpu.matmul %256, %258, %cst_244 {dimension_numbers = #tpu.dot_dimension_numbers<[1], [0], [0], [1], [0, 0, 1, 1], [], []>} : vector<24x128xbf16>, vector<128x128xbf16>, vector<24x128xf32> -> vector<24x128xf32>
    %260 = arith.addf %255, %259 : vector<24x128xf32>
    %c8_245 = arith.constant 8 : index
    %c0_246 = arith.constant 0 : index
    %261 = vector.load %arg13[%c8_245, %c0_246] : memref<38x128xbf16, #tpu.memory_space<vmem>>, vector<24x128xbf16>
    %c41 = arith.constant 41 : index
    %c0_247 = arith.constant 0 : index
    %c0_248 = arith.constant 0 : index
    %262 = vector.load %arg2[%c41, %c0_247, %c0_248] : memref<55x128x128xbf16, #tpu.memory_space<vmem>>, vector<1x128x128xbf16>
    %263 = vector.shape_cast %262 : vector<1x128x128xbf16> to vector<128x128xbf16>
    %cst_249 = arith.constant dense<0.000000e+00> : vector<24x128xf32>
    %264 = tpu.matmul %261, %263, %cst_249 {dimension_numbers = #tpu.dot_dimension_numbers<[1], [0], [0], [1], [0, 0, 1, 1], [], []>} : vector<24x128xbf16>, vector<128x128xbf16>, vector<24x128xf32> -> vector<24x128xf32>
    %265 = arith.addf %260, %264 : vector<24x128xf32>
    %c12_250 = arith.constant 12 : index
    %c0_251 = arith.constant 0 : index
    %266 = vector.load %arg13[%c12_250, %c0_251] : memref<38x128xbf16, #tpu.memory_space<vmem>>, vector<24x128xbf16>
    %c42 = arith.constant 42 : index
    %c0_252 = arith.constant 0 : index
    %c0_253 = arith.constant 0 : index
    %267 = vector.load %arg2[%c42, %c0_252, %c0_253] : memref<55x128x128xbf16, #tpu.memory_space<vmem>>, vector<1x128x128xbf16>
    %268 = vector.shape_cast %267 : vector<1x128x128xbf16> to vector<128x128xbf16>
    %cst_254 = arith.constant dense<0.000000e+00> : vector<24x128xf32>
    %269 = tpu.matmul %266, %268, %cst_254 {dimension_numbers = #tpu.dot_dimension_numbers<[1], [0], [0], [1], [0, 0, 1, 1], [], []>} : vector<24x128xbf16>, vector<128x128xbf16>, vector<24x128xf32> -> vector<24x128xf32>
    %270 = arith.addf %265, %269 : vector<24x128xf32>
    %c13_255 = arith.constant 13 : index
    %c0_256 = arith.constant 0 : index
    %271 = vector.load %arg13[%c13_255, %c0_256] : memref<38x128xbf16, #tpu.memory_space<vmem>>, vector<24x128xbf16>
    %c43 = arith.constant 43 : index
    %c0_257 = arith.constant 0 : index
    %c0_258 = arith.constant 0 : index
    %272 = vector.load %arg2[%c43, %c0_257, %c0_258] : memref<55x128x128xbf16, #tpu.memory_space<vmem>>, vector<1x128x128xbf16>
    %273 = vector.shape_cast %272 : vector<1x128x128xbf16> to vector<128x128xbf16>
    %cst_259 = arith.constant dense<0.000000e+00> : vector<24x128xf32>
    %274 = tpu.matmul %271, %273, %cst_259 {dimension_numbers = #tpu.dot_dimension_numbers<[1], [0], [0], [1], [0, 0, 1, 1], [], []>} : vector<24x128xbf16>, vector<128x128xbf16>, vector<24x128xf32> -> vector<24x128xf32>
    %275 = arith.addf %270, %274 : vector<24x128xf32>
    %c14_260 = arith.constant 14 : index
    %c0_261 = arith.constant 0 : index
    %276 = vector.load %arg13[%c14_260, %c0_261] : memref<38x128xbf16, #tpu.memory_space<vmem>>, vector<24x128xbf16>
    %c44 = arith.constant 44 : index
    %c0_262 = arith.constant 0 : index
    %c0_263 = arith.constant 0 : index
    %277 = vector.load %arg2[%c44, %c0_262, %c0_263] : memref<55x128x128xbf16, #tpu.memory_space<vmem>>, vector<1x128x128xbf16>
    %278 = vector.shape_cast %277 : vector<1x128x128xbf16> to vector<128x128xbf16>
    %cst_264 = arith.constant dense<0.000000e+00> : vector<24x128xf32>
    %279 = tpu.matmul %276, %278, %cst_264 {dimension_numbers = #tpu.dot_dimension_numbers<[1], [0], [0], [1], [0, 0, 1, 1], [], []>} : vector<24x128xbf16>, vector<128x128xbf16>, vector<24x128xf32> -> vector<24x128xf32>
    %280 = arith.addf %275, %279 : vector<24x128xf32>
    %c4_265 = arith.constant 4 : index
    %c0_266 = arith.constant 0 : index
    %281 = vector.load %arg3[%c4_265, %c0_266] : memref<8x128xf32, #tpu.memory_space<vmem>>, vector<1x128xf32>
    %282 = vector.broadcast %281 : vector<1x128xf32> to vector<24x128xf32>
    %283 = arith.addf %280, %282 : vector<24x128xf32>
    %cst_267 = arith.constant 0.000000e+00 : f32
    %284 = vector.broadcast %cst_267 : f32 to vector<24x128xf32>
    %285 = arith.maximumf %283, %284 : vector<24x128xf32>
    %286 = arith.truncf %285 : vector<24x128xf32> to vector<24x128xbf16>
    %c0_268 = arith.constant 0 : index
    %c0_269 = arith.constant 0 : index
    %287 = vector.load %arg7[%c0_268, %c0_269] : memref<102x24xbf16, #tpu.memory_space<vmem>>, vector<102x24xbf16>
    %cst_270 = arith.constant dense<0.000000e+00> : vector<102x128xf32>
    %288 = tpu.matmul %287, %286, %cst_270 {dimension_numbers = #tpu.dot_dimension_numbers<[1], [0], [0], [1], [0, 0, 1, 1], [], []>} : vector<102x24xbf16>, vector<24x128xbf16>, vector<102x128xf32> -> vector<102x128xf32>
    %289 = arith.truncf %288 : vector<102x128xf32> to vector<102x128xbf16>
    %c0_271 = arith.constant 0 : index
    %c0_272 = arith.constant 0 : index
    %290 = vector.load %arg14[%c0_271, %c0_272] : memref<102x128xbf16, #tpu.memory_space<vmem>>, vector<102x128xbf16>
    tpu.vector_store %arg14[%c0_271, %c0_272], %289 {strides = array<i32>} : memref<102x128xbf16, #tpu.memory_space<vmem>>, vector<102x128xbf16>,
    %c0_273 = arith.constant 0 : index
    %c0_274 = arith.constant 0 : index
    %291 = vector.load %arg14[%c0_273, %c0_274] : memref<102x128xbf16, #tpu.memory_space<vmem>>, vector<80x128xbf16>
    %c45 = arith.constant 45 : index
    %c0_275 = arith.constant 0 : index
    %c0_276 = arith.constant 0 : index
    %292 = vector.load %arg2[%c45, %c0_275, %c0_276] : memref<55x128x128xbf16, #tpu.memory_space<vmem>>, vector<1x128x128xbf16>
    %293 = vector.shape_cast %292 : vector<1x128x128xbf16> to vector<128x128xbf16>
    %cst_277 = arith.constant dense<0.000000e+00> : vector<80x128xf32>
    %294 = tpu.matmul %291, %293, %cst_277 {dimension_numbers = #tpu.dot_dimension_numbers<[1], [0], [0], [1], [0, 0, 1, 1], [], []>} : vector<80x128xbf16>, vector<128x128xbf16>, vector<80x128xf32> -> vector<80x128xf32>
    %c1_278 = arith.constant 1 : index
    %c0_279 = arith.constant 0 : index
    %295 = vector.load %arg14[%c1_278, %c0_279] : memref<102x128xbf16, #tpu.memory_space<vmem>>, vector<80x128xbf16>
    %c46 = arith.constant 46 : index
    %c0_280 = arith.constant 0 : index
    %c0_281 = arith.constant 0 : index
    %296 = vector.load %arg2[%c46, %c0_280, %c0_281] : memref<55x128x128xbf16, #tpu.memory_space<vmem>>, vector<1x128x128xbf16>
    %297 = vector.shape_cast %296 : vector<1x128x128xbf16> to vector<128x128xbf16>
    %cst_282 = arith.constant dense<0.000000e+00> : vector<80x128xf32>
    %298 = tpu.matmul %295, %297, %cst_282 {dimension_numbers = #tpu.dot_dimension_numbers<[1], [0], [0], [1], [0, 0, 1, 1], [], []>} : vector<80x128xbf16>, vector<128x128xbf16>, vector<80x128xf32> -> vector<80x128xf32>
    %299 = arith.addf %294, %298 : vector<80x128xf32>
    %c2_283 = arith.constant 2 : index
    %c0_284 = arith.constant 0 : index
    %300 = vector.load %arg14[%c2_283, %c0_284] : memref<102x128xbf16, #tpu.memory_space<vmem>>, vector<80x128xbf16>
    %c47 = arith.constant 47 : index
    %c0_285 = arith.constant 0 : index
    %c0_286 = arith.constant 0 : index
    %301 = vector.load %arg2[%c47, %c0_285, %c0_286] : memref<55x128x128xbf16, #tpu.memory_space<vmem>>, vector<1x128x128xbf16>
    %302 = vector.shape_cast %301 : vector<1x128x128xbf16> to vector<128x128xbf16>
    %cst_287 = arith.constant dense<0.000000e+00> : vector<80x128xf32>
    %303 = tpu.matmul %300, %302, %cst_287 {dimension_numbers = #tpu.dot_dimension_numbers<[1], [0], [0], [1], [0, 0, 1, 1], [], []>} : vector<80x128xbf16>, vector<128x128xbf16>, vector<80x128xf32> -> vector<80x128xf32>
    %304 = arith.addf %299, %303 : vector<80x128xf32>
    %c10_288 = arith.constant 10 : index
    %c0_289 = arith.constant 0 : index
    %305 = vector.load %arg14[%c10_288, %c0_289] : memref<102x128xbf16, #tpu.memory_space<vmem>>, vector<80x128xbf16>
    %c48 = arith.constant 48 : index
    %c0_290 = arith.constant 0 : index
    %c0_291 = arith.constant 0 : index
    %306 = vector.load %arg2[%c48, %c0_290, %c0_291] : memref<55x128x128xbf16, #tpu.memory_space<vmem>>, vector<1x128x128xbf16>
    %307 = vector.shape_cast %306 : vector<1x128x128xbf16> to vector<128x128xbf16>
    %cst_292 = arith.constant dense<0.000000e+00> : vector<80x128xf32>
    %308 = tpu.matmul %305, %307, %cst_292 {dimension_numbers = #tpu.dot_dimension_numbers<[1], [0], [0], [1], [0, 0, 1, 1], [], []>} : vector<80x128xbf16>, vector<128x128xbf16>, vector<80x128xf32> -> vector<80x128xf32>
    %309 = arith.addf %304, %308 : vector<80x128xf32>
    %c11_293 = arith.constant 11 : index
    %c0_294 = arith.constant 0 : index
    %310 = vector.load %arg14[%c11_293, %c0_294] : memref<102x128xbf16, #tpu.memory_space<vmem>>, vector<80x128xbf16>
    %c49 = arith.constant 49 : index
    %c0_295 = arith.constant 0 : index
    %c0_296 = arith.constant 0 : index
    %311 = vector.load %arg2[%c49, %c0_295, %c0_296] : memref<55x128x128xbf16, #tpu.memory_space<vmem>>, vector<1x128x128xbf16>
    %312 = vector.shape_cast %311 : vector<1x128x128xbf16> to vector<128x128xbf16>
    %cst_297 = arith.constant dense<0.000000e+00> : vector<80x128xf32>
    %313 = tpu.matmul %310, %312, %cst_297 {dimension_numbers = #tpu.dot_dimension_numbers<[1], [0], [0], [1], [0, 0, 1, 1], [], []>} : vector<80x128xbf16>, vector<128x128xbf16>, vector<80x128xf32> -> vector<80x128xf32>
    %314 = arith.addf %309, %313 : vector<80x128xf32>
    %c12_298 = arith.constant 12 : index
    %c0_299 = arith.constant 0 : index
    %315 = vector.load %arg14[%c12_298, %c0_299] : memref<102x128xbf16, #tpu.memory_space<vmem>>, vector<80x128xbf16>
    %c50 = arith.constant 50 : index
    %c0_300 = arith.constant 0 : index
    %c0_301 = arith.constant 0 : index
    %316 = vector.load %arg2[%c50, %c0_300, %c0_301] : memref<55x128x128xbf16, #tpu.memory_space<vmem>>, vector<1x128x128xbf16>
    %317 = vector.shape_cast %316 : vector<1x128x128xbf16> to vector<128x128xbf16>
    %cst_302 = arith.constant dense<0.000000e+00> : vector<80x128xf32>
    %318 = tpu.matmul %315, %317, %cst_302 {dimension_numbers = #tpu.dot_dimension_numbers<[1], [0], [0], [1], [0, 0, 1, 1], [], []>} : vector<80x128xbf16>, vector<128x128xbf16>, vector<80x128xf32> -> vector<80x128xf32>
    %319 = arith.addf %314, %318 : vector<80x128xf32>
    %c20_303 = arith.constant 20 : index
    %c0_304 = arith.constant 0 : index
    %320 = vector.load %arg14[%c20_303, %c0_304] : memref<102x128xbf16, #tpu.memory_space<vmem>>, vector<80x128xbf16>
    %c51 = arith.constant 51 : index
    %c0_305 = arith.constant 0 : index
    %c0_306 = arith.constant 0 : index
    %321 = vector.load %arg2[%c51, %c0_305, %c0_306] : memref<55x128x128xbf16, #tpu.memory_space<vmem>>, vector<1x128x128xbf16>
    %322 = vector.shape_cast %321 : vector<1x128x128xbf16> to vector<128x128xbf16>
    %cst_307 = arith.constant dense<0.000000e+00> : vector<80x128xf32>
    %323 = tpu.matmul %320, %322, %cst_307 {dimension_numbers = #tpu.dot_dimension_numbers<[1], [0], [0], [1], [0, 0, 1, 1], [], []>} : vector<80x128xbf16>, vector<128x128xbf16>, vector<80x128xf32> -> vector<80x128xf32>
    %324 = arith.addf %319, %323 : vector<80x128xf32>
    %c21_308 = arith.constant 21 : index
    %c0_309 = arith.constant 0 : index
    %325 = vector.load %arg14[%c21_308, %c0_309] : memref<102x128xbf16, #tpu.memory_space<vmem>>, vector<80x128xbf16>
    %c52 = arith.constant 52 : index
    %c0_310 = arith.constant 0 : index
    %c0_311 = arith.constant 0 : index
    %326 = vector.load %arg2[%c52, %c0_310, %c0_311] : memref<55x128x128xbf16, #tpu.memory_space<vmem>>, vector<1x128x128xbf16>
    %327 = vector.shape_cast %326 : vector<1x128x128xbf16> to vector<128x128xbf16>
    %cst_312 = arith.constant dense<0.000000e+00> : vector<80x128xf32>
    %328 = tpu.matmul %325, %327, %cst_312 {dimension_numbers = #tpu.dot_dimension_numbers<[1], [0], [0], [1], [0, 0, 1, 1], [], []>} : vector<80x128xbf16>, vector<128x128xbf16>, vector<80x128xf32> -> vector<80x128xf32>
    %329 = arith.addf %324, %328 : vector<80x128xf32>
    %c22_313 = arith.constant 22 : index
    %c0_314 = arith.constant 0 : index
    %330 = vector.load %arg14[%c22_313, %c0_314] : memref<102x128xbf16, #tpu.memory_space<vmem>>, vector<80x128xbf16>
    %c53 = arith.constant 53 : index
    %c0_315 = arith.constant 0 : index
    %c0_316 = arith.constant 0 : index
    %331 = vector.load %arg2[%c53, %c0_315, %c0_316] : memref<55x128x128xbf16, #tpu.memory_space<vmem>>, vector<1x128x128xbf16>
    %332 = vector.shape_cast %331 : vector<1x128x128xbf16> to vector<128x128xbf16>
    %cst_317 = arith.constant dense<0.000000e+00> : vector<80x128xf32>
    %333 = tpu.matmul %330, %332, %cst_317 {dimension_numbers = #tpu.dot_dimension_numbers<[1], [0], [0], [1], [0, 0, 1, 1], [], []>} : vector<80x128xbf16>, vector<128x128xbf16>, vector<80x128xf32> -> vector<80x128xf32>
    %334 = arith.addf %329, %333 : vector<80x128xf32>
    %c5_318 = arith.constant 5 : index
    %c0_319 = arith.constant 0 : index
    %335 = vector.load %arg3[%c5_318, %c0_319] : memref<8x128xf32, #tpu.memory_space<vmem>>, vector<1x128xf32>
    %336 = vector.broadcast %335 : vector<1x128xf32> to vector<80x128xf32>
    %337 = arith.addf %334, %336 : vector<80x128xf32>
    %cst_320 = arith.constant 0.000000e+00 : f32
    %338 = vector.broadcast %cst_320 : f32 to vector<80x128xf32>
    %339 = arith.maximumf %337, %338 : vector<80x128xf32>
    %340 = arith.truncf %339 : vector<80x128xf32> to vector<80x128xbf16>
    %c0_321 = arith.constant 0 : index
    %c0_322 = arith.constant 0 : index
    %341 = vector.load %arg8[%c0_321, %c0_322] : memref<256x80xbf16, #tpu.memory_space<vmem>>, vector<256x80xbf16>
    %cst_323 = arith.constant dense<0.000000e+00> : vector<256x128xf32>
    %342 = tpu.matmul %341, %340, %cst_323 {dimension_numbers = #tpu.dot_dimension_numbers<[1], [0], [0], [1], [0, 0, 1, 1], [], []>} : vector<256x80xbf16>, vector<80x128xbf16>, vector<256x128xf32> -> vector<256x128xf32>
    %343 = arith.truncf %342 : vector<256x128xf32> to vector<256x128xbf16>
    %c0_324 = arith.constant 0 : index
    %c0_325 = arith.constant 0 : index
    %344 = vector.load %arg15[%c0_324, %c0_325] : memref<256x128xbf16, #tpu.memory_space<vmem>>, vector<256x128xbf16>
    tpu.vector_store %arg15[%c0_324, %c0_325], %343 {strides = array<i32>} : memref<256x128xbf16, #tpu.memory_space<vmem>>, vector<256x128xbf16>,
    %c0_326 = arith.constant 0 : index
    %c0_327 = arith.constant 0 : index
    %345 = vector.load %arg15[%c0_326, %c0_327] : memref<256x128xbf16, #tpu.memory_space<vmem>>, vector<256x128xbf16>
    %c54 = arith.constant 54 : index
    %c0_328 = arith.constant 0 : index
    %c0_329 = arith.constant 0 : index
    %346 = vector.load %arg2[%c54, %c0_328, %c0_329] : memref<55x128x128xbf16, #tpu.memory_space<vmem>>, vector<1x128x128xbf16>
    %347 = vector.shape_cast %346 : vector<1x128x128xbf16> to vector<128x128xbf16>
    %cst_330 = arith.constant dense<0.000000e+00> : vector<256x128xf32>
    %348 = tpu.matmul %345, %347, %cst_330 {dimension_numbers = #tpu.dot_dimension_numbers<[1], [0], [0], [1], [0, 0, 1, 1], [], []>} : vector<256x128xbf16>, vector<128x128xbf16>, vector<256x128xf32> -> vector<256x128xf32>
    %c6_331 = arith.constant 6 : index
    %c0_332 = arith.constant 0 : index
    %349 = vector.load %arg3[%c6_331, %c0_332] : memref<8x128xf32, #tpu.memory_space<vmem>>, vector<1x128xf32>
    %350 = vector.broadcast %349 : vector<1x128xf32> to vector<256x128xf32>
    %351 = arith.addf %348, %350 : vector<256x128xf32>
    %352 = arith.negf %351 : vector<256x128xf32>
    %353 = math.exp %352 : vector<256x128xf32>
    %cst_333 = arith.constant 1.000000e+00 : f32
    %354 = vector.broadcast %cst_333 : f32 to vector<256x128xf32>
    %355 = arith.addf %354, %353 : vector<256x128xf32>
    %356 = arith.divf %354, %355 : vector<256x128xf32>
    %c0_334 = arith.constant 0 : index
    %c0_335 = arith.constant 0 : index
    %c0_336 = arith.constant 0 : index
    %357 = vector.load %arg9[%c0_334, %c0_335, %c0_336] : memref<1x256x128xf32, #tpu.memory_space<vmem>>, vector<1x256x128xf32>
    %358 = vector.shape_cast %357 : vector<1x256x128xf32> to vector<256x128xf32>
    %359 = vector.shape_cast %356 : vector<256x128xf32> to vector<1x256x128xf32>
    tpu.vector_store %arg9[%c0_334, %c0_335, %c0_336], %359 {strides = array<i32>} : memref<1x256x128xf32, #tpu.memory_space<vmem>>, vector<1x256x128xf32>,
    return
  }
  func.func @transform_0(%arg0: i32) -> (i32, i32, i32) {
    %c0_i32 = arith.constant 0 : i32
    %c0_i32_0 = arith.constant 0 : i32
    %c0_i32_1 = arith.constant 0 : i32
    return %arg0, %c0_i32, %c0_i32_0 : i32, i32, i32
  }
  func.func @transform_1(%arg0: i32) -> (i32, i32, i32) {
    %c0_i32 = arith.constant 0 : i32
    %c0_i32_0 = arith.constant 0 : i32
    %c0_i32_1 = arith.constant 0 : i32
    %c0_i32_2 = arith.constant 0 : i32
    return %c0_i32, %c0_i32_0, %c0_i32_1 : i32, i32, i32
  }
  func.func @transform_2(%arg0: i32) -> (i32, i32) {
    %c0_i32 = arith.constant 0 : i32
    %c0_i32_0 = arith.constant 0 : i32
    %c0_i32_1 = arith.constant 0 : i32
    return %c0_i32, %c0_i32_0 : i32, i32
  }
  func.func @transform_3(%arg0: i32) -> (i32, i32) {
    %c0_i32 = arith.constant 0 : i32
    %c0_i32_0 = arith.constant 0 : i32
    %c0_i32_1 = arith.constant 0 : i32
    return %c0_i32, %c0_i32_0 : i32, i32
  }
  func.func @transform_4(%arg0: i32) -> (i32, i32) {
    %c0_i32 = arith.constant 0 : i32
    %c0_i32_0 = arith.constant 0 : i32
    %c0_i32_1 = arith.constant 0 : i32
    return %c0_i32, %c0_i32_0 : i32, i32
  }
  func.func @transform_5(%arg0: i32) -> (i32, i32) {
    %c0_i32 = arith.constant 0 : i32
    %c0_i32_0 = arith.constant 0 : i32
    %c0_i32_1 = arith.constant 0 : i32
    return %c0_i32, %c0_i32_0 : i32, i32
  }
  func.func @transform_6(%arg0: i32) -> (i32, i32) {
    %c0_i32 = arith.constant 0 : i32
    %c0_i32_0 = arith.constant 0 : i32
    %c0_i32_1 = arith.constant 0 : i32
    return %c0_i32, %c0_i32_0 : i32, i32
  }
  func.func @transform_7(%arg0: i32) -> (i32, i32) {
    %c0_i32 = arith.constant 0 : i32
    %c0_i32_0 = arith.constant 0 : i32
    %c0_i32_1 = arith.constant 0 : i32
    return %c0_i32, %c0_i32_0 : i32, i32
  }
  func.func @transform_8(%arg0: i32) -> (i32, i32, i32) {
    %c0_i32 = arith.constant 0 : i32
    %c0_i32_0 = arith.constant 0 : i32
    %c0_i32_1 = arith.constant 0 : i32
    return %arg0, %c0_i32, %c0_i32_0 : i32, i32, i32
  }
}

</mosaic_0001>

<llo_original>
// kernel: cnn_forward.1
$region0: #{cnn_forward.1}
  #allocation0 [shape = 'u32[]', space=smem, size = 0x4, offset = 0x4, fixed_abs, tag = 'smem constant byte address 0x4 - core index']
  #allocation1 [shape = 'u32[72,128]{1,0:T(1,128)}', space=vmem, size = 0x9000, scoped, tag = 'internal scratch']
  #allocation2 [shape = 'bf16[102,128]{1,0:T(8,128)(2,1)}', space=vmem, size = 0x6800, scoped, tag = 'scratch operand']
  #allocation3 [shape = 'bf16[38,128]{1,0:T(8,128)(2,1)}', space=vmem, size = 0x2800, scoped, tag = 'scratch operand']
  #allocation4 [shape = 'bf16[38,128]{1,0:T(8,128)(2,1)}', space=vmem, size = 0x2800, scoped, tag = 'scratch operand']
  #allocation5 [shape = 'bf16[38,128]{1,0:T(8,128)(2,1)}', space=vmem, size = 0x2800, scoped, tag = 'scratch operand']
  #allocation6 [shape = 'bf16[102,128]{1,0:T(8,128)(2,1)}', space=vmem, size = 0x6800, scoped, tag = 'scratch operand']
  #allocation7 [shape = 'bf16[256,128]{1,0:T(8,128)(2,1)}', space=vmem, size = 0x10000, scoped, tag = 'scratch operand']
  %s0 = inlined_call_operand.vmem [shape: bf16[2,326,128], index: 0, kind: input, shape index: {}]
  %s1 = inlined_call_operand.vmem [shape: bf16[55,128,128], index: 1, kind: input, shape index: {}]
  %s2 = inlined_call_operand.vmem [shape: f32[8,128], index: 2, kind: input, shape index: {}]
  %s3 = inlined_call_operand.vmem [shape: bf16[102,269], index: 3, kind: input, shape index: {}]
  %s4 = inlined_call_operand.vmem [shape: bf16[38,69], index: 4, kind: input, shape index: {}]
  %s5 = inlined_call_operand.vmem [shape: bf16[38,24], index: 5, kind: input, shape index: {}]
  %s6 = inlined_call_operand.vmem [shape: bf16[102,24], index: 6, kind: input, shape index: {}]
  %s7 = inlined_call_operand.vmem [shape: bf16[256,80], index: 7, kind: input, shape index: {}]
  %s8 = inlined_call_operand.vmem [shape: f32[2,256,128], index: 8, kind: output, shape index: {}]
  %s9 = sld [smem:[#allocation0]]
  $region65: #{cnn_forward.1} parent=0
    _
  %s11 = ssub.s32 1, %s9
  %s12 = scalar_select 0, %s11, %s9
  loop: start=0, step=1, limit=4
  $region2: #{cnn_forward.1} parent=0 // loop_pre_header
    _
  $region3: #{cnn_forward.1} parent=0 // loop_header
    %s14 = sphi 0, %s18
    %p15 = scmp.ge.s32.totalorder %s14, 4
    %s24 = sphi 0, %s26
    %s27 = sphi 0, %s24
    %s28 = sphi 0, %s27
    %s44 = sphi 0, %s28
    %s48 = sphi 0, %s48
    %s50 = sphi 0, %s48
    %s51 = sphi 0, %s50
    %s65 = sphi 0, %s51
    %s69 = sphi 0, %s69
    %s71 = sphi 0, %s69
    %s72 = sphi 0, %s71
    %s86 = sphi 0, %s72
    %s90 = sphi 0, %s90
    %s92 = sphi 0, %s90
    %s93 = sphi 0, %s92
    %s107 = sphi 0, %s93
    %s111 = sphi 0, %s111
    %s113 = sphi 0, %s111
    %s114 = sphi 0, %s113
    %s128 = sphi 0, %s114
    %s132 = sphi 0, %s132
    %s134 = sphi 0, %s132
    %s135 = sphi 0, %s134
    %s149 = sphi 0, %s135
    %s153 = sphi 0, %s153
    %s155 = sphi 0, %s153
    %s156 = sphi 0, %s155
    %s170 = sphi 0, %s156
    %s174 = sphi 0, %s174
    %s176 = sphi 0, %s174
    %s177 = sphi 0, %s176
    %s191 = sphi 0, %s177
    %s197 = sphi 0, %s199
    %s200 = sphi 0, %s197
    %s201 = sphi 0, %s200
    %s217 = sphi 0, %s201
  $region4: #{cnn_forward.1} parent=0 // loop_header_branch
    %17 = sbr.rel (%p15) target = $region8
  $region5: #{cnn_forward.1} parent=0 // loop_body
    %s19 = ssub.s32 %s14, 1
    %s20 = ssub.s32 %s14, 2
    %s21 = sadd.s32 %s14, 1
    %s22 = ssub.s32 %s14, %s21
    %p23 = scmp.eq.s32.totalorder %s22, 0
    %s25 = sadd.s32 %s24, 1
    %s26 = scalar_select %p23, %s24, %s25
    %p29 = pneg %p23
    %p30 = scmp.eq.s32.totalorder %s14, 1
    %p31 = por %p29, %p30
    %p32 = scmp.ne.s32.totalorder %s24, %s27
    %p33 = scmp.eq.s32.totalorder %s14, 0
    %p34 = por %p32, %p33
    %p35 = scmp.ne.s32.totalorder %s24, %s27
    %p36 = scmp.eq.s32.totalorder %s19, 1
    %p37 = por %p35, %p36
    %p38 = scmp.ne.s32.totalorder %s27, %s28
    %p39 = scmp.eq.s32.totalorder %s19, 0
    %p40 = por %p38, %p39
    %p41 = scmp.ne.s32.totalorder %s27, %s28
    %p42 = scmp.eq.s32.totalorder %s20, 1
    %p43 = por %p41, %p42
    %p45 = scmp.ne.s32.totalorder %s28, %s44
    %p46 = scmp.eq.s32.totalorder %s20, 0
    %p47 = por %p45, %p46
    %s49 = sadd.s32 %s48, 1
    %p52 = scmp.eq.s32.totalorder %s14, 1
    %p53 = scmp.ne.s32.totalorder %s48, %s50
    %p54 = scmp.eq.s32.totalorder %s14, 0
    %p55 = por %p53, %p54
    %p56 = scmp.ne.s32.totalorder %s48, %s50
    %p57 = scmp.eq.s32.totalorder %s19, 1
    %p58 = por %p56, %p57
    %p59 = scmp.ne.s32.totalorder %s50, %s51
    %p60 = scmp.eq.s32.totalorder %s19, 0
    %p61 = por %p59, %p60
    %p62 = scmp.ne.s32.totalorder %s50, %s51
    %p63 = scmp.eq.s32.totalorder %s20, 1
    %p64 = por %p62, %p63
    %p66 = scmp.ne.s32.totalorder %s51, %s65
    %p67 = scmp.eq.s32.totalorder %s20, 0
    %p68 = por %p66, %p67
    %s70 = sadd.s32 %s69, 1
    %p73 = scmp.eq.s32.totalorder %s14, 1
    %p74 = scmp.ne.s32.totalorder %s69, %s71
    %p75 = scmp.eq.s32.totalorder %s14, 0
    %p76 = por %p74, %p75
    %p77 = scmp.ne.s32.totalorder %s69, %s71
    %p78 = scmp.eq.s32.totalorder %s19, 1
    %p79 = por %p77, %p78
    %p80 = scmp.ne.s32.totalorder %s71, %s72
    %p81 = scmp.eq.s32.totalorder %s19, 0
    %p82 = por %p80, %p81
    %p83 = scmp.ne.s32.totalorder %s71, %s72
    %p84 = scmp.eq.s32.totalorder %s20, 1
    %p85 = por %p83, %p84
    %p87 = scmp.ne.s32.totalorder %s72, %s86
    %p88 = scmp.eq.s32.totalorder %s20, 0
    %p89 = por %p87, %p88
    %s91 = sadd.s32 %s90, 1
    %p94 = scmp.eq.s32.totalorder %s14, 1
    %p95 = scmp.ne.s32.totalorder %s90, %s92
    %p96 = scmp.eq.s32.totalorder %s14, 0
    %p97 = por %p95, %p96
    %p98 = scmp.ne.s32.totalorder %s90, %s92
    %p99 = scmp.eq.s32.totalorder %s19, 1
    %p100 = por %p98, %p99
    %p101 = scmp.ne.s32.totalorder %s92, %s93
    %p102 = scmp.eq.s32.totalorder %s19, 0
    %p103 = por %p101, %p102
    %p104 = scmp.ne.s32.totalorder %s92, %s93
    %p105 = scmp.eq.s32.totalorder %s20, 1
    %p106 = por %p104, %p105
    %p108 = scmp.ne.s32.totalorder %s93, %s107
    %p109 = scmp.eq.s32.totalorder %s20, 0
    %p110 = por %p108, %p109
    %s112 = sadd.s32 %s111, 1
    %p115 = scmp.eq.s32.totalorder %s14, 1
    %p116 = scmp.ne.s32.totalorder %s111, %s113
    %p117 = scmp.eq.s32.totalorder %s14, 0
    %p118 = por %p116, %p117
    %p119 = scmp.ne.s32.totalorder %s111, %s113
    %p120 = scmp.eq.s32.totalorder %s19, 1
    %p121 = por %p119, %p120
    %p122 = scmp.ne.s32.totalorder %s113, %s114
    %p123 = scmp.eq.s32.totalorder %s19, 0
    %p124 = por %p122, %p123
    %p125 = scmp.ne.s32.totalorder %s113, %s114
    %p126 = scmp.eq.s32.totalorder %s20, 1
    %p127 = por %p125, %p126
    %p129 = scmp.ne.s32.totalorder %s114, %s128
    %p130 = scmp.eq.s32.totalorder %s20, 0
    %p131 = por %p129, %p130
    %s133 = sadd.s32 %s132, 1
    %p136 = scmp.eq.s32.totalorder %s14, 1
    %p137 = scmp.ne.s32.totalorder %s132, %s134
    %p138 = scmp.eq.s32.totalorder %s14, 0
    %p139 = por %p137, %p138
    %p140 = scmp.ne.s32.totalorder %s132, %s134
    %p141 = scmp.eq.s32.totalorder %s19, 1
    %p142 = por %p140, %p141
    %p143 = scmp.ne.s32.totalorder %s134, %s135
    %p144 = scmp.eq.s32.totalorder %s19, 0
    %p145 = por %p143, %p144
    %p146 = scmp.ne.s32.totalorder %s134, %s135
    %p147 = scmp.eq.s32.totalorder %s20, 1
    %p148 = por %p146, %p147
    %p150 = scmp.ne.s32.totalorder %s135, %s149
    %p151 = scmp.eq.s32.totalorder %s20, 0
    %p152 = por %p150, %p151
    %s154 = sadd.s32 %s153, 1
    %p157 = scmp.eq.s32.totalorder %s14, 1
    %p158 = scmp.ne.s32.totalorder %s153, %s155
    %p159 = scmp.eq.s32.totalorder %s14, 0
    %p160 = por %p158, %p159
    %p161 = scmp.ne.s32.totalorder %s153, %s155
    %p162 = scmp.eq.s32.totalorder %s19, 1
    %p163 = por %p161, %p162
    %p164 = scmp.ne.s32.totalorder %s155, %s156
    %p165 = scmp.eq.s32.totalorder %s19, 0
    %p166 = por %p164, %p165
    %p167 = scmp.ne.s32.totalorder %s155, %s156
    %p168 = scmp.eq.s32.totalorder %s20, 1
    %p169 = por %p167, %p168
    %p171 = scmp.ne.s32.totalorder %s156, %s170
    %p172 = scmp.eq.s32.totalorder %s20, 0
    %p173 = por %p171, %p172
    %s175 = sadd.s32 %s174, 1
    %p178 = scmp.eq.s32.totalorder %s14, 1
    %p179 = scmp.ne.s32.totalorder %s174, %s176
    %p180 = scmp.eq.s32.totalorder %s14, 0
    %p181 = por %p179, %p180
    %p182 = scmp.ne.s32.totalorder %s174, %s176
    %p183 = scmp.eq.s32.totalorder %s19, 1
    %p184 = por %p182, %p183
    %p185 = scmp.ne.s32.totalorder %s176, %s177
    %p186 = scmp.eq.s32.totalorder %s19, 0
    %p187 = por %p185, %p186
    %p188 = scmp.ne.s32.totalorder %s176, %s177
    %p189 = scmp.eq.s32.totalorder %s20, 1
    %p190 = por %p188, %p189
    %p192 = scmp.ne.s32.totalorder %s177, %s191
    %p193 = scmp.eq.s32.totalorder %s20, 0
    %p194 = por %p192, %p193
    %s195 = ssub.s32 %s14, %s21
    %p196 = scmp.eq.s32.totalorder %s195, 0
    %s198 = sadd.s32 %s197, 1
    %s199 = scalar_select %p196, %s197, %s198
    %p202 = pneg %p196
    %p203 = scmp.eq.s32.totalorder %s14, 1
    %p204 = por %p202, %p203
    %p205 = scmp.ne.s32.totalorder %s197, %s200
    %p206 = scmp.eq.s32.totalorder %s14, 0
    %p207 = por %p205, %p206
    %p208 = scmp.ne.s32.totalorder %s197, %s200
    %p209 = scmp.eq.s32.totalorder %s19, 1
    %p210 = por %p208, %p209
    %p211 = scmp.ne.s32.totalorder %s200, %s201
    %p212 = scmp.eq.s32.totalorder %s19, 0
    %p213 = por %p211, %p212
    %p214 = scmp.ne.s32.totalorder %s200, %s201
    %p215 = scmp.eq.s32.totalorder %s20, 1
    %p216 = por %p214, %p215
    %p218 = scmp.ne.s32.totalorder %s201, %s217
    %p219 = scmp.eq.s32.totalorder %s20, 0
    %p220 = por %p218, %p219
    %p221 = scmp.le.s32.totalorder 1, %s14
    %p222 = scmp.lt.s32.totalorder %s14, 3
    %p223 = pnand %p221, %p222
    %p224 = pneg %p223
    // Predicated region
    $region9: #{cnn_forward.1} parent=5 // pred_check
      _
    $region10: #{cnn_forward.1} parent=5 // pred_check_branch
      %226 = sbr.rel (%p223) target = $region12
    $region11: #{cnn_forward.1} parent=5 // pred_region
      %s227 = ssub.s32 %s14, 1
      // Predicated region
      $region13: #{cnn_forward.1} parent=11 // pred_check
        %p228 = pneg %p61
      $region14: #{cnn_forward.1} parent=11 // pred_check_branch
        %230 = sbr.rel (%p228) target = $region16
      $region15: #{cnn_forward.1} parent=11 // pred_region
        _
      $region16: #{cnn_forward.1} parent=11 // pred_fallthru
        _
      // Predicated region
      $region17: #{cnn_forward.1} parent=11 // pred_check
        %p231 = pneg %p82
      $region18: #{cnn_forward.1} parent=11 // pred_check_branch
        %233 = sbr.rel (%p231) target = $region20
      $region19: #{cnn_forward.1} parent=11 // pred_region
        _
      $region20: #{cnn_forward.1} parent=11 // pred_fallthru
        _
      // Predicated region
      $region21: #{cnn_forward.1} parent=11 // pred_check
        %p234 = pneg %p103
      $region22: #{cnn_forward.1} parent=11 // pred_check_branch
        %236 = sbr.rel (%p234) target = $region24
      $region23: #{cnn_forward.1} parent=11 // pred_region
        _
      $region24: #{cnn_forward.1} parent=11 // pred_fallthru
        _
      // Predicated region
      $region25: #{cnn_forward.1} parent=11 // pred_check
        %p237 = pneg %p124
      $region26: #{cnn_forward.1} parent=11 // pred_check_branch
        %239 = sbr.rel (%p237) target = $region28
      $region27: #{cnn_forward.1} parent=11 // pred_region
        _
      $region28: #{cnn_forward.1} parent=11 // pred_fallthru
        _
      // Predicated region
      $region29: #{cnn_forward.1} parent=11 // pred_check
        %p240 = pneg %p145
      $region30: #{cnn_forward.1} parent=11 // pred_check_branch
        %242 = sbr.rel (%p240) target = $region32
      $region31: #{cnn_forward.1} parent=11 // pred_region
        _
      $region32: #{cnn_forward.1} parent=11 // pred_fallthru
        _
      // Predicated region
      $region33: #{cnn_forward.1} parent=11 // pred_check
        %p243 = pneg %p166
      $region34: #{cnn_forward.1} parent=11 // pred_check_branch
        %245 = sbr.rel (%p243) target = $region36
      $region35: #{cnn_forward.1} parent=11 // pred_region
        _
      $region36: #{cnn_forward.1} parent=11 // pred_fallthru
        _
      // Predicated region
      $region37: #{cnn_forward.1} parent=11 // pred_check
        %p246 = pneg %p187
      $region38: #{cnn_forward.1} parent=11 // pred_check_branch
        %248 = sbr.rel (%p246) target = $region40
      $region39: #{cnn_forward.1} parent=11 // pred_region
        _
      $region40: #{cnn_forward.1} parent=11 // pred_fallthru
        _
    $region12: #{cnn_forward.1} parent=5 // pred_fallthru
      _
    %p249 = scmp.lt.s32.totalorder %s14, 2
    // Predicated region
    $region41: #{cnn_forward.1} parent=5 // pred_check
      %p250 = pneg %p249
    $region42: #{cnn_forward.1} parent=5 // pred_check_branch
      %252 = sbr.rel (%p250) target = $region44
    $region43: #{cnn_forward.1} parent=5 // pred_region
      // Predicated region
      $region45: #{cnn_forward.1} parent=43 // pred_check
        %p253 = pneg %p34
      $region46: #{cnn_forward.1} parent=43 // pred_check_branch
        %255 = sbr.rel (%p253) target = $region48
      $region47: #{cnn_forward.1} parent=43 // pred_region
        %p256 = scmp.lt.s32.totalorder %s14, 1
        %s257 = scalar_select %p256, %s14, 1
        %s258 = smul.addr %s257, 41
        %s259 = smul.addr %s258, 4
        %s260 = scalar_lea.vmem %s0, %s259
      $region48: #{cnn_forward.1} parent=43 // pred_fallthru
        _
    $region44: #{cnn_forward.1} parent=5 // pred_fallthru
      _
    %p261 = scmp.le.s32.totalorder 1, %s14
    %p262 = scmp.lt.s32.totalorder %s14, 3
    %p263 = pnand %p261, %p262
    %p264 = pneg %p263
    // Predicated region
    $region49: #{cnn_forward.1} parent=5 // pred_check
      _
    $region50: #{cnn_forward.1} parent=5 // pred_check_branch
      %266 = sbr.rel (%p263) target = $region52
    $region51: #{cnn_forward.1} parent=5 // pred_region
      %s267 = ssub.s32 %s14, 1
      %p268 = scmp.lt.s32.totalorder %s19, 1
      %s269 = scalar_select %p268, %s19, 1
      %s270 = smul.addr %s269, 41
      %s271 = smul.addr %s270, 4
      %s272 = scalar_lea.vmem %s0, %s271
      %p273 = pneg %p40
      %p274 = pneg %p37
      %p275 = pneg %p61
      %p276 = pneg %p58
      %p277 = pneg %p82
      %p278 = pneg %p79
      %p279 = pneg %p103
      %p280 = pneg %p100
      %p281 = pneg %p124
      %p282 = pneg %p121
      %p283 = pneg %p145
      %p284 = pneg %p142
      %p285 = pneg %p166
      %p286 = pneg %p163
      %p287 = pneg %p187
      %p288 = pneg %p184
      %p289 = pneg %p213
      %p290 = pneg %p210
      %p291 = scmp.lt.s32.totalorder %s19, 1
      %s292 = scalar_select %p291, %s19, 1
      %s293 = smul.addr %s292, 32
      %s294 = smul.addr %s293, 8
      %s295 = scalar_lea.vmem %s8, %s294
      %p296 = scmp.lt.s32.totalorder %s19, 1
      %s297 = scalar_select %p296, %s19, 1
      %s298 = smul.addr %s297, 41
      %s299 = smul.addr %s298, 4
      %s300 = scalar_lea.vmem %s0, %s299
      %p301 = scmp.lt.s32.totalorder %s19, 1
      %s302 = scalar_select %p301, %s19, 1
      %s303 = smul.addr %s302, 32
      %s304 = smul.addr %s303, 8
      %s305 = scalar_lea.vmem %s8, %s304
      %v307 = vld [vmem:[%s300] sm:$0xf]
      %v308 = vld [vmem:[%s300 + $0x4] sm:$0xf]
      %v309 = vld [vmem:[%s300 + $0x8] sm:$0xf]
      %v310 = vld [vmem:[%s300 + $0xc] sm:$0xf]
      %v311 = vld [vmem:[%s300 + $0x10] sm:$0xf]
      %v312 = vld [vmem:[%s300 + $0x14] sm:$0xf]
      %v313 = vld [vmem:[%s300 + $0x18] sm:$0xf]
      %v314 = vld [vmem:[%s300 + $0x1c] sm:$0xf]
      %v315 = vld [vmem:[%s300 + $0x20] sm:$0xf]
      %v316 = vld [vmem:[%s300 + $0x24] sm:$0xf]
      %v317 = vld [vmem:[%s300 + $0x28] sm:$0xf]
      %v318 = vld [vmem:[%s300 + $0x2c] sm:$0xf]
      %v319 = vld [vmem:[%s300 + $0x30] sm:$0xf]
      %v320 = vld [vmem:[%s300 + $0x34] sm:$0xf]
      %v321 = vld [vmem:[%s300 + $0x38] sm:$0xf]
      %v322 = vld [vmem:[%s300 + $0x3c] sm:$0xf]
      %v323 = vld [vmem:[%s300 + $0x40] sm:$0xf]
      %v324 = vld [vmem:[%s300 + $0x44] sm:$0xf]
      %v325 = vld [vmem:[%s300 + $0x48] sm:$0xf]
      %v326 = vld [vmem:[%s300 + $0x4c] sm:$0xf]
      %v327 = vld [vmem:[%s300 + $0x50] sm:$0xf]
      %v328 = vld [vmem:[%s300 + $0x54] sm:$0xf]
      %v329 = vld [vmem:[%s300 + $0x58] sm:$0xf]
      %v330 = vld [vmem:[%s300 + $0x5c] sm:$0xf]
      %v331 = vld [vmem:[%s300 + $0x60] sm:$0xf]
      %v332 = vld [vmem:[%s300 + $0x64] sm:$0xf]
      %v333 = vld [vmem:[%s300 + $0x68] sm:$0xf]
      %v334 = vld [vmem:[%s300 + $0x6c] sm:$0xf]
      %v335 = vld [vmem:[%s300 + $0x70] sm:$0xf]
      %v336 = vld [vmem:[%s300 + $0x74] sm:$0xf]
      %v337 = vld [vmem:[%s300 + $0x78] sm:$0xf]
      %v338 = vld [vmem:[%s300 + $0x7c] sm:$0xf]
      %v339 = vld [vmem:[%s300 + $0x80] sm:$0xf]
      %v340 = vld [vmem:[%s300 + $0x84] sm:$0xf]
      %v341 = vld [vmem:[%s300 + $0x88] sm:$0xf]
      %v342 = vld [vmem:[%s300 + $0x8c] sm:$0xf]
      %v343 = vld [vmem:[%s1] sm:$0xf]
      %v344 = vld [vmem:[%s1 + $0x4] sm:$0xf]
      %v345 = vld [vmem:[%s1 + $0x8] sm:$0xf]
      %v346 = vld [vmem:[%s1 + $0xc] sm:$0xf]
      %v347 = vld [vmem:[%s1 + $0x10] sm:$0xf]
      %v348 = vld [vmem:[%s1 + $0x14] sm:$0xf]
      %v349 = vld [vmem:[%s1 + $0x18] sm:$0xf]
      %v350 = vld [vmem:[%s1 + $0x1c] sm:$0xf]
      %v351 = vld [vmem:[%s1 + $0x20] sm:$0xf]
      %v352 = vld [vmem:[%s1 + $0x24] sm:$0xf]
      %v353 = vld [vmem:[%s1 + $0x28] sm:$0xf]
      %v354 = vld [vmem:[%s1 + $0x2c] sm:$0xf]
      %v355 = vld [vmem:[%s1 + $0x30] sm:$0xf]
      %v356 = vld [vmem:[%s1 + $0x34] sm:$0xf]
      %v357 = vld [vmem:[%s1 + $0x38] sm:$0xf]
      %v358 = vld [vmem:[%s1 + $0x3c] sm:$0xf]
      %v359 = vld [vmem:[%s300 + $0x90] sm:$0x1]
      %s360 = scalar_lea.vmem %s1, 64
      %v361 = vld [vmem:[%s360] sm:$0xf]
      %v362 = vld [vmem:[%s360 + $0x4] sm:$0xf]
      %v363 = vld [vmem:[%s360 + $0x8] sm:$0xf]
      %v364 = vld [vmem:[%s360 + $0xc] sm:$0xf]
      %v365 = vld [vmem:[%s360 + $0x10] sm:$0xf]
      %v366 = vld [vmem:[%s360 + $0x14] sm:$0xf]
      %v367 = vld [vmem:[%s360 + $0x18] sm:$0xf]
      %v368 = vld [vmem:[%s360 + $0x1c] sm:$0xf]
      %v369 = vld [vmem:[%s360 + $0x20] sm:$0xf]
      %v370 = vld [vmem:[%s360 + $0x24] sm:$0xf]
      %v371 = vld [vmem:[%s360 + $0x28] sm:$0xf]
      %v372 = vld [vmem:[%s360 + $0x2c] sm:$0xf]
      %v373 = vld [vmem:[%s360 + $0x30] sm:$0xf]
      %v374 = vld [vmem:[%s360 + $0x34] sm:$0xf]
      %v375 = vld [vmem:[%s360 + $0x38] sm:$0xf]
      %v376 = vld [vmem:[%s360 + $0x3c] sm:$0xf]
      %v414 = vunpack.c.l.b16 %v307
      %v415 = vunpack.c.l.b16 %v308
      %v416 = vunpack.c.l.b16 %v309
      %v417 = vunpack.c.l.b16 %v310
      %v418 = vunpack.c.l.b16 %v311
      %v419 = vunpack.c.l.b16 %v312
      %v420 = vunpack.c.l.b16 %v313
      %v421 = vunpack.c.l.b16 %v314
      %v422 = vunpack.c.l.b16 %v315
      %v423 = vunpack.c.l.b16 %v316
      %v424 = vunpack.c.l.b16 %v317
      %v425 = vunpack.c.l.b16 %v318
      %v426 = vunpack.c.l.b16 %v319
      %v427 = vunpack.c.l.b16 %v320
      %v428 = vunpack.c.l.b16 %v321
      %v429 = vunpack.c.l.b16 %v322
      %v430 = vunpack.c.l.b16 %v323
      %v431 = vunpack.c.l.b16 %v324
      %v432 = vunpack.c.l.b16 %v325
      %v433 = vunpack.c.l.b16 %v326
      %v434 = vunpack.c.l.b16 %v327
      %v435 = vunpack.c.l.b16 %v328
      %v436 = vunpack.c.l.b16 %v329
      %v437 = vunpack.c.l.b16 %v330
      %v438 = vunpack.c.l.b16 %v331
      %v439 = vunpack.c.l.b16 %v332
      %v440 = vunpack.c.l.b16 %v333
      %v441 = vunpack.c.l.b16 %v334
      %v442 = vunpack.c.l.b16 %v335
      %v443 = vunpack.c.l.b16 %v336
      %v444 = vunpack.c.l.b16 %v337
      %v445 = vunpack.c.l.b16 %v338
      %v446 = vunpack.c.l.b16 %v339
      %v447 = vunpack.c.l.b16 %v340
      %v448 = vunpack.c.l.b16 %v341
      %v449 = vunpack.c.l.b16 %v342
      %v450 = vunpack.c.l.b16 %v359
      %v451 = vpack.c.b16 %v415, %v414
      %v452 = vpack.c.b16 %v417, %v416
      %v453 = vpack.c.b16 %v419, %v418
      %v454 = vpack.c.b16 %v421, %v420
      %v455 = vpack.c.b16 %v423, %v422
      %v456 = vpack.c.b16 %v425, %v424
      %v457 = vpack.c.b16 %v427, %v426
      %v458 = vpack.c.b16 %v429, %v428
      %v459 = vpack.c.b16 %v431, %v430
      %v460 = vpack.c.b16 %v433, %v432
      %v461 = vpack.c.b16 %v435, %v434
      %v462 = vpack.c.b16 %v437, %v436
      %v463 = vpack.c.b16 %v439, %v438
      %v464 = vpack.c.b16 %v441, %v440
      %v465 = vpack.c.b16 %v443, %v442
      %v466 = vpack.c.b16 %v445, %v444
      %v467 = vpack.c.b16 %v447, %v446
      %v468 = vpack.c.b16 %v449, %v448
      %v469 = vpack.c.b16 %v450, %v450
      %vm470 = vsmask.f32 7424
      %v472 = vshrl.u32 %v451, 16
      %v474 = vshll.u32 %v451, 16
      %v476 = vrot.slane %v474, 1
      %v477 = vor.u32 %v472, %v476
      %v479 = vshll.u32 %v452, 16
      %v481 = vrot.slane %v479, 1
      %v482 = vsel %vm470, %v477, %v481
      %v483 = vshrl.u32 %v452, 16
      %v485 = vor.u32 %v483, %v481
      %v487 = vshll.u32 %v453, 16
      %v489 = vrot.slane %v487, 1
      %v490 = vsel %vm470, %v485, %v489
      %v491 = vshrl.u32 %v453, 16
      %v493 = vor.u32 %v491, %v489
      %v495 = vshll.u32 %v454, 16
      %v497 = vrot.slane %v495, 1
      %v498 = vsel %vm470, %v493, %v497
      %v499 = vshrl.u32 %v454, 16
      %v501 = vor.u32 %v499, %v497
      %v503 = vshll.u32 %v455, 16
      %v505 = vrot.slane %v503, 1
      %v506 = vsel %vm470, %v501, %v505
      %v507 = vshrl.u32 %v455, 16
      %v509 = vor.u32 %v507, %v505
      %v511 = vshll.u32 %v456, 16
      %v513 = vrot.slane %v511, 1
      %v514 = vsel %vm470, %v509, %v513
      %v515 = vshrl.u32 %v456, 16
      %v517 = vor.u32 %v515, %v513
      %v519 = vshll.u32 %v457, 16
      %v521 = vrot.slane %v519, 1
      %v522 = vsel %vm470, %v517, %v521
      %v523 = vshrl.u32 %v457, 16
      %v525 = vor.u32 %v523, %v521
      %v527 = vshll.u32 %v458, 16
      %v529 = vrot.slane %v527, 1
      %v530 = vsel %vm470, %v525, %v529
      %v531 = vshrl.u32 %v458, 16
      %v533 = vor.u32 %v531, %v529
      %v535 = vshll.u32 %v459, 16
      %v537 = vrot.slane %v535, 1
      %v538 = vsel %vm470, %v533, %v537
      %v539 = vshrl.u32 %v459, 16
      %v541 = vor.u32 %v539, %v537
      %v543 = vshll.u32 %v460, 16
      %v545 = vrot.slane %v543, 1
      %v546 = vsel %vm470, %v541, %v545
      %v547 = vshrl.u32 %v460, 16
      %v549 = vor.u32 %v547, %v545
      %v551 = vshll.u32 %v461, 16
      %v553 = vrot.slane %v551, 1
      %v554 = vsel %vm470, %v549, %v553
      %v555 = vshrl.u32 %v461, 16
      %v557 = vor.u32 %v555, %v553
      %v559 = vshll.u32 %v462, 16
      %v561 = vrot.slane %v559, 1
      %v562 = vsel %vm470, %v557, %v561
      %v563 = vshrl.u32 %v462, 16
      %v565 = vor.u32 %v563, %v561
      %v567 = vshll.u32 %v463, 16
      %v569 = vrot.slane %v567, 1
      %v570 = vsel %vm470, %v565, %v569
      %v571 = vshrl.u32 %v463, 16
      %v573 = vor.u32 %v571, %v569
      %v575 = vshll.u32 %v464, 16
      %v577 = vrot.slane %v575, 1
      %v578 = vsel %vm470, %v573, %v577
      %v579 = vshrl.u32 %v464, 16
      %v581 = vor.u32 %v579, %v577
      %v583 = vshll.u32 %v465, 16
      %v585 = vrot.slane %v583, 1
      %v586 = vsel %vm470, %v581, %v585
      %v587 = vshrl.u32 %v465, 16
      %v589 = vor.u32 %v587, %v585
      %v591 = vshll.u32 %v466, 16
      %v593 = vrot.slane %v591, 1
      %v594 = vsel %vm470, %v589, %v593
      %v595 = vshrl.u32 %v466, 16
      %v597 = vor.u32 %v595, %v593
      %v599 = vshll.u32 %v467, 16
      %v601 = vrot.slane %v599, 1
      %v602 = vsel %vm470, %v597, %v601
      %v603 = vshrl.u32 %v467, 16
      %v605 = vor.u32 %v603, %v601
      %v607 = vshll.u32 %v468, 16
      %v609 = vrot.slane %v607, 1
      %v610 = vsel %vm470, %v605, %v609
      %v611 = vshrl.u32 %v468, 16
      %v613 = vor.u32 %v611, %v609
      %v615 = vshll.u32 %v469, 16
      %v617 = vrot.slane %v615, 1
      %v618 = vsel %vm470, %v613, %v617
      %v653 = vunpack.c.l.b16 %v361
      %v654 = vunpack.c.l.b16 %v362
      %v655 = vunpack.c.l.b16 %v363
      %v656 = vunpack.c.l.b16 %v364
      %v657 = vunpack.c.l.b16 %v365
      %v658 = vunpack.c.l.b16 %v366
      %v659 = vunpack.c.l.b16 %v367
      %v660 = vunpack.c.l.b16 %v368
      %v661 = vunpack.c.l.b16 %v369
      %v662 = vunpack.c.l.b16 %v370
      %v663 = vunpack.c.l.b16 %v371
      %v664 = vunpack.c.l.b16 %v372
      %v665 = vunpack.c.l.b16 %v373
      %v666 = vunpack.c.l.b16 %v374
      %v667 = vunpack.c.l.b16 %v375
      %v668 = vunpack.c.l.b16 %v376
      %v669 = vpack.c.b16 %v654, %v653
      %v670 = vpack.c.b16 %v656, %v655
      %v671 = vpack.c.b16 %v658, %v657
      %v672 = vpack.c.b16 %v660, %v659
      %v673 = vpack.c.b16 %v662, %v661
      %v674 = vpack.c.b16 %v664, %v663
      %v675 = vpack.c.b16 %v666, %v665
      %v676 = vpack.c.b16 %v668, %v667
      %685 = vmatpush.bf16.msra.mxu0 %v676
      %686 = vmatpush.bf16.msra.mxu0 %v675
      %687 = vmatpush.bf16.msra.mxu0 %v674
      %688 = vmatpush.bf16.msra.mxu0 %v673
      %689 = vmatpush.bf16.msra.mxu0 %v672
      %690 = vmatpush.bf16.msra.mxu0 %v671
      %691 = vmatpush.bf16.msra.mxu0 %v670
      %692 = vmatpush.bf16.msra.mxu0 %v669
      %693 = vmatmul.bf16.gmra.mxu0 %v482
      %v694 = vpop.f32.mrf.mxu0
      %v695 = vadd.f32 0.0, %v694
      %v696 = vpop.f32.mrf.mxu0
      %v697 = vadd.f32 0.0, %v696
      %698 = vmatmul.bf16.gmra.mxu0 %v490
      %v699 = vpop.f32.mrf.mxu0
      %v700 = vadd.f32 0.0, %v699
      %v701 = vpop.f32.mrf.mxu0
      %v702 = vadd.f32 0.0, %v701
      %703 = vmatmul.bf16.gmra.mxu0 %v498
      %v704 = vpop.f32.mrf.mxu0
      %v705 = vadd.f32 0.0, %v704
      %v706 = vpop.f32.mrf.mxu0
      %v707 = vadd.f32 0.0, %v706
      %708 = vmatmul.bf16.gmra.mxu0 %v506
      %v709 = vpop.f32.mrf.mxu0
      %v710 = vadd.f32 0.0, %v709
      %v711 = vpop.f32.mrf.mxu0
      %v712 = vadd.f32 0.0, %v711
      %713 = vmatmul.bf16.gmra.mxu0 %v514
      %v714 = vpop.f32.mrf.mxu0
      %v715 = vadd.f32 0.0, %v714
      %v716 = vpop.f32.mrf.mxu0
      %v717 = vadd.f32 0.0, %v716
      %718 = vmatmul.bf16.gmra.mxu0 %v522
      %v719 = vpop.f32.mrf.mxu0
      %v720 = vadd.f32 0.0, %v719
      %v721 = vpop.f32.mrf.mxu0
      %v722 = vadd.f32 0.0, %v721
      %723 = vmatmul.bf16.gmra.mxu0 %v530
      %v724 = vpop.f32.mrf.mxu0
      %v725 = vadd.f32 0.0, %v724
      %v726 = vpop.f32.mrf.mxu0
      %v727 = vadd.f32 0.0, %v726
      %728 = vmatmul.bf16.gmra.mxu0 %v538
      %v729 = vpop.f32.mrf.mxu0
      %v730 = vadd.f32 0.0, %v729
      %v731 = vpop.f32.mrf.mxu0
      %v732 = vadd.f32 0.0, %v731
      %733 = vmatmul.bf16.gmra.mxu0 %v546
      %v734 = vpop.f32.mrf.mxu0
      %v735 = vadd.f32 0.0, %v734
      %v736 = vpop.f32.mrf.mxu0
      %v737 = vadd.f32 0.0, %v736
      %738 = vmatmul.bf16.gmra.mxu0 %v554
      %v739 = vpop.f32.mrf.mxu0
      %v740 = vadd.f32 0.0, %v739
      %v741 = vpop.f32.mrf.mxu0
      %v742 = vadd.f32 0.0, %v741
      %743 = vmatmul.bf16.gmra.mxu0 %v562
      %v744 = vpop.f32.mrf.mxu0
      %v745 = vadd.f32 0.0, %v744
      %v746 = vpop.f32.mrf.mxu0
      %v747 = vadd.f32 0.0, %v746
      %748 = vmatmul.bf16.gmra.mxu0 %v570
      %v749 = vpop.f32.mrf.mxu0
      %v750 = vadd.f32 0.0, %v749
      %v751 = vpop.f32.mrf.mxu0
      %v752 = vadd.f32 0.0, %v751
      %753 = vmatmul.bf16.gmra.mxu0 %v578
      %v754 = vpop.f32.mrf.mxu0
      %v755 = vadd.f32 0.0, %v754
      %v756 = vpop.f32.mrf.mxu0
      %v757 = vadd.f32 0.0, %v756
      %758 = vmatmul.bf16.gmra.mxu0 %v586
      %v759 = vpop.f32.mrf.mxu0
      %v760 = vadd.f32 0.0, %v759
      %v761 = vpop.f32.mrf.mxu0
      %v762 = vadd.f32 0.0, %v761
      %763 = vmatmul.bf16.gmra.mxu0 %v594
      %v764 = vpop.f32.mrf.mxu0
      %v765 = vadd.f32 0.0, %v764
      %v766 = vpop.f32.mrf.mxu0
      %v767 = vadd.f32 0.0, %v766
      %768 = vmatmul.bf16.gmra.mxu0 %v602
      %v769 = vpop.f32.mrf.mxu0
      %v770 = vadd.f32 0.0, %v769
      %v771 = vpop.f32.mrf.mxu0
      %v772 = vadd.f32 0.0, %v771
      %773 = vmatmul.bf16.gmra.mxu0 %v610
      %v774 = vpop.f32.mrf.mxu0
      %v775 = vadd.f32 0.0, %v774
      %v776 = vpop.f32.mrf.mxu0
      %v777 = vadd.f32 0.0, %v776
      %778 = vmatmul.bf16.gmra.mxu0 %v618
      %v779 = vpop.f32.mrf.mxu0
      %v780 = vadd.f32 0.0, %v779
      %v781 = vpop.f32.mrf.mxu0
      %v782 = vadd.f32 0.0, %v781
      %783 = vdwg.mxu0
      %v818 = vunpack.c.l.b16 %v343
      %v819 = vunpack.c.l.b16 %v344
      %v820 = vunpack.c.l.b16 %v345
      %v821 = vunpack.c.l.b16 %v346
      %v822 = vunpack.c.l.b16 %v347
      %v823 = vunpack.c.l.b16 %v348
      %v824 = vunpack.c.l.b16 %v349
      %v825 = vunpack.c.l.b16 %v350
      %v826 = vunpack.c.l.b16 %v351
      %v827 = vunpack.c.l.b16 %v352
      %v828 = vunpack.c.l.b16 %v353
      %v829 = vunpack.c.l.b16 %v354
      %v830 = vunpack.c.l.b16 %v355
      %v831 = vunpack.c.l.b16 %v356
      %v832 = vunpack.c.l.b16 %v357
      %v833 = vunpack.c.l.b16 %v358
      %v834 = vpack.c.b16 %v819, %v818
      %v835 = vpack.c.b16 %v821, %v820
      %v836 = vpack.c.b16 %v823, %v822
      %v837 = vpack.c.b16 %v825, %v824
      %v838 = vpack.c.b16 %v827, %v826
      %v839 = vpack.c.b16 %v829, %v828
      %v840 = vpack.c.b16 %v831, %v830
      %v841 = vpack.c.b16 %v833, %v832
      %850 = vmatpush.bf16.msra.mxu0 %v841
      %851 = vmatpush.bf16.msra.mxu0 %v840
      %852 = vmatpush.bf16.msra.mxu0 %v839
      %853 = vmatpush.bf16.msra.mxu0 %v838
      %854 = vmatpush.bf16.msra.mxu0 %v837
      %855 = vmatpush.bf16.msra.mxu0 %v836
      %856 = vmatpush.bf16.msra.mxu0 %v835
      %857 = vmatpush.bf16.msra.mxu0 %v834
      %858 = vmatmul.bf16.gmra.mxu0 %v451
      %v859 = vpop.f32.mrf.mxu0
      %v860 = vadd.f32 %v695, %v859
      %v861 = vpop.f32.mrf.mxu0
      %v862 = vadd.f32 %v697, %v861
      %863 = vmatmul.bf16.gmra.mxu0 %v452
      %v864 = vpop.f32.mrf.mxu0
      %v865 = vadd.f32 %v700, %v864
      %v866 = vpop.f32.mrf.mxu0
      %v867 = vadd.f32 %v702, %v866
      %868 = vmatmul.bf16.gmra.mxu0 %v453
      %v869 = vpop.f32.mrf.mxu0
      %v870 = vadd.f32 %v705, %v869
      %v871 = vpop.f32.mrf.mxu0
      %v872 = vadd.f32 %v707, %v871
      %873 = vmatmul.bf16.gmra.mxu0 %v454
      %v874 = vpop.f32.mrf.mxu0
      %v875 = vadd.f32 %v710, %v874
      %v876 = vpop.f32.mrf.mxu0
      %v877 = vadd.f32 %v712, %v876
      %878 = vmatmul.bf16.gmra.mxu0 %v455
      %v879 = vpop.f32.mrf.mxu0
      %v880 = vadd.f32 %v715, %v879
      %v881 = vpop.f32.mrf.mxu0
      %v882 = vadd.f32 %v717, %v881
      %883 = vmatmul.bf16.gmra.mxu0 %v456
      %v884 = vpop.f32.mrf.mxu0
      %v885 = vadd.f32 %v720, %v884
      %v886 = vpop.f32.mrf.mxu0
      %v887 = vadd.f32 %v722, %v886
      %888 = vmatmul.bf16.gmra.mxu0 %v457
      %v889 = vpop.f32.mrf.mxu0
      %v890 = vadd.f32 %v725, %v889
      %v891 = vpop.f32.mrf.mxu0
      %v892 = vadd.f32 %v727, %v891
      %893 = vmatmul.bf16.gmra.mxu0 %v458
      %v894 = vpop.f32.mrf.mxu0
      %v895 = vadd.f32 %v730, %v894
      %v896 = vpop.f32.mrf.mxu0
      %v897 = vadd.f32 %v732, %v896
      %898 = vmatmul.bf16.gmra.mxu0 %v459
      %v899 = vpop.f32.mrf.mxu0
      %v900 = vadd.f32 %v735, %v899
      %v901 = vpop.f32.mrf.mxu0
      %v902 = vadd.f32 %v737, %v901
      %903 = vmatmul.bf16.gmra.mxu0 %v460
      %v904 = vpop.f32.mrf.mxu0
      %v905 = vadd.f32 %v740, %v904
      %v906 = vpop.f32.mrf.mxu0
      %v907 = vadd.f32 %v742, %v906
      %908 = vmatmul.bf16.gmra.mxu0 %v461
      %v909 = vpop.f32.mrf.mxu0
      %v910 = vadd.f32 %v745, %v909
      %v911 = vpop.f32.mrf.mxu0
      %v912 = vadd.f32 %v747, %v911
      %913 = vmatmul.bf16.gmra.mxu0 %v462
      %v914 = vpop.f32.mrf.mxu0
      %v915 = vadd.f32 %v750, %v914
      %v916 = vpop.f32.mrf.mxu0
      %v917 = vadd.f32 %v752, %v916
      %918 = vmatmul.bf16.gmra.mxu0 %v463
      %v919 = vpop.f32.mrf.mxu0
      %v920 = vadd.f32 %v755, %v919
      %v921 = vpop.f32.mrf.mxu0
      %v922 = vadd.f32 %v757, %v921
      %923 = vmatmul.bf16.gmra.mxu0 %v464
      %v924 = vpop.f32.mrf.mxu0
      %v925 = vadd.f32 %v760, %v924
      %v926 = vpop.f32.mrf.mxu0
      %v927 = vadd.f32 %v762, %v926
      %928 = vmatmul.bf16.gmra.mxu0 %v465
      %v929 = vpop.f32.mrf.mxu0
      %v930 = vadd.f32 %v765, %v929
      %v931 = vpop.f32.mrf.mxu0
      %v932 = vadd.f32 %v767, %v931
      %933 = vmatmul.bf16.gmra.mxu0 %v466
      %v934 = vpop.f32.mrf.mxu0
      %v935 = vadd.f32 %v770, %v934
      %v936 = vpop.f32.mrf.mxu0
      %v937 = vadd.f32 %v772, %v936
      %938 = vmatmul.bf16.gmra.mxu0 %v467
      %v939 = vpop.f32.mrf.mxu0
      %v940 = vadd.f32 %v775, %v939
      %v941 = vpop.f32.mrf.mxu0
      %v942 = vadd.f32 %v777, %v941
      %943 = vmatmul.bf16.gmra.mxu0 %v468
      %v944 = vpop.f32.mrf.mxu0
      %v945 = vadd.f32 %v780, %v944
      %v946 = vpop.f32.mrf.mxu0
      %v947 = vadd.f32 %v782, %v946
      %948 = vdwg.mxu0
      %v949 = vld [vmem:[%s300] sm:$0xe]
      %s950 = scalar_lea.vmem %s1, 128
      %v951 = vld [vmem:[%s950] sm:$0xf]
      %v952 = vld [vmem:[%s950 + $0x4] sm:$0xf]
      %v953 = vld [vmem:[%s950 + $0x8] sm:$0xf]
      %v954 = vld [vmem:[%s950 + $0xc] sm:$0xf]
      %v955 = vld [vmem:[%s950 + $0x10] sm:$0xf]
      %v956 = vld [vmem:[%s950 + $0x14] sm:$0xf]
      %v957 = vld [vmem:[%s950 + $0x18] sm:$0xf]
      %v958 = vld [vmem:[%s950 + $0x1c] sm:$0xf]
      %v959 = vld [vmem:[%s950 + $0x20] sm:$0xf]
      %v960 = vld [vmem:[%s950 + $0x24] sm:$0xf]
      %v961 = vld [vmem:[%s950 + $0x28] sm:$0xf]
      %v962 = vld [vmem:[%s950 + $0x2c] sm:$0xf]
      %v963 = vld [vmem:[%s950 + $0x30] sm:$0xf]
      %v964 = vld [vmem:[%s950 + $0x34] sm:$0xf]
      %v965 = vld [vmem:[%s950 + $0x38] sm:$0xf]
      %v966 = vld [vmem:[%s950 + $0x3c] sm:$0xf]
      %v968 = vunpack.c.l.b16 %v949
      %v969 = vpack.c.b16 %v415, %v968
      %vm970 = vcmask 1046528
      %v971 = vrot.slane %v969, 1
      %v972 = vrot.slane %v452, 1
      %v973 = vsel %vm970, %v971, %v972
      %v974 = vrot.slane %v453, 1
      %v975 = vsel %vm970, %v972, %v974
      %v976 = vrot.slane %v454, 1
      %v977 = vsel %vm970, %v974, %v976
      %v978 = vrot.slane %v455, 1
      %v979 = vsel %vm970, %v976, %v978
      %v980 = vrot.slane %v456, 1
      %v981 = vsel %vm970, %v978, %v980
      %v982 = vrot.slane %v457, 1
      %v983 = vsel %vm970, %v980, %v982
      %v984 = vrot.slane %v458, 1
      %v985 = vsel %vm970, %v982, %v984
      %v986 = vrot.slane %v459, 1
      %v987 = vsel %vm970, %v984, %v986
      %v988 = vrot.slane %v460, 1
      %v989 = vsel %vm970, %v986, %v988
      %v990 = vrot.slane %v461, 1
      %v991 = vsel %vm970, %v988, %v990
      %v992 = vrot.slane %v462, 1
      %v993 = vsel %vm970, %v990, %v992
      %v994 = vrot.slane %v463, 1
      %v995 = vsel %vm970, %v992, %v994
      %v996 = vrot.slane %v464, 1
      %v997 = vsel %vm970, %v994, %v996
      %v998 = vrot.slane %v465, 1
      %v999 = vsel %vm970, %v996, %v998
      %v1000 = vrot.slane %v466, 1
      %v1001 = vsel %vm970, %v998, %v1000
      %v1002 = vrot.slane %v467, 1
      %v1003 = vsel %vm970, %v1000, %v1002
      %v1004 = vrot.slane %v468, 1
      %v1005 = vsel %vm970, %v1002, %v1004
      %v1006 = vrot.slane %v469, 1
      %v1007 = vsel %vm970, %v1004, %v1006
      %v1042 = vunpack.c.l.b16 %v951
      %v1043 = vunpack.c.l.b16 %v952
      %v1044 = vunpack.c.l.b16 %v953
      %v1045 = vunpack.c.l.b16 %v954
      %v1046 = vunpack.c.l.b16 %v955
      %v1047 = vunpack.c.l.b16 %v956
      %v1048 = vunpack.c.l.b16 %v957
      %v1049 = vunpack.c.l.b16 %v958
      %v1050 = vunpack.c.l.b16 %v959
      %v1051 = vunpack.c.l.b16 %v960
      %v1052 = vunpack.c.l.b16 %v961
      %v1053 = vunpack.c.l.b16 %v962
      %v1054 = vunpack.c.l.b16 %v963
      %v1055 = vunpack.c.l.b16 %v964
      %v1056 = vunpack.c.l.b16 %v965
      %v1057 = vunpack.c.l.b16 %v966
      %v1058 = vpack.c.b16 %v1043, %v1042
      %v1059 = vpack.c.b16 %v1045, %v1044
      %v1060 = vpack.c.b16 %v1047, %v1046
      %v1061 = vpack.c.b16 %v1049, %v1048
      %v1062 = vpack.c.b16 %v1051, %v1050
      %v1063 = vpack.c.b16 %v1053, %v1052
      %v1064 = vpack.c.b16 %v1055, %v1054
      %v1065 = vpack.c.b16 %v1057, %v1056
      %1074 = vmatpush.bf16.msra.mxu0 %v1065
      %1075 = vmatpush.bf16.msra.mxu0 %v1064
      %1076 = vmatpush.bf16.msra.mxu0 %v1063
      %1077 = vmatpush.bf16.msra.mxu0 %v1062
      %1078 = vmatpush.bf16.msra.mxu0 %v1061
      %1079 = vmatpush.bf16.msra.mxu0 %v1060
      %1080 = vmatpush.bf16.msra.mxu0 %v1059
      %1081 = vmatpush.bf16.msra.mxu0 %v1058
      %1082 = vmatmul.bf16.gmra.mxu0 %v973
      %v1083 = vpop.f32.mrf.mxu0
      %v1084 = vadd.f32 0.0, %v1083
      %v1085 = vpop.f32.mrf.mxu0
      %v1086 = vadd.f32 0.0, %v1085
      %1087 = vmatmul.bf16.gmra.mxu0 %v975
      %v1088 = vpop.f32.mrf.mxu0
      %v1089 = vadd.f32 0.0, %v1088
      %v1090 = vpop.f32.mrf.mxu0
      %v1091 = vadd.f32 0.0, %v1090
      %1092 = vmatmul.bf16.gmra.mxu0 %v977
      %v1093 = vpop.f32.mrf.mxu0
      %v1094 = vadd.f32 0.0, %v1093
      %v1095 = vpop.f32.mrf.mxu0
      %v1096 = vadd.f32 0.0, %v1095
      %1097 = vmatmul.bf16.gmra.mxu0 %v979
      %v1098 = vpop.f32.mrf.mxu0
      %v1099 = vadd.f32 0.0, %v1098
      %v1100 = vpop.f32.mrf.mxu0
      %v1101 = vadd.f32 0.0, %v1100
      %1102 = vmatmul.bf16.gmra.mxu0 %v981
      %v1103 = vpop.f32.mrf.mxu0
      %v1104 = vadd.f32 0.0, %v1103
      %v1105 = vpop.f32.mrf.mxu0
      %v1106 = vadd.f32 0.0, %v1105
      %1107 = vmatmul.bf16.gmra.mxu0 %v983
      %v1108 = vpop.f32.mrf.mxu0
      %v1109 = vadd.f32 0.0, %v1108
      %v1110 = vpop.f32.mrf.mxu0
      %v1111 = vadd.f32 0.0, %v1110
      %1112 = vmatmul.bf16.gmra.mxu0 %v985
      %v1113 = vpop.f32.mrf.mxu0
      %v1114 = vadd.f32 0.0, %v1113
      %v1115 = vpop.f32.mrf.mxu0
      %v1116 = vadd.f32 0.0, %v1115
      %1117 = vmatmul.bf16.gmra.mxu0 %v987
      %v1118 = vpop.f32.mrf.mxu0
      %v1119 = vadd.f32 0.0, %v1118
      %v1120 = vpop.f32.mrf.mxu0
      %v1121 = vadd.f32 0.0, %v1120
      %1122 = vmatmul.bf16.gmra.mxu0 %v989
      %v1123 = vpop.f32.mrf.mxu0
      %v1124 = vadd.f32 0.0, %v1123
      %v1125 = vpop.f32.mrf.mxu0
      %v1126 = vadd.f32 0.0, %v1125
      %1127 = vmatmul.bf16.gmra.mxu0 %v991
      %v1128 = vpop.f32.mrf.mxu0
      %v1129 = vadd.f32 0.0, %v1128
      %v1130 = vpop.f32.mrf.mxu0
      %v1131 = vadd.f32 0.0, %v1130
      %1132 = vmatmul.bf16.gmra.mxu0 %v993
      %v1133 = vpop.f32.mrf.mxu0
      %v1134 = vadd.f32 0.0, %v1133
      %v1135 = vpop.f32.mrf.mxu0
      %v1136 = vadd.f32 0.0, %v1135
      %1137 = vmatmul.bf16.gmra.mxu0 %v995
      %v1138 = vpop.f32.mrf.mxu0
      %v1139 = vadd.f32 0.0, %v1138
      %v1140 = vpop.f32.mrf.mxu0
      %v1141 = vadd.f32 0.0, %v1140
      %1142 = vmatmul.bf16.gmra.mxu0 %v997
      %v1143 = vpop.f32.mrf.mxu0
      %v1144 = vadd.f32 0.0, %v1143
      %v1145 = vpop.f32.mrf.mxu0
      %v1146 = vadd.f32 0.0, %v1145
      %1147 = vmatmul.bf16.gmra.mxu0 %v999
      %v1148 = vpop.f32.mrf.mxu0
      %v1149 = vadd.f32 0.0, %v1148
      %v1150 = vpop.f32.mrf.mxu0
      %v1151 = vadd.f32 0.0, %v1150
      %1152 = vmatmul.bf16.gmra.mxu0 %v1001
      %v1153 = vpop.f32.mrf.mxu0
      %v1154 = vadd.f32 0.0, %v1153
      %v1155 = vpop.f32.mrf.mxu0
      %v1156 = vadd.f32 0.0, %v1155
      %1157 = vmatmul.bf16.gmra.mxu0 %v1003
      %v1158 = vpop.f32.mrf.mxu0
      %v1159 = vadd.f32 0.0, %v1158
      %v1160 = vpop.f32.mrf.mxu0
      %v1161 = vadd.f32 0.0, %v1160
      %1162 = vmatmul.bf16.gmra.mxu0 %v1005
      %v1163 = vpop.f32.mrf.mxu0
      %v1164 = vadd.f32 0.0, %v1163
      %v1165 = vpop.f32.mrf.mxu0
      %v1166 = vadd.f32 0.0, %v1165
      %1167 = vmatmul.bf16.gmra.mxu0 %v1007
      %v1168 = vpop.f32.mrf.mxu0
      %v1169 = vadd.f32 0.0, %v1168
      %v1170 = vpop.f32.mrf.mxu0
      %v1171 = vadd.f32 0.0, %v1170
      %1172 = vdwg.mxu0
      %v1173 = vadd.f32 %v860, %v1084
      %v1174 = vadd.f32 %v862, %v1086
      %v1175 = vadd.f32 %v865, %v1089
      %v1176 = vadd.f32 %v867, %v1091
      %v1177 = vadd.f32 %v870, %v1094
      %v1178 = vadd.f32 %v872, %v1096
      %v1179 = vadd.f32 %v875, %v1099
      %v1180 = vadd.f32 %v877, %v1101
      %v1181 = vadd.f32 %v880, %v1104
      %v1182 = vadd.f32 %v882, %v1106
      %v1183 = vadd.f32 %v885, %v1109
      %v1184 = vadd.f32 %v887, %v1111
      %v1185 = vadd.f32 %v890, %v1114
      %v1186 = vadd.f32 %v892, %v1116
      %v1187 = vadd.f32 %v895, %v1119
      %v1188 = vadd.f32 %v897, %v1121
      %v1189 = vadd.f32 %v900, %v1124
      %v1190 = vadd.f32 %v902, %v1126
      %v1191 = vadd.f32 %v905, %v1129
      %v1192 = vadd.f32 %v907, %v1131
      %v1193 = vadd.f32 %v910, %v1134
      %v1194 = vadd.f32 %v912, %v1136
      %v1195 = vadd.f32 %v915, %v1139
      %v1196 = vadd.f32 %v917, %v1141
      %v1197 = vadd.f32 %v920, %v1144
      %v1198 = vadd.f32 %v922, %v1146
      %v1199 = vadd.f32 %v925, %v1149
      %v1200 = vadd.f32 %v927, %v1151
      %v1201 = vadd.f32 %v930, %v1154
      %v1202 = vadd.f32 %v932, %v1156
      %v1203 = vadd.f32 %v935, %v1159
      %v1204 = vadd.f32 %v937, %v1161
      %v1205 = vadd.f32 %v940, %v1164
      %v1206 = vadd.f32 %v942, %v1166
      %v1207 = vadd.f32 %v945, %v1169
      %v1208 = vadd.f32 %v947, %v1171
      %v1209 = vld [vmem:[%s300 + $0x8] sm:$0xe]
      %v1210 = vld [vmem:[%s300 + $0xc] sm:$0xf]
      %v1211 = vld [vmem:[%s300 + $0x10] sm:$0xf]
      %v1212 = vld [vmem:[%s300 + $0x14] sm:$0xf]
      %v1213 = vld [vmem:[%s300 + $0x18] sm:$0xf]
      %v1214 = vld [vmem:[%s300 + $0x1c] sm:$0xf]
      %v1215 = vld [vmem:[%s300 + $0x20] sm:$0xf]
      %v1216 = vld [vmem:[%s300 + $0x24] sm:$0xf]
      %v1217 = vld [vmem:[%s300 + $0x28] sm:$0xf]
      %v1218 = vld [vmem:[%s300 + $0x2c] sm:$0xf]
      %v1219 = vld [vmem:[%s300 + $0x30] sm:$0xf]
      %v1220 = vld [vmem:[%s300 + $0x34] sm:$0xf]
      %v1221 = vld [vmem:[%s300 + $0x38] sm:$0xf]
      %v1222 = vld [vmem:[%s300 + $0x3c] sm:$0xf]
      %v1223 = vld [vmem:[%s300 + $0x40] sm:$0xf]
      %v1224 = vld [vmem:[%s300 + $0x44] sm:$0xf]
      %v1225 = vld [vmem:[%s300 + $0x48] sm:$0xf]
      %v1226 = vld [vmem:[%s300 + $0x4c] sm:$0xf]
      %v1227 = vld [vmem:[%s300 + $0x50] sm:$0xf]
      %v1228 = vld [vmem:[%s300 + $0x54] sm:$0xf]
      %v1229 = vld [vmem:[%s300 + $0x58] sm:$0xf]
      %v1230 = vld [vmem:[%s300 + $0x5c] sm:$0xf]
      %v1231 = vld [vmem:[%s300 + $0x60] sm:$0xf]
      %v1232 = vld [vmem:[%s300 + $0x64] sm:$0xf]
      %v1233 = vld [vmem:[%s300 + $0x68] sm:$0xf]
      %v1234 = vld [vmem:[%s300 + $0x6c] sm:$0xf]
      %v1235 = vld [vmem:[%s300 + $0x70] sm:$0xf]
      %v1236 = vld [vmem:[%s300 + $0x74] sm:$0xf]
      %v1237 = vld [vmem:[%s300 + $0x78] sm:$0xf]
      %v1238 = vld [vmem:[%s300 + $0x7c] sm:$0xf]
      %v1239 = vld [vmem:[%s300 + $0x80] sm:$0xf]
      %v1240 = vld [vmem:[%s300 + $0x84] sm:$0xf]
      %v1241 = vld [vmem:[%s300 + $0x88] sm:$0xf]
      %v1242 = vld [vmem:[%s300 + $0x8c] sm:$0xf]
      %v1243 = vld [vmem:[%s300 + $0x90] sm:$0xf]
      %v1244 = vld [vmem:[%s300 + $0x94] sm:$0xf]
      %v1245 = vld [vmem:[%s300 + $0x98] sm:$0x1]
      %s1246 = scalar_lea.vmem %s1, 192
      %v1247 = vld [vmem:[%s1246] sm:$0xf]
      %v1248 = vld [vmem:[%s1246 + $0x4] sm:$0xf]
      %v1249 = vld [vmem:[%s1246 + $0x8] sm:$0xf]
      %v1250 = vld [vmem:[%s1246 + $0xc] sm:$0xf]
      %v1251 = vld [vmem:[%s1246 + $0x10] sm:$0xf]
      %v1252 = vld [vmem:[%s1246 + $0x14] sm:$0xf]
      %v1253 = vld [vmem:[%s1246 + $0x18] sm:$0xf]
      %v1254 = vld [vmem:[%s1246 + $0x1c] sm:$0xf]
      %v1255 = vld [vmem:[%s1246 + $0x20] sm:$0xf]
      %v1256 = vld [vmem:[%s1246 + $0x24] sm:$0xf]
      %v1257 = vld [vmem:[%s1246 + $0x28] sm:$0xf]
      %v1258 = vld [vmem:[%s1246 + $0x2c] sm:$0xf]
      %v1259 = vld [vmem:[%s1246 + $0x30] sm:$0xf]
      %v1260 = vld [vmem:[%s1246 + $0x34] sm:$0xf]
      %v1261 = vld [vmem:[%s1246 + $0x38] sm:$0xf]
      %v1262 = vld [vmem:[%s1246 + $0x3c] sm:$0xf]
      %v1300 = vunpack.c.l.b16 %v1209
      %v1301 = vunpack.c.l.b16 %v1210
      %v1302 = vunpack.c.l.b16 %v1211
      %v1303 = vunpack.c.l.b16 %v1212
      %v1304 = vunpack.c.l.b16 %v1213
      %v1305 = vunpack.c.l.b16 %v1214
      %v1306 = vunpack.c.l.b16 %v1215
      %v1307 = vunpack.c.l.b16 %v1216
      %v1308 = vunpack.c.l.b16 %v1217
      %v1309 = vunpack.c.l.b16 %v1218
      %v1310 = vunpack.c.l.b16 %v1219
      %v1311 = vunpack.c.l.b16 %v1220
      %v1312 = vunpack.c.l.b16 %v1221
      %v1313 = vunpack.c.l.b16 %v1222
      %v1314 = vunpack.c.l.b16 %v1223
      %v1315 = vunpack.c.l.b16 %v1224
      %v1316 = vunpack.c.l.b16 %v1225
      %v1317 = vunpack.c.l.b16 %v1226
      %v1318 = vunpack.c.l.b16 %v1227
      %v1319 = vunpack.c.l.b16 %v1228
      %v1320 = vunpack.c.l.b16 %v1229
      %v1321 = vunpack.c.l.b16 %v1230
      %v1322 = vunpack.c.l.b16 %v1231
      %v1323 = vunpack.c.l.b16 %v1232
      %v1324 = vunpack.c.l.b16 %v1233
      %v1325 = vunpack.c.l.b16 %v1234
      %v1326 = vunpack.c.l.b16 %v1235
      %v1327 = vunpack.c.l.b16 %v1236
      %v1328 = vunpack.c.l.b16 %v1237
      %v1329 = vunpack.c.l.b16 %v1238
      %v1330 = vunpack.c.l.b16 %v1239
      %v1331 = vunpack.c.l.b16 %v1240
      %v1332 = vunpack.c.l.b16 %v1241
      %v1333 = vunpack.c.l.b16 %v1242
      %v1334 = vunpack.c.l.b16 %v1243
      %v1335 = vunpack.c.l.b16 %v1244
      %v1336 = vunpack.c.l.b16 %v1245
      %v1337 = vpack.c.b16 %v1301, %v1300
      %v1338 = vpack.c.b16 %v1303, %v1302
      %v1339 = vpack.c.b16 %v1305, %v1304
      %v1340 = vpack.c.b16 %v1307, %v1306
      %v1341 = vpack.c.b16 %v1309, %v1308
      %v1342 = vpack.c.b16 %v1311, %v1310
      %v1343 = vpack.c.b16 %v1313, %v1312
      %v1344 = vpack.c.b16 %v1315, %v1314
      %v1345 = vpack.c.b16 %v1317, %v1316
      %v1346 = vpack.c.b16 %v1319, %v1318
      %v1347 = vpack.c.b16 %v1321, %v1320
      %v1348 = vpack.c.b16 %v1323, %v1322
      %v1349 = vpack.c.b16 %v1325, %v1324
      %v1350 = vpack.c.b16 %v1327, %v1326
      %v1351 = vpack.c.b16 %v1329, %v1328
      %v1352 = vpack.c.b16 %v1331, %v1330
      %v1353 = vpack.c.b16 %v1333, %v1332
      %v1354 = vpack.c.b16 %v1335, %v1334
      %v1355 = vpack.c.b16 %v1336, %v1336
      %v1356 = vrot.slane %v1337, 1
      %v1357 = vrot.slane %v1338, 1
      %v1358 = vsel %vm970, %v1356, %v1357
      %v1359 = vrot.slane %v1339, 1
      %v1360 = vsel %vm970, %v1357, %v1359
      %v1361 = vrot.slane %v1340, 1
      %v1362 = vsel %vm970, %v1359, %v1361
      %v1363 = vrot.slane %v1341, 1
      %v1364 = vsel %vm970, %v1361, %v1363
      %v1365 = vrot.slane %v1342, 1
      %v1366 = vsel %vm970, %v1363, %v1365
      %v1367 = vrot.slane %v1343, 1
      %v1368 = vsel %vm970, %v1365, %v1367
      %v1369 = vrot.slane %v1344, 1
      %v1370 = vsel %vm970, %v1367, %v1369
      %v1371 = vrot.slane %v1345, 1
      %v1372 = vsel %vm970, %v1369, %v1371
      %v1373 = vrot.slane %v1346, 1
      %v1374 = vsel %vm970, %v1371, %v1373
      %v1375 = vrot.slane %v1347, 1
      %v1376 = vsel %vm970, %v1373, %v1375
      %v1377 = vrot.slane %v1348, 1
      %v1378 = vsel %vm970, %v1375, %v1377
      %v1379 = vrot.slane %v1349, 1
      %v1380 = vsel %vm970, %v1377, %v1379
      %v1381 = vrot.slane %v1350, 1
      %v1382 = vsel %vm970, %v1379, %v1381
      %v1383 = vrot.slane %v1351, 1
      %v1384 = vsel %vm970, %v1381, %v1383
      %v1385 = vrot.slane %v1352, 1
      %v1386 = vsel %vm970, %v1383, %v1385
      %v1387 = vrot.slane %v1353, 1
      %v1388 = vsel %vm970, %v1385, %v1387
      %v1389 = vrot.slane %v1354, 1
      %v1390 = vsel %vm970, %v1387, %v1389
      %v1391 = vrot.slane %v1355, 1
      %v1392 = vsel %vm970, %v1389, %v1391
      %v1427 = vunpack.c.l.b16 %v1247
      %v1428 = vunpack.c.l.b16 %v1248
      %v1429 = vunpack.c.l.b16 %v1249
      %v1430 = vunpack.c.l.b16 %v1250
      %v1431 = vunpack.c.l.b16 %v1251
      %v1432 = vunpack.c.l.b16 %v1252
      %v1433 = vunpack.c.l.b16 %v1253
      %v1434 = vunpack.c.l.b16 %v1254
      %v1435 = vunpack.c.l.b16 %v1255
      %v1436 = vunpack.c.l.b16 %v1256
      %v1437 = vunpack.c.l.b16 %v1257
      %v1438 = vunpack.c.l.b16 %v1258
      %v1439 = vunpack.c.l.b16 %v1259
      %v1440 = vunpack.c.l.b16 %v1260
      %v1441 = vunpack.c.l.b16 %v1261
      %v1442 = vunpack.c.l.b16 %v1262
      %v1443 = vpack.c.b16 %v1428, %v1427
      %v1444 = vpack.c.b16 %v1430, %v1429
      %v1445 = vpack.c.b16 %v1432, %v1431
      %v1446 = vpack.c.b16 %v1434, %v1433
      %v1447 = vpack.c.b16 %v1436, %v1435
      %v1448 = vpack.c.b16 %v1438, %v1437
      %v1449 = vpack.c.b16 %v1440, %v1439
      %v1450 = vpack.c.b16 %v1442, %v1441
      %1459 = vmatpush.bf16.msra.mxu0 %v1450
      %1460 = vmatpush.bf16.msra.mxu0 %v1449
      %1461 = vmatpush.bf16.msra.mxu0 %v1448
      %1462 = vmatpush.bf16.msra.mxu0 %v1447
      %1463 = vmatpush.bf16.msra.mxu0 %v1446
      %1464 = vmatpush.bf16.msra.mxu0 %v1445
      %1465 = vmatpush.bf16.msra.mxu0 %v1444
      %1466 = vmatpush.bf16.msra.mxu0 %v1443
      %1467 = vmatmul.bf16.gmra.mxu0 %v1358
      %v1468 = vpop.f32.mrf.mxu0
      %v1469 = vadd.f32 0.0, %v1468
      %v1470 = vpop.f32.mrf.mxu0
      %v1471 = vadd.f32 0.0, %v1470
      %1472 = vmatmul.bf16.gmra.mxu0 %v1360
      %v1473 = vpop.f32.mrf.mxu0
      %v1474 = vadd.f32 0.0, %v1473
      %v1475 = vpop.f32.mrf.mxu0
      %v1476 = vadd.f32 0.0, %v1475
      %1477 = vmatmul.bf16.gmra.mxu0 %v1362
      %v1478 = vpop.f32.mrf.mxu0
      %v1479 = vadd.f32 0.0, %v1478
      %v1480 = vpop.f32.mrf.mxu0
      %v1481 = vadd.f32 0.0, %v1480
      %1482 = vmatmul.bf16.gmra.mxu0 %v1364
      %v1483 = vpop.f32.mrf.mxu0
      %v1484 = vadd.f32 0.0, %v1483
      %v1485 = vpop.f32.mrf.mxu0
      %v1486 = vadd.f32 0.0, %v1485
      %1487 = vmatmul.bf16.gmra.mxu0 %v1366
      %v1488 = vpop.f32.mrf.mxu0
      %v1489 = vadd.f32 0.0, %v1488
      %v1490 = vpop.f32.mrf.mxu0
      %v1491 = vadd.f32 0.0, %v1490
      %1492 = vmatmul.bf16.gmra.mxu0 %v1368
      %v1493 = vpop.f32.mrf.mxu0
      %v1494 = vadd.f32 0.0, %v1493
      %v1495 = vpop.f32.mrf.mxu0
      %v1496 = vadd.f32 0.0, %v1495
      %1497 = vmatmul.bf16.gmra.mxu0 %v1370
      %v1498 = vpop.f32.mrf.mxu0
      %v1499 = vadd.f32 0.0, %v1498
      %v1500 = vpop.f32.mrf.mxu0
      %v1501 = vadd.f32 0.0, %v1500
      %1502 = vmatmul.bf16.gmra.mxu0 %v1372
      %v1503 = vpop.f32.mrf.mxu0
      %v1504 = vadd.f32 0.0, %v1503
      %v1505 = vpop.f32.mrf.mxu0
      %v1506 = vadd.f32 0.0, %v1505
      %1507 = vmatmul.bf16.gmra.mxu0 %v1374
      %v1508 = vpop.f32.mrf.mxu0
      %v1509 = vadd.f32 0.0, %v1508
      %v1510 = vpop.f32.mrf.mxu0
      %v1511 = vadd.f32 0.0, %v1510
      %1512 = vmatmul.bf16.gmra.mxu0 %v1376
      %v1513 = vpop.f32.mrf.mxu0
      %v1514 = vadd.f32 0.0, %v1513
      %v1515 = vpop.f32.mrf.mxu0
      %v1516 = vadd.f32 0.0, %v1515
      %1517 = vmatmul.bf16.gmra.mxu0 %v1378
      %v1518 = vpop.f32.mrf.mxu0
      %v1519 = vadd.f32 0.0, %v1518
      %v1520 = vpop.f32.mrf.mxu0
      %v1521 = vadd.f32 0.0, %v1520
      %1522 = vmatmul.bf16.gmra.mxu0 %v1380
      %v1523 = vpop.f32.mrf.mxu0
      %v1524 = vadd.f32 0.0, %v1523
      %v1525 = vpop.f32.mrf.mxu0
      %v1526 = vadd.f32 0.0, %v1525
      %1527 = vmatmul.bf16.gmra.mxu0 %v1382
      %v1528 = vpop.f32.mrf.mxu0
      %v1529 = vadd.f32 0.0, %v1528
      %v1530 = vpop.f32.mrf.mxu0
      %v1531 = vadd.f32 0.0, %v1530
      %1532 = vmatmul.bf16.gmra.mxu0 %v1384
      %v1533 = vpop.f32.mrf.mxu0
      %v1534 = vadd.f32 0.0, %v1533
      %v1535 = vpop.f32.mrf.mxu0
      %v1536 = vadd.f32 0.0, %v1535
      %1537 = vmatmul.bf16.gmra.mxu0 %v1386
      %v1538 = vpop.f32.mrf.mxu0
      %v1539 = vadd.f32 0.0, %v1538
      %v1540 = vpop.f32.mrf.mxu0
      %v1541 = vadd.f32 0.0, %v1540
      %1542 = vmatmul.bf16.gmra.mxu0 %v1388
      %v1543 = vpop.f32.mrf.mxu0
      %v1544 = vadd.f32 0.0, %v1543
      %v1545 = vpop.f32.mrf.mxu0
      %v1546 = vadd.f32 0.0, %v1545
      %1547 = vmatmul.bf16.gmra.mxu0 %v1390
      %v1548 = vpop.f32.mrf.mxu0
      %v1549 = vadd.f32 0.0, %v1548
      %v1550 = vpop.f32.mrf.mxu0
      %v1551 = vadd.f32 0.0, %v1550
      %1552 = vmatmul.bf16.gmra.mxu0 %v1392
      %v1553 = vpop.f32.mrf.mxu0
      %v1554 = vadd.f32 0.0, %v1553
      %v1555 = vpop.f32.mrf.mxu0
      %v1556 = vadd.f32 0.0, %v1555
      %1557 = vdwg.mxu0
      %v1558 = vadd.f32 %v1173, %v1469
      %v1559 = vadd.f32 %v1174, %v1471
      %v1560 = vadd.f32 %v1175, %v1474
      %v1561 = vadd.f32 %v1176, %v1476
      %v1562 = vadd.f32 %v1177, %v1479
      %v1563 = vadd.f32 %v1178, %v1481
      %v1564 = vadd.f32 %v1179, %v1484
      %v1565 = vadd.f32 %v1180, %v1486
      %v1566 = vadd.f32 %v1181, %v1489
      %v1567 = vadd.f32 %v1182, %v1491
      %v1568 = vadd.f32 %v1183, %v1494
      %v1569 = vadd.f32 %v1184, %v1496
      %v1570 = vadd.f32 %v1185, %v1499
      %v1571 = vadd.f32 %v1186, %v1501
      %v1572 = vadd.f32 %v1187, %v1504
      %v1573 = vadd.f32 %v1188, %v1506
      %v1574 = vadd.f32 %v1189, %v1509
      %v1575 = vadd.f32 %v1190, %v1511
      %v1576 = vadd.f32 %v1191, %v1514
      %v1577 = vadd.f32 %v1192, %v1516
      %v1578 = vadd.f32 %v1193, %v1519
      %v1579 = vadd.f32 %v1194, %v1521
      %v1580 = vadd.f32 %v1195, %v1524
      %v1581 = vadd.f32 %v1196, %v1526
      %v1582 = vadd.f32 %v1197, %v1529
      %v1583 = vadd.f32 %v1198, %v1531
      %v1584 = vadd.f32 %v1199, %v1534
      %v1585 = vadd.f32 %v1200, %v1536
      %v1586 = vadd.f32 %v1201, %v1539
      %v1587 = vadd.f32 %v1202, %v1541
      %v1588 = vadd.f32 %v1203, %v1544
      %v1589 = vadd.f32 %v1204, %v1546
      %v1590 = vadd.f32 %v1205, %v1549
      %v1591 = vadd.f32 %v1206, %v1551
      %v1592 = vadd.f32 %v1207, %v1554
      %v1593 = vadd.f32 %v1208, %v1556
      %v1594 = vld [vmem:[%s300 + $0x98] sm:$0x3]
      %s1595 = scalar_lea.vmem %s1, 256
      %v1596 = vld [vmem:[%s1595] sm:$0xf]
      %v1597 = vld [vmem:[%s1595 + $0x4] sm:$0xf]
      %v1598 = vld [vmem:[%s1595 + $0x8] sm:$0xf]
      %v1599 = vld [vmem:[%s1595 + $0xc] sm:$0xf]
      %v1600 = vld [vmem:[%s1595 + $0x10] sm:$0xf]
      %v1601 = vld [vmem:[%s1595 + $0x14] sm:$0xf]
      %v1602 = vld [vmem:[%s1595 + $0x18] sm:$0xf]
      %v1603 = vld [vmem:[%s1595 + $0x1c] sm:$0xf]
      %v1604 = vld [vmem:[%s1595 + $0x20] sm:$0xf]
      %v1605 = vld [vmem:[%s1595 + $0x24] sm:$0xf]
      %v1606 = vld [vmem:[%s1595 + $0x28] sm:$0xf]
      %v1607 = vld [vmem:[%s1595 + $0x2c] sm:$0xf]
      %v1608 = vld [vmem:[%s1595 + $0x30] sm:$0xf]
      %v1609 = vld [vmem:[%s1595 + $0x34] sm:$0xf]
      %v1610 = vld [vmem:[%s1595 + $0x38] sm:$0xf]
      %v1611 = vld [vmem:[%s1595 + $0x3c] sm:$0xf]
      %v1613 = vunpack.c.l.b16 %v1594
      %v1614 = vpack.c.b16 %v1613, %v1613
      %vm1615 = vsmask.f32 6400
      %v1617 = vshrl.u32 %v1337, 16
      %v1619 = vrot.slane %v1617, 1
      %v1620 = vshll.u32 %v1337, 16
      %v1622 = vrot.slane %v1620, 2
      %v1623 = vor.u32 %v1619, %v1622
      %v1625 = vshrl.u32 %v1338, 16
      %v1627 = vrot.slane %v1625, 1
      %v1628 = vshll.u32 %v1338, 16
      %v1630 = vrot.slane %v1628, 2
      %v1631 = vor.u32 %v1627, %v1630
      %v1632 = vsel %vm1615, %v1623, %v1631
      %v1634 = vshrl.u32 %v1339, 16
      %v1636 = vrot.slane %v1634, 1
      %v1637 = vshll.u32 %v1339, 16
      %v1639 = vrot.slane %v1637, 2
      %v1640 = vor.u32 %v1636, %v1639
      %v1641 = vsel %vm1615, %v1631, %v1640
      %v1643 = vshrl.u32 %v1340, 16
      %v1645 = vrot.slane %v1643, 1
      %v1646 = vshll.u32 %v1340, 16
      %v1648 = vrot.slane %v1646, 2
      %v1649 = vor.u32 %v1645, %v1648
      %v1650 = vsel %vm1615, %v1640, %v1649
      %v1652 = vshrl.u32 %v1341, 16
      %v1654 = vrot.slane %v1652, 1
      %v1655 = vshll.u32 %v1341, 16
      %v1657 = vrot.slane %v1655, 2
      %v1658 = vor.u32 %v1654, %v1657
      %v1659 = vsel %vm1615, %v1649, %v1658
      %v1661 = vshrl.u32 %v1342, 16
      %v1663 = vrot.slane %v1661, 1
      %v1664 = vshll.u32 %v1342, 16
      %v1666 = vrot.slane %v1664, 2
      %v1667 = vor.u32 %v1663, %v1666
      %v1668 = vsel %vm1615, %v1658, %v1667
      %v1670 = vshrl.u32 %v1343, 16
      %v1672 = vrot.slane %v1670, 1
      %v1673 = vshll.u32 %v1343, 16
      %v1675 = vrot.slane %v1673, 2
      %v1676 = vor.u32 %v1672, %v1675
      %v1677 = vsel %vm1615, %v1667, %v1676
      %v1679 = vshrl.u32 %v1344, 16
      %v1681 = vrot.slane %v1679, 1
      %v1682 = vshll.u32 %v1344, 16
      %v1684 = vrot.slane %v1682, 2
      %v1685 = vor.u32 %v1681, %v1684
      %v1686 = vsel %vm1615, %v1676, %v1685
      %v1688 = vshrl.u32 %v1345, 16
      %v1690 = vrot.slane %v1688, 1
      %v1691 = vshll.u32 %v1345, 16
      %v1693 = vrot.slane %v1691, 2
      %v1694 = vor.u32 %v1690, %v1693
      %v1695 = vsel %vm1615, %v1685, %v1694
      %v1697 = vshrl.u32 %v1346, 16
      %v1699 = vrot.slane %v1697, 1
      %v1700 = vshll.u32 %v1346, 16
      %v1702 = vrot.slane %v1700, 2
      %v1703 = vor.u32 %v1699, %v1702
      %v1704 = vsel %vm1615, %v1694, %v1703
      %v1706 = vshrl.u32 %v1347, 16
      %v1708 = vrot.slane %v1706, 1
      %v1709 = vshll.u32 %v1347, 16
      %v1711 = vrot.slane %v1709, 2
      %v1712 = vor.u32 %v1708, %v1711
      %v1713 = vsel %vm1615, %v1703, %v1712
      %v1715 = vshrl.u32 %v1348, 16
      %v1717 = vrot.slane %v1715, 1
      %v1718 = vshll.u32 %v1348, 16
      %v1720 = vrot.slane %v1718, 2
      %v1721 = vor.u32 %v1717, %v1720
      %v1722 = vsel %vm1615, %v1712, %v1721
      %v1724 = vshrl.u32 %v1349, 16
      %v1726 = vrot.slane %v1724, 1
      %v1727 = vshll.u32 %v1349, 16
      %v1729 = vrot.slane %v1727, 2
      %v1730 = vor.u32 %v1726, %v1729
      %v1731 = vsel %vm1615, %v1721, %v1730
      %v1733 = vshrl.u32 %v1350, 16
      %v1735 = vrot.slane %v1733, 1
      %v1736 = vshll.u32 %v1350, 16
      %v1738 = vrot.slane %v1736, 2
      %v1739 = vor.u32 %v1735, %v1738
      %v1740 = vsel %vm1615, %v1730, %v1739
      %v1742 = vshrl.u32 %v1351, 16
      %v1744 = vrot.slane %v1742, 1
      %v1745 = vshll.u32 %v1351, 16
      %v1747 = vrot.slane %v1745, 2
      %v1748 = vor.u32 %v1744, %v1747
      %v1749 = vsel %vm1615, %v1739, %v1748
      %v1751 = vshrl.u32 %v1352, 16
      %v1753 = vrot.slane %v1751, 1
      %v1754 = vshll.u32 %v1352, 16
      %v1756 = vrot.slane %v1754, 2
      %v1757 = vor.u32 %v1753, %v1756
      %v1758 = vsel %vm1615, %v1748, %v1757
      %v1760 = vshrl.u32 %v1353, 16
      %v1762 = vrot.slane %v1760, 1
      %v1763 = vshll.u32 %v1353, 16
      %v1765 = vrot.slane %v1763, 2
      %v1766 = vor.u32 %v1762, %v1765
      %v1767 = vsel %vm1615, %v1757, %v1766
      %v1769 = vshrl.u32 %v1354, 16
      %v1771 = vrot.slane %v1769, 1
      %v1772 = vshll.u32 %v1354, 16
      %v1774 = vrot.slane %v1772, 2
      %v1775 = vor.u32 %v1771, %v1774
      %v1776 = vsel %vm1615, %v1766, %v1775
      %v1778 = vshrl.u32 %v1614, 16
      %v1780 = vrot.slane %v1778, 1
      %v1781 = vshll.u32 %v1614, 16
      %v1783 = vrot.slane %v1781, 2
      %v1784 = vor.u32 %v1780, %v1783
      %v1785 = vsel %vm1615, %v1775, %v1784
      %v1820 = vunpack.c.l.b16 %v1596
      %v1821 = vunpack.c.l.b16 %v1597
      %v1822 = vunpack.c.l.b16 %v1598
      %v1823 = vunpack.c.l.b16 %v1599
      %v1824 = vunpack.c.l.b16 %v1600
      %v1825 = vunpack.c.l.b16 %v1601
      %v1826 = vunpack.c.l.b16 %v1602
      %v1827 = vunpack.c.l.b16 %v1603
      %v1828 = vunpack.c.l.b16 %v1604
      %v1829 = vunpack.c.l.b16 %v1605
      %v1830 = vunpack.c.l.b16 %v1606
      %v1831 = vunpack.c.l.b16 %v1607
      %v1832 = vunpack.c.l.b16 %v1608
      %v1833 = vunpack.c.l.b16 %v1609
      %v1834 = vunpack.c.l.b16 %v1610
      %v1835 = vunpack.c.l.b16 %v1611
      %v1836 = vpack.c.b16 %v1821, %v1820
      %v1837 = vpack.c.b16 %v1823, %v1822
      %v1838 = vpack.c.b16 %v1825, %v1824
      %v1839 = vpack.c.b16 %v1827, %v1826
      %v1840 = vpack.c.b16 %v1829, %v1828
      %v1841 = vpack.c.b16 %v1831, %v1830
      %v1842 = vpack.c.b16 %v1833, %v1832
      %v1843 = vpack.c.b16 %v1835, %v1834
      %1852 = vmatpush.bf16.msra.mxu0 %v1843
      %1853 = vmatpush.bf16.msra.mxu0 %v1842
      %1854 = vmatpush.bf16.msra.mxu0 %v1841
      %1855 = vmatpush.bf16.msra.mxu0 %v1840
      %1856 = vmatpush.bf16.msra.mxu0 %v1839
      %1857 = vmatpush.bf16.msra.mxu0 %v1838
      %1858 = vmatpush.bf16.msra.mxu0 %v1837
      %1859 = vmatpush.bf16.msra.mxu0 %v1836
      %1860 = vmatmul.bf16.gmra.mxu0 %v1632
      %v1861 = vpop.f32.mrf.mxu0
      %v1862 = vadd.f32 0.0, %v1861
      %v1863 = vpop.f32.mrf.mxu0
      %v1864 = vadd.f32 0.0, %v1863
      %1865 = vmatmul.bf16.gmra.mxu0 %v1641
      %v1866 = vpop.f32.mrf.mxu0
      %v1867 = vadd.f32 0.0, %v1866
      %v1868 = vpop.f32.mrf.mxu0
      %v1869 = vadd.f32 0.0, %v1868
      %1870 = vmatmul.bf16.gmra.mxu0 %v1650
      %v1871 = vpop.f32.mrf.mxu0
      %v1872 = vadd.f32 0.0, %v1871
      %v1873 = vpop.f32.mrf.mxu0
      %v1874 = vadd.f32 0.0, %v1873
      %1875 = vmatmul.bf16.gmra.mxu0 %v1659
      %v1876 = vpop.f32.mrf.mxu0
      %v1877 = vadd.f32 0.0, %v1876
      %v1878 = vpop.f32.mrf.mxu0
      %v1879 = vadd.f32 0.0, %v1878
      %1880 = vmatmul.bf16.gmra.mxu0 %v1668
      %v1881 = vpop.f32.mrf.mxu0
      %v1882 = vadd.f32 0.0, %v1881
      %v1883 = vpop.f32.mrf.mxu0
      %v1884 = vadd.f32 0.0, %v1883
      %1885 = vmatmul.bf16.gmra.mxu0 %v1677
      %v1886 = vpop.f32.mrf.mxu0
      %v1887 = vadd.f32 0.0, %v1886
      %v1888 = vpop.f32.mrf.mxu0
      %v1889 = vadd.f32 0.0, %v1888
      %1890 = vmatmul.bf16.gmra.mxu0 %v1686
      %v1891 = vpop.f32.mrf.mxu0
      %v1892 = vadd.f32 0.0, %v1891
      %v1893 = vpop.f32.mrf.mxu0
      %v1894 = vadd.f32 0.0, %v1893
      %1895 = vmatmul.bf16.gmra.mxu0 %v1695
      %v1896 = vpop.f32.mrf.mxu0
      %v1897 = vadd.f32 0.0, %v1896
      %v1898 = vpop.f32.mrf.mxu0
      %v1899 = vadd.f32 0.0, %v1898
      %1900 = vmatmul.bf16.gmra.mxu0 %v1704
      %v1901 = vpop.f32.mrf.mxu0
      %v1902 = vadd.f32 0.0, %v1901
      %v1903 = vpop.f32.mrf.mxu0
      %v1904 = vadd.f32 0.0, %v1903
      %1905 = vmatmul.bf16.gmra.mxu0 %v1713
      %v1906 = vpop.f32.mrf.mxu0
      %v1907 = vadd.f32 0.0, %v1906
      %v1908 = vpop.f32.mrf.mxu0
      %v1909 = vadd.f32 0.0, %v1908
      %1910 = vmatmul.bf16.gmra.mxu0 %v1722
      %v1911 = vpop.f32.mrf.mxu0
      %v1912 = vadd.f32 0.0, %v1911
      %v1913 = vpop.f32.mrf.mxu0
      %v1914 = vadd.f32 0.0, %v1913
      %1915 = vmatmul.bf16.gmra.mxu0 %v1731
      %v1916 = vpop.f32.mrf.mxu0
      %v1917 = vadd.f32 0.0, %v1916
      %v1918 = vpop.f32.mrf.mxu0
      %v1919 = vadd.f32 0.0, %v1918
      %1920 = vmatmul.bf16.gmra.mxu0 %v1740
      %v1921 = vpop.f32.mrf.mxu0
      %v1922 = vadd.f32 0.0, %v1921
      %v1923 = vpop.f32.mrf.mxu0
      %v1924 = vadd.f32 0.0, %v1923
      %1925 = vmatmul.bf16.gmra.mxu0 %v1749
      %v1926 = vpop.f32.mrf.mxu0
      %v1927 = vadd.f32 0.0, %v1926
      %v1928 = vpop.f32.mrf.mxu0
      %v1929 = vadd.f32 0.0, %v1928
      %1930 = vmatmul.bf16.gmra.mxu0 %v1758
      %v1931 = vpop.f32.mrf.mxu0
      %v1932 = vadd.f32 0.0, %v1931
      %v1933 = vpop.f32.mrf.mxu0
      %v1934 = vadd.f32 0.0, %v1933
      %1935 = vmatmul.bf16.gmra.mxu0 %v1767
      %v1936 = vpop.f32.mrf.mxu0
      %v1937 = vadd.f32 0.0, %v1936
      %v1938 = vpop.f32.mrf.mxu0
      %v1939 = vadd.f32 0.0, %v1938
      %1940 = vmatmul.bf16.gmra.mxu0 %v1776
      %v1941 = vpop.f32.mrf.mxu0
      %v1942 = vadd.f32 0.0, %v1941
      %v1943 = vpop.f32.mrf.mxu0
      %v1944 = vadd.f32 0.0, %v1943
      %1945 = vmatmul.bf16.gmra.mxu0 %v1785
      %v1946 = vpop.f32.mrf.mxu0
      %v1947 = vadd.f32 0.0, %v1946
      %v1948 = vpop.f32.mrf.mxu0
      %v1949 = vadd.f32 0.0, %v1948
      %1950 = vdwg.mxu0
      %v1951 = vadd.f32 %v1558, %v1862
      %v1952 = vadd.f32 %v1559, %v1864
      %v1953 = vadd.f32 %v1560, %v1867
      %v1954 = vadd.f32 %v1561, %v1869
      %v1955 = vadd.f32 %v1562, %v1872
      %v1956 = vadd.f32 %v1563, %v1874
      %v1957 = vadd.f32 %v1564, %v1877
      %v1958 = vadd.f32 %v1565, %v1879
      %v1959 = vadd.f32 %v1566, %v1882
      %v1960 = vadd.f32 %v1567, %v1884
      %v1961 = vadd.f32 %v1568, %v1887
      %v1962 = vadd.f32 %v1569, %v1889
      %v1963 = vadd.f32 %v1570, %v1892
      %v1964 = vadd.f32 %v1571, %v1894
      %v1965 = vadd.f32 %v1572, %v1897
      %v1966 = vadd.f32 %v1573, %v1899
      %v1967 = vadd.f32 %v1574, %v1902
      %v1968 = vadd.f32 %v1575, %v1904
      %v1969 = vadd.f32 %v1576, %v1907
      %v1970 = vadd.f32 %v1577, %v1909
      %v1971 = vadd.f32 %v1578, %v1912
      %v1972 = vadd.f32 %v1579, %v1914
      %v1973 = vadd.f32 %v1580, %v1917
      %v1974 = vadd.f32 %v1581, %v1919
      %v1975 = vadd.f32 %v1582, %v1922
      %v1976 = vadd.f32 %v1583, %v1924
      %v1977 = vadd.f32 %v1584, %v1927
      %v1978 = vadd.f32 %v1585, %v1929
      %v1979 = vadd.f32 %v1586, %v1932
      %v1980 = vadd.f32 %v1587, %v1934
      %v1981 = vadd.f32 %v1588, %v1937
      %v1982 = vadd.f32 %v1589, %v1939
      %v1983 = vadd.f32 %v1590, %v1942
      %v1984 = vadd.f32 %v1591, %v1944
      %v1985 = vadd.f32 %v1592, %v1947
      %v1986 = vadd.f32 %v1593, %v1949
      %v1987 = vld [vmem:[%s300 + $0x8] sm:$0xc]
      %s1988 = scalar_lea.vmem %s1, 320
      %v1989 = vld [vmem:[%s1988] sm:$0xf]
      %v1990 = vld [vmem:[%s1988 + $0x4] sm:$0xf]
      %v1991 = vld [vmem:[%s1988 + $0x8] sm:$0xf]
      %v1992 = vld [vmem:[%s1988 + $0xc] sm:$0xf]
      %v1993 = vld [vmem:[%s1988 + $0x10] sm:$0xf]
      %v1994 = vld [vmem:[%s1988 + $0x14] sm:$0xf]
      %v1995 = vld [vmem:[%s1988 + $0x18] sm:$0xf]
      %v1996 = vld [vmem:[%s1988 + $0x1c] sm:$0xf]
      %v1997 = vld [vmem:[%s1988 + $0x20] sm:$0xf]
      %v1998 = vld [vmem:[%s1988 + $0x24] sm:$0xf]
      %v1999 = vld [vmem:[%s1988 + $0x28] sm:$0xf]
      %v2000 = vld [vmem:[%s1988 + $0x2c] sm:$0xf]
      %v2001 = vld [vmem:[%s1988 + $0x30] sm:$0xf]
      %v2002 = vld [vmem:[%s1988 + $0x34] sm:$0xf]
      %v2003 = vld [vmem:[%s1988 + $0x38] sm:$0xf]
      %v2004 = vld [vmem:[%s1988 + $0x3c] sm:$0xf]
      %v2006 = vunpack.c.l.b16 %v1987
      %v2007 = vpack.c.b16 %v1301, %v2006
      %vm2008 = vcmask 1045504
      %v2009 = vrot.slane %v2007, 2
      %v2010 = vrot.slane %v1338, 2
      %v2011 = vsel %vm2008, %v2009, %v2010
      %v2012 = vrot.slane %v1339, 2
      %v2013 = vsel %vm2008, %v2010, %v2012
      %v2014 = vrot.slane %v1340, 2
      %v2015 = vsel %vm2008, %v2012, %v2014
      %v2016 = vrot.slane %v1341, 2
      %v2017 = vsel %vm2008, %v2014, %v2016
      %v2018 = vrot.slane %v1342, 2
      %v2019 = vsel %vm2008, %v2016, %v2018
      %v2020 = vrot.slane %v1343, 2
      %v2021 = vsel %vm2008, %v2018, %v2020
      %v2022 = vrot.slane %v1344, 2
      %v2023 = vsel %vm2008, %v2020, %v2022
      %v2024 = vrot.slane %v1345, 2
      %v2025 = vsel %vm2008, %v2022, %v2024
      %v2026 = vrot.slane %v1346, 2
      %v2027 = vsel %vm2008, %v2024, %v2026
      %v2028 = vrot.slane %v1347, 2
      %v2029 = vsel %vm2008, %v2026, %v2028
      %v2030 = vrot.slane %v1348, 2
      %v2031 = vsel %vm2008, %v2028, %v2030
      %v2032 = vrot.slane %v1349, 2
      %v2033 = vsel %vm2008, %v2030, %v2032
      %v2034 = vrot.slane %v1350, 2
      %v2035 = vsel %vm2008, %v2032, %v2034
      %v2036 = vrot.slane %v1351, 2
      %v2037 = vsel %vm2008, %v2034, %v2036
      %v2038 = vrot.slane %v1352, 2
      %v2039 = vsel %vm2008, %v2036, %v2038
      %v2040 = vrot.slane %v1353, 2
      %v2041 = vsel %vm2008, %v2038, %v2040
      %v2042 = vrot.slane %v1354, 2
      %v2043 = vsel %vm2008, %v2040, %v2042
      %v2044 = vrot.slane %v1614, 2
      %v2045 = vsel %vm2008, %v2042, %v2044
      %v2080 = vunpack.c.l.b16 %v1989
      %v2081 = vunpack.c.l.b16 %v1990
      %v2082 = vunpack.c.l.b16 %v1991
      %v2083 = vunpack.c.l.b16 %v1992
      %v2084 = vunpack.c.l.b16 %v1993
      %v2085 = vunpack.c.l.b16 %v1994
      %v2086 = vunpack.c.l.b16 %v1995
      %v2087 = vunpack.c.l.b16 %v1996
      %v2088 = vunpack.c.l.b16 %v1997
      %v2089 = vunpack.c.l.b16 %v1998
      %v2090 = vunpack.c.l.b16 %v1999
      %v2091 = vunpack.c.l.b16 %v2000
      %v2092 = vunpack.c.l.b16 %v2001
      %v2093 = vunpack.c.l.b16 %v2002
      %v2094 = vunpack.c.l.b16 %v2003
      %v2095 = vunpack.c.l.b16 %v2004
      %v2096 = vpack.c.b16 %v2081, %v2080
      %v2097 = vpack.c.b16 %v2083, %v2082
      %v2098 = vpack.c.b16 %v2085, %v2084
      %v2099 = vpack.c.b16 %v2087, %v2086
      %v2100 = vpack.c.b16 %v2089, %v2088
      %v2101 = vpack.c.b16 %v2091, %v2090
      %v2102 = vpack.c.b16 %v2093, %v2092
      %v2103 = vpack.c.b16 %v2095, %v2094
      %2112 = vmatpush.bf16.msra.mxu0 %v2103
      %2113 = vmatpush.bf16.msra.mxu0 %v2102
      %2114 = vmatpush.bf16.msra.mxu0 %v2101
      %2115 = vmatpush.bf16.msra.mxu0 %v2100
      %2116 = vmatpush.bf16.msra.mxu0 %v2099
      %2117 = vmatpush.bf16.msra.mxu0 %v2098
      %2118 = vmatpush.bf16.msra.mxu0 %v2097
      %2119 = vmatpush.bf16.msra.mxu0 %v2096
      %2120 = vmatmul.bf16.gmra.mxu0 %v2011
      %v2121 = vpop.f32.mrf.mxu0
      %v2122 = vadd.f32 0.0, %v2121
      %v2123 = vpop.f32.mrf.mxu0
      %v2124 = vadd.f32 0.0, %v2123
      %2125 = vmatmul.bf16.gmra.mxu0 %v2013
      %v2126 = vpop.f32.mrf.mxu0
      %v2127 = vadd.f32 0.0, %v2126
      %v2128 = vpop.f32.mrf.mxu0
      %v2129 = vadd.f32 0.0, %v2128
      %2130 = vmatmul.bf16.gmra.mxu0 %v2015
      %v2131 = vpop.f32.mrf.mxu0
      %v2132 = vadd.f32 0.0, %v2131
      %v2133 = vpop.f32.mrf.mxu0
      %v2134 = vadd.f32 0.0, %v2133
      %2135 = vmatmul.bf16.gmra.mxu0 %v2017
      %v2136 = vpop.f32.mrf.mxu0
      %v2137 = vadd.f32 0.0, %v2136
      %v2138 = vpop.f32.mrf.mxu0
      %v2139 = vadd.f32 0.0, %v2138
      %2140 = vmatmul.bf16.gmra.mxu0 %v2019
      %v2141 = vpop.f32.mrf.mxu0
      %v2142 = vadd.f32 0.0, %v2141
      %v2143 = vpop.f32.mrf.mxu0
      %v2144 = vadd.f32 0.0, %v2143
      %2145 = vmatmul.bf16.gmra.mxu0 %v2021
      %v2146 = vpop.f32.mrf.mxu0
      %v2147 = vadd.f32 0.0, %v2146
      %v2148 = vpop.f32.mrf.mxu0
      %v2149 = vadd.f32 0.0, %v2148
      %2150 = vmatmul.bf16.gmra.mxu0 %v2023
      %v2151 = vpop.f32.mrf.mxu0
      %v2152 = vadd.f32 0.0, %v2151
      %v2153 = vpop.f32.mrf.mxu0
      %v2154 = vadd.f32 0.0, %v2153
      %2155 = vmatmul.bf16.gmra.mxu0 %v2025
      %v2156 = vpop.f32.mrf.mxu0
      %v2157 = vadd.f32 0.0, %v2156
      %v2158 = vpop.f32.mrf.mxu0
      %v2159 = vadd.f32 0.0, %v2158
      %2160 = vmatmul.bf16.gmra.mxu0 %v2027
      %v2161 = vpop.f32.mrf.mxu0
      %v2162 = vadd.f32 0.0, %v2161
      %v2163 = vpop.f32.mrf.mxu0
      %v2164 = vadd.f32 0.0, %v2163
      %2165 = vmatmul.bf16.gmra.mxu0 %v2029
      %v2166 = vpop.f32.mrf.mxu0
      %v2167 = vadd.f32 0.0, %v2166
      %v2168 = vpop.f32.mrf.mxu0
      %v2169 = vadd.f32 0.0, %v2168
      %2170 = vmatmul.bf16.gmra.mxu0 %v2031
      %v2171 = vpop.f32.mrf.mxu0
      %v2172 = vadd.f32 0.0, %v2171
      %v2173 = vpop.f32.mrf.mxu0
      %v2174 = vadd.f32 0.0, %v2173
      %2175 = vmatmul.bf16.gmra.mxu0 %v2033
      %v2176 = vpop.f32.mrf.mxu0
      %v2177 = vadd.f32 0.0, %v2176
      %v2178 = vpop.f32.mrf.mxu0
      %v2179 = vadd.f32 0.0, %v2178
      %2180 = vmatmul.bf16.gmra.mxu0 %v2035
      %v2181 = vpop.f32.mrf.mxu0
      %v2182 = vadd.f32 0.0, %v2181
      %v2183 = vpop.f32.mrf.mxu0
      %v2184 = vadd.f32 0.0, %v2183
      %2185 = vmatmul.bf16.gmra.mxu0 %v2037
      %v2186 = vpop.f32.mrf.mxu0
      %v2187 = vadd.f32 0.0, %v2186
      %v2188 = vpop.f32.mrf.mxu0
      %v2189 = vadd.f32 0.0, %v2188
      %2190 = vmatmul.bf16.gmra.mxu0 %v2039
      %v2191 = vpop.f32.mrf.mxu0
      %v2192 = vadd.f32 0.0, %v2191
      %v2193 = vpop.f32.mrf.mxu0
      %v2194 = vadd.f32 0.0, %v2193
      %2195 = vmatmul.bf16.gmra.mxu0 %v2041
      %v2196 = vpop.f32.mrf.mxu0
      %v2197 = vadd.f32 0.0, %v2196
      %v2198 = vpop.f32.mrf.mxu0
      %v2199 = vadd.f32 0.0, %v2198
      %2200 = vmatmul.bf16.gmra.mxu0 %v2043
      %v2201 = vpop.f32.mrf.mxu0
      %v2202 = vadd.f32 0.0, %v2201
      %v2203 = vpop.f32.mrf.mxu0
      %v2204 = vadd.f32 0.0, %v2203
      %2205 = vmatmul.bf16.gmra.mxu0 %v2045
      %v2206 = vpop.f32.mrf.mxu0
      %v2207 = vadd.f32 0.0, %v2206
      %v2208 = vpop.f32.mrf.mxu0
      %v2209 = vadd.f32 0.0, %v2208
      %2210 = vdwg.mxu0
      %v2211 = vadd.f32 %v1951, %v2122
      %v2212 = vadd.f32 %v1952, %v2124
      %v2213 = vadd.f32 %v1953, %v2127
      %v2214 = vadd.f32 %v1954, %v2129
      %v2215 = vadd.f32 %v1955, %v2132
      %v2216 = vadd.f32 %v1956, %v2134
      %v2217 = vadd.f32 %v1957, %v2137
      %v2218 = vadd.f32 %v1958, %v2139
      %v2219 = vadd.f32 %v1959, %v2142
      %v2220 = vadd.f32 %v1960, %v2144
      %v2221 = vadd.f32 %v1961, %v2147
      %v2222 = vadd.f32 %v1962, %v2149
      %v2223 = vadd.f32 %v1963, %v2152
      %v2224 = vadd.f32 %v1964, %v2154
      %v2225 = vadd.f32 %v1965, %v2157
      %v2226 = vadd.f32 %v1966, %v2159
      %v2227 = vadd.f32 %v1967, %v2162
      %v2228 = vadd.f32 %v1968, %v2164
      %v2229 = vadd.f32 %v1969, %v2167
      %v2230 = vadd.f32 %v1970, %v2169
      %v2231 = vadd.f32 %v1971, %v2172
      %v2232 = vadd.f32 %v1972, %v2174
      %v2233 = vadd.f32 %v1973, %v2177
      %v2234 = vadd.f32 %v1974, %v2179
      %v2235 = vadd.f32 %v1975, %v2182
      %v2236 = vadd.f32 %v1976, %v2184
      %v2237 = vadd.f32 %v1977, %v2187
      %v2238 = vadd.f32 %v1978, %v2189
      %v2239 = vadd.f32 %v1979, %v2192
      %v2240 = vadd.f32 %v1980, %v2194
      %v2241 = vadd.f32 %v1981, %v2197
      %v2242 = vadd.f32 %v1982, %v2199
      %v2243 = vadd.f32 %v1983, %v2202
      %v2244 = vadd.f32 %v1984, %v2204
      %v2245 = vadd.f32 %v1985, %v2207
      %v2246 = vadd.f32 %v1986, %v2209
      %v2247 = vld [vmem:[%s300 + $0x10] sm:$0xc]
      %v2248 = vld [vmem:[%s300 + $0x14] sm:$0xf]
      %v2249 = vld [vmem:[%s300 + $0x18] sm:$0xf]
      %v2250 = vld [vmem:[%s300 + $0x1c] sm:$0xf]
      %v2251 = vld [vmem:[%s300 + $0x20] sm:$0xf]
      %v2252 = vld [vmem:[%s300 + $0x24] sm:$0xf]
      %v2253 = vld [vmem:[%s300 + $0x28] sm:$0xf]
      %v2254 = vld [vmem:[%s300 + $0x2c] sm:$0xf]
      %v2255 = vld [vmem:[%s300 + $0x30] sm:$0xf]
      %v2256 = vld [vmem:[%s300 + $0x34] sm:$0xf]
      %v2257 = vld [vmem:[%s300 + $0x38] sm:$0xf]
      %v2258 = vld [vmem:[%s300 + $0x3c] sm:$0xf]
      %v2259 = vld [vmem:[%s300 + $0x40] sm:$0xf]
      %v2260 = vld [vmem:[%s300 + $0x44] sm:$0xf]
      %v2261 = vld [vmem:[%s300 + $0x48] sm:$0xf]
      %v2262 = vld [vmem:[%s300 + $0x4c] sm:$0xf]
      %v2263 = vld [vmem:[%s300 + $0x50] sm:$0xf]
      %v2264 = vld [vmem:[%s300 + $0x54] sm:$0xf]
      %v2265 = vld [vmem:[%s300 + $0x58] sm:$0xf]
      %v2266 = vld [vmem:[%s300 + $0x5c] sm:$0xf]
      %v2267 = vld [vmem:[%s300 + $0x60] sm:$0xf]
      %v2268 = vld [vmem:[%s300 + $0x64] sm:$0xf]
      %v2269 = vld [vmem:[%s300 + $0x68] sm:$0xf]
      %v2270 = vld [vmem:[%s300 + $0x6c] sm:$0xf]
      %v2271 = vld [vmem:[%s300 + $0x70] sm:$0xf]
      %v2272 = vld [vmem:[%s300 + $0x74] sm:$0xf]
      %v2273 = vld [vmem:[%s300 + $0x78] sm:$0xf]
      %v2274 = vld [vmem:[%s300 + $0x7c] sm:$0xf]
      %v2275 = vld [vmem:[%s300 + $0x80] sm:$0xf]
      %v2276 = vld [vmem:[%s300 + $0x84] sm:$0xf]
      %v2277 = vld [vmem:[%s300 + $0x88] sm:$0xf]
      %v2278 = vld [vmem:[%s300 + $0x8c] sm:$0xf]
      %v2279 = vld [vmem:[%s300 + $0x90] sm:$0xf]
      %v2280 = vld [vmem:[%s300 + $0x94] sm:$0xf]
      %v2281 = vld [vmem:[%s300 + $0x98] sm:$0xf]
      %v2282 = vld [vmem:[%s300 + $0x9c] sm:$0xf]
      %v2283 = vld [vmem:[%s300 + $0xa0] sm:$0x3]
      %s2284 = scalar_lea.vmem %s1, 384
      %v2285 = vld [vmem:[%s2284] sm:$0xf]
      %v2286 = vld [vmem:[%s2284 + $0x4] sm:$0xf]
      %v2287 = vld [vmem:[%s2284 + $0x8] sm:$0xf]
      %v2288 = vld [vmem:[%s2284 + $0xc] sm:$0xf]
      %v2289 = vld [vmem:[%s2284 + $0x10] sm:$0xf]
      %v2290 = vld [vmem:[%s2284 + $0x14] sm:$0xf]
      %v2291 = vld [vmem:[%s2284 + $0x18] sm:$0xf]
      %v2292 = vld [vmem:[%s2284 + $0x1c] sm:$0xf]
      %v2293 = vld [vmem:[%s2284 + $0x20] sm:$0xf]
      %v2294 = vld [vmem:[%s2284 + $0x24] sm:$0xf]
      %v2295 = vld [vmem:[%s2284 + $0x28] sm:$0xf]
      %v2296 = vld [vmem:[%s2284 + $0x2c] sm:$0xf]
      %v2297 = vld [vmem:[%s2284 + $0x30] sm:$0xf]
      %v2298 = vld [vmem:[%s2284 + $0x34] sm:$0xf]
      %v2299 = vld [vmem:[%s2284 + $0x38] sm:$0xf]
      %v2300 = vld [vmem:[%s2284 + $0x3c] sm:$0xf]
      %v2338 = vunpack.c.l.b16 %v2247
      %v2339 = vunpack.c.l.b16 %v2248
      %v2340 = vunpack.c.l.b16 %v2249
      %v2341 = vunpack.c.l.b16 %v2250
      %v2342 = vunpack.c.l.b16 %v2251
      %v2343 = vunpack.c.l.b16 %v2252
      %v2344 = vunpack.c.l.b16 %v2253
      %v2345 = vunpack.c.l.b16 %v2254
      %v2346 = vunpack.c.l.b16 %v2255
      %v2347 = vunpack.c.l.b16 %v2256
      %v2348 = vunpack.c.l.b16 %v2257
      %v2349 = vunpack.c.l.b16 %v2258
      %v2350 = vunpack.c.l.b16 %v2259
      %v2351 = vunpack.c.l.b16 %v2260
      %v2352 = vunpack.c.l.b16 %v2261
      %v2353 = vunpack.c.l.b16 %v2262
      %v2354 = vunpack.c.l.b16 %v2263
      %v2355 = vunpack.c.l.b16 %v2264
      %v2356 = vunpack.c.l.b16 %v2265
      %v2357 = vunpack.c.l.b16 %v2266
      %v2358 = vunpack.c.l.b16 %v2267
      %v2359 = vunpack.c.l.b16 %v2268
      %v2360 = vunpack.c.l.b16 %v2269
      %v2361 = vunpack.c.l.b16 %v2270
      %v2362 = vunpack.c.l.b16 %v2271
      %v2363 = vunpack.c.l.b16 %v2272
      %v2364 = vunpack.c.l.b16 %v2273
      %v2365 = vunpack.c.l.b16 %v2274
      %v2366 = vunpack.c.l.b16 %v2275
      %v2367 = vunpack.c.l.b16 %v2276
      %v2368 = vunpack.c.l.b16 %v2277
      %v2369 = vunpack.c.l.b16 %v2278
      %v2370 = vunpack.c.l.b16 %v2279
      %v2371 = vunpack.c.l.b16 %v2280
      %v2372 = vunpack.c.l.b16 %v2281
      %v2373 = vunpack.c.l.b16 %v2282
      %v2374 = vunpack.c.l.b16 %v2283
      %v2375 = vpack.c.b16 %v2339, %v2338
      %v2376 = vpack.c.b16 %v2341, %v2340
      %v2377 = vpack.c.b16 %v2343, %v2342
      %v2378 = vpack.c.b16 %v2345, %v2344
      %v2379 = vpack.c.b16 %v2347, %v2346
      %v2380 = vpack.c.b16 %v2349, %v2348
      %v2381 = vpack.c.b16 %v2351, %v2350
      %v2382 = vpack.c.b16 %v2353, %v2352
      %v2383 = vpack.c.b16 %v2355, %v2354
      %v2384 = vpack.c.b16 %v2357, %v2356
      %v2385 = vpack.c.b16 %v2359, %v2358
      %v2386 = vpack.c.b16 %v2361, %v2360
      %v2387 = vpack.c.b16 %v2363, %v2362
      %v2388 = vpack.c.b16 %v2365, %v2364
      %v2389 = vpack.c.b16 %v2367, %v2366
      %v2390 = vpack.c.b16 %v2369, %v2368
      %v2391 = vpack.c.b16 %v2371, %v2370
      %v2392 = vpack.c.b16 %v2373, %v2372
      %v2393 = vpack.c.b16 %v2374, %v2374
      %v2394 = vrot.slane %v2375, 2
      %v2395 = vrot.slane %v2376, 2
      %v2396 = vsel %vm2008, %v2394, %v2395
      %v2397 = vrot.slane %v2377, 2
      %v2398 = vsel %vm2008, %v2395, %v2397
      %v2399 = vrot.slane %v2378, 2
      %v2400 = vsel %vm2008, %v2397, %v2399
      %v2401 = vrot.slane %v2379, 2
      %v2402 = vsel %vm2008, %v2399, %v2401
      %v2403 = vrot.slane %v2380, 2
      %v2404 = vsel %vm2008, %v2401, %v2403
      %v2405 = vrot.slane %v2381, 2
      %v2406 = vsel %vm2008, %v2403, %v2405
      %v2407 = vrot.slane %v2382, 2
      %v2408 = vsel %vm2008, %v2405, %v2407
      %v2409 = vrot.slane %v2383, 2
      %v2410 = vsel %vm2008, %v2407, %v2409
      %v2411 = vrot.slane %v2384, 2
      %v2412 = vsel %vm2008, %v2409, %v2411
      %v2413 = vrot.slane %v2385, 2
      %v2414 = vsel %vm2008, %v2411, %v2413
      %v2415 = vrot.slane %v2386, 2
      %v2416 = vsel %vm2008, %v2413, %v2415
      %v2417 = vrot.slane %v2387, 2
      %v2418 = vsel %vm2008, %v2415, %v2417
      %v2419 = vrot.slane %v2388, 2
      %v2420 = vsel %vm2008, %v2417, %v2419
      %v2421 = vrot.slane %v2389, 2
      %v2422 = vsel %vm2008, %v2419, %v2421
      %v2423 = vrot.slane %v2390, 2
      %v2424 = vsel %vm2008, %v2421, %v2423
      %v2425 = vrot.slane %v2391, 2
      %v2426 = vsel %vm2008, %v2423, %v2425
      %v2427 = vrot.slane %v2392, 2
      %v2428 = vsel %vm2008, %v2425, %v2427
      %v2429 = vrot.slane %v2393, 2
      %v2430 = vsel %vm2008, %v2427, %v2429
      %v2465 = vunpack.c.l.b16 %v2285
      %v2466 = vunpack.c.l.b16 %v2286
      %v2467 = vunpack.c.l.b16 %v2287
      %v2468 = vunpack.c.l.b16 %v2288
      %v2469 = vunpack.c.l.b16 %v2289
      %v2470 = vunpack.c.l.b16 %v2290
      %v2471 = vunpack.c.l.b16 %v2291
      %v2472 = vunpack.c.l.b16 %v2292
      %v2473 = vunpack.c.l.b16 %v2293
      %v2474 = vunpack.c.l.b16 %v2294
      %v2475 = vunpack.c.l.b16 %v2295
      %v2476 = vunpack.c.l.b16 %v2296
      %v2477 = vunpack.c.l.b16 %v2297
      %v2478 = vunpack.c.l.b16 %v2298
      %v2479 = vunpack.c.l.b16 %v2299
      %v2480 = vunpack.c.l.b16 %v2300
      %v2481 = vpack.c.b16 %v2466, %v2465
      %v2482 = vpack.c.b16 %v2468, %v2467
      %v2483 = vpack.c.b16 %v2470, %v2469
      %v2484 = vpack.c.b16 %v2472, %v2471
      %v2485 = vpack.c.b16 %v2474, %v2473
      %v2486 = vpack.c.b16 %v2476, %v2475
      %v2487 = vpack.c.b16 %v2478, %v2477
      %v2488 = vpack.c.b16 %v2480, %v2479
      %2497 = vmatpush.bf16.msra.mxu0 %v2488
      %2498 = vmatpush.bf16.msra.mxu0 %v2487
      %2499 = vmatpush.bf16.msra.mxu0 %v2486
      %2500 = vmatpush.bf16.msra.mxu0 %v2485
      %2501 = vmatpush.bf16.msra.mxu0 %v2484
      %2502 = vmatpush.bf16.msra.mxu0 %v2483
      %2503 = vmatpush.bf16.msra.mxu0 %v2482
      %2504 = vmatpush.bf16.msra.mxu0 %v2481
      %2505 = vmatmul.bf16.gmra.mxu0 %v2396
      %v2506 = vpop.f32.mrf.mxu0
      %v2507 = vadd.f32 0.0, %v2506
      %v2508 = vpop.f32.mrf.mxu0
      %v2509 = vadd.f32 0.0, %v2508
      %2510 = vmatmul.bf16.gmra.mxu0 %v2398
      %v2511 = vpop.f32.mrf.mxu0
      %v2512 = vadd.f32 0.0, %v2511
      %v2513 = vpop.f32.mrf.mxu0
      %v2514 = vadd.f32 0.0, %v2513
      %2515 = vmatmul.bf16.gmra.mxu0 %v2400
      %v2516 = vpop.f32.mrf.mxu0
      %v2517 = vadd.f32 0.0, %v2516
      %v2518 = vpop.f32.mrf.mxu0
      %v2519 = vadd.f32 0.0, %v2518
      %2520 = vmatmul.bf16.gmra.mxu0 %v2402
      %v2521 = vpop.f32.mrf.mxu0
      %v2522 = vadd.f32 0.0, %v2521
      %v2523 = vpop.f32.mrf.mxu0
      %v2524 = vadd.f32 0.0, %v2523
      %2525 = vmatmul.bf16.gmra.mxu0 %v2404
      %v2526 = vpop.f32.mrf.mxu0
      %v2527 = vadd.f32 0.0, %v2526
      %v2528 = vpop.f32.mrf.mxu0
      %v2529 = vadd.f32 0.0, %v2528
      %2530 = vmatmul.bf16.gmra.mxu0 %v2406
      %v2531 = vpop.f32.mrf.mxu0
      %v2532 = vadd.f32 0.0, %v2531
      %v2533 = vpop.f32.mrf.mxu0
      %v2534 = vadd.f32 0.0, %v2533
      %2535 = vmatmul.bf16.gmra.mxu0 %v2408
      %v2536 = vpop.f32.mrf.mxu0
      %v2537 = vadd.f32 0.0, %v2536
      %v2538 = vpop.f32.mrf.mxu0
      %v2539 = vadd.f32 0.0, %v2538
      %2540 = vmatmul.bf16.gmra.mxu0 %v2410
      %v2541 = vpop.f32.mrf.mxu0
      %v2542 = vadd.f32 0.0, %v2541
      %v2543 = vpop.f32.mrf.mxu0
      %v2544 = vadd.f32 0.0, %v2543
      %2545 = vmatmul.bf16.gmra.mxu0 %v2412
      %v2546 = vpop.f32.mrf.mxu0
      %v2547 = vadd.f32 0.0, %v2546
      %v2548 = vpop.f32.mrf.mxu0
      %v2549 = vadd.f32 0.0, %v2548
      %2550 = vmatmul.bf16.gmra.mxu0 %v2414
      %v2551 = vpop.f32.mrf.mxu0
      %v2552 = vadd.f32 0.0, %v2551
      %v2553 = vpop.f32.mrf.mxu0
      %v2554 = vadd.f32 0.0, %v2553
      %2555 = vmatmul.bf16.gmra.mxu0 %v2416
      %v2556 = vpop.f32.mrf.mxu0
      %v2557 = vadd.f32 0.0, %v2556
      %v2558 = vpop.f32.mrf.mxu0
      %v2559 = vadd.f32 0.0, %v2558
      %2560 = vmatmul.bf16.gmra.mxu0 %v2418
      %v2561 = vpop.f32.mrf.mxu0
      %v2562 = vadd.f32 0.0, %v2561
      %v2563 = vpop.f32.mrf.mxu0
      %v2564 = vadd.f32 0.0, %v2563
      %2565 = vmatmul.bf16.gmra.mxu0 %v2420
      %v2566 = vpop.f32.mrf.mxu0
      %v2567 = vadd.f32 0.0, %v2566
      %v2568 = vpop.f32.mrf.mxu0
      %v2569 = vadd.f32 0.0, %v2568
      %2570 = vmatmul.bf16.gmra.mxu0 %v2422
      %v2571 = vpop.f32.mrf.mxu0
      %v2572 = vadd.f32 0.0, %v2571
      %v2573 = vpop.f32.mrf.mxu0
      %v2574 = vadd.f32 0.0, %v2573
      %2575 = vmatmul.bf16.gmra.mxu0 %v2424
      %v2576 = vpop.f32.mrf.mxu0
      %v2577 = vadd.f32 0.0, %v2576
      %v2578 = vpop.f32.mrf.mxu0
      %v2579 = vadd.f32 0.0, %v2578
      %2580 = vmatmul.bf16.gmra.mxu0 %v2426
      %v2581 = vpop.f32.mrf.mxu0
      %v2582 = vadd.f32 0.0, %v2581
      %v2583 = vpop.f32.mrf.mxu0
      %v2584 = vadd.f32 0.0, %v2583
      %2585 = vmatmul.bf16.gmra.mxu0 %v2428
      %v2586 = vpop.f32.mrf.mxu0
      %v2587 = vadd.f32 0.0, %v2586
      %v2588 = vpop.f32.mrf.mxu0
      %v2589 = vadd.f32 0.0, %v2588
      %2590 = vmatmul.bf16.gmra.mxu0 %v2430
      %v2591 = vpop.f32.mrf.mxu0
      %v2592 = vadd.f32 0.0, %v2591
      %v2593 = vpop.f32.mrf.mxu0
      %v2594 = vadd.f32 0.0, %v2593
      %2595 = vdwg.mxu0
      %v2596 = vadd.f32 %v2211, %v2507
      %v2597 = vadd.f32 %v2212, %v2509
      %v2598 = vadd.f32 %v2213, %v2512
      %v2599 = vadd.f32 %v2214, %v2514
      %v2600 = vadd.f32 %v2215, %v2517
      %v2601 = vadd.f32 %v2216, %v2519
      %v2602 = vadd.f32 %v2217, %v2522
      %v2603 = vadd.f32 %v2218, %v2524
      %v2604 = vadd.f32 %v2219, %v2527
      %v2605 = vadd.f32 %v2220, %v2529
      %v2606 = vadd.f32 %v2221, %v2532
      %v2607 = vadd.f32 %v2222, %v2534
      %v2608 = vadd.f32 %v2223, %v2537
      %v2609 = vadd.f32 %v2224, %v2539
      %v2610 = vadd.f32 %v2225, %v2542
      %v2611 = vadd.f32 %v2226, %v2544
      %v2612 = vadd.f32 %v2227, %v2547
      %v2613 = vadd.f32 %v2228, %v2549
      %v2614 = vadd.f32 %v2229, %v2552
      %v2615 = vadd.f32 %v2230, %v2554
      %v2616 = vadd.f32 %v2231, %v2557
      %v2617 = vadd.f32 %v2232, %v2559
      %v2618 = vadd.f32 %v2233, %v2562
      %v2619 = vadd.f32 %v2234, %v2564
      %v2620 = vadd.f32 %v2235, %v2567
      %v2621 = vadd.f32 %v2236, %v2569
      %v2622 = vadd.f32 %v2237, %v2572
      %v2623 = vadd.f32 %v2238, %v2574
      %v2624 = vadd.f32 %v2239, %v2577
      %v2625 = vadd.f32 %v2240, %v2579
      %v2626 = vadd.f32 %v2241, %v2582
      %v2627 = vadd.f32 %v2242, %v2584
      %v2628 = vadd.f32 %v2243, %v2587
      %v2629 = vadd.f32 %v2244, %v2589
      %v2630 = vadd.f32 %v2245, %v2592
      %v2631 = vadd.f32 %v2246, %v2594
      %v2632 = vld [vmem:[%s300 + $0xa0] sm:$0x7]
      %s2633 = scalar_lea.vmem %s1, 448
      %v2634 = vld [vmem:[%s2633] sm:$0xf]
      %v2635 = vld [vmem:[%s2633 + $0x4] sm:$0xf]
      %v2636 = vld [vmem:[%s2633 + $0x8] sm:$0xf]
      %v2637 = vld [vmem:[%s2633 + $0xc] sm:$0xf]
      %v2638 = vld [vmem:[%s2633 + $0x10] sm:$0xf]
      %v2639 = vld [vmem:[%s2633 + $0x14] sm:$0xf]
      %v2640 = vld [vmem:[%s2633 + $0x18] sm:$0xf]
      %v2641 = vld [vmem:[%s2633 + $0x1c] sm:$0xf]
      %v2642 = vld [vmem:[%s2633 + $0x20] sm:$0xf]
      %v2643 = vld [vmem:[%s2633 + $0x24] sm:$0xf]
      %v2644 = vld [vmem:[%s2633 + $0x28] sm:$0xf]
      %v2645 = vld [vmem:[%s2633 + $0x2c] sm:$0xf]
      %v2646 = vld [vmem:[%s2633 + $0x30] sm:$0xf]
      %v2647 = vld [vmem:[%s2633 + $0x34] sm:$0xf]
      %v2648 = vld [vmem:[%s2633 + $0x38] sm:$0xf]
      %v2649 = vld [vmem:[%s2633 + $0x3c] sm:$0xf]
      %v2651 = vunpack.c.l.b16 %v2632
      %v2652 = vpack.c.b16 %v2651, %v2651
      %vm2653 = vsmask.f32 5376
      %v2655 = vshrl.u32 %v2375, 16
      %v2657 = vrot.slane %v2655, 2
      %v2658 = vshll.u32 %v2375, 16
      %v2660 = vrot.slane %v2658, 3
      %v2661 = vor.u32 %v2657, %v2660
      %v2663 = vshrl.u32 %v2376, 16
      %v2665 = vrot.slane %v2663, 2
      %v2666 = vshll.u32 %v2376, 16
      %v2668 = vrot.slane %v2666, 3
      %v2669 = vor.u32 %v2665, %v2668
      %v2670 = vsel %vm2653, %v2661, %v2669
      %v2672 = vshrl.u32 %v2377, 16
      %v2674 = vrot.slane %v2672, 2
      %v2675 = vshll.u32 %v2377, 16
      %v2677 = vrot.slane %v2675, 3
      %v2678 = vor.u32 %v2674, %v2677
      %v2679 = vsel %vm2653, %v2669, %v2678
      %v2681 = vshrl.u32 %v2378, 16
      %v2683 = vrot.slane %v2681, 2
      %v2684 = vshll.u32 %v2378, 16
      %v2686 = vrot.slane %v2684, 3
      %v2687 = vor.u32 %v2683, %v2686
      %v2688 = vsel %vm2653, %v2678, %v2687
      %v2690 = vshrl.u32 %v2379, 16
      %v2692 = vrot.slane %v2690, 2
      %v2693 = vshll.u32 %v2379, 16
      %v2695 = vrot.slane %v2693, 3
      %v2696 = vor.u32 %v2692, %v2695
      %v2697 = vsel %vm2653, %v2687, %v2696
      %v2699 = vshrl.u32 %v2380, 16
      %v2701 = vrot.slane %v2699, 2
      %v2702 = vshll.u32 %v2380, 16
      %v2704 = vrot.slane %v2702, 3
      %v2705 = vor.u32 %v2701, %v2704
      %v2706 = vsel %vm2653, %v2696, %v2705
      %v2708 = vshrl.u32 %v2381, 16
      %v2710 = vrot.slane %v2708, 2
      %v2711 = vshll.u32 %v2381, 16
      %v2713 = vrot.slane %v2711, 3
      %v2714 = vor.u32 %v2710, %v2713
      %v2715 = vsel %vm2653, %v2705, %v2714
      %v2717 = vshrl.u32 %v2382, 16
      %v2719 = vrot.slane %v2717, 2
      %v2720 = vshll.u32 %v2382, 16
      %v2722 = vrot.slane %v2720, 3
      %v2723 = vor.u32 %v2719, %v2722
      %v2724 = vsel %vm2653, %v2714, %v2723
      %v2726 = vshrl.u32 %v2383, 16
      %v2728 = vrot.slane %v2726, 2
      %v2729 = vshll.u32 %v2383, 16
      %v2731 = vrot.slane %v2729, 3
      %v2732 = vor.u32 %v2728, %v2731
      %v2733 = vsel %vm2653, %v2723, %v2732
      %v2735 = vshrl.u32 %v2384, 16
      %v2737 = vrot.slane %v2735, 2
      %v2738 = vshll.u32 %v2384, 16
      %v2740 = vrot.slane %v2738, 3
      %v2741 = vor.u32 %v2737, %v2740
      %v2742 = vsel %vm2653, %v2732, %v2741
      %v2744 = vshrl.u32 %v2385, 16
      %v2746 = vrot.slane %v2744, 2
      %v2747 = vshll.u32 %v2385, 16
      %v2749 = vrot.slane %v2747, 3
      %v2750 = vor.u32 %v2746, %v2749
      %v2751 = vsel %vm2653, %v2741, %v2750
      %v2753 = vshrl.u32 %v2386, 16
      %v2755 = vrot.slane %v2753, 2
      %v2756 = vshll.u32 %v2386, 16
      %v2758 = vrot.slane %v2756, 3
      %v2759 = vor.u32 %v2755, %v2758
      %v2760 = vsel %vm2653, %v2750, %v2759
      %v2762 = vshrl.u32 %v2387, 16
      %v2764 = vrot.slane %v2762, 2
      %v2765 = vshll.u32 %v2387, 16
      %v2767 = vrot.slane %v2765, 3
      %v2768 = vor.u32 %v2764, %v2767
      %v2769 = vsel %vm2653, %v2759, %v2768
      %v2771 = vshrl.u32 %v2388, 16
      %v2773 = vrot.slane %v2771, 2
      %v2774 = vshll.u32 %v2388, 16
      %v2776 = vrot.slane %v2774, 3
      %v2777 = vor.u32 %v2773, %v2776
      %v2778 = vsel %vm2653, %v2768, %v2777
      %v2780 = vshrl.u32 %v2389, 16
      %v2782 = vrot.slane %v2780, 2
      %v2783 = vshll.u32 %v2389, 16
      %v2785 = vrot.slane %v2783, 3
      %v2786 = vor.u32 %v2782, %v2785
      %v2787 = vsel %vm2653, %v2777, %v2786
      %v2789 = vshrl.u32 %v2390, 16
      %v2791 = vrot.slane %v2789, 2
      %v2792 = vshll.u32 %v2390, 16
      %v2794 = vrot.slane %v2792, 3
      %v2795 = vor.u32 %v2791, %v2794
      %v2796 = vsel %vm2653, %v2786, %v2795
      %v2798 = vshrl.u32 %v2391, 16
      %v2800 = vrot.slane %v2798, 2
      %v2801 = vshll.u32 %v2391, 16
      %v2803 = vrot.slane %v2801, 3
      %v2804 = vor.u32 %v2800, %v2803
      %v2805 = vsel %vm2653, %v2795, %v2804
      %v2807 = vshrl.u32 %v2392, 16
      %v2809 = vrot.slane %v2807, 2
      %v2810 = vshll.u32 %v2392, 16
      %v2812 = vrot.slane %v2810, 3
      %v2813 = vor.u32 %v2809, %v2812
      %v2814 = vsel %vm2653, %v2804, %v2813
      %v2816 = vshrl.u32 %v2652, 16
      %v2818 = vrot.slane %v2816, 2
      %v2819 = vshll.u32 %v2652, 16
      %v2821 = vrot.slane %v2819, 3
      %v2822 = vor.u32 %v2818, %v2821
      %v2823 = vsel %vm2653, %v2813, %v2822
      %v2858 = vunpack.c.l.b16 %v2634
      %v2859 = vunpack.c.l.b16 %v2635
      %v2860 = vunpack.c.l.b16 %v2636
      %v2861 = vunpack.c.l.b16 %v2637
      %v2862 = vunpack.c.l.b16 %v2638
      %v2863 = vunpack.c.l.b16 %v2639
      %v2864 = vunpack.c.l.b16 %v2640
      %v2865 = vunpack.c.l.b16 %v2641
      %v2866 = vunpack.c.l.b16 %v2642
      %v2867 = vunpack.c.l.b16 %v2643
      %v2868 = vunpack.c.l.b16 %v2644
      %v2869 = vunpack.c.l.b16 %v2645
      %v2870 = vunpack.c.l.b16 %v2646
      %v2871 = vunpack.c.l.b16 %v2647
      %v2872 = vunpack.c.l.b16 %v2648
      %v2873 = vunpack.c.l.b16 %v2649
      %v2874 = vpack.c.b16 %v2859, %v2858
      %v2875 = vpack.c.b16 %v2861, %v2860
      %v2876 = vpack.c.b16 %v2863, %v2862
      %v2877 = vpack.c.b16 %v2865, %v2864
      %v2878 = vpack.c.b16 %v2867, %v2866
      %v2879 = vpack.c.b16 %v2869, %v2868
      %v2880 = vpack.c.b16 %v2871, %v2870
      %v2881 = vpack.c.b16 %v2873, %v2872
      %2890 = vmatpush.bf16.msra.mxu0 %v2881
      %2891 = vmatpush.bf16.msra.mxu0 %v2880
      %2892 = vmatpush.bf16.msra.mxu0 %v2879
      %2893 = vmatpush.bf16.msra.mxu0 %v2878
      %2894 = vmatpush.bf16.msra.mxu0 %v2877
      %2895 = vmatpush.bf16.msra.mxu0 %v2876
      %2896 = vmatpush.bf16.msra.mxu0 %v2875
      %2897 = vmatpush.bf16.msra.mxu0 %v2874
      %2898 = vmatmul.bf16.gmra.mxu0 %v2670
      %v2899 = vpop.f32.mrf.mxu0
      %v2900 = vadd.f32 0.0, %v2899
      %v2901 = vpop.f32.mrf.mxu0
      %v2902 = vadd.f32 0.0, %v2901
      %2903 = vmatmul.bf16.gmra.mxu0 %v2679
      %v2904 = vpop.f32.mrf.mxu0
      %v2905 = vadd.f32 0.0, %v2904
      %v2906 = vpop.f32.mrf.mxu0
      %v2907 = vadd.f32 0.0, %v2906
      %2908 = vmatmul.bf16.gmra.mxu0 %v2688
      %v2909 = vpop.f32.mrf.mxu0
      %v2910 = vadd.f32 0.0, %v2909
      %v2911 = vpop.f32.mrf.mxu0
      %v2912 = vadd.f32 0.0, %v2911
      %2913 = vmatmul.bf16.gmra.mxu0 %v2697
      %v2914 = vpop.f32.mrf.mxu0
      %v2915 = vadd.f32 0.0, %v2914
      %v2916 = vpop.f32.mrf.mxu0
      %v2917 = vadd.f32 0.0, %v2916
      %2918 = vmatmul.bf16.gmra.mxu0 %v2706
      %v2919 = vpop.f32.mrf.mxu0
      %v2920 = vadd.f32 0.0, %v2919
      %v2921 = vpop.f32.mrf.mxu0
      %v2922 = vadd.f32 0.0, %v2921
      %2923 = vmatmul.bf16.gmra.mxu0 %v2715
      %v2924 = vpop.f32.mrf.mxu0
      %v2925 = vadd.f32 0.0, %v2924
      %v2926 = vpop.f32.mrf.mxu0
      %v2927 = vadd.f32 0.0, %v2926
      %2928 = vmatmul.bf16.gmra.mxu0 %v2724
      %v2929 = vpop.f32.mrf.mxu0
      %v2930 = vadd.f32 0.0, %v2929
      %v2931 = vpop.f32.mrf.mxu0
      %v2932 = vadd.f32 0.0, %v2931
      %2933 = vmatmul.bf16.gmra.mxu0 %v2733
      %v2934 = vpop.f32.mrf.mxu0
      %v2935 = vadd.f32 0.0, %v2934
      %v2936 = vpop.f32.mrf.mxu0
      %v2937 = vadd.f32 0.0, %v2936
      %2938 = vmatmul.bf16.gmra.mxu0 %v2742
      %v2939 = vpop.f32.mrf.mxu0
      %v2940 = vadd.f32 0.0, %v2939
      %v2941 = vpop.f32.mrf.mxu0
      %v2942 = vadd.f32 0.0, %v2941
      %2943 = vmatmul.bf16.gmra.mxu0 %v2751
      %v2944 = vpop.f32.mrf.mxu0
      %v2945 = vadd.f32 0.0, %v2944
      %v2946 = vpop.f32.mrf.mxu0
      %v2947 = vadd.f32 0.0, %v2946
      %2948 = vmatmul.bf16.gmra.mxu0 %v2760
      %v2949 = vpop.f32.mrf.mxu0
      %v2950 = vadd.f32 0.0, %v2949
      %v2951 = vpop.f32.mrf.mxu0
      %v2952 = vadd.f32 0.0, %v2951
      %2953 = vmatmul.bf16.gmra.mxu0 %v2769
      %v2954 = vpop.f32.mrf.mxu0
      %v2955 = vadd.f32 0.0, %v2954
      %v2956 = vpop.f32.mrf.mxu0
      %v2957 = vadd.f32 0.0, %v2956
      %2958 = vmatmul.bf16.gmra.mxu0 %v2778
      %v2959 = vpop.f32.mrf.mxu0
      %v2960 = vadd.f32 0.0, %v2959
      %v2961 = vpop.f32.mrf.mxu0
      %v2962 = vadd.f32 0.0, %v2961
      %2963 = vmatmul.bf16.gmra.mxu0 %v2787
      %v2964 = vpop.f32.mrf.mxu0
      %v2965 = vadd.f32 0.0, %v2964
      %v2966 = vpop.f32.mrf.mxu0
      %v2967 = vadd.f32 0.0, %v2966
      %2968 = vmatmul.bf16.gmra.mxu0 %v2796
      %v2969 = vpop.f32.mrf.mxu0
      %v2970 = vadd.f32 0.0, %v2969
      %v2971 = vpop.f32.mrf.mxu0
      %v2972 = vadd.f32 0.0, %v2971
      %2973 = vmatmul.bf16.gmra.mxu0 %v2805
      %v2974 = vpop.f32.mrf.mxu0
      %v2975 = vadd.f32 0.0, %v2974
      %v2976 = vpop.f32.mrf.mxu0
      %v2977 = vadd.f32 0.0, %v2976
      %2978 = vmatmul.bf16.gmra.mxu0 %v2814
      %v2979 = vpop.f32.mrf.mxu0
      %v2980 = vadd.f32 0.0, %v2979
      %v2981 = vpop.f32.mrf.mxu0
      %v2982 = vadd.f32 0.0, %v2981
      %2983 = vmatmul.bf16.gmra.mxu0 %v2823
      %v2984 = vpop.f32.mrf.mxu0
      %v2985 = vadd.f32 0.0, %v2984
      %v2986 = vpop.f32.mrf.mxu0
      %v2987 = vadd.f32 0.0, %v2986
      %2988 = vdwg.mxu0
      %v2989 = vadd.f32 %v2596, %v2900
      %v2990 = vadd.f32 %v2597, %v2902
      %v2991 = vadd.f32 %v2598, %v2905
      %v2992 = vadd.f32 %v2599, %v2907
      %v2993 = vadd.f32 %v2600, %v2910
      %v2994 = vadd.f32 %v2601, %v2912
      %v2995 = vadd.f32 %v2602, %v2915
      %v2996 = vadd.f32 %v2603, %v2917
      %v2997 = vadd.f32 %v2604, %v2920
      %v2998 = vadd.f32 %v2605, %v2922
      %v2999 = vadd.f32 %v2606, %v2925
      %v3000 = vadd.f32 %v2607, %v2927
      %v3001 = vadd.f32 %v2608, %v2930
      %v3002 = vadd.f32 %v2609, %v2932
      %v3003 = vadd.f32 %v2610, %v2935
      %v3004 = vadd.f32 %v2611, %v2937
      %v3005 = vadd.f32 %v2612, %v2940
      %v3006 = vadd.f32 %v2613, %v2942
      %v3007 = vadd.f32 %v2614, %v2945
      %v3008 = vadd.f32 %v2615, %v2947
      %v3009 = vadd.f32 %v2616, %v2950
      %v3010 = vadd.f32 %v2617, %v2952
      %v3011 = vadd.f32 %v2618, %v2955
      %v3012 = vadd.f32 %v2619, %v2957
      %v3013 = vadd.f32 %v2620, %v2960
      %v3014 = vadd.f32 %v2621, %v2962
      %v3015 = vadd.f32 %v2622, %v2965
      %v3016 = vadd.f32 %v2623, %v2967
      %v3017 = vadd.f32 %v2624, %v2970
      %v3018 = vadd.f32 %v2625, %v2972
      %v3019 = vadd.f32 %v2626, %v2975
      %v3020 = vadd.f32 %v2627, %v2977
      %v3021 = vadd.f32 %v2628, %v2980
      %v3022 = vadd.f32 %v2629, %v2982
      %v3023 = vadd.f32 %v2630, %v2985
      %v3024 = vadd.f32 %v2631, %v2987
      %v3025 = vld [vmem:[%s300 + $0x10] sm:$0x8]
      %s3026 = scalar_lea.vmem %s1, 512
      %v3027 = vld [vmem:[%s3026] sm:$0xf]
      %v3028 = vld [vmem:[%s3026 + $0x4] sm:$0xf]
      %v3029 = vld [vmem:[%s3026 + $0x8] sm:$0xf]
      %v3030 = vld [vmem:[%s3026 + $0xc] sm:$0xf]
      %v3031 = vld [vmem:[%s3026 + $0x10] sm:$0xf]
      %v3032 = vld [vmem:[%s3026 + $0x14] sm:$0xf]
      %v3033 = vld [vmem:[%s3026 + $0x18] sm:$0xf]
      %v3034 = vld [vmem:[%s3026 + $0x1c] sm:$0xf]
      %v3035 = vld [vmem:[%s3026 + $0x20] sm:$0xf]
      %v3036 = vld [vmem:[%s3026 + $0x24] sm:$0xf]
      %v3037 = vld [vmem:[%s3026 + $0x28] sm:$0xf]
      %v3038 = vld [vmem:[%s3026 + $0x2c] sm:$0xf]
      %v3039 = vld [vmem:[%s3026 + $0x30] sm:$0xf]
      %v3040 = vld [vmem:[%s3026 + $0x34] sm:$0xf]
      %v3041 = vld [vmem:[%s3026 + $0x38] sm:$0xf]
      %v3042 = vld [vmem:[%s3026 + $0x3c] sm:$0xf]
      %v3044 = vunpack.c.l.b16 %v3025
      %v3045 = vpack.c.b16 %v2339, %v3044
      %vm3046 = vcmask 1044480
      %v3047 = vrot.slane %v3045, 3
      %v3048 = vrot.slane %v2376, 3
      %v3049 = vsel %vm3046, %v3047, %v3048
      %v3050 = vrot.slane %v2377, 3
      %v3051 = vsel %vm3046, %v3048, %v3050
      %v3052 = vrot.slane %v2378, 3
      %v3053 = vsel %vm3046, %v3050, %v3052
      %v3054 = vrot.slane %v2379, 3
      %v3055 = vsel %vm3046, %v3052, %v3054
      %v3056 = vrot.slane %v2380, 3
      %v3057 = vsel %vm3046, %v3054, %v3056
      %v3058 = vrot.slane %v2381, 3
      %v3059 = vsel %vm3046, %v3056, %v3058
      %v3060 = vrot.slane %v2382, 3
      %v3061 = vsel %vm3046, %v3058, %v3060
      %v3062 = vrot.slane %v2383, 3
      %v3063 = vsel %vm3046, %v3060, %v3062
      %v3064 = vrot.slane %v2384, 3
      %v3065 = vsel %vm3046, %v3062, %v3064
      %v3066 = vrot.slane %v2385, 3
      %v3067 = vsel %vm3046, %v3064, %v3066
      %v3068 = vrot.slane %v2386, 3
      %v3069 = vsel %vm3046, %v3066, %v3068
      %v3070 = vrot.slane %v2387, 3
      %v3071 = vsel %vm3046, %v3068, %v3070
      %v3072 = vrot.slane %v2388, 3
      %v3073 = vsel %vm3046, %v3070, %v3072
      %v3074 = vrot.slane %v2389, 3
      %v3075 = vsel %vm3046, %v3072, %v3074
      %v3076 = vrot.slane %v2390, 3
      %v3077 = vsel %vm3046, %v3074, %v3076
      %v3078 = vrot.slane %v2391, 3
      %v3079 = vsel %vm3046, %v3076, %v3078
      %v3080 = vrot.slane %v2392, 3
      %v3081 = vsel %vm3046, %v3078, %v3080
      %v3082 = vrot.slane %v2652, 3
      %v3083 = vsel %vm3046, %v3080, %v3082
      %v3118 = vunpack.c.l.b16 %v3027
      %v3119 = vunpack.c.l.b16 %v3028
      %v3120 = vunpack.c.l.b16 %v3029
      %v3121 = vunpack.c.l.b16 %v3030
      %v3122 = vunpack.c.l.b16 %v3031
      %v3123 = vunpack.c.l.b16 %v3032
      %v3124 = vunpack.c.l.b16 %v3033
      %v3125 = vunpack.c.l.b16 %v3034
      %v3126 = vunpack.c.l.b16 %v3035
      %v3127 = vunpack.c.l.b16 %v3036
      %v3128 = vunpack.c.l.b16 %v3037
      %v3129 = vunpack.c.l.b16 %v3038
      %v3130 = vunpack.c.l.b16 %v3039
      %v3131 = vunpack.c.l.b16 %v3040
      %v3132 = vunpack.c.l.b16 %v3041
      %v3133 = vunpack.c.l.b16 %v3042
      %v3134 = vpack.c.b16 %v3119, %v3118
      %v3135 = vpack.c.b16 %v3121, %v3120
      %v3136 = vpack.c.b16 %v3123, %v3122
      %v3137 = vpack.c.b16 %v3125, %v3124
      %v3138 = vpack.c.b16 %v3127, %v3126
      %v3139 = vpack.c.b16 %v3129, %v3128
      %v3140 = vpack.c.b16 %v3131, %v3130
      %v3141 = vpack.c.b16 %v3133, %v3132
      %3150 = vmatpush.bf16.msra.mxu0 %v3141
      %3151 = vmatpush.bf16.msra.mxu0 %v3140
      %3152 = vmatpush.bf16.msra.mxu0 %v3139
      %3153 = vmatpush.bf16.msra.mxu0 %v3138
      %3154 = vmatpush.bf16.msra.mxu0 %v3137
      %3155 = vmatpush.bf16.msra.mxu0 %v3136
      %3156 = vmatpush.bf16.msra.mxu0 %v3135
      %3157 = vmatpush.bf16.msra.mxu0 %v3134
      %3158 = vmatmul.bf16.gmra.mxu0 %v3049
      %v3159 = vpop.f32.mrf.mxu0
      %v3160 = vadd.f32 0.0, %v3159
      %v3161 = vpop.f32.mrf.mxu0
      %v3162 = vadd.f32 0.0, %v3161
      %3163 = vmatmul.bf16.gmra.mxu0 %v3051
      %v3164 = vpop.f32.mrf.mxu0
      %v3165 = vadd.f32 0.0, %v3164
      %v3166 = vpop.f32.mrf.mxu0
      %v3167 = vadd.f32 0.0, %v3166
      %3168 = vmatmul.bf16.gmra.mxu0 %v3053
      %v3169 = vpop.f32.mrf.mxu0
      %v3170 = vadd.f32 0.0, %v3169
      %v3171 = vpop.f32.mrf.mxu0
      %v3172 = vadd.f32 0.0, %v3171
      %3173 = vmatmul.bf16.gmra.mxu0 %v3055
      %v3174 = vpop.f32.mrf.mxu0
      %v3175 = vadd.f32 0.0, %v3174
      %v3176 = vpop.f32.mrf.mxu0
      %v3177 = vadd.f32 0.0, %v3176
      %3178 = vmatmul.bf16.gmra.mxu0 %v3057
      %v3179 = vpop.f32.mrf.mxu0
      %v3180 = vadd.f32 0.0, %v3179
      %v3181 = vpop.f32.mrf.mxu0
      %v3182 = vadd.f32 0.0, %v3181
      %3183 = vmatmul.bf16.gmra.mxu0 %v3059
      %v3184 = vpop.f32.mrf.mxu0
      %v3185 = vadd.f32 0.0, %v3184
      %v3186 = vpop.f32.mrf.mxu0
      %v3187 = vadd.f32 0.0, %v3186
      %3188 = vmatmul.bf16.gmra.mxu0 %v3061
      %v3189 = vpop.f32.mrf.mxu0
      %v3190 = vadd.f32 0.0, %v3189
      %v3191 = vpop.f32.mrf.mxu0
      %v3192 = vadd.f32 0.0, %v3191
      %3193 = vmatmul.bf16.gmra.mxu0 %v3063
      %v3194 = vpop.f32.mrf.mxu0
      %v3195 = vadd.f32 0.0, %v3194
      %v3196 = vpop.f32.mrf.mxu0
      %v3197 = vadd.f32 0.0, %v3196
      %3198 = vmatmul.bf16.gmra.mxu0 %v3065
      %v3199 = vpop.f32.mrf.mxu0
      %v3200 = vadd.f32 0.0, %v3199
      %v3201 = vpop.f32.mrf.mxu0
      %v3202 = vadd.f32 0.0, %v3201
      %3203 = vmatmul.bf16.gmra.mxu0 %v3067
      %v3204 = vpop.f32.mrf.mxu0
      %v3205 = vadd.f32 0.0, %v3204
      %v3206 = vpop.f32.mrf.mxu0
      %v3207 = vadd.f32 0.0, %v3206
      %3208 = vmatmul.bf16.gmra.mxu0 %v3069
      %v3209 = vpop.f32.mrf.mxu0
      %v3210 = vadd.f32 0.0, %v3209
      %v3211 = vpop.f32.mrf.mxu0
      %v3212 = vadd.f32 0.0, %v3211
      %3213 = vmatmul.bf16.gmra.mxu0 %v3071
      %v3214 = vpop.f32.mrf.mxu0
      %v3215 = vadd.f32 0.0, %v3214
      %v3216 = vpop.f32.mrf.mxu0
      %v3217 = vadd.f32 0.0, %v3216
      %3218 = vmatmul.bf16.gmra.mxu0 %v3073
      %v3219 = vpop.f32.mrf.mxu0
      %v3220 = vadd.f32 0.0, %v3219
      %v3221 = vpop.f32.mrf.mxu0
      %v3222 = vadd.f32 0.0, %v3221
      %3223 = vmatmul.bf16.gmra.mxu0 %v3075
      %v3224 = vpop.f32.mrf.mxu0
      %v3225 = vadd.f32 0.0, %v3224
      %v3226 = vpop.f32.mrf.mxu0
      %v3227 = vadd.f32 0.0, %v3226
      %3228 = vmatmul.bf16.gmra.mxu0 %v3077
      %v3229 = vpop.f32.mrf.mxu0
      %v3230 = vadd.f32 0.0, %v3229
      %v3231 = vpop.f32.mrf.mxu0
      %v3232 = vadd.f32 0.0, %v3231
      %3233 = vmatmul.bf16.gmra.mxu0 %v3079
      %v3234 = vpop.f32.mrf.mxu0
      %v3235 = vadd.f32 0.0, %v3234
      %v3236 = vpop.f32.mrf.mxu0
      %v3237 = vadd.f32 0.0, %v3236
      %3238 = vmatmul.bf16.gmra.mxu0 %v3081
      %v3239 = vpop.f32.mrf.mxu0
      %v3240 = vadd.f32 0.0, %v3239
      %v3241 = vpop.f32.mrf.mxu0
      %v3242 = vadd.f32 0.0, %v3241
      %3243 = vmatmul.bf16.gmra.mxu0 %v3083
      %v3244 = vpop.f32.mrf.mxu0
      %v3245 = vadd.f32 0.0, %v3244
      %v3246 = vpop.f32.mrf.mxu0
      %v3247 = vadd.f32 0.0, %v3246
      %3248 = vdwg.mxu0
      %v3249 = vadd.f32 %v2989, %v3160
      %v3250 = vadd.f32 %v2990, %v3162
      %v3251 = vadd.f32 %v2991, %v3165
      %v3252 = vadd.f32 %v2992, %v3167
      %v3253 = vadd.f32 %v2993, %v3170
      %v3254 = vadd.f32 %v2994, %v3172
      %v3255 = vadd.f32 %v2995, %v3175
      %v3256 = vadd.f32 %v2996, %v3177
      %v3257 = vadd.f32 %v2997, %v3180
      %v3258 = vadd.f32 %v2998, %v3182
      %v3259 = vadd.f32 %v2999, %v3185
      %v3260 = vadd.f32 %v3000, %v3187
      %v3261 = vadd.f32 %v3001, %v3190
      %v3262 = vadd.f32 %v3002, %v3192
      %v3263 = vadd.f32 %v3003, %v3195
      %v3264 = vadd.f32 %v3004, %v3197
      %v3265 = vadd.f32 %v3005, %v3200
      %v3266 = vadd.f32 %v3006, %v3202
      %v3267 = vadd.f32 %v3007, %v3205
      %v3268 = vadd.f32 %v3008, %v3207
      %v3269 = vadd.f32 %v3009, %v3210
      %v3270 = vadd.f32 %v3010, %v3212
      %v3271 = vadd.f32 %v3011, %v3215
      %v3272 = vadd.f32 %v3012, %v3217
      %v3273 = vadd.f32 %v3013, %v3220
      %v3274 = vadd.f32 %v3014, %v3222
      %v3275 = vadd.f32 %v3015, %v3225
      %v3276 = vadd.f32 %v3016, %v3227
      %v3277 = vadd.f32 %v3017, %v3230
      %v3278 = vadd.f32 %v3018, %v3232
      %v3279 = vadd.f32 %v3019, %v3235
      %v3280 = vadd.f32 %v3020, %v3237
      %v3281 = vadd.f32 %v3021, %v3240
      %v3282 = vadd.f32 %v3022, %v3242
      %v3283 = vadd.f32 %v3023, %v3245
      %v3284 = vadd.f32 %v3024, %v3247
      %vm3319 = vcmask 1045504
      %v3320 = vrot.slane %v3251, 2
      %v3321 = vrot.slane %v3252, 2
      %v3322 = vsel %vm3319, %v3320, %v3321
      %v3323 = vrot.slane %v3253, 2
      %v3324 = vsel %vm3319, %v3321, %v3323
      %v3325 = vrot.slane %v3254, 2
      %v3326 = vsel %vm3319, %v3323, %v3325
      %v3327 = vrot.slane %v3255, 2
      %v3328 = vsel %vm3319, %v3325, %v3327
      %v3329 = vrot.slane %v3256, 2
      %v3330 = vsel %vm3319, %v3327, %v3329
      %v3331 = vrot.slane %v3257, 2
      %v3332 = vsel %vm3319, %v3329, %v3331
      %v3333 = vrot.slane %v3258, 2
      %v3334 = vsel %vm3319, %v3331, %v3333
      %v3335 = vrot.slane %v3259, 2
      %v3336 = vsel %vm3319, %v3333, %v3335
      %v3337 = vrot.slane %v3260, 2
      %v3338 = vsel %vm3319, %v3335, %v3337
      %v3339 = vrot.slane %v3261, 2
      %v3340 = vsel %vm3319, %v3337, %v3339
      %v3341 = vrot.slane %v3262, 2
      %v3342 = vsel %vm3319, %v3339, %v3341
      %v3343 = vrot.slane %v3263, 2
      %v3344 = vsel %vm3319, %v3341, %v3343
      %v3345 = vrot.slane %v3264, 2
      %v3346 = vsel %vm3319, %v3343, %v3345
      %v3347 = vrot.slane %v3265, 2
      %v3348 = vsel %vm3319, %v3345, %v3347
      %v3349 = vrot.slane %v3266, 2
      %v3350 = vsel %vm3319, %v3347, %v3349
      %v3351 = vrot.slane %v3267, 2
      %v3352 = vsel %vm3319, %v3349, %v3351
      %v3353 = vrot.slane %v3268, 2
      %v3354 = vsel %vm3319, %v3351, %v3353
      %v3355 = vrot.slane %v3269, 2
      %v3356 = vsel %vm3319, %v3353, %v3355
      %v3357 = vrot.slane %v3270, 2
      %v3358 = vsel %vm3319, %v3355, %v3357
      %v3359 = vrot.slane %v3271, 2
      %v3360 = vsel %vm3319, %v3357, %v3359
      %v3361 = vrot.slane %v3272, 2
      %v3362 = vsel %vm3319, %v3359, %v3361
      %v3363 = vrot.slane %v3273, 2
      %v3364 = vsel %vm3319, %v3361, %v3363
      %v3365 = vrot.slane %v3274, 2
      %v3366 = vsel %vm3319, %v3363, %v3365
      %v3367 = vrot.slane %v3275, 2
      %v3368 = vsel %vm3319, %v3365, %v3367
      %v3369 = vrot.slane %v3276, 2
      %v3370 = vsel %vm3319, %v3367, %v3369
      %v3371 = vrot.slane %v3277, 2
      %v3372 = vsel %vm3319, %v3369, %v3371
      %v3373 = vrot.slane %v3278, 2
      %v3374 = vsel %vm3319, %v3371, %v3373
      %v3375 = vrot.slane %v3279, 2
      %v3376 = vsel %vm3319, %v3373, %v3375
      %v3377 = vrot.slane %v3280, 2
      %v3378 = vsel %vm3319, %v3375, %v3377
      %v3379 = vrot.slane %v3281, 2
      %v3380 = vsel %vm3319, %v3377, %v3379
      %v3381 = vrot.slane %v3282, 2
      %v3382 = vsel %vm3319, %v3379, %v3381
      %v3383 = vrot.slane %v3283, 2
      %v3384 = vsel %vm3319, %v3381, %v3383
      %v3385 = vrot.slane %v3284, 2
      %v3386 = vsel %vm3319, %v3383, %v3385
      %v3421 = vmax.f32 %v3249, %v3322
      %v3422 = vmax.f32 %v3250, %v3324
      %v3423 = vmax.f32 %v3251, %v3326
      %v3424 = vmax.f32 %v3252, %v3328
      %v3425 = vmax.f32 %v3253, %v3330
      %v3426 = vmax.f32 %v3254, %v3332
      %v3427 = vmax.f32 %v3255, %v3334
      %v3428 = vmax.f32 %v3256, %v3336
      %v3429 = vmax.f32 %v3257, %v3338
      %v3430 = vmax.f32 %v3258, %v3340
      %v3431 = vmax.f32 %v3259, %v3342
      %v3432 = vmax.f32 %v3260, %v3344
      %v3433 = vmax.f32 %v3261, %v3346
      %v3434 = vmax.f32 %v3262, %v3348
      %v3435 = vmax.f32 %v3263, %v3350
      %v3436 = vmax.f32 %v3264, %v3352
      %v3437 = vmax.f32 %v3265, %v3354
      %v3438 = vmax.f32 %v3266, %v3356
      %v3439 = vmax.f32 %v3267, %v3358
      %v3440 = vmax.f32 %v3268, %v3360
      %v3441 = vmax.f32 %v3269, %v3362
      %v3442 = vmax.f32 %v3270, %v3364
      %v3443 = vmax.f32 %v3271, %v3366
      %v3444 = vmax.f32 %v3272, %v3368
      %v3445 = vmax.f32 %v3273, %v3370
      %v3446 = vmax.f32 %v3274, %v3372
      %v3447 = vmax.f32 %v3275, %v3374
      %v3448 = vmax.f32 %v3276, %v3376
      %v3449 = vmax.f32 %v3277, %v3378
      %v3450 = vmax.f32 %v3278, %v3380
      %v3451 = vmax.f32 %v3279, %v3382
      %v3452 = vmax.f32 %v3280, %v3384
      %v3453 = vmax.f32 %v3281, %v3386
      %v3454 = vmax.f32 %v3282, %v3385
      %vm3489 = vcmask 1046528
      %v3490 = vrot.slane %v3421, 1
      %v3491 = vrot.slane %v3422, 1
      %v3492 = vsel %vm3489, %v3490, %v3491
      %v3493 = vrot.slane %v3423, 1
      %v3494 = vsel %vm3489, %v3491, %v3493
      %v3495 = vrot.slane %v3424, 1
      %v3496 = vsel %vm3489, %v3493, %v3495
      %v3497 = vrot.slane %v3425, 1
      %v3498 = vsel %vm3489, %v3495, %v3497
      %v3499 = vrot.slane %v3426, 1
      %v3500 = vsel %vm3489, %v3497, %v3499
      %v3501 = vrot.slane %v3427, 1
      %v3502 = vsel %vm3489, %v3499, %v3501
      %v3503 = vrot.slane %v3428, 1
      %v3504 = vsel %vm3489, %v3501, %v3503
      %v3505 = vrot.slane %v3429, 1
      %v3506 = vsel %vm3489, %v3503, %v3505
      %v3507 = vrot.slane %v3430, 1
      %v3508 = vsel %vm3489, %v3505, %v3507
      %v3509 = vrot.slane %v3431, 1
      %v3510 = vsel %vm3489, %v3507, %v3509
      %v3511 = vrot.slane %v3432, 1
      %v3512 = vsel %vm3489, %v3509, %v3511
      %v3513 = vrot.slane %v3433, 1
      %v3514 = vsel %vm3489, %v3511, %v3513
      %v3515 = vrot.slane %v3434, 1
      %v3516 = vsel %vm3489, %v3513, %v3515
      %v3517 = vrot.slane %v3435, 1
      %v3518 = vsel %vm3489, %v3515, %v3517
      %v3519 = vrot.slane %v3436, 1
      %v3520 = vsel %vm3489, %v3517, %v3519
      %v3521 = vrot.slane %v3437, 1
      %v3522 = vsel %vm3489, %v3519, %v3521
      %v3523 = vrot.slane %v3438, 1
      %v3524 = vsel %vm3489, %v3521, %v3523
      %v3525 = vrot.slane %v3439, 1
      %v3526 = vsel %vm3489, %v3523, %v3525
      %v3527 = vrot.slane %v3440, 1
      %v3528 = vsel %vm3489, %v3525, %v3527
      %v3529 = vrot.slane %v3441, 1
      %v3530 = vsel %vm3489, %v3527, %v3529
      %v3531 = vrot.slane %v3442, 1
      %v3532 = vsel %vm3489, %v3529, %v3531
      %v3533 = vrot.slane %v3443, 1
      %v3534 = vsel %vm3489, %v3531, %v3533
      %v3535 = vrot.slane %v3444, 1
      %v3536 = vsel %vm3489, %v3533, %v3535
      %v3537 = vrot.slane %v3445, 1
      %v3538 = vsel %vm3489, %v3535, %v3537
      %v3539 = vrot.slane %v3446, 1
      %v3540 = vsel %vm3489, %v3537, %v3539
      %v3541 = vrot.slane %v3447, 1
      %v3542 = vsel %vm3489, %v3539, %v3541
      %v3543 = vrot.slane %v3448, 1
      %v3544 = vsel %vm3489, %v3541, %v3543
      %v3545 = vrot.slane %v3449, 1
      %v3546 = vsel %vm3489, %v3543, %v3545
      %v3547 = vrot.slane %v3450, 1
      %v3548 = vsel %vm3489, %v3545, %v3547
      %v3549 = vrot.slane %v3451, 1
      %v3550 = vsel %vm3489, %v3547, %v3549
      %v3551 = vrot.slane %v3452, 1
      %v3552 = vsel %vm3489, %v3549, %v3551
      %v3553 = vrot.slane %v3453, 1
      %v3554 = vsel %vm3489, %v3551, %v3553
      %v3555 = vrot.slane %v3454, 1
      %v3556 = vsel %vm3489, %v3553, %v3555
      %v3591 = vmax.f32 %v3421, %v3492
      %v3592 = vmax.f32 %v3422, %v3494
      %v3593 = vmax.f32 %v3423, %v3496
      %v3594 = vmax.f32 %v3424, %v3498
      %v3595 = vmax.f32 %v3425, %v3500
      %v3596 = vmax.f32 %v3426, %v3502
      %v3597 = vmax.f32 %v3427, %v3504
      %v3598 = vmax.f32 %v3428, %v3506
      %v3599 = vmax.f32 %v3429, %v3508
      %v3600 = vmax.f32 %v3430, %v3510
      %v3601 = vmax.f32 %v3431, %v3512
      %v3602 = vmax.f32 %v3432, %v3514
      %v3603 = vmax.f32 %v3433, %v3516
      %v3604 = vmax.f32 %v3434, %v3518
      %v3605 = vmax.f32 %v3435, %v3520
      %v3606 = vmax.f32 %v3436, %v3522
      %v3607 = vmax.f32 %v3437, %v3524
      %v3608 = vmax.f32 %v3438, %v3526
      %v3609 = vmax.f32 %v3439, %v3528
      %v3610 = vmax.f32 %v3440, %v3530
      %v3611 = vmax.f32 %v3441, %v3532
      %v3612 = vmax.f32 %v3442, %v3534
      %v3613 = vmax.f32 %v3443, %v3536
      %v3614 = vmax.f32 %v3444, %v3538
      %v3615 = vmax.f32 %v3445, %v3540
      %v3616 = vmax.f32 %v3446, %v3542
      %v3617 = vmax.f32 %v3447, %v3544
      %v3618 = vmax.f32 %v3448, %v3546
      %v3619 = vmax.f32 %v3449, %v3548
      %v3620 = vmax.f32 %v3450, %v3550
      %v3621 = vmax.f32 %v3451, %v3552
      %v3622 = vmax.f32 %v3452, %v3554
      %v3623 = vmax.f32 %v3453, %v3556
      %v3624 = vmax.f32 %v3454, %v3555
      %v3625 = vld [vmem:[%s2] sm:$0x1]
      %v3626 = vperm.slane %v3625, 0
      %v3627 = vadd.f32 %v3591, %v3626
      %v3628 = vadd.f32 %v3592, %v3626
      %v3629 = vadd.f32 %v3593, %v3626
      %v3630 = vadd.f32 %v3594, %v3626
      %v3631 = vadd.f32 %v3595, %v3626
      %v3632 = vadd.f32 %v3596, %v3626
      %v3633 = vadd.f32 %v3597, %v3626
      %v3634 = vadd.f32 %v3598, %v3626
      %v3635 = vadd.f32 %v3599, %v3626
      %v3636 = vadd.f32 %v3600, %v3626
      %v3637 = vadd.f32 %v3601, %v3626
      %v3638 = vadd.f32 %v3602, %v3626
      %v3639 = vadd.f32 %v3603, %v3626
      %v3640 = vadd.f32 %v3604, %v3626
      %v3641 = vadd.f32 %v3605, %v3626
      %v3642 = vadd.f32 %v3606, %v3626
      %v3643 = vadd.f32 %v3607, %v3626
      %v3644 = vadd.f32 %v3608, %v3626
      %v3645 = vadd.f32 %v3609, %v3626
      %v3646 = vadd.f32 %v3610, %v3626
      %v3647 = vadd.f32 %v3611, %v3626
      %v3648 = vadd.f32 %v3612, %v3626
      %v3649 = vadd.f32 %v3613, %v3626
      %v3650 = vadd.f32 %v3614, %v3626
      %v3651 = vadd.f32 %v3615, %v3626
      %v3652 = vadd.f32 %v3616, %v3626
      %v3653 = vadd.f32 %v3617, %v3626
      %v3654 = vadd.f32 %v3618, %v3626
      %v3655 = vadd.f32 %v3619, %v3626
      %v3656 = vadd.f32 %v3620, %v3626
      %v3657 = vadd.f32 %v3621, %v3626
      %v3658 = vadd.f32 %v3622, %v3626
      %v3659 = vadd.f32 %v3623, %v3626
      %v3660 = vadd.f32 %v3624, %v3626
      %v3661 = vmax.f32 %v3627, 0.0
      %v3662 = vmax.f32 %v3628, 0.0
      %v3663 = vmax.f32 %v3629, 0.0
      %v3664 = vmax.f32 %v3630, 0.0
      %v3665 = vmax.f32 %v3631, 0.0
      %v3666 = vmax.f32 %v3632, 0.0
      %v3667 = vmax.f32 %v3633, 0.0
      %v3668 = vmax.f32 %v3634, 0.0
      %v3669 = vmax.f32 %v3635, 0.0
      %v3670 = vmax.f32 %v3636, 0.0
      %v3671 = vmax.f32 %v3637, 0.0
      %v3672 = vmax.f32 %v3638, 0.0
      %v3673 = vmax.f32 %v3639, 0.0
      %v3674 = vmax.f32 %v3640, 0.0
      %v3675 = vmax.f32 %v3641, 0.0
      %v3676 = vmax.f32 %v3642, 0.0
      %v3677 = vmax.f32 %v3643, 0.0
      %v3678 = vmax.f32 %v3644, 0.0
      %v3679 = vmax.f32 %v3645, 0.0
      %v3680 = vmax.f32 %v3646, 0.0
      %v3681 = vmax.f32 %v3647, 0.0
      %v3682 = vmax.f32 %v3648, 0.0
      %v3683 = vmax.f32 %v3649, 0.0
      %v3684 = vmax.f32 %v3650, 0.0
      %v3685 = vmax.f32 %v3651, 0.0
      %v3686 = vmax.f32 %v3652, 0.0
      %v3687 = vmax.f32 %v3653, 0.0
      %v3688 = vmax.f32 %v3654, 0.0
      %v3689 = vmax.f32 %v3655, 0.0
      %v3690 = vmax.f32 %v3656, 0.0
      %v3691 = vmax.f32 %v3657, 0.0
      %v3692 = vmax.f32 %v3658, 0.0
      %v3693 = vmax.f32 %v3659, 0.0
      %v3694 = vmax.f32 %v3660, 0.0
      %v3695 = vpack.c.bf16 %v3662, %v3661
      %v3696 = vpack.c.bf16 %v3664, %v3663
      %v3697 = vpack.c.bf16 %v3666, %v3665
      %v3698 = vpack.c.bf16 %v3668, %v3667
      %v3699 = vpack.c.bf16 %v3670, %v3669
      %v3700 = vpack.c.bf16 %v3672, %v3671
      %v3701 = vpack.c.bf16 %v3674, %v3673
      %v3702 = vpack.c.bf16 %v3676, %v3675
      %v3703 = vpack.c.bf16 %v3678, %v3677
      %v3704 = vpack.c.bf16 %v3680, %v3679
      %v3705 = vpack.c.bf16 %v3682, %v3681
      %v3706 = vpack.c.bf16 %v3684, %v3683
      %v3707 = vpack.c.bf16 %v3686, %v3685
      %v3708 = vpack.c.bf16 %v3688, %v3687
      %v3709 = vpack.c.bf16 %v3690, %v3689
      %v3710 = vpack.c.bf16 %v3692, %v3691
      %v3711 = vpack.c.bf16 %v3694, %v3693
      %v3712 = vld [vmem:[%s3] sm:$0xff]
      %v3713 = vld [vmem:[%s3 + $0x8] sm:$0xf]
      %v3714 = vld [vmem:[%s3 + $0xc] sm:$0xff]
      %v3715 = vld [vmem:[%s3 + $0x14] sm:$0xf]
      %v3716 = vld [vmem:[%s3 + $0x18] sm:$0xff]
      %v3717 = vld [vmem:[%s3 + $0x20] sm:$0xf]
      %v3718 = vld [vmem:[%s3 + $0x24] sm:$0xff]
      %v3719 = vld [vmem:[%s3 + $0x2c] sm:$0xf]
      %v3720 = vld [vmem:[%s3 + $0x30] sm:$0xff]
      %v3721 = vld [vmem:[%s3 + $0x38] sm:$0xf]
      %v3722 = vld [vmem:[%s3 + $0x3c] sm:$0xff]
      %v3723 = vld [vmem:[%s3 + $0x44] sm:$0xf]
      %v3724 = vld [vmem:[%s3 + $0x48] sm:$0xff]
      %v3725 = vld [vmem:[%s3 + $0x50] sm:$0xf]
      %v3726 = vld [vmem:[%s3 + $0x54] sm:$0xff]
      %v3727 = vld [vmem:[%s3 + $0x5c] sm:$0xf]
      %v3728 = vld [vmem:[%s3 + $0x60] sm:$0xff]
      %v3729 = vld [vmem:[%s3 + $0x68] sm:$0xf]
      %v3730 = vld [vmem:[%s3 + $0x6c] sm:$0xff]
      %v3731 = vld [vmem:[%s3 + $0x74] sm:$0xf]
      %v3732 = vld [vmem:[%s3 + $0x78] sm:$0xff]
      %v3733 = vld [vmem:[%s3 + $0x80] sm:$0xf]
      %v3734 = vld [vmem:[%s3 + $0x84] sm:$0xff]
      %v3735 = vld [vmem:[%s3 + $0x8c] sm:$0xf]
      %v3736 = vld [vmem:[%s3 + $0x90] sm:$0x77]
      %v3737 = vld [vmem:[%s3 + $0x98] sm:$0x7]
      %v3764 = vunpack.c.l.b16 %v3712
      %v3765 = vunpack.c.h.b16 %v3712
      %v3766 = vunpack.c.l.b16 %v3713
      %v3767 = vunpack.c.l.b16 %v3714
      %v3768 = vunpack.c.h.b16 %v3714
      %v3769 = vunpack.c.l.b16 %v3715
      %v3770 = vunpack.c.l.b16 %v3716
      %v3771 = vunpack.c.h.b16 %v3716
      %v3772 = vunpack.c.l.b16 %v3717
      %v3773 = vunpack.c.l.b16 %v3718
      %v3774 = vunpack.c.h.b16 %v3718
      %v3775 = vunpack.c.l.b16 %v3719
      %v3776 = vunpack.c.l.b16 %v3720
      %v3777 = vunpack.c.h.b16 %v3720
      %v3778 = vunpack.c.l.b16 %v3721
      %v3779 = vunpack.c.l.b16 %v3722
      %v3780 = vunpack.c.h.b16 %v3722
      %v3781 = vunpack.c.l.b16 %v3723
      %v3782 = vunpack.c.l.b16 %v3724
      %v3783 = vunpack.c.h.b16 %v3724
      %v3784 = vunpack.c.l.b16 %v3725
      %v3785 = vunpack.c.l.b16 %v3726
      %v3786 = vunpack.c.h.b16 %v3726
      %v3787 = vunpack.c.l.b16 %v3727
      %v3788 = vunpack.c.l.b16 %v3728
      %v3789 = vunpack.c.h.b16 %v3728
      %v3790 = vunpack.c.l.b16 %v3729
      %v3791 = vunpack.c.l.b16 %v3730
      %v3792 = vunpack.c.h.b16 %v3730
      %v3793 = vunpack.c.l.b16 %v3731
      %v3794 = vunpack.c.l.b16 %v3732
      %v3795 = vunpack.c.h.b16 %v3732
      %v3796 = vunpack.c.l.b16 %v3733
      %v3797 = vunpack.c.l.b16 %v3734
      %v3798 = vunpack.c.h.b16 %v3734
      %v3799 = vunpack.c.l.b16 %v3735
      %v3800 = vunpack.c.l.b16 %v3736
      %v3801 = vunpack.c.h.b16 %v3736
      %v3802 = vunpack.c.l.b16 %v3737
      %v3803 = vpack.c.b16 %v3767, %v3764
      %v3804 = vpack.c.b16 %v3768, %v3765
      %v3805 = vpack.c.b16 %v3769, %v3766
      %v3806 = vpack.c.b16 %v3773, %v3770
      %v3807 = vpack.c.b16 %v3774, %v3771
      %v3808 = vpack.c.b16 %v3775, %v3772
      %v3809 = vpack.c.b16 %v3779, %v3776
      %v3810 = vpack.c.b16 %v3780, %v3777
      %v3811 = vpack.c.b16 %v3781, %v3778
      %v3812 = vpack.c.b16 %v3785, %v3782
      %v3813 = vpack.c.b16 %v3786, %v3783
      %v3814 = vpack.c.b16 %v3787, %v3784
      %v3815 = vpack.c.b16 %v3791, %v3788
      %v3816 = vpack.c.b16 %v3792, %v3789
      %v3817 = vpack.c.b16 %v3793, %v3790
      %v3818 = vpack.c.b16 %v3797, %v3794
      %v3819 = vpack.c.b16 %v3798, %v3795
      %v3820 = vpack.c.b16 %v3799, %v3796
      %v3821 = vpack.c.b16 %v3800, %v3800
      %v3822 = vpack.c.b16 %v3801, %v3801
      %v3823 = vpack.c.b16 %v3802, %v3802
      %vm3838 = vcmask 105472
      %v3840 = vsel %vm3838, %v3805, 0
      %v3843 = vsel %vm3838, %v3808, 0
      %v3846 = vsel %vm3838, %v3811, 0
      %v3849 = vsel %vm3838, %v3814, 0
      %v3852 = vsel %vm3838, %v3817, 0
      %v3855 = vsel %vm3838, %v3820, 0
      %v3858 = vsel %vm3838, %v3823, 0
      %v3860 = vsel %vm3319, 4294967295, 65535
      %v3861 = vsel %vm3489, %v3860, 0
      %v3863 = vand.u32 %v3711, %v3861
      %3865 = vmatpush.bf16.msra.mxu0 %v3702
      %3866 = vmatpush.bf16.msra.mxu0 %v3701
      %3867 = vmatpush.bf16.msra.mxu0 %v3700
      %3868 = vmatpush.bf16.msra.mxu0 %v3699
      %3869 = vmatpush.bf16.msra.mxu0 %v3698
      %3870 = vmatpush.bf16.msra.mxu0 %v3697
      %3871 = vmatpush.bf16.msra.mxu0 %v3696
      %3872 = vmatpush.bf16.msra.mxu0 %v3695
      %3873 = vmatmul.bf16.gmra.mxu0 %v3803
      %v3874 = vpop.f32.mrf.mxu0
      %v3875 = vadd.f32 0.0, %v3874
      %v3876 = vpop.f32.mrf.mxu0
      %v3877 = vadd.f32 0.0, %v3876
      %3878 = vmatmul.bf16.gmra.mxu0 %v3806
      %v3879 = vpop.f32.mrf.mxu0
      %v3880 = vadd.f32 0.0, %v3879
      %v3881 = vpop.f32.mrf.mxu0
      %v3882 = vadd.f32 0.0, %v3881
      %3883 = vmatmul.bf16.gmra.mxu0 %v3809
      %v3884 = vpop.f32.mrf.mxu0
      %v3885 = vadd.f32 0.0, %v3884
      %v3886 = vpop.f32.mrf.mxu0
      %v3887 = vadd.f32 0.0, %v3886
      %3888 = vmatmul.bf16.gmra.mxu0 %v3812
      %v3889 = vpop.f32.mrf.mxu0
      %v3890 = vadd.f32 0.0, %v3889
      %v3891 = vpop.f32.mrf.mxu0
      %v3892 = vadd.f32 0.0, %v3891
      %3893 = vmatmul.bf16.gmra.mxu0 %v3815
      %v3894 = vpop.f32.mrf.mxu0
      %v3895 = vadd.f32 0.0, %v3894
      %v3896 = vpop.f32.mrf.mxu0
      %v3897 = vadd.f32 0.0, %v3896
      %3898 = vmatmul.bf16.gmra.mxu0 %v3818
      %v3899 = vpop.f32.mrf.mxu0
      %v3900 = vadd.f32 0.0, %v3899
      %v3901 = vpop.f32.mrf.mxu0
      %v3902 = vadd.f32 0.0, %v3901
      %3903 = vmatmul.bf16.gmra.mxu0 %v3821
      %v3904 = vpop.f32.mrf.mxu0
      %v3905 = vadd.f32 0.0, %v3904
      %v3906 = vpop.f32.mrf.mxu0
      %3907 = vdwg.mxu0
      %3908 = vmatpush.bf16.msra.mxu0 %v3710
      %3909 = vmatpush.bf16.msra.mxu0 %v3709
      %3910 = vmatpush.bf16.msra.mxu0 %v3708
      %3911 = vmatpush.bf16.msra.mxu0 %v3707
      %3912 = vmatpush.bf16.msra.mxu0 %v3706
      %3913 = vmatpush.bf16.msra.mxu0 %v3705
      %3914 = vmatpush.bf16.msra.mxu0 %v3704
      %3915 = vmatpush.bf16.msra.mxu0 %v3703
      %3916 = vmatmul.bf16.gmra.mxu0 %v3804
      %v3917 = vpop.f32.mrf.mxu0
      %v3918 = vadd.f32 %v3875, %v3917
      %v3919 = vpop.f32.mrf.mxu0
      %v3920 = vadd.f32 %v3877, %v3919
      %3921 = vmatmul.bf16.gmra.mxu0 %v3807
      %v3922 = vpop.f32.mrf.mxu0
      %v3923 = vadd.f32 %v3880, %v3922
      %v3924 = vpop.f32.mrf.mxu0
      %v3925 = vadd.f32 %v3882, %v3924
      %3926 = vmatmul.bf16.gmra.mxu0 %v3810
      %v3927 = vpop.f32.mrf.mxu0
      %v3928 = vadd.f32 %v3885, %v3927
      %v3929 = vpop.f32.mrf.mxu0
      %v3930 = vadd.f32 %v3887, %v3929
      %3931 = vmatmul.bf16.gmra.mxu0 %v3813
      %v3932 = vpop.f32.mrf.mxu0
      %v3933 = vadd.f32 %v3890, %v3932
      %v3934 = vpop.f32.mrf.mxu0
      %v3935 = vadd.f32 %v3892, %v3934
      %3936 = vmatmul.bf16.gmra.mxu0 %v3816
      %v3937 = vpop.f32.mrf.mxu0
      %v3938 = vadd.f32 %v3895, %v3937
      %v3939 = vpop.f32.mrf.mxu0
      %v3940 = vadd.f32 %v3897, %v3939
      %3941 = vmatmul.bf16.gmra.mxu0 %v3819
      %v3942 = vpop.f32.mrf.mxu0
      %v3943 = vadd.f32 %v3900, %v3942
      %v3944 = vpop.f32.mrf.mxu0
      %v3945 = vadd.f32 %v3902, %v3944
      %3946 = vmatmul.bf16.gmra.mxu0 %v3822
      %v3947 = vpop.f32.mrf.mxu0
      %v3948 = vadd.f32 %v3905, %v3947
      %v3949 = vpop.f32.mrf.mxu0
      %3950 = vdwg.mxu0
      %3951 = vmatpush.bf16.msra.mxu0 0
      %3952 = vmatpush.bf16.msra.mxu0 0
      %3953 = vmatpush.bf16.msra.mxu0 0
      %3954 = vmatpush.bf16.msra.mxu0 0
      %3955 = vmatpush.bf16.msra.mxu0 0
      %3956 = vmatpush.bf16.msra.mxu0 0
      %3957 = vmatpush.bf16.msra.mxu0 0
      %3958 = vmatpush.bf16.msra.mxu0 %v3863
      %3959 = vmatmul.bf16.gmra.mxu0 %v3840
      %v3960 = vpop.f32.mrf.mxu0
      %v3961 = vadd.f32 %v3918, %v3960
      %v3962 = vpop.f32.mrf.mxu0
      %v3963 = vadd.f32 %v3920, %v3962
      %3964 = vmatmul.bf16.gmra.mxu0 %v3843
      %v3965 = vpop.f32.mrf.mxu0
      %v3966 = vadd.f32 %v3923, %v3965
      %v3967 = vpop.f32.mrf.mxu0
      %v3968 = vadd.f32 %v3925, %v3967
      %3969 = vmatmul.bf16.gmra.mxu0 %v3846
      %v3970 = vpop.f32.mrf.mxu0
      %v3971 = vadd.f32 %v3928, %v3970
      %v3972 = vpop.f32.mrf.mxu0
      %v3973 = vadd.f32 %v3930, %v3972
      %3974 = vmatmul.bf16.gmra.mxu0 %v3849
      %v3975 = vpop.f32.mrf.mxu0
      %v3976 = vadd.f32 %v3933, %v3975
      %v3977 = vpop.f32.mrf.mxu0
      %v3978 = vadd.f32 %v3935, %v3977
      %3979 = vmatmul.bf16.gmra.mxu0 %v3852
      %v3980 = vpop.f32.mrf.mxu0
      %v3981 = vadd.f32 %v3938, %v3980
      %v3982 = vpop.f32.mrf.mxu0
      %v3983 = vadd.f32 %v3940, %v3982
      %3984 = vmatmul.bf16.gmra.mxu0 %v3855
      %v3985 = vpop.f32.mrf.mxu0
      %v3986 = vadd.f32 %v3943, %v3985
      %v3987 = vpop.f32.mrf.mxu0
      %v3988 = vadd.f32 %v3945, %v3987
      %3989 = vmatmul.bf16.gmra.mxu0 %v3858
      %v3990 = vpop.f32.mrf.mxu0
      %v3991 = vadd.f32 %v3948, %v3990
      %v3992 = vpop.f32.mrf.mxu0
      %3993 = vdwg.mxu0
      %v3994 = vpack.c.bf16 %v3961, %v3961
      %v3995 = vpack.c.bf16 %v3963, %v3963
      %v3996 = vpack.c.bf16 %v3966, %v3966
      %v3997 = vpack.c.bf16 %v3968, %v3968
      %v3998 = vpack.c.bf16 %v3971, %v3971
      %v3999 = vpack.c.bf16 %v3973, %v3973
      %v4000 = vpack.c.bf16 %v3976, %v3976
      %v4001 = vpack.c.bf16 %v3978, %v3978
      %v4002 = vpack.c.bf16 %v3981, %v3981
      %v4003 = vpack.c.bf16 %v3983, %v3983
      %v4004 = vpack.c.bf16 %v3986, %v3986
      %v4005 = vpack.c.bf16 %v3988, %v3988
      %v4006 = vpack.c.bf16 %v3991, %v3991
      %4007 = vst [vmem:[#allocation2] sm:$0xf] %v3994
      %4008 = vst [vmem:[#allocation2 + $0x4] sm:$0xf] %v3995
      %4009 = vst [vmem:[#allocation2 + $0x8] sm:$0xf] %v3996
      %4010 = vst [vmem:[#allocation2 + $0xc] sm:$0xf] %v3997
      %4011 = vst [vmem:[#allocation2 + $0x10] sm:$0xf] %v3998
      %4012 = vst [vmem:[#allocation2 + $0x14] sm:$0xf] %v3999
      %4013 = vst [vmem:[#allocation2 + $0x18] sm:$0xf] %v4000
      %4014 = vst [vmem:[#allocation2 + $0x1c] sm:$0xf] %v4001
      %4015 = vst [vmem:[#allocation2 + $0x20] sm:$0xf] %v4002
      %4016 = vst [vmem:[#allocation2 + $0x24] sm:$0xf] %v4003
      %4017 = vst [vmem:[#allocation2 + $0x28] sm:$0xf] %v4004
      %4018 = vst [vmem:[#allocation2 + $0x2c] sm:$0xf] %v4005
      %4019 = vst [vmem:[#allocation2 + $0x30] sm:$0x7] %v4006
      %v4020 = vld [vmem:[#allocation2] sm:$0xf]
      %v4021 = vld [vmem:[#allocation2 + $0x4] sm:$0xf]
      %v4022 = vld [vmem:[#allocation2 + $0x8] sm:$0xf]
      %v4023 = vld [vmem:[#allocation2 + $0xc] sm:$0xf]
      %v4024 = vld [vmem:[#allocation2 + $0x10] sm:$0xf]
      %v4025 = vld [vmem:[#allocation2 + $0x14] sm:$0xf]
      %v4026 = vld [vmem:[#allocation2 + $0x18] sm:$0xf]
      %v4027 = vld [vmem:[#allocation2 + $0x1c] sm:$0xf]
      %v4028 = vld [vmem:[#allocation2 + $0x20] sm:$0xf]
      %v4029 = vld [vmem:[#allocation2 + $0x24] sm:$0xf]
      %s4030 = scalar_lea.vmem %s1, 576
      %v4031 = vld [vmem:[%s4030] sm:$0xf]
      %v4032 = vld [vmem:[%s4030 + $0x4] sm:$0xf]
      %v4033 = vld [vmem:[%s4030 + $0x8] sm:$0xf]
      %v4034 = vld [vmem:[%s4030 + $0xc] sm:$0xf]
      %v4035 = vld [vmem:[%s4030 + $0x10] sm:$0xf]
      %v4036 = vld [vmem:[%s4030 + $0x14] sm:$0xf]
      %v4037 = vld [vmem:[%s4030 + $0x18] sm:$0xf]
      %v4038 = vld [vmem:[%s4030 + $0x1c] sm:$0xf]
      %v4039 = vld [vmem:[%s4030 + $0x20] sm:$0xf]
      %v4040 = vld [vmem:[%s4030 + $0x24] sm:$0xf]
      %v4041 = vld [vmem:[%s4030 + $0x28] sm:$0xf]
      %v4042 = vld [vmem:[%s4030 + $0x2c] sm:$0xf]
      %v4043 = vld [vmem:[%s4030 + $0x30] sm:$0xf]
      %v4044 = vld [vmem:[%s4030 + $0x34] sm:$0xf]
      %v4045 = vld [vmem:[%s4030 + $0x38] sm:$0xf]
      %v4046 = vld [vmem:[%s4030 + $0x3c] sm:$0xf]
      %v4047 = vld [vmem:[#allocation2 + $0x28] sm:$0x1]
      %s4048 = scalar_lea.vmem %s1, 640
      %v4049 = vld [vmem:[%s4048] sm:$0xf]
      %v4050 = vld [vmem:[%s4048 + $0x4] sm:$0xf]
      %v4051 = vld [vmem:[%s4048 + $0x8] sm:$0xf]
      %v4052 = vld [vmem:[%s4048 + $0xc] sm:$0xf]
      %v4053 = vld [vmem:[%s4048 + $0x10] sm:$0xf]
      %v4054 = vld [vmem:[%s4048 + $0x14] sm:$0xf]
      %v4055 = vld [vmem:[%s4048 + $0x18] sm:$0xf]
      %v4056 = vld [vmem:[%s4048 + $0x1c] sm:$0xf]
      %v4057 = vld [vmem:[%s4048 + $0x20] sm:$0xf]
      %v4058 = vld [vmem:[%s4048 + $0x24] sm:$0xf]
      %v4059 = vld [vmem:[%s4048 + $0x28] sm:$0xf]
      %v4060 = vld [vmem:[%s4048 + $0x2c] sm:$0xf]
      %v4061 = vld [vmem:[%s4048 + $0x30] sm:$0xf]
      %v4062 = vld [vmem:[%s4048 + $0x34] sm:$0xf]
      %v4063 = vld [vmem:[%s4048 + $0x38] sm:$0xf]
      %v4064 = vld [vmem:[%s4048 + $0x3c] sm:$0xf]
      %v4076 = vunpack.c.l.b16 %v4020
      %v4077 = vunpack.c.l.b16 %v4021
      %v4078 = vunpack.c.l.b16 %v4022
      %v4079 = vunpack.c.l.b16 %v4023
      %v4080 = vunpack.c.l.b16 %v4024
      %v4081 = vunpack.c.l.b16 %v4025
      %v4082 = vunpack.c.l.b16 %v4026
      %v4083 = vunpack.c.l.b16 %v4027
      %v4084 = vunpack.c.l.b16 %v4028
      %v4085 = vunpack.c.l.b16 %v4029
      %v4086 = vunpack.c.l.b16 %v4047
      %v4087 = vpack.c.b16 %v4077, %v4076
      %v4088 = vpack.c.b16 %v4079, %v4078
      %v4089 = vpack.c.b16 %v4081, %v4080
      %v4090 = vpack.c.b16 %v4083, %v4082
      %v4091 = vpack.c.b16 %v4085, %v4084
      %v4092 = vpack.c.b16 %v4086, %v4086
      %v4094 = vshrl.u32 %v4087, 16
      %v4096 = vshll.u32 %v4087, 16
      %v4098 = vrot.slane %v4096, 1
      %v4099 = vor.u32 %v4094, %v4098
      %v4101 = vshll.u32 %v4088, 16
      %v4103 = vrot.slane %v4101, 1
      %v4104 = vsel %vm470, %v4099, %v4103
      %v4105 = vshrl.u32 %v4088, 16
      %v4107 = vor.u32 %v4105, %v4103
      %v4109 = vshll.u32 %v4089, 16
      %v4111 = vrot.slane %v4109, 1
      %v4112 = vsel %vm470, %v4107, %v4111
      %v4113 = vshrl.u32 %v4089, 16
      %v4115 = vor.u32 %v4113, %v4111
      %v4117 = vshll.u32 %v4090, 16
      %v4119 = vrot.slane %v4117, 1
      %v4120 = vsel %vm470, %v4115, %v4119
      %v4121 = vshrl.u32 %v4090, 16
      %v4123 = vor.u32 %v4121, %v4119
      %v4125 = vshll.u32 %v4091, 16
      %v4127 = vrot.slane %v4125, 1
      %v4128 = vsel %vm470, %v4123, %v4127
      %v4129 = vshrl.u32 %v4091, 16
      %v4131 = vor.u32 %v4129, %v4127
      %v4133 = vshll.u32 %v4092, 16
      %v4135 = vrot.slane %v4133, 1
      %v4136 = vsel %vm470, %v4131, %v4135
      %v4158 = vunpack.c.l.b16 %v4049
      %v4159 = vunpack.c.l.b16 %v4050
      %v4160 = vunpack.c.l.b16 %v4051
      %v4161 = vunpack.c.l.b16 %v4052
      %v4162 = vunpack.c.l.b16 %v4053
      %v4163 = vunpack.c.l.b16 %v4054
      %v4164 = vunpack.c.l.b16 %v4055
      %v4165 = vunpack.c.l.b16 %v4056
      %v4166 = vunpack.c.l.b16 %v4057
      %v4167 = vunpack.c.l.b16 %v4058
      %v4168 = vunpack.c.l.b16 %v4059
      %v4169 = vunpack.c.l.b16 %v4060
      %v4170 = vunpack.c.l.b16 %v4061
      %v4171 = vunpack.c.l.b16 %v4062
      %v4172 = vunpack.c.l.b16 %v4063
      %v4173 = vunpack.c.l.b16 %v4064
      %v4174 = vpack.c.b16 %v4159, %v4158
      %v4175 = vpack.c.b16 %v4161, %v4160
      %v4176 = vpack.c.b16 %v4163, %v4162
      %v4177 = vpack.c.b16 %v4165, %v4164
      %v4178 = vpack.c.b16 %v4167, %v4166
      %v4179 = vpack.c.b16 %v4169, %v4168
      %v4180 = vpack.c.b16 %v4171, %v4170
      %v4181 = vpack.c.b16 %v4173, %v4172
      %4190 = vmatpush.bf16.msra.mxu0 %v4181
      %4191 = vmatpush.bf16.msra.mxu0 %v4180
      %4192 = vmatpush.bf16.msra.mxu0 %v4179
      %4193 = vmatpush.bf16.msra.mxu0 %v4178
      %4194 = vmatpush.bf16.msra.mxu0 %v4177
      %4195 = vmatpush.bf16.msra.mxu0 %v4176
      %4196 = vmatpush.bf16.msra.mxu0 %v4175
      %4197 = vmatpush.bf16.msra.mxu0 %v4174
      %4198 = vmatmul.bf16.gmra.mxu0 %v4104
      %v4199 = vpop.f32.mrf.mxu0
      %v4200 = vadd.f32 0.0, %v4199
      %v4201 = vpop.f32.mrf.mxu0
      %v4202 = vadd.f32 0.0, %v4201
      %4203 = vmatmul.bf16.gmra.mxu0 %v4112
      %v4204 = vpop.f32.mrf.mxu0
      %v4205 = vadd.f32 0.0, %v4204
      %v4206 = vpop.f32.mrf.mxu0
      %v4207 = vadd.f32 0.0, %v4206
      %4208 = vmatmul.bf16.gmra.mxu0 %v4120
      %v4209 = vpop.f32.mrf.mxu0
      %v4210 = vadd.f32 0.0, %v4209
      %v4211 = vpop.f32.mrf.mxu0
      %v4212 = vadd.f32 0.0, %v4211
      %4213 = vmatmul.bf16.gmra.mxu0 %v4128
      %v4214 = vpop.f32.mrf.mxu0
      %v4215 = vadd.f32 0.0, %v4214
      %v4216 = vpop.f32.mrf.mxu0
      %v4217 = vadd.f32 0.0, %v4216
      %4218 = vmatmul.bf16.gmra.mxu0 %v4136
      %v4219 = vpop.f32.mrf.mxu0
      %v4220 = vadd.f32 0.0, %v4219
      %v4221 = vpop.f32.mrf.mxu0
      %v4222 = vadd.f32 0.0, %v4221
      %4223 = vdwg.mxu0
      %v4245 = vunpack.c.l.b16 %v4031
      %v4246 = vunpack.c.l.b16 %v4032
      %v4247 = vunpack.c.l.b16 %v4033
      %v4248 = vunpack.c.l.b16 %v4034
      %v4249 = vunpack.c.l.b16 %v4035
      %v4250 = vunpack.c.l.b16 %v4036
      %v4251 = vunpack.c.l.b16 %v4037
      %v4252 = vunpack.c.l.b16 %v4038
      %v4253 = vunpack.c.l.b16 %v4039
      %v4254 = vunpack.c.l.b16 %v4040
      %v4255 = vunpack.c.l.b16 %v4041
      %v4256 = vunpack.c.l.b16 %v4042
      %v4257 = vunpack.c.l.b16 %v4043
      %v4258 = vunpack.c.l.b16 %v4044
      %v4259 = vunpack.c.l.b16 %v4045
      %v4260 = vunpack.c.l.b16 %v4046
      %v4261 = vpack.c.b16 %v4246, %v4245
      %v4262 = vpack.c.b16 %v4248, %v4247
      %v4263 = vpack.c.b16 %v4250, %v4249
      %v4264 = vpack.c.b16 %v4252, %v4251
      %v4265 = vpack.c.b16 %v4254, %v4253
      %v4266 = vpack.c.b16 %v4256, %v4255
      %v4267 = vpack.c.b16 %v4258, %v4257
      %v4268 = vpack.c.b16 %v4260, %v4259
      %4277 = vmatpush.bf16.msra.mxu0 %v4268
      %4278 = vmatpush.bf16.msra.mxu0 %v4267
      %4279 = vmatpush.bf16.msra.mxu0 %v4266
      %4280 = vmatpush.bf16.msra.mxu0 %v4265
      %4281 = vmatpush.bf16.msra.mxu0 %v4264
      %4282 = vmatpush.bf16.msra.mxu0 %v4263
      %4283 = vmatpush.bf16.msra.mxu0 %v4262
      %4284 = vmatpush.bf16.msra.mxu0 %v4261
      %4285 = vmatmul.bf16.gmra.mxu0 %v4087
      %v4286 = vpop.f32.mrf.mxu0
      %v4287 = vadd.f32 %v4200, %v4286
      %v4288 = vpop.f32.mrf.mxu0
      %v4289 = vadd.f32 %v4202, %v4288
      %4290 = vmatmul.bf16.gmra.mxu0 %v4088
      %v4291 = vpop.f32.mrf.mxu0
      %v4292 = vadd.f32 %v4205, %v4291
      %v4293 = vpop.f32.mrf.mxu0
      %v4294 = vadd.f32 %v4207, %v4293
      %4295 = vmatmul.bf16.gmra.mxu0 %v4089
      %v4296 = vpop.f32.mrf.mxu0
      %v4297 = vadd.f32 %v4210, %v4296
      %v4298 = vpop.f32.mrf.mxu0
      %v4299 = vadd.f32 %v4212, %v4298
      %4300 = vmatmul.bf16.gmra.mxu0 %v4090
      %v4301 = vpop.f32.mrf.mxu0
      %v4302 = vadd.f32 %v4215, %v4301
      %v4303 = vpop.f32.mrf.mxu0
      %v4304 = vadd.f32 %v4217, %v4303
      %4305 = vmatmul.bf16.gmra.mxu0 %v4091
      %v4306 = vpop.f32.mrf.mxu0
      %v4307 = vadd.f32 %v4220, %v4306
      %v4308 = vpop.f32.mrf.mxu0
      %v4309 = vadd.f32 %v4222, %v4308
      %4310 = vdwg.mxu0
      %v4311 = vld [vmem:[#allocation2] sm:$0xe]
      %s4312 = scalar_lea.vmem %s1, 704
      %v4313 = vld [vmem:[%s4312] sm:$0xf]
      %v4314 = vld [vmem:[%s4312 + $0x4] sm:$0xf]
      %v4315 = vld [vmem:[%s4312 + $0x8] sm:$0xf]
      %v4316 = vld [vmem:[%s4312 + $0xc] sm:$0xf]
      %v4317 = vld [vmem:[%s4312 + $0x10] sm:$0xf]
      %v4318 = vld [vmem:[%s4312 + $0x14] sm:$0xf]
      %v4319 = vld [vmem:[%s4312 + $0x18] sm:$0xf]
      %v4320 = vld [vmem:[%s4312 + $0x1c] sm:$0xf]
      %v4321 = vld [vmem:[%s4312 + $0x20] sm:$0xf]
      %v4322 = vld [vmem:[%s4312 + $0x24] sm:$0xf]
      %v4323 = vld [vmem:[%s4312 + $0x28] sm:$0xf]
      %v4324 = vld [vmem:[%s4312 + $0x2c] sm:$0xf]
      %v4325 = vld [vmem:[%s4312 + $0x30] sm:$0xf]
      %v4326 = vld [vmem:[%s4312 + $0x34] sm:$0xf]
      %v4327 = vld [vmem:[%s4312 + $0x38] sm:$0xf]
      %v4328 = vld [vmem:[%s4312 + $0x3c] sm:$0xf]
      %v4330 = vunpack.c.l.b16 %v4311
      %v4331 = vpack.c.b16 %v4077, %v4330
      %v4332 = vrot.slane %v4331, 1
      %v4333 = vrot.slane %v4088, 1
      %v4334 = vsel %vm970, %v4332, %v4333
      %v4335 = vrot.slane %v4089, 1
      %v4336 = vsel %vm970, %v4333, %v4335
      %v4337 = vrot.slane %v4090, 1
      %v4338 = vsel %vm970, %v4335, %v4337
      %v4339 = vrot.slane %v4091, 1
      %v4340 = vsel %vm970, %v4337, %v4339
      %v4341 = vrot.slane %v4092, 1
      %v4342 = vsel %vm970, %v4339, %v4341
      %v4364 = vunpack.c.l.b16 %v4313
      %v4365 = vunpack.c.l.b16 %v4314
      %v4366 = vunpack.c.l.b16 %v4315
      %v4367 = vunpack.c.l.b16 %v4316
      %v4368 = vunpack.c.l.b16 %v4317
      %v4369 = vunpack.c.l.b16 %v4318
      %v4370 = vunpack.c.l.b16 %v4319
      %v4371 = vunpack.c.l.b16 %v4320
      %v4372 = vunpack.c.l.b16 %v4321
      %v4373 = vunpack.c.l.b16 %v4322
      %v4374 = vunpack.c.l.b16 %v4323
      %v4375 = vunpack.c.l.b16 %v4324
      %v4376 = vunpack.c.l.b16 %v4325
      %v4377 = vunpack.c.l.b16 %v4326
      %v4378 = vunpack.c.l.b16 %v4327
      %v4379 = vunpack.c.l.b16 %v4328
      %v4380 = vpack.c.b16 %v4365, %v4364
      %v4381 = vpack.c.b16 %v4367, %v4366
      %v4382 = vpack.c.b16 %v4369, %v4368
      %v4383 = vpack.c.b16 %v4371, %v4370
      %v4384 = vpack.c.b16 %v4373, %v4372
      %v4385 = vpack.c.b16 %v4375, %v4374
      %v4386 = vpack.c.b16 %v4377, %v4376
      %v4387 = vpack.c.b16 %v4379, %v4378
      %4396 = vmatpush.bf16.msra.mxu0 %v4387
      %4397 = vmatpush.bf16.msra.mxu0 %v4386
      %4398 = vmatpush.bf16.msra.mxu0 %v4385
      %4399 = vmatpush.bf16.msra.mxu0 %v4384
      %4400 = vmatpush.bf16.msra.mxu0 %v4383
      %4401 = vmatpush.bf16.msra.mxu0 %v4382
      %4402 = vmatpush.bf16.msra.mxu0 %v4381
      %4403 = vmatpush.bf16.msra.mxu0 %v4380
      %4404 = vmatmul.bf16.gmra.mxu0 %v4334
      %v4405 = vpop.f32.mrf.mxu0
      %v4406 = vadd.f32 0.0, %v4405
      %v4407 = vpop.f32.mrf.mxu0
      %v4408 = vadd.f32 0.0, %v4407
      %4409 = vmatmul.bf16.gmra.mxu0 %v4336
      %v4410 = vpop.f32.mrf.mxu0
      %v4411 = vadd.f32 0.0, %v4410
      %v4412 = vpop.f32.mrf.mxu0
      %v4413 = vadd.f32 0.0, %v4412
      %4414 = vmatmul.bf16.gmra.mxu0 %v4338
      %v4415 = vpop.f32.mrf.mxu0
      %v4416 = vadd.f32 0.0, %v4415
      %v4417 = vpop.f32.mrf.mxu0
      %v4418 = vadd.f32 0.0, %v4417
      %4419 = vmatmul.bf16.gmra.mxu0 %v4340
      %v4420 = vpop.f32.mrf.mxu0
      %v4421 = vadd.f32 0.0, %v4420
      %v4422 = vpop.f32.mrf.mxu0
      %v4423 = vadd.f32 0.0, %v4422
      %4424 = vmatmul.bf16.gmra.mxu0 %v4342
      %v4425 = vpop.f32.mrf.mxu0
      %v4426 = vadd.f32 0.0, %v4425
      %v4427 = vpop.f32.mrf.mxu0
      %v4428 = vadd.f32 0.0, %v4427
      %4429 = vdwg.mxu0
      %v4430 = vadd.f32 %v4287, %v4406
      %v4431 = vadd.f32 %v4289, %v4408
      %v4432 = vadd.f32 %v4292, %v4411
      %v4433 = vadd.f32 %v4294, %v4413
      %v4434 = vadd.f32 %v4297, %v4416
      %v4435 = vadd.f32 %v4299, %v4418
      %v4436 = vadd.f32 %v4302, %v4421
      %v4437 = vadd.f32 %v4304, %v4423
      %v4438 = vadd.f32 %v4307, %v4426
      %v4439 = vadd.f32 %v4309, %v4428
      %v4440 = vld [vmem:[#allocation2 + $0x4] sm:$0xe]
      %v4441 = vld [vmem:[#allocation2 + $0x8] sm:$0xf]
      %v4442 = vld [vmem:[#allocation2 + $0xc] sm:$0xf]
      %v4443 = vld [vmem:[#allocation2 + $0x10] sm:$0xf]
      %v4444 = vld [vmem:[#allocation2 + $0x14] sm:$0xf]
      %v4445 = vld [vmem:[#allocation2 + $0x18] sm:$0xf]
      %v4446 = vld [vmem:[#allocation2 + $0x1c] sm:$0xf]
      %v4447 = vld [vmem:[#allocation2 + $0x20] sm:$0xf]
      %v4448 = vld [vmem:[#allocation2 + $0x24] sm:$0xf]
      %v4449 = vld [vmem:[#allocation2 + $0x28] sm:$0xf]
      %v4450 = vld [vmem:[#allocation2 + $0x2c] sm:$0x1]
      %s4451 = scalar_lea.vmem %s1, 768
      %v4452 = vld [vmem:[%s4451] sm:$0xf]
      %v4453 = vld [vmem:[%s4451 + $0x4] sm:$0xf]
      %v4454 = vld [vmem:[%s4451 + $0x8] sm:$0xf]
      %v4455 = vld [vmem:[%s4451 + $0xc] sm:$0xf]
      %v4456 = vld [vmem:[%s4451 + $0x10] sm:$0xf]
      %v4457 = vld [vmem:[%s4451 + $0x14] sm:$0xf]
      %v4458 = vld [vmem:[%s4451 + $0x18] sm:$0xf]
      %v4459 = vld [vmem:[%s4451 + $0x1c] sm:$0xf]
      %v4460 = vld [vmem:[%s4451 + $0x20] sm:$0xf]
      %v4461 = vld [vmem:[%s4451 + $0x24] sm:$0xf]
      %v4462 = vld [vmem:[%s4451 + $0x28] sm:$0xf]
      %v4463 = vld [vmem:[%s4451 + $0x2c] sm:$0xf]
      %v4464 = vld [vmem:[%s4451 + $0x30] sm:$0xf]
      %v4465 = vld [vmem:[%s4451 + $0x34] sm:$0xf]
      %v4466 = vld [vmem:[%s4451 + $0x38] sm:$0xf]
      %v4467 = vld [vmem:[%s4451 + $0x3c] sm:$0xf]
      %v4479 = vunpack.c.l.b16 %v4440
      %v4480 = vunpack.c.l.b16 %v4441
      %v4481 = vunpack.c.l.b16 %v4442
      %v4482 = vunpack.c.l.b16 %v4443
      %v4483 = vunpack.c.l.b16 %v4444
      %v4484 = vunpack.c.l.b16 %v4445
      %v4485 = vunpack.c.l.b16 %v4446
      %v4486 = vunpack.c.l.b16 %v4447
      %v4487 = vunpack.c.l.b16 %v4448
      %v4488 = vunpack.c.l.b16 %v4449
      %v4489 = vunpack.c.l.b16 %v4450
      %v4490 = vpack.c.b16 %v4480, %v4479
      %v4491 = vpack.c.b16 %v4482, %v4481
      %v4492 = vpack.c.b16 %v4484, %v4483
      %v4493 = vpack.c.b16 %v4486, %v4485
      %v4494 = vpack.c.b16 %v4488, %v4487
      %v4495 = vpack.c.b16 %v4489, %v4489
      %v4496 = vrot.slane %v4490, 1
      %v4497 = vrot.slane %v4491, 1
      %v4498 = vsel %vm970, %v4496, %v4497
      %v4499 = vrot.slane %v4492, 1
      %v4500 = vsel %vm970, %v4497, %v4499
      %v4501 = vrot.slane %v4493, 1
      %v4502 = vsel %vm970, %v4499, %v4501
      %v4503 = vrot.slane %v4494, 1
      %v4504 = vsel %vm970, %v4501, %v4503
      %v4505 = vrot.slane %v4495, 1
      %v4506 = vsel %vm970, %v4503, %v4505
      %v4528 = vunpack.c.l.b16 %v4452
      %v4529 = vunpack.c.l.b16 %v4453
      %v4530 = vunpack.c.l.b16 %v4454
      %v4531 = vunpack.c.l.b16 %v4455
      %v4532 = vunpack.c.l.b16 %v4456
      %v4533 = vunpack.c.l.b16 %v4457
      %v4534 = vunpack.c.l.b16 %v4458
      %v4535 = vunpack.c.l.b16 %v4459
      %v4536 = vunpack.c.l.b16 %v4460
      %v4537 = vunpack.c.l.b16 %v4461
      %v4538 = vunpack.c.l.b16 %v4462
      %v4539 = vunpack.c.l.b16 %v4463
      %v4540 = vunpack.c.l.b16 %v4464
      %v4541 = vunpack.c.l.b16 %v4465
      %v4542 = vunpack.c.l.b16 %v4466
      %v4543 = vunpack.c.l.b16 %v4467
      %v4544 = vpack.c.b16 %v4529, %v4528
      %v4545 = vpack.c.b16 %v4531, %v4530
      %v4546 = vpack.c.b16 %v4533, %v4532
      %v4547 = vpack.c.b16 %v4535, %v4534
      %v4548 = vpack.c.b16 %v4537, %v4536
      %v4549 = vpack.c.b16 %v4539, %v4538
      %v4550 = vpack.c.b16 %v4541, %v4540
      %v4551 = vpack.c.b16 %v4543, %v4542
      %4560 = vmatpush.bf16.msra.mxu0 %v4551
      %4561 = vmatpush.bf16.msra.mxu0 %v4550
      %4562 = vmatpush.bf16.msra.mxu0 %v4549
      %4563 = vmatpush.bf16.msra.mxu0 %v4548
      %4564 = vmatpush.bf16.msra.mxu0 %v4547
      %4565 = vmatpush.bf16.msra.mxu0 %v4546
      %4566 = vmatpush.bf16.msra.mxu0 %v4545
      %4567 = vmatpush.bf16.msra.mxu0 %v4544
      %4568 = vmatmul.bf16.gmra.mxu0 %v4498
      %v4569 = vpop.f32.mrf.mxu0
      %v4570 = vadd.f32 0.0, %v4569
      %v4571 = vpop.f32.mrf.mxu0
      %v4572 = vadd.f32 0.0, %v4571
      %4573 = vmatmul.bf16.gmra.mxu0 %v4500
      %v4574 = vpop.f32.mrf.mxu0
      %v4575 = vadd.f32 0.0, %v4574
      %v4576 = vpop.f32.mrf.mxu0
      %v4577 = vadd.f32 0.0, %v4576
      %4578 = vmatmul.bf16.gmra.mxu0 %v4502
      %v4579 = vpop.f32.mrf.mxu0
      %v4580 = vadd.f32 0.0, %v4579
      %v4581 = vpop.f32.mrf.mxu0
      %v4582 = vadd.f32 0.0, %v4581
      %4583 = vmatmul.bf16.gmra.mxu0 %v4504
      %v4584 = vpop.f32.mrf.mxu0
      %v4585 = vadd.f32 0.0, %v4584
      %v4586 = vpop.f32.mrf.mxu0
      %v4587 = vadd.f32 0.0, %v4586
      %4588 = vmatmul.bf16.gmra.mxu0 %v4506
      %v4589 = vpop.f32.mrf.mxu0
      %v4590 = vadd.f32 0.0, %v4589
      %v4591 = vpop.f32.mrf.mxu0
      %v4592 = vadd.f32 0.0, %v4591
      %4593 = vdwg.mxu0
      %v4594 = vadd.f32 %v4430, %v4570
      %v4595 = vadd.f32 %v4431, %v4572
      %v4596 = vadd.f32 %v4432, %v4575
      %v4597 = vadd.f32 %v4433, %v4577
      %v4598 = vadd.f32 %v4434, %v4580
      %v4599 = vadd.f32 %v4435, %v4582
      %v4600 = vadd.f32 %v4436, %v4585
      %v4601 = vadd.f32 %v4437, %v4587
      %v4602 = vadd.f32 %v4438, %v4590
      %v4603 = vadd.f32 %v4439, %v4592
      %v4604 = vld [vmem:[#allocation2 + $0x2c] sm:$0x3]
      %s4605 = scalar_lea.vmem %s1, 832
      %v4606 = vld [vmem:[%s4605] sm:$0xf]
      %v4607 = vld [vmem:[%s4605 + $0x4] sm:$0xf]
      %v4608 = vld [vmem:[%s4605 + $0x8] sm:$0xf]
      %v4609 = vld [vmem:[%s4605 + $0xc] sm:$0xf]
      %v4610 = vld [vmem:[%s4605 + $0x10] sm:$0xf]
      %v4611 = vld [vmem:[%s4605 + $0x14] sm:$0xf]
      %v4612 = vld [vmem:[%s4605 + $0x18] sm:$0xf]
      %v4613 = vld [vmem:[%s4605 + $0x1c] sm:$0xf]
      %v4614 = vld [vmem:[%s4605 + $0x20] sm:$0xf]
      %v4615 = vld [vmem:[%s4605 + $0x24] sm:$0xf]
      %v4616 = vld [vmem:[%s4605 + $0x28] sm:$0xf]
      %v4617 = vld [vmem:[%s4605 + $0x2c] sm:$0xf]
      %v4618 = vld [vmem:[%s4605 + $0x30] sm:$0xf]
      %v4619 = vld [vmem:[%s4605 + $0x34] sm:$0xf]
      %v4620 = vld [vmem:[%s4605 + $0x38] sm:$0xf]
      %v4621 = vld [vmem:[%s4605 + $0x3c] sm:$0xf]
      %v4623 = vunpack.c.l.b16 %v4604
      %v4624 = vpack.c.b16 %v4623, %v4623
      %v4626 = vshrl.u32 %v4490, 16
      %v4628 = vrot.slane %v4626, 1
      %v4629 = vshll.u32 %v4490, 16
      %v4631 = vrot.slane %v4629, 2
      %v4632 = vor.u32 %v4628, %v4631
      %v4634 = vshrl.u32 %v4491, 16
      %v4636 = vrot.slane %v4634, 1
      %v4637 = vshll.u32 %v4491, 16
      %v4639 = vrot.slane %v4637, 2
      %v4640 = vor.u32 %v4636, %v4639
      %v4641 = vsel %vm1615, %v4632, %v4640
      %v4643 = vshrl.u32 %v4492, 16
      %v4645 = vrot.slane %v4643, 1
      %v4646 = vshll.u32 %v4492, 16
      %v4648 = vrot.slane %v4646, 2
      %v4649 = vor.u32 %v4645, %v4648
      %v4650 = vsel %vm1615, %v4640, %v4649
      %v4652 = vshrl.u32 %v4493, 16
      %v4654 = vrot.slane %v4652, 1
      %v4655 = vshll.u32 %v4493, 16
      %v4657 = vrot.slane %v4655, 2
      %v4658 = vor.u32 %v4654, %v4657
      %v4659 = vsel %vm1615, %v4649, %v4658
      %v4661 = vshrl.u32 %v4494, 16
      %v4663 = vrot.slane %v4661, 1
      %v4664 = vshll.u32 %v4494, 16
      %v4666 = vrot.slane %v4664, 2
      %v4667 = vor.u32 %v4663, %v4666
      %v4668 = vsel %vm1615, %v4658, %v4667
      %v4670 = vshrl.u32 %v4624, 16
      %v4672 = vrot.slane %v4670, 1
      %v4673 = vshll.u32 %v4624, 16
      %v4675 = vrot.slane %v4673, 2
      %v4676 = vor.u32 %v4672, %v4675
      %v4677 = vsel %vm1615, %v4667, %v4676
      %v4699 = vunpack.c.l.b16 %v4606
      %v4700 = vunpack.c.l.b16 %v4607
      %v4701 = vunpack.c.l.b16 %v4608
      %v4702 = vunpack.c.l.b16 %v4609
      %v4703 = vunpack.c.l.b16 %v4610
      %v4704 = vunpack.c.l.b16 %v4611
      %v4705 = vunpack.c.l.b16 %v4612
      %v4706 = vunpack.c.l.b16 %v4613
      %v4707 = vunpack.c.l.b16 %v4614
      %v4708 = vunpack.c.l.b16 %v4615
      %v4709 = vunpack.c.l.b16 %v4616
      %v4710 = vunpack.c.l.b16 %v4617
      %v4711 = vunpack.c.l.b16 %v4618
      %v4712 = vunpack.c.l.b16 %v4619
      %v4713 = vunpack.c.l.b16 %v4620
      %v4714 = vunpack.c.l.b16 %v4621
      %v4715 = vpack.c.b16 %v4700, %v4699
      %v4716 = vpack.c.b16 %v4702, %v4701
      %v4717 = vpack.c.b16 %v4704, %v4703
      %v4718 = vpack.c.b16 %v4706, %v4705
      %v4719 = vpack.c.b16 %v4708, %v4707
      %v4720 = vpack.c.b16 %v4710, %v4709
      %v4721 = vpack.c.b16 %v4712, %v4711
      %v4722 = vpack.c.b16 %v4714, %v4713
      %4731 = vmatpush.bf16.msra.mxu0 %v4722
      %4732 = vmatpush.bf16.msra.mxu0 %v4721
      %4733 = vmatpush.bf16.msra.mxu0 %v4720
      %4734 = vmatpush.bf16.msra.mxu0 %v4719
      %4735 = vmatpush.bf16.msra.mxu0 %v4718
      %4736 = vmatpush.bf16.msra.mxu0 %v4717
      %4737 = vmatpush.bf16.msra.mxu0 %v4716
      %4738 = vmatpush.bf16.msra.mxu0 %v4715
      %4739 = vmatmul.bf16.gmra.mxu0 %v4641
      %v4740 = vpop.f32.mrf.mxu0
      %v4741 = vadd.f32 0.0, %v4740
      %v4742 = vpop.f32.mrf.mxu0
      %v4743 = vadd.f32 0.0, %v4742
      %4744 = vmatmul.bf16.gmra.mxu0 %v4650
      %v4745 = vpop.f32.mrf.mxu0
      %v4746 = vadd.f32 0.0, %v4745
      %v4747 = vpop.f32.mrf.mxu0
      %v4748 = vadd.f32 0.0, %v4747
      %4749 = vmatmul.bf16.gmra.mxu0 %v4659
      %v4750 = vpop.f32.mrf.mxu0
      %v4751 = vadd.f32 0.0, %v4750
      %v4752 = vpop.f32.mrf.mxu0
      %v4753 = vadd.f32 0.0, %v4752
      %4754 = vmatmul.bf16.gmra.mxu0 %v4668
      %v4755 = vpop.f32.mrf.mxu0
      %v4756 = vadd.f32 0.0, %v4755
      %v4757 = vpop.f32.mrf.mxu0
      %v4758 = vadd.f32 0.0, %v4757
      %4759 = vmatmul.bf16.gmra.mxu0 %v4677
      %v4760 = vpop.f32.mrf.mxu0
      %v4761 = vadd.f32 0.0, %v4760
      %v4762 = vpop.f32.mrf.mxu0
      %v4763 = vadd.f32 0.0, %v4762
      %4764 = vdwg.mxu0
      %v4765 = vadd.f32 %v4594, %v4741
      %v4766 = vadd.f32 %v4595, %v4743
      %v4767 = vadd.f32 %v4596, %v4746
      %v4768 = vadd.f32 %v4597, %v4748
      %v4769 = vadd.f32 %v4598, %v4751
      %v4770 = vadd.f32 %v4599, %v4753
      %v4771 = vadd.f32 %v4600, %v4756
      %v4772 = vadd.f32 %v4601, %v4758
      %v4773 = vadd.f32 %v4602, %v4761
      %v4774 = vadd.f32 %v4603, %v4763
      %v4775 = vld [vmem:[#allocation2 + $0x4] sm:$0xc]
      %s4776 = scalar_lea.vmem %s1, 896
      %v4777 = vld [vmem:[%s4776] sm:$0xf]
      %v4778 = vld [vmem:[%s4776 + $0x4] sm:$0xf]
      %v4779 = vld [vmem:[%s4776 + $0x8] sm:$0xf]
      %v4780 = vld [vmem:[%s4776 + $0xc] sm:$0xf]
      %v4781 = vld [vmem:[%s4776 + $0x10] sm:$0xf]
      %v4782 = vld [vmem:[%s4776 + $0x14] sm:$0xf]
      %v4783 = vld [vmem:[%s4776 + $0x18] sm:$0xf]
      %v4784 = vld [vmem:[%s4776 + $0x1c] sm:$0xf]
      %v4785 = vld [vmem:[%s4776 + $0x20] sm:$0xf]
      %v4786 = vld [vmem:[%s4776 + $0x24] sm:$0xf]
      %v4787 = vld [vmem:[%s4776 + $0x28] sm:$0xf]
      %v4788 = vld [vmem:[%s4776 + $0x2c] sm:$0xf]
      %v4789 = vld [vmem:[%s4776 + $0x30] sm:$0xf]
      %v4790 = vld [vmem:[%s4776 + $0x34] sm:$0xf]
      %v4791 = vld [vmem:[%s4776 + $0x38] sm:$0xf]
      %v4792 = vld [vmem:[%s4776 + $0x3c] sm:$0xf]
      %v4794 = vunpack.c.l.b16 %v4775
      %v4795 = vpack.c.b16 %v4480, %v4794
      %v4796 = vrot.slane %v4795, 2
      %v4797 = vrot.slane %v4491, 2
      %v4798 = vsel %vm2008, %v4796, %v4797
      %v4799 = vrot.slane %v4492, 2
      %v4800 = vsel %vm2008, %v4797, %v4799
      %v4801 = vrot.slane %v4493, 2
      %v4802 = vsel %vm2008, %v4799, %v4801
      %v4803 = vrot.slane %v4494, 2
      %v4804 = vsel %vm2008, %v4801, %v4803
      %v4805 = vrot.slane %v4624, 2
      %v4806 = vsel %vm2008, %v4803, %v4805
      %v4828 = vunpack.c.l.b16 %v4777
      %v4829 = vunpack.c.l.b16 %v4778
      %v4830 = vunpack.c.l.b16 %v4779
      %v4831 = vunpack.c.l.b16 %v4780
      %v4832 = vunpack.c.l.b16 %v4781
      %v4833 = vunpack.c.l.b16 %v4782
      %v4834 = vunpack.c.l.b16 %v4783
      %v4835 = vunpack.c.l.b16 %v4784
      %v4836 = vunpack.c.l.b16 %v4785
      %v4837 = vunpack.c.l.b16 %v4786
      %v4838 = vunpack.c.l.b16 %v4787
      %v4839 = vunpack.c.l.b16 %v4788
      %v4840 = vunpack.c.l.b16 %v4789
      %v4841 = vunpack.c.l.b16 %v4790
      %v4842 = vunpack.c.l.b16 %v4791
      %v4843 = vunpack.c.l.b16 %v4792
      %v4844 = vpack.c.b16 %v4829, %v4828
      %v4845 = vpack.c.b16 %v4831, %v4830
      %v4846 = vpack.c.b16 %v4833, %v4832
      %v4847 = vpack.c.b16 %v4835, %v4834
      %v4848 = vpack.c.b16 %v4837, %v4836
      %v4849 = vpack.c.b16 %v4839, %v4838
      %v4850 = vpack.c.b16 %v4841, %v4840
      %v4851 = vpack.c.b16 %v4843, %v4842
      %4860 = vmatpush.bf16.msra.mxu0 %v4851
      %4861 = vmatpush.bf16.msra.mxu0 %v4850
      %4862 = vmatpush.bf16.msra.mxu0 %v4849
      %4863 = vmatpush.bf16.msra.mxu0 %v4848
      %4864 = vmatpush.bf16.msra.mxu0 %v4847
      %4865 = vmatpush.bf16.msra.mxu0 %v4846
      %4866 = vmatpush.bf16.msra.mxu0 %v4845
      %4867 = vmatpush.bf16.msra.mxu0 %v4844
      %4868 = vmatmul.bf16.gmra.mxu0 %v4798
      %v4869 = vpop.f32.mrf.mxu0
      %v4870 = vadd.f32 0.0, %v4869
      %v4871 = vpop.f32.mrf.mxu0
      %v4872 = vadd.f32 0.0, %v4871
      %4873 = vmatmul.bf16.gmra.mxu0 %v4800
      %v4874 = vpop.f32.mrf.mxu0
      %v4875 = vadd.f32 0.0, %v4874
      %v4876 = vpop.f32.mrf.mxu0
      %v4877 = vadd.f32 0.0, %v4876
      %4878 = vmatmul.bf16.gmra.mxu0 %v4802
      %v4879 = vpop.f32.mrf.mxu0
      %v4880 = vadd.f32 0.0, %v4879
      %v4881 = vpop.f32.mrf.mxu0
      %v4882 = vadd.f32 0.0, %v4881
      %4883 = vmatmul.bf16.gmra.mxu0 %v4804
      %v4884 = vpop.f32.mrf.mxu0
      %v4885 = vadd.f32 0.0, %v4884
      %v4886 = vpop.f32.mrf.mxu0
      %v4887 = vadd.f32 0.0, %v4886
      %4888 = vmatmul.bf16.gmra.mxu0 %v4806
      %v4889 = vpop.f32.mrf.mxu0
      %v4890 = vadd.f32 0.0, %v4889
      %v4891 = vpop.f32.mrf.mxu0
      %v4892 = vadd.f32 0.0, %v4891
      %4893 = vdwg.mxu0
      %v4894 = vadd.f32 %v4765, %v4870
      %v4895 = vadd.f32 %v4766, %v4872
      %v4896 = vadd.f32 %v4767, %v4875
      %v4897 = vadd.f32 %v4768, %v4877
      %v4898 = vadd.f32 %v4769, %v4880
      %v4899 = vadd.f32 %v4770, %v4882
      %v4900 = vadd.f32 %v4771, %v4885
      %v4901 = vadd.f32 %v4772, %v4887
      %v4902 = vadd.f32 %v4773, %v4890
      %v4903 = vadd.f32 %v4774, %v4892
      %v4904 = vld [vmem:[#allocation2 + $0x8] sm:$0xc]
      %v4905 = vld [vmem:[#allocation2 + $0xc] sm:$0xf]
      %v4906 = vld [vmem:[#allocation2 + $0x10] sm:$0xf]
      %v4907 = vld [vmem:[#allocation2 + $0x14] sm:$0xf]
      %v4908 = vld [vmem:[#allocation2 + $0x18] sm:$0xf]
      %v4909 = vld [vmem:[#allocation2 + $0x1c] sm:$0xf]
      %v4910 = vld [vmem:[#allocation2 + $0x20] sm:$0xf]
      %v4911 = vld [vmem:[#allocation2 + $0x24] sm:$0xf]
      %v4912 = vld [vmem:[#allocation2 + $0x28] sm:$0xf]
      %v4913 = vld [vmem:[#allocation2 + $0x2c] sm:$0xf]
      %v4914 = vld [vmem:[#allocation2 + $0x30] sm:$0x3]
      %s4915 = scalar_lea.vmem %s1, 960
      %v4916 = vld [vmem:[%s4915] sm:$0xf]
      %v4917 = vld [vmem:[%s4915 + $0x4] sm:$0xf]
      %v4918 = vld [vmem:[%s4915 + $0x8] sm:$0xf]
      %v4919 = vld [vmem:[%s4915 + $0xc] sm:$0xf]
      %v4920 = vld [vmem:[%s4915 + $0x10] sm:$0xf]
      %v4921 = vld [vmem:[%s4915 + $0x14] sm:$0xf]
      %v4922 = vld [vmem:[%s4915 + $0x18] sm:$0xf]
      %v4923 = vld [vmem:[%s4915 + $0x1c] sm:$0xf]
      %v4924 = vld [vmem:[%s4915 + $0x20] sm:$0xf]
      %v4925 = vld [vmem:[%s4915 + $0x24] sm:$0xf]
      %v4926 = vld [vmem:[%s4915 + $0x28] sm:$0xf]
      %v4927 = vld [vmem:[%s4915 + $0x2c] sm:$0xf]
      %v4928 = vld [vmem:[%s4915 + $0x30] sm:$0xf]
      %v4929 = vld [vmem:[%s4915 + $0x34] sm:$0xf]
      %v4930 = vld [vmem:[%s4915 + $0x38] sm:$0xf]
      %v4931 = vld [vmem:[%s4915 + $0x3c] sm:$0xf]
      %v4943 = vunpack.c.l.b16 %v4904
      %v4944 = vunpack.c.l.b16 %v4905
      %v4945 = vunpack.c.l.b16 %v4906
      %v4946 = vunpack.c.l.b16 %v4907
      %v4947 = vunpack.c.l.b16 %v4908
      %v4948 = vunpack.c.l.b16 %v4909
      %v4949 = vunpack.c.l.b16 %v4910
      %v4950 = vunpack.c.l.b16 %v4911
      %v4951 = vunpack.c.l.b16 %v4912
      %v4952 = vunpack.c.l.b16 %v4913
      %v4953 = vunpack.c.l.b16 %v4914
      %v4954 = vpack.c.b16 %v4944, %v4943
      %v4955 = vpack.c.b16 %v4946, %v4945
      %v4956 = vpack.c.b16 %v4948, %v4947
      %v4957 = vpack.c.b16 %v4950, %v4949
      %v4958 = vpack.c.b16 %v4952, %v4951
      %v4959 = vpack.c.b16 %v4953, %v4953
      %v4960 = vrot.slane %v4954, 2
      %v4961 = vrot.slane %v4955, 2
      %v4962 = vsel %vm2008, %v4960, %v4961
      %v4963 = vrot.slane %v4956, 2
      %v4964 = vsel %vm2008, %v4961, %v4963
      %v4965 = vrot.slane %v4957, 2
      %v4966 = vsel %vm2008, %v4963, %v4965
      %v4967 = vrot.slane %v4958, 2
      %v4968 = vsel %vm2008, %v4965, %v4967
      %v4969 = vrot.slane %v4959, 2
      %v4970 = vsel %vm2008, %v4967, %v4969
      %v4992 = vunpack.c.l.b16 %v4916
      %v4993 = vunpack.c.l.b16 %v4917
      %v4994 = vunpack.c.l.b16 %v4918
      %v4995 = vunpack.c.l.b16 %v4919
      %v4996 = vunpack.c.l.b16 %v4920
      %v4997 = vunpack.c.l.b16 %v4921
      %v4998 = vunpack.c.l.b16 %v4922
      %v4999 = vunpack.c.l.b16 %v4923
      %v5000 = vunpack.c.l.b16 %v4924
      %v5001 = vunpack.c.l.b16 %v4925
      %v5002 = vunpack.c.l.b16 %v4926
      %v5003 = vunpack.c.l.b16 %v4927
      %v5004 = vunpack.c.l.b16 %v4928
      %v5005 = vunpack.c.l.b16 %v4929
      %v5006 = vunpack.c.l.b16 %v4930
      %v5007 = vunpack.c.l.b16 %v4931
      %v5008 = vpack.c.b16 %v4993, %v4992
      %v5009 = vpack.c.b16 %v4995, %v4994
      %v5010 = vpack.c.b16 %v4997, %v4996
      %v5011 = vpack.c.b16 %v4999, %v4998
      %v5012 = vpack.c.b16 %v5001, %v5000
      %v5013 = vpack.c.b16 %v5003, %v5002
      %v5014 = vpack.c.b16 %v5005, %v5004
      %v5015 = vpack.c.b16 %v5007, %v5006
      %5024 = vmatpush.bf16.msra.mxu0 %v5015
      %5025 = vmatpush.bf16.msra.mxu0 %v5014
      %5026 = vmatpush.bf16.msra.mxu0 %v5013
      %5027 = vmatpush.bf16.msra.mxu0 %v5012
      %5028 = vmatpush.bf16.msra.mxu0 %v5011
      %5029 = vmatpush.bf16.msra.mxu0 %v5010
      %5030 = vmatpush.bf16.msra.mxu0 %v5009
      %5031 = vmatpush.bf16.msra.mxu0 %v5008
      %5032 = vmatmul.bf16.gmra.mxu0 %v4962
      %v5033 = vpop.f32.mrf.mxu0
      %v5034 = vadd.f32 0.0, %v5033
      %v5035 = vpop.f32.mrf.mxu0
      %v5036 = vadd.f32 0.0, %v5035
      %5037 = vmatmul.bf16.gmra.mxu0 %v4964
      %v5038 = vpop.f32.mrf.mxu0
      %v5039 = vadd.f32 0.0, %v5038
      %v5040 = vpop.f32.mrf.mxu0
      %v5041 = vadd.f32 0.0, %v5040
      %5042 = vmatmul.bf16.gmra.mxu0 %v4966
      %v5043 = vpop.f32.mrf.mxu0
      %v5044 = vadd.f32 0.0, %v5043
      %v5045 = vpop.f32.mrf.mxu0
      %v5046 = vadd.f32 0.0, %v5045
      %5047 = vmatmul.bf16.gmra.mxu0 %v4968
      %v5048 = vpop.f32.mrf.mxu0
      %v5049 = vadd.f32 0.0, %v5048
      %v5050 = vpop.f32.mrf.mxu0
      %v5051 = vadd.f32 0.0, %v5050
      %5052 = vmatmul.bf16.gmra.mxu0 %v4970
      %v5053 = vpop.f32.mrf.mxu0
      %v5054 = vadd.f32 0.0, %v5053
      %v5055 = vpop.f32.mrf.mxu0
      %v5056 = vadd.f32 0.0, %v5055
      %5057 = vdwg.mxu0
      %v5058 = vadd.f32 %v4894, %v5034
      %v5059 = vadd.f32 %v4895, %v5036
      %v5060 = vadd.f32 %v4896, %v5039
      %v5061 = vadd.f32 %v4897, %v5041
      %v5062 = vadd.f32 %v4898, %v5044
      %v5063 = vadd.f32 %v4899, %v5046
      %v5064 = vadd.f32 %v4900, %v5049
      %v5065 = vadd.f32 %v4901, %v5051
      %v5066 = vadd.f32 %v4902, %v5054
      %v5067 = vadd.f32 %v4903, %v5056
      %v5068 = vld [vmem:[#allocation2 + $0x30] sm:$0x7]
      %s5069 = scalar_lea.vmem %s1, 1024
      %v5070 = vld [vmem:[%s5069] sm:$0xf]
      %v5071 = vld [vmem:[%s5069 + $0x4] sm:$0xf]
      %v5072 = vld [vmem:[%s5069 + $0x8] sm:$0xf]
      %v5073 = vld [vmem:[%s5069 + $0xc] sm:$0xf]
      %v5074 = vld [vmem:[%s5069 + $0x10] sm:$0xf]
      %v5075 = vld [vmem:[%s5069 + $0x14] sm:$0xf]
      %v5076 = vld [vmem:[%s5069 + $0x18] sm:$0xf]
      %v5077 = vld [vmem:[%s5069 + $0x1c] sm:$0xf]
      %v5078 = vld [vmem:[%s5069 + $0x20] sm:$0xf]
      %v5079 = vld [vmem:[%s5069 + $0x24] sm:$0xf]
      %v5080 = vld [vmem:[%s5069 + $0x28] sm:$0xf]
      %v5081 = vld [vmem:[%s5069 + $0x2c] sm:$0xf]
      %v5082 = vld [vmem:[%s5069 + $0x30] sm:$0xf]
      %v5083 = vld [vmem:[%s5069 + $0x34] sm:$0xf]
      %v5084 = vld [vmem:[%s5069 + $0x38] sm:$0xf]
      %v5085 = vld [vmem:[%s5069 + $0x3c] sm:$0xf]
      %v5087 = vunpack.c.l.b16 %v5068
      %v5088 = vpack.c.b16 %v5087, %v5087
      %v5090 = vshrl.u32 %v4954, 16
      %v5092 = vrot.slane %v5090, 2
      %v5093 = vshll.u32 %v4954, 16
      %v5095 = vrot.slane %v5093, 3
      %v5096 = vor.u32 %v5092, %v5095
      %v5098 = vshrl.u32 %v4955, 16
      %v5100 = vrot.slane %v5098, 2
      %v5101 = vshll.u32 %v4955, 16
      %v5103 = vrot.slane %v5101, 3
      %v5104 = vor.u32 %v5100, %v5103
      %v5105 = vsel %vm2653, %v5096, %v5104
      %v5107 = vshrl.u32 %v4956, 16
      %v5109 = vrot.slane %v5107, 2
      %v5110 = vshll.u32 %v4956, 16
      %v5112 = vrot.slane %v5110, 3
      %v5113 = vor.u32 %v5109, %v5112
      %v5114 = vsel %vm2653, %v5104, %v5113
      %v5116 = vshrl.u32 %v4957, 16
      %v5118 = vrot.slane %v5116, 2
      %v5119 = vshll.u32 %v4957, 16
      %v5121 = vrot.slane %v5119, 3
      %v5122 = vor.u32 %v5118, %v5121
      %v5123 = vsel %vm2653, %v5113, %v5122
      %v5125 = vshrl.u32 %v4958, 16
      %v5127 = vrot.slane %v5125, 2
      %v5128 = vshll.u32 %v4958, 16
      %v5130 = vrot.slane %v5128, 3
      %v5131 = vor.u32 %v5127, %v5130
      %v5132 = vsel %vm2653, %v5122, %v5131
      %v5134 = vshrl.u32 %v5088, 16
      %v5136 = vrot.slane %v5134, 2
      %v5137 = vshll.u32 %v5088, 16
      %v5139 = vrot.slane %v5137, 3
      %v5140 = vor.u32 %v5136, %v5139
      %v5141 = vsel %vm2653, %v5131, %v5140
      %v5163 = vunpack.c.l.b16 %v5070
      %v5164 = vunpack.c.l.b16 %v5071
      %v5165 = vunpack.c.l.b16 %v5072
      %v5166 = vunpack.c.l.b16 %v5073
      %v5167 = vunpack.c.l.b16 %v5074
      %v5168 = vunpack.c.l.b16 %v5075
      %v5169 = vunpack.c.l.b16 %v5076
      %v5170 = vunpack.c.l.b16 %v5077
      %v5171 = vunpack.c.l.b16 %v5078
      %v5172 = vunpack.c.l.b16 %v5079
      %v5173 = vunpack.c.l.b16 %v5080
      %v5174 = vunpack.c.l.b16 %v5081
      %v5175 = vunpack.c.l.b16 %v5082
      %v5176 = vunpack.c.l.b16 %v5083
      %v5177 = vunpack.c.l.b16 %v5084
      %v5178 = vunpack.c.l.b16 %v5085
      %v5179 = vpack.c.b16 %v5164, %v5163
      %v5180 = vpack.c.b16 %v5166, %v5165
      %v5181 = vpack.c.b16 %v5168, %v5167
      %v5182 = vpack.c.b16 %v5170, %v5169
      %v5183 = vpack.c.b16 %v5172, %v5171
      %v5184 = vpack.c.b16 %v5174, %v5173
      %v5185 = vpack.c.b16 %v5176, %v5175
      %v5186 = vpack.c.b16 %v5178, %v5177
      %5195 = vmatpush.bf16.msra.mxu0 %v5186
      %5196 = vmatpush.bf16.msra.mxu0 %v5185
      %5197 = vmatpush.bf16.msra.mxu0 %v5184
      %5198 = vmatpush.bf16.msra.mxu0 %v5183
      %5199 = vmatpush.bf16.msra.mxu0 %v5182
      %5200 = vmatpush.bf16.msra.mxu0 %v5181
      %5201 = vmatpush.bf16.msra.mxu0 %v5180
      %5202 = vmatpush.bf16.msra.mxu0 %v5179
      %5203 = vmatmul.bf16.gmra.mxu0 %v5105
      %v5204 = vpop.f32.mrf.mxu0
      %v5205 = vadd.f32 0.0, %v5204
      %v5206 = vpop.f32.mrf.mxu0
      %v5207 = vadd.f32 0.0, %v5206
      %5208 = vmatmul.bf16.gmra.mxu0 %v5114
      %v5209 = vpop.f32.mrf.mxu0
      %v5210 = vadd.f32 0.0, %v5209
      %v5211 = vpop.f32.mrf.mxu0
      %v5212 = vadd.f32 0.0, %v5211
      %5213 = vmatmul.bf16.gmra.mxu0 %v5123
      %v5214 = vpop.f32.mrf.mxu0
      %v5215 = vadd.f32 0.0, %v5214
      %v5216 = vpop.f32.mrf.mxu0
      %v5217 = vadd.f32 0.0, %v5216
      %5218 = vmatmul.bf16.gmra.mxu0 %v5132
      %v5219 = vpop.f32.mrf.mxu0
      %v5220 = vadd.f32 0.0, %v5219
      %v5221 = vpop.f32.mrf.mxu0
      %v5222 = vadd.f32 0.0, %v5221
      %5223 = vmatmul.bf16.gmra.mxu0 %v5141
      %v5224 = vpop.f32.mrf.mxu0
      %v5225 = vadd.f32 0.0, %v5224
      %v5226 = vpop.f32.mrf.mxu0
      %v5227 = vadd.f32 0.0, %v5226
      %5228 = vdwg.mxu0
      %v5229 = vadd.f32 %v5058, %v5205
      %v5230 = vadd.f32 %v5059, %v5207
      %v5231 = vadd.f32 %v5060, %v5210
      %v5232 = vadd.f32 %v5061, %v5212
      %v5233 = vadd.f32 %v5062, %v5215
      %v5234 = vadd.f32 %v5063, %v5217
      %v5235 = vadd.f32 %v5064, %v5220
      %v5236 = vadd.f32 %v5065, %v5222
      %v5237 = vadd.f32 %v5066, %v5225
      %v5238 = vadd.f32 %v5067, %v5227
      %v5239 = vld [vmem:[#allocation2 + $0x8] sm:$0x8]
      %s5240 = scalar_lea.vmem %s1, 1088
      %v5241 = vld [vmem:[%s5240] sm:$0xf]
      %v5242 = vld [vmem:[%s5240 + $0x4] sm:$0xf]
      %v5243 = vld [vmem:[%s5240 + $0x8] sm:$0xf]
      %v5244 = vld [vmem:[%s5240 + $0xc] sm:$0xf]
      %v5245 = vld [vmem:[%s5240 + $0x10] sm:$0xf]
      %v5246 = vld [vmem:[%s5240 + $0x14] sm:$0xf]
      %v5247 = vld [vmem:[%s5240 + $0x18] sm:$0xf]
      %v5248 = vld [vmem:[%s5240 + $0x1c] sm:$0xf]
      %v5249 = vld [vmem:[%s5240 + $0x20] sm:$0xf]
      %v5250 = vld [vmem:[%s5240 + $0x24] sm:$0xf]
      %v5251 = vld [vmem:[%s5240 + $0x28] sm:$0xf]
      %v5252 = vld [vmem:[%s5240 + $0x2c] sm:$0xf]
      %v5253 = vld [vmem:[%s5240 + $0x30] sm:$0xf]
      %v5254 = vld [vmem:[%s5240 + $0x34] sm:$0xf]
      %v5255 = vld [vmem:[%s5240 + $0x38] sm:$0xf]
      %v5256 = vld [vmem:[%s5240 + $0x3c] sm:$0xf]
      %v5258 = vunpack.c.l.b16 %v5239
      %v5259 = vpack.c.b16 %v4944, %v5258
      %v5260 = vrot.slane %v5259, 3
      %v5261 = vrot.slane %v4955, 3
      %v5262 = vsel %vm3046, %v5260, %v5261
      %v5263 = vrot.slane %v4956, 3
      %v5264 = vsel %vm3046, %v5261, %v5263
      %v5265 = vrot.slane %v4957, 3
      %v5266 = vsel %vm3046, %v5263, %v5265
      %v5267 = vrot.slane %v4958, 3
      %v5268 = vsel %vm3046, %v5265, %v5267
      %v5269 = vrot.slane %v5088, 3
      %v5270 = vsel %vm3046, %v5267, %v5269
      %v5292 = vunpack.c.l.b16 %v5241
      %v5293 = vunpack.c.l.b16 %v5242
      %v5294 = vunpack.c.l.b16 %v5243
      %v5295 = vunpack.c.l.b16 %v5244
      %v5296 = vunpack.c.l.b16 %v5245
      %v5297 = vunpack.c.l.b16 %v5246
      %v5298 = vunpack.c.l.b16 %v5247
      %v5299 = vunpack.c.l.b16 %v5248
      %v5300 = vunpack.c.l.b16 %v5249
      %v5301 = vunpack.c.l.b16 %v5250
      %v5302 = vunpack.c.l.b16 %v5251
      %v5303 = vunpack.c.l.b16 %v5252
      %v5304 = vunpack.c.l.b16 %v5253
      %v5305 = vunpack.c.l.b16 %v5254
      %v5306 = vunpack.c.l.b16 %v5255
      %v5307 = vunpack.c.l.b16 %v5256
      %v5308 = vpack.c.b16 %v5293, %v5292
      %v5309 = vpack.c.b16 %v5295, %v5294
      %v5310 = vpack.c.b16 %v5297, %v5296
      %v5311 = vpack.c.b16 %v5299, %v5298
      %v5312 = vpack.c.b16 %v5301, %v5300
      %v5313 = vpack.c.b16 %v5303, %v5302
      %v5314 = vpack.c.b16 %v5305, %v5304
      %v5315 = vpack.c.b16 %v5307, %v5306
      %5324 = vmatpush.bf16.msra.mxu0 %v5315
      %5325 = vmatpush.bf16.msra.mxu0 %v5314
      %5326 = vmatpush.bf16.msra.mxu0 %v5313
      %5327 = vmatpush.bf16.msra.mxu0 %v5312
      %5328 = vmatpush.bf16.msra.mxu0 %v5311
      %5329 = vmatpush.bf16.msra.mxu0 %v5310
      %5330 = vmatpush.bf16.msra.mxu0 %v5309
      %5331 = vmatpush.bf16.msra.mxu0 %v5308
      %5332 = vmatmul.bf16.gmra.mxu0 %v5262
      %v5333 = vpop.f32.mrf.mxu0
      %v5334 = vadd.f32 0.0, %v5333
      %v5335 = vpop.f32.mrf.mxu0
      %v5336 = vadd.f32 0.0, %v5335
      %5337 = vmatmul.bf16.gmra.mxu0 %v5264
      %v5338 = vpop.f32.mrf.mxu0
      %v5339 = vadd.f32 0.0, %v5338
      %v5340 = vpop.f32.mrf.mxu0
      %v5341 = vadd.f32 0.0, %v5340
      %5342 = vmatmul.bf16.gmra.mxu0 %v5266
      %v5343 = vpop.f32.mrf.mxu0
      %v5344 = vadd.f32 0.0, %v5343
      %v5345 = vpop.f32.mrf.mxu0
      %v5346 = vadd.f32 0.0, %v5345
      %5347 = vmatmul.bf16.gmra.mxu0 %v5268
      %v5348 = vpop.f32.mrf.mxu0
      %v5349 = vadd.f32 0.0, %v5348
      %v5350 = vpop.f32.mrf.mxu0
      %v5351 = vadd.f32 0.0, %v5350
      %5352 = vmatmul.bf16.gmra.mxu0 %v5270
      %v5353 = vpop.f32.mrf.mxu0
      %v5354 = vadd.f32 0.0, %v5353
      %v5355 = vpop.f32.mrf.mxu0
      %v5356 = vadd.f32 0.0, %v5355
      %5357 = vdwg.mxu0
      %v5358 = vadd.f32 %v5229, %v5334
      %v5359 = vadd.f32 %v5230, %v5336
      %v5360 = vadd.f32 %v5231, %v5339
      %v5361 = vadd.f32 %v5232, %v5341
      %v5362 = vadd.f32 %v5233, %v5344
      %v5363 = vadd.f32 %v5234, %v5346
      %v5364 = vadd.f32 %v5235, %v5349
      %v5365 = vadd.f32 %v5236, %v5351
      %v5366 = vadd.f32 %v5237, %v5354
      %v5367 = vadd.f32 %v5238, %v5356
      %v5377 = vrot.slane %v5359, 2
      %v5378 = vrot.slane %v5360, 2
      %v5379 = vsel %vm3319, %v5377, %v5378
      %v5380 = vrot.slane %v5361, 2
      %v5381 = vsel %vm3319, %v5378, %v5380
      %v5382 = vrot.slane %v5362, 2
      %v5383 = vsel %vm3319, %v5380, %v5382
      %v5384 = vrot.slane %v5363, 2
      %v5385 = vsel %vm3319, %v5382, %v5384
      %v5386 = vrot.slane %v5364, 2
      %v5387 = vsel %vm3319, %v5384, %v5386
      %v5388 = vrot.slane %v5365, 2
      %v5389 = vsel %vm3319, %v5386, %v5388
      %v5390 = vrot.slane %v5366, 2
      %v5391 = vsel %vm3319, %v5388, %v5390
      %v5392 = vrot.slane %v5367, 2
      %v5393 = vsel %vm3319, %v5390, %v5392
      %v5403 = vmax.f32 %v5358, %v5379
      %v5404 = vmax.f32 %v5359, %v5381
      %v5405 = vmax.f32 %v5360, %v5383
      %v5406 = vmax.f32 %v5361, %v5385
      %v5407 = vmax.f32 %v5362, %v5387
      %v5408 = vmax.f32 %v5363, %v5389
      %v5409 = vmax.f32 %v5364, %v5391
      %v5410 = vmax.f32 %v5365, %v5393
      %v5411 = vmax.f32 %v5366, %v5392
      %v5421 = vrot.slane %v5403, 1
      %v5422 = vrot.slane %v5404, 1
      %v5423 = vsel %vm3489, %v5421, %v5422
      %v5424 = vrot.slane %v5405, 1
      %v5425 = vsel %vm3489, %v5422, %v5424
      %v5426 = vrot.slane %v5406, 1
      %v5427 = vsel %vm3489, %v5424, %v5426
      %v5428 = vrot.slane %v5407, 1
      %v5429 = vsel %vm3489, %v5426, %v5428
      %v5430 = vrot.slane %v5408, 1
      %v5431 = vsel %vm3489, %v5428, %v5430
      %v5432 = vrot.slane %v5409, 1
      %v5433 = vsel %vm3489, %v5430, %v5432
      %v5434 = vrot.slane %v5410, 1
      %v5435 = vsel %vm3489, %v5432, %v5434
      %v5436 = vrot.slane %v5411, 1
      %v5437 = vsel %vm3489, %v5434, %v5436
      %v5447 = vmax.f32 %v5403, %v5423
      %v5448 = vmax.f32 %v5404, %v5425
      %v5449 = vmax.f32 %v5405, %v5427
      %v5450 = vmax.f32 %v5406, %v5429
      %v5451 = vmax.f32 %v5407, %v5431
      %v5452 = vmax.f32 %v5408, %v5433
      %v5453 = vmax.f32 %v5409, %v5435
      %v5454 = vmax.f32 %v5410, %v5437
      %v5455 = vmax.f32 %v5411, %v5436
      %v5456 = vld [vmem:[%s2 + $0x1] sm:$0x1]
      %v5457 = vperm.slane %v5456, 0
      %v5458 = vadd.f32 %v5447, %v5457
      %v5459 = vadd.f32 %v5448, %v5457
      %v5460 = vadd.f32 %v5449, %v5457
      %v5461 = vadd.f32 %v5450, %v5457
      %v5462 = vadd.f32 %v5451, %v5457
      %v5463 = vadd.f32 %v5452, %v5457
      %v5464 = vadd.f32 %v5453, %v5457
      %v5465 = vadd.f32 %v5454, %v5457
      %v5466 = vadd.f32 %v5455, %v5457
      %v5467 = vmax.f32 %v5458, 0.0
      %v5468 = vmax.f32 %v5459, 0.0
      %v5469 = vmax.f32 %v5460, 0.0
      %v5470 = vmax.f32 %v5461, 0.0
      %v5471 = vmax.f32 %v5462, 0.0
      %v5472 = vmax.f32 %v5463, 0.0
      %v5473 = vmax.f32 %v5464, 0.0
      %v5474 = vmax.f32 %v5465, 0.0
      %v5475 = vmax.f32 %v5466, 0.0
      %v5476 = vpack.c.bf16 %v5468, %v5467
      %v5477 = vpack.c.bf16 %v5470, %v5469
      %v5478 = vpack.c.bf16 %v5472, %v5471
      %v5479 = vpack.c.bf16 %v5474, %v5473
      %v5480 = vpack.c.bf16 %v5475, %v5475
      %v5481 = vld [vmem:[%s4] sm:$0xf]
      %v5482 = vld [vmem:[%s4 + $0x4] sm:$0xf]
      %v5483 = vld [vmem:[%s4 + $0x8] sm:$0xf]
      %v5484 = vld [vmem:[%s4 + $0xc] sm:$0xf]
      %v5485 = vld [vmem:[%s4 + $0x10] sm:$0x7]
      %v5491 = vunpack.c.l.b16 %v5481
      %v5492 = vunpack.c.l.b16 %v5482
      %v5493 = vunpack.c.l.b16 %v5483
      %v5494 = vunpack.c.l.b16 %v5484
      %v5495 = vunpack.c.l.b16 %v5485
      %v5496 = vpack.c.b16 %v5492, %v5491
      %v5497 = vpack.c.b16 %v5494, %v5493
      %v5498 = vpack.c.b16 %v5495, %v5495
      %vm5499 = vcmask 564224
      %v5501 = vsel %vm5499, %v5496, 0
      %v5504 = vsel %vm5499, %v5497, 0
      %v5507 = vsel %vm5499, %v5498, 0
      %vm5509 = vcmask 1041408
      %vm5510 = vcmask 1042432
      %v5511 = vsel %vm5509, 4294967295, 65535
      %v5512 = vsel %vm5510, %v5511, 0
      %v5514 = vand.u32 %v5480, %v5512
      %5516 = vmatpush.bf16.msra.mxu0 0
      %5517 = vmatpush.bf16.msra.mxu0 0
      %5518 = vmatpush.bf16.msra.mxu0 0
      %5519 = vmatpush.bf16.msra.mxu0 %v5514
      %5520 = vmatpush.bf16.msra.mxu0 %v5479
      %5521 = vmatpush.bf16.msra.mxu0 %v5478
      %5522 = vmatpush.bf16.msra.mxu0 %v5477
      %5523 = vmatpush.bf16.msra.mxu0 %v5476
      %5524 = vmatmul.bf16.gmra.mxu0 %v5501
      %v5525 = vpop.f32.mrf.mxu0
      %v5526 = vadd.f32 0.0, %v5525
      %v5527 = vpop.f32.mrf.mxu0
      %v5528 = vadd.f32 0.0, %v5527
      %5529 = vmatmul.bf16.gmra.mxu0 %v5504
      %v5530 = vpop.f32.mrf.mxu0
      %v5531 = vadd.f32 0.0, %v5530
      %v5532 = vpop.f32.mrf.mxu0
      %v5533 = vadd.f32 0.0, %v5532
      %5534 = vmatmul.bf16.gmra.mxu0 %v5507
      %v5535 = vpop.f32.mrf.mxu0
      %v5536 = vadd.f32 0.0, %v5535
      %v5537 = vpop.f32.mrf.mxu0
      %5538 = vdwg.mxu0
      %v5539 = vpack.c.bf16 %v5526, %v5526
      %v5540 = vpack.c.bf16 %v5528, %v5528
      %v5541 = vpack.c.bf16 %v5531, %v5531
      %v5542 = vpack.c.bf16 %v5533, %v5533
      %v5543 = vpack.c.bf16 %v5536, %v5536
      %5544 = vst [vmem:[#allocation3] sm:$0xf] %v5539
      %5545 = vst [vmem:[#allocation3 + $0x4] sm:$0xf] %v5540
      %5546 = vst [vmem:[#allocation3 + $0x8] sm:$0xf] %v5541
      %5547 = vst [vmem:[#allocation3 + $0xc] sm:$0xf] %v5542
      %5548 = vst [vmem:[#allocation3 + $0x10] sm:$0x7] %v5543
      %v5549 = vld [vmem:[#allocation3] sm:$0xf]
      %v5550 = vld [vmem:[#allocation3 + $0x4] sm:$0xf]
      %v5551 = vld [vmem:[#allocation3 + $0x8] sm:$0xf]
      %s5552 = scalar_lea.vmem %s1, 1152
      %v5553 = vld [vmem:[%s5552] sm:$0xf]
      %v5554 = vld [vmem:[%s5552 + $0x4] sm:$0xf]
      %v5555 = vld [vmem:[%s5552 + $0x8] sm:$0xf]
      %v5556 = vld [vmem:[%s5552 + $0xc] sm:$0xf]
      %v5557 = vld [vmem:[%s5552 + $0x10] sm:$0xf]
      %v5558 = vld [vmem:[%s5552 + $0x14] sm:$0xf]
      %v5559 = vld [vmem:[%s5552 + $0x18] sm:$0xf]
      %v5560 = vld [vmem:[%s5552 + $0x1c] sm:$0xf]
      %v5561 = vld [vmem:[%s5552 + $0x20] sm:$0xf]
      %v5562 = vld [vmem:[%s5552 + $0x24] sm:$0xf]
      %v5563 = vld [vmem:[%s5552 + $0x28] sm:$0xf]
      %v5564 = vld [vmem:[%s5552 + $0x2c] sm:$0xf]
      %v5565 = vld [vmem:[%s5552 + $0x30] sm:$0xf]
      %v5566 = vld [vmem:[%s5552 + $0x34] sm:$0xf]
      %v5567 = vld [vmem:[%s5552 + $0x38] sm:$0xf]
      %v5568 = vld [vmem:[%s5552 + $0x3c] sm:$0xf]
      %v5569 = vld [vmem:[#allocation3 + $0xc] sm:$0x1]
      %s5570 = scalar_lea.vmem %s1, 1216
      %v5571 = vld [vmem:[%s5570] sm:$0xf]
      %v5572 = vld [vmem:[%s5570 + $0x4] sm:$0xf]
      %v5573 = vld [vmem:[%s5570 + $0x8] sm:$0xf]
      %v5574 = vld [vmem:[%s5570 + $0xc] sm:$0xf]
      %v5575 = vld [vmem:[%s5570 + $0x10] sm:$0xf]
      %v5576 = vld [vmem:[%s5570 + $0x14] sm:$0xf]
      %v5577 = vld [vmem:[%s5570 + $0x18] sm:$0xf]
      %v5578 = vld [vmem:[%s5570 + $0x1c] sm:$0xf]
      %v5579 = vld [vmem:[%s5570 + $0x20] sm:$0xf]
      %v5580 = vld [vmem:[%s5570 + $0x24] sm:$0xf]
      %v5581 = vld [vmem:[%s5570 + $0x28] sm:$0xf]
      %v5582 = vld [vmem:[%s5570 + $0x2c] sm:$0xf]
      %v5583 = vld [vmem:[%s5570 + $0x30] sm:$0xf]
      %v5584 = vld [vmem:[%s5570 + $0x34] sm:$0xf]
      %v5585 = vld [vmem:[%s5570 + $0x38] sm:$0xf]
      %v5586 = vld [vmem:[%s5570 + $0x3c] sm:$0xf]
      %v5591 = vunpack.c.l.b16 %v5549
      %v5592 = vunpack.c.l.b16 %v5550
      %v5593 = vunpack.c.l.b16 %v5551
      %v5594 = vunpack.c.l.b16 %v5569
      %v5595 = vpack.c.b16 %v5592, %v5591
      %v5596 = vpack.c.b16 %v5594, %v5593
      %v5598 = vshrl.u32 %v5595, 16
      %v5600 = vshll.u32 %v5595, 16
      %v5602 = vrot.slane %v5600, 1
      %v5603 = vor.u32 %v5598, %v5602
      %v5605 = vshll.u32 %v5596, 16
      %v5607 = vrot.slane %v5605, 1
      %v5608 = vsel %vm470, %v5603, %v5607
      %v5609 = vshrl.u32 %v5596, 16
      %v5611 = vor.u32 %v5609, %v5607
      %v5630 = vunpack.c.l.b16 %v5571
      %v5631 = vunpack.c.l.b16 %v5572
      %v5632 = vunpack.c.l.b16 %v5573
      %v5633 = vunpack.c.l.b16 %v5574
      %v5634 = vunpack.c.l.b16 %v5575
      %v5635 = vunpack.c.l.b16 %v5576
      %v5636 = vunpack.c.l.b16 %v5577
      %v5637 = vunpack.c.l.b16 %v5578
      %v5638 = vunpack.c.l.b16 %v5579
      %v5639 = vunpack.c.l.b16 %v5580
      %v5640 = vunpack.c.l.b16 %v5581
      %v5641 = vunpack.c.l.b16 %v5582
      %v5642 = vunpack.c.l.b16 %v5583
      %v5643 = vunpack.c.l.b16 %v5584
      %v5644 = vunpack.c.l.b16 %v5585
      %v5645 = vunpack.c.l.b16 %v5586
      %v5646 = vpack.c.b16 %v5631, %v5630
      %v5647 = vpack.c.b16 %v5633, %v5632
      %v5648 = vpack.c.b16 %v5635, %v5634
      %v5649 = vpack.c.b16 %v5637, %v5636
      %v5650 = vpack.c.b16 %v5639, %v5638
      %v5651 = vpack.c.b16 %v5641, %v5640
      %v5652 = vpack.c.b16 %v5643, %v5642
      %v5653 = vpack.c.b16 %v5645, %v5644
      %5662 = vmatpush.bf16.msra.mxu0 %v5653
      %5663 = vmatpush.bf16.msra.mxu0 %v5652
      %5664 = vmatpush.bf16.msra.mxu0 %v5651
      %5665 = vmatpush.bf16.msra.mxu0 %v5650
      %5666 = vmatpush.bf16.msra.mxu0 %v5649
      %5667 = vmatpush.bf16.msra.mxu0 %v5648
      %5668 = vmatpush.bf16.msra.mxu0 %v5647
      %5669 = vmatpush.bf16.msra.mxu0 %v5646
      %5670 = vmatmul.bf16.gmra.mxu0 %v5608
      %v5671 = vpop.f32.mrf.mxu0
      %v5672 = vadd.f32 0.0, %v5671
      %v5673 = vpop.f32.mrf.mxu0
      %v5674 = vadd.f32 0.0, %v5673
      %5675 = vmatmul.bf16.gmra.mxu0 %v5611
      %v5676 = vpop.f32.mrf.mxu0
      %v5677 = vadd.f32 0.0, %v5676
      %v5678 = vpop.f32.mrf.mxu0
      %5679 = vdwg.mxu0
      %v5680 = vpack.c.b16 %v5593, %v5593
      %v5699 = vunpack.c.l.b16 %v5553
      %v5700 = vunpack.c.l.b16 %v5554
      %v5701 = vunpack.c.l.b16 %v5555
      %v5702 = vunpack.c.l.b16 %v5556
      %v5703 = vunpack.c.l.b16 %v5557
      %v5704 = vunpack.c.l.b16 %v5558
      %v5705 = vunpack.c.l.b16 %v5559
      %v5706 = vunpack.c.l.b16 %v5560
      %v5707 = vunpack.c.l.b16 %v5561
      %v5708 = vunpack.c.l.b16 %v5562
      %v5709 = vunpack.c.l.b16 %v5563
      %v5710 = vunpack.c.l.b16 %v5564
      %v5711 = vunpack.c.l.b16 %v5565
      %v5712 = vunpack.c.l.b16 %v5566
      %v5713 = vunpack.c.l.b16 %v5567
      %v5714 = vunpack.c.l.b16 %v5568
      %v5715 = vpack.c.b16 %v5700, %v5699
      %v5716 = vpack.c.b16 %v5702, %v5701
      %v5717 = vpack.c.b16 %v5704, %v5703
      %v5718 = vpack.c.b16 %v5706, %v5705
      %v5719 = vpack.c.b16 %v5708, %v5707
      %v5720 = vpack.c.b16 %v5710, %v5709
      %v5721 = vpack.c.b16 %v5712, %v5711
      %v5722 = vpack.c.b16 %v5714, %v5713
      %5731 = vmatpush.bf16.msra.mxu0 %v5722
      %5732 = vmatpush.bf16.msra.mxu0 %v5721
      %5733 = vmatpush.bf16.msra.mxu0 %v5720
      %5734 = vmatpush.bf16.msra.mxu0 %v5719
      %5735 = vmatpush.bf16.msra.mxu0 %v5718
      %5736 = vmatpush.bf16.msra.mxu0 %v5717
      %5737 = vmatpush.bf16.msra.mxu0 %v5716
      %5738 = vmatpush.bf16.msra.mxu0 %v5715
      %5739 = vmatmul.bf16.gmra.mxu0 %v5595
      %v5740 = vpop.f32.mrf.mxu0
      %v5741 = vadd.f32 %v5672, %v5740
      %v5742 = vpop.f32.mrf.mxu0
      %v5743 = vadd.f32 %v5674, %v5742
      %5744 = vmatmul.bf16.gmra.mxu0 %v5680
      %v5745 = vpop.f32.mrf.mxu0
      %v5746 = vadd.f32 %v5677, %v5745
      %v5747 = vpop.f32.mrf.mxu0
      %5748 = vdwg.mxu0
      %v5749 = vld [vmem:[#allocation3] sm:$0xe]
      %s5750 = scalar_lea.vmem %s1, 1280
      %v5751 = vld [vmem:[%s5750] sm:$0xf]
      %v5752 = vld [vmem:[%s5750 + $0x4] sm:$0xf]
      %v5753 = vld [vmem:[%s5750 + $0x8] sm:$0xf]
      %v5754 = vld [vmem:[%s5750 + $0xc] sm:$0xf]
      %v5755 = vld [vmem:[%s5750 + $0x10] sm:$0xf]
      %v5756 = vld [vmem:[%s5750 + $0x14] sm:$0xf]
      %v5757 = vld [vmem:[%s5750 + $0x18] sm:$0xf]
      %v5758 = vld [vmem:[%s5750 + $0x1c] sm:$0xf]
      %v5759 = vld [vmem:[%s5750 + $0x20] sm:$0xf]
      %v5760 = vld [vmem:[%s5750 + $0x24] sm:$0xf]
      %v5761 = vld [vmem:[%s5750 + $0x28] sm:$0xf]
      %v5762 = vld [vmem:[%s5750 + $0x2c] sm:$0xf]
      %v5763 = vld [vmem:[%s5750 + $0x30] sm:$0xf]
      %v5764 = vld [vmem:[%s5750 + $0x34] sm:$0xf]
      %v5765 = vld [vmem:[%s5750 + $0x38] sm:$0xf]
      %v5766 = vld [vmem:[%s5750 + $0x3c] sm:$0xf]
      %v5768 = vunpack.c.l.b16 %v5749
      %v5769 = vpack.c.b16 %v5592, %v5768
      %v5770 = vrot.slane %v5769, 1
      %v5771 = vrot.slane %v5596, 1
      %v5772 = vsel %vm970, %v5770, %v5771
      %v5791 = vunpack.c.l.b16 %v5751
      %v5792 = vunpack.c.l.b16 %v5752
      %v5793 = vunpack.c.l.b16 %v5753
      %v5794 = vunpack.c.l.b16 %v5754
      %v5795 = vunpack.c.l.b16 %v5755
      %v5796 = vunpack.c.l.b16 %v5756
      %v5797 = vunpack.c.l.b16 %v5757
      %v5798 = vunpack.c.l.b16 %v5758
      %v5799 = vunpack.c.l.b16 %v5759
      %v5800 = vunpack.c.l.b16 %v5760
      %v5801 = vunpack.c.l.b16 %v5761
      %v5802 = vunpack.c.l.b16 %v5762
      %v5803 = vunpack.c.l.b16 %v5763
      %v5804 = vunpack.c.l.b16 %v5764
      %v5805 = vunpack.c.l.b16 %v5765
      %v5806 = vunpack.c.l.b16 %v5766
      %v5807 = vpack.c.b16 %v5792, %v5791
      %v5808 = vpack.c.b16 %v5794, %v5793
      %v5809 = vpack.c.b16 %v5796, %v5795
      %v5810 = vpack.c.b16 %v5798, %v5797
      %v5811 = vpack.c.b16 %v5800, %v5799
      %v5812 = vpack.c.b16 %v5802, %v5801
      %v5813 = vpack.c.b16 %v5804, %v5803
      %v5814 = vpack.c.b16 %v5806, %v5805
      %5823 = vmatpush.bf16.msra.mxu0 %v5814
      %5824 = vmatpush.bf16.msra.mxu0 %v5813
      %5825 = vmatpush.bf16.msra.mxu0 %v5812
      %5826 = vmatpush.bf16.msra.mxu0 %v5811
      %5827 = vmatpush.bf16.msra.mxu0 %v5810
      %5828 = vmatpush.bf16.msra.mxu0 %v5809
      %5829 = vmatpush.bf16.msra.mxu0 %v5808
      %5830 = vmatpush.bf16.msra.mxu0 %v5807
      %5831 = vmatmul.bf16.gmra.mxu0 %v5772
      %v5832 = vpop.f32.mrf.mxu0
      %v5833 = vadd.f32 0.0, %v5832
      %v5834 = vpop.f32.mrf.mxu0
      %v5835 = vadd.f32 0.0, %v5834
      %5836 = vmatmul.bf16.gmra.mxu0 %v5771
      %v5837 = vpop.f32.mrf.mxu0
      %v5838 = vadd.f32 0.0, %v5837
      %v5839 = vpop.f32.mrf.mxu0
      %5840 = vdwg.mxu0
      %v5841 = vadd.f32 %v5741, %v5833
      %v5842 = vadd.f32 %v5743, %v5835
      %v5843 = vadd.f32 %v5746, %v5838
      %v5844 = vld [vmem:[#allocation3] sm:$0x8]
      %v5845 = vld [vmem:[#allocation3 + $0xc] sm:$0x7]
      %s5846 = scalar_lea.vmem %s1, 1344
      %v5847 = vld [vmem:[%s5846] sm:$0xf]
      %v5848 = vld [vmem:[%s5846 + $0x4] sm:$0xf]
      %v5849 = vld [vmem:[%s5846 + $0x8] sm:$0xf]
      %v5850 = vld [vmem:[%s5846 + $0xc] sm:$0xf]
      %v5851 = vld [vmem:[%s5846 + $0x10] sm:$0xf]
      %v5852 = vld [vmem:[%s5846 + $0x14] sm:$0xf]
      %v5853 = vld [vmem:[%s5846 + $0x18] sm:$0xf]
      %v5854 = vld [vmem:[%s5846 + $0x1c] sm:$0xf]
      %v5855 = vld [vmem:[%s5846 + $0x20] sm:$0xf]
      %v5856 = vld [vmem:[%s5846 + $0x24] sm:$0xf]
      %v5857 = vld [vmem:[%s5846 + $0x28] sm:$0xf]
      %v5858 = vld [vmem:[%s5846 + $0x2c] sm:$0xf]
      %v5859 = vld [vmem:[%s5846 + $0x30] sm:$0xf]
      %v5860 = vld [vmem:[%s5846 + $0x34] sm:$0xf]
      %v5861 = vld [vmem:[%s5846 + $0x38] sm:$0xf]
      %v5862 = vld [vmem:[%s5846 + $0x3c] sm:$0xf]
      %v5865 = vunpack.c.l.b16 %v5844
      %v5866 = vunpack.c.l.b16 %v5845
      %v5867 = vpack.c.b16 %v5592, %v5865
      %v5868 = vpack.c.b16 %v5866, %v5593
      %v5869 = vrot.slane %v5867, 3
      %v5870 = vrot.slane %v5868, 3
      %v5871 = vsel %vm3046, %v5869, %v5870
      %v5890 = vunpack.c.l.b16 %v5847
      %v5891 = vunpack.c.l.b16 %v5848
      %v5892 = vunpack.c.l.b16 %v5849
      %v5893 = vunpack.c.l.b16 %v5850
      %v5894 = vunpack.c.l.b16 %v5851
      %v5895 = vunpack.c.l.b16 %v5852
      %v5896 = vunpack.c.l.b16 %v5853
      %v5897 = vunpack.c.l.b16 %v5854
      %v5898 = vunpack.c.l.b16 %v5855
      %v5899 = vunpack.c.l.b16 %v5856
      %v5900 = vunpack.c.l.b16 %v5857
      %v5901 = vunpack.c.l.b16 %v5858
      %v5902 = vunpack.c.l.b16 %v5859
      %v5903 = vunpack.c.l.b16 %v5860
      %v5904 = vunpack.c.l.b16 %v5861
      %v5905 = vunpack.c.l.b16 %v5862
      %v5906 = vpack.c.b16 %v5891, %v5890
      %v5907 = vpack.c.b16 %v5893, %v5892
      %v5908 = vpack.c.b16 %v5895, %v5894
      %v5909 = vpack.c.b16 %v5897, %v5896
      %v5910 = vpack.c.b16 %v5899, %v5898
      %v5911 = vpack.c.b16 %v5901, %v5900
      %v5912 = vpack.c.b16 %v5903, %v5902
      %v5913 = vpack.c.b16 %v5905, %v5904
      %5922 = vmatpush.bf16.msra.mxu0 %v5913
      %5923 = vmatpush.bf16.msra.mxu0 %v5912
      %5924 = vmatpush.bf16.msra.mxu0 %v5911
      %5925 = vmatpush.bf16.msra.mxu0 %v5910
      %5926 = vmatpush.bf16.msra.mxu0 %v5909
      %5927 = vmatpush.bf16.msra.mxu0 %v5908
      %5928 = vmatpush.bf16.msra.mxu0 %v5907
      %5929 = vmatpush.bf16.msra.mxu0 %v5906
      %5930 = vmatmul.bf16.gmra.mxu0 %v5871
      %v5931 = vpop.f32.mrf.mxu0
      %v5932 = vadd.f32 0.0, %v5931
      %v5933 = vpop.f32.mrf.mxu0
      %v5934 = vadd.f32 0.0, %v5933
      %5935 = vmatmul.bf16.gmra.mxu0 %v5870
      %v5936 = vpop.f32.mrf.mxu0
      %v5937 = vadd.f32 0.0, %v5936
      %v5938 = vpop.f32.mrf.mxu0
      %5939 = vdwg.mxu0
      %v5940 = vadd.f32 %v5841, %v5932
      %v5941 = vadd.f32 %v5842, %v5934
      %v5942 = vadd.f32 %v5843, %v5937
      %v5943 = vld [vmem:[#allocation3 + $0xc] sm:$0xf]
      %s5944 = scalar_lea.vmem %s1, 1408
      %v5945 = vld [vmem:[%s5944] sm:$0xf]
      %v5946 = vld [vmem:[%s5944 + $0x4] sm:$0xf]
      %v5947 = vld [vmem:[%s5944 + $0x8] sm:$0xf]
      %v5948 = vld [vmem:[%s5944 + $0xc] sm:$0xf]
      %v5949 = vld [vmem:[%s5944 + $0x10] sm:$0xf]
      %v5950 = vld [vmem:[%s5944 + $0x14] sm:$0xf]
      %v5951 = vld [vmem:[%s5944 + $0x18] sm:$0xf]
      %v5952 = vld [vmem:[%s5944 + $0x1c] sm:$0xf]
      %v5953 = vld [vmem:[%s5944 + $0x20] sm:$0xf]
      %v5954 = vld [vmem:[%s5944 + $0x24] sm:$0xf]
      %v5955 = vld [vmem:[%s5944 + $0x28] sm:$0xf]
      %v5956 = vld [vmem:[%s5944 + $0x2c] sm:$0xf]
      %v5957 = vld [vmem:[%s5944 + $0x30] sm:$0xf]
      %v5958 = vld [vmem:[%s5944 + $0x34] sm:$0xf]
      %v5959 = vld [vmem:[%s5944 + $0x38] sm:$0xf]
      %v5960 = vld [vmem:[%s5944 + $0x3c] sm:$0xf]
      %v5962 = vunpack.c.l.b16 %v5943
      %v5963 = vpack.c.b16 %v5962, %v5593
      %vm5964 = vsmask.f32 4352
      %v5966 = vshrl.u32 %v5867, 16
      %v5968 = vrot.slane %v5966, 3
      %v5969 = vshll.u32 %v5867, 16
      %v5971 = vrot.slane %v5969, 4
      %v5972 = vor.u32 %v5968, %v5971
      %v5974 = vshrl.u32 %v5963, 16
      %v5976 = vrot.slane %v5974, 3
      %v5977 = vshll.u32 %v5963, 16
      %v5979 = vrot.slane %v5977, 4
      %v5980 = vor.u32 %v5976, %v5979
      %v5981 = vsel %vm5964, %v5972, %v5980
      %v6000 = vunpack.c.l.b16 %v5945
      %v6001 = vunpack.c.l.b16 %v5946
      %v6002 = vunpack.c.l.b16 %v5947
      %v6003 = vunpack.c.l.b16 %v5948
      %v6004 = vunpack.c.l.b16 %v5949
      %v6005 = vunpack.c.l.b16 %v5950
      %v6006 = vunpack.c.l.b16 %v5951
      %v6007 = vunpack.c.l.b16 %v5952
      %v6008 = vunpack.c.l.b16 %v5953
      %v6009 = vunpack.c.l.b16 %v5954
      %v6010 = vunpack.c.l.b16 %v5955
      %v6011 = vunpack.c.l.b16 %v5956
      %v6012 = vunpack.c.l.b16 %v5957
      %v6013 = vunpack.c.l.b16 %v5958
      %v6014 = vunpack.c.l.b16 %v5959
      %v6015 = vunpack.c.l.b16 %v5960
      %v6016 = vpack.c.b16 %v6001, %v6000
      %v6017 = vpack.c.b16 %v6003, %v6002
      %v6018 = vpack.c.b16 %v6005, %v6004
      %v6019 = vpack.c.b16 %v6007, %v6006
      %v6020 = vpack.c.b16 %v6009, %v6008
      %v6021 = vpack.c.b16 %v6011, %v6010
      %v6022 = vpack.c.b16 %v6013, %v6012
      %v6023 = vpack.c.b16 %v6015, %v6014
      %6032 = vmatpush.bf16.msra.mxu0 %v6023
      %6033 = vmatpush.bf16.msra.mxu0 %v6022
      %6034 = vmatpush.bf16.msra.mxu0 %v6021
      %6035 = vmatpush.bf16.msra.mxu0 %v6020
      %6036 = vmatpush.bf16.msra.mxu0 %v6019
      %6037 = vmatpush.bf16.msra.mxu0 %v6018
      %6038 = vmatpush.bf16.msra.mxu0 %v6017
      %6039 = vmatpush.bf16.msra.mxu0 %v6016
      %6040 = vmatmul.bf16.gmra.mxu0 %v5981
      %v6041 = vpop.f32.mrf.mxu0
      %v6042 = vadd.f32 0.0, %v6041
      %v6043 = vpop.f32.mrf.mxu0
      %v6044 = vadd.f32 0.0, %v6043
      %6045 = vmatmul.bf16.gmra.mxu0 %v5980
      %v6046 = vpop.f32.mrf.mxu0
      %v6047 = vadd.f32 0.0, %v6046
      %v6048 = vpop.f32.mrf.mxu0
      %6049 = vdwg.mxu0
      %v6050 = vadd.f32 %v5940, %v6042
      %v6051 = vadd.f32 %v5941, %v6044
      %v6052 = vadd.f32 %v5942, %v6047
      %s6053 = scalar_lea.vmem %s1, 1472
      %v6054 = vld [vmem:[%s6053] sm:$0xf]
      %v6055 = vld [vmem:[%s6053 + $0x4] sm:$0xf]
      %v6056 = vld [vmem:[%s6053 + $0x8] sm:$0xf]
      %v6057 = vld [vmem:[%s6053 + $0xc] sm:$0xf]
      %v6058 = vld [vmem:[%s6053 + $0x10] sm:$0xf]
      %v6059 = vld [vmem:[%s6053 + $0x14] sm:$0xf]
      %v6060 = vld [vmem:[%s6053 + $0x18] sm:$0xf]
      %v6061 = vld [vmem:[%s6053 + $0x1c] sm:$0xf]
      %v6062 = vld [vmem:[%s6053 + $0x20] sm:$0xf]
      %v6063 = vld [vmem:[%s6053 + $0x24] sm:$0xf]
      %v6064 = vld [vmem:[%s6053 + $0x28] sm:$0xf]
      %v6065 = vld [vmem:[%s6053 + $0x2c] sm:$0xf]
      %v6066 = vld [vmem:[%s6053 + $0x30] sm:$0xf]
      %v6067 = vld [vmem:[%s6053 + $0x34] sm:$0xf]
      %v6068 = vld [vmem:[%s6053 + $0x38] sm:$0xf]
      %v6069 = vld [vmem:[%s6053 + $0x3c] sm:$0xf]
      %v6070 = vpack.c.b16 %v5593, %v5592
      %v6071 = vpack.c.b16 %v5962, %v5962
      %v6090 = vunpack.c.l.b16 %v6054
      %v6091 = vunpack.c.l.b16 %v6055
      %v6092 = vunpack.c.l.b16 %v6056
      %v6093 = vunpack.c.l.b16 %v6057
      %v6094 = vunpack.c.l.b16 %v6058
      %v6095 = vunpack.c.l.b16 %v6059
      %v6096 = vunpack.c.l.b16 %v6060
      %v6097 = vunpack.c.l.b16 %v6061
      %v6098 = vunpack.c.l.b16 %v6062
      %v6099 = vunpack.c.l.b16 %v6063
      %v6100 = vunpack.c.l.b16 %v6064
      %v6101 = vunpack.c.l.b16 %v6065
      %v6102 = vunpack.c.l.b16 %v6066
      %v6103 = vunpack.c.l.b16 %v6067
      %v6104 = vunpack.c.l.b16 %v6068
      %v6105 = vunpack.c.l.b16 %v6069
      %v6106 = vpack.c.b16 %v6091, %v6090
      %v6107 = vpack.c.b16 %v6093, %v6092
      %v6108 = vpack.c.b16 %v6095, %v6094
      %v6109 = vpack.c.b16 %v6097, %v6096
      %v6110 = vpack.c.b16 %v6099, %v6098
      %v6111 = vpack.c.b16 %v6101, %v6100
      %v6112 = vpack.c.b16 %v6103, %v6102
      %v6113 = vpack.c.b16 %v6105, %v6104
      %6122 = vmatpush.bf16.msra.mxu0 %v6113
      %6123 = vmatpush.bf16.msra.mxu0 %v6112
      %6124 = vmatpush.bf16.msra.mxu0 %v6111
      %6125 = vmatpush.bf16.msra.mxu0 %v6110
      %6126 = vmatpush.bf16.msra.mxu0 %v6109
      %6127 = vmatpush.bf16.msra.mxu0 %v6108
      %6128 = vmatpush.bf16.msra.mxu0 %v6107
      %6129 = vmatpush.bf16.msra.mxu0 %v6106
      %6130 = vmatmul.bf16.gmra.mxu0 %v6070
      %v6131 = vpop.f32.mrf.mxu0
      %v6132 = vadd.f32 0.0, %v6131
      %v6133 = vpop.f32.mrf.mxu0
      %v6134 = vadd.f32 0.0, %v6133
      %6135 = vmatmul.bf16.gmra.mxu0 %v6071
      %v6136 = vpop.f32.mrf.mxu0
      %v6137 = vadd.f32 0.0, %v6136
      %v6138 = vpop.f32.mrf.mxu0
      %6139 = vdwg.mxu0
      %v6140 = vadd.f32 %v6050, %v6132
      %v6141 = vadd.f32 %v6051, %v6134
      %v6142 = vadd.f32 %v6052, %v6137
      %v6143 = vld [vmem:[#allocation3 + $0x4] sm:$0xc]
      %v6144 = vld [vmem:[#allocation3 + $0x8] sm:$0xf]
      %v6145 = vld [vmem:[#allocation3 + $0xc] sm:$0xf]
      %v6146 = vld [vmem:[#allocation3 + $0x10] sm:$0x3]
      %s6147 = scalar_lea.vmem %s1, 1536
      %v6148 = vld [vmem:[%s6147] sm:$0xf]
      %v6149 = vld [vmem:[%s6147 + $0x4] sm:$0xf]
      %v6150 = vld [vmem:[%s6147 + $0x8] sm:$0xf]
      %v6151 = vld [vmem:[%s6147 + $0xc] sm:$0xf]
      %v6152 = vld [vmem:[%s6147 + $0x10] sm:$0xf]
      %v6153 = vld [vmem:[%s6147 + $0x14] sm:$0xf]
      %v6154 = vld [vmem:[%s6147 + $0x18] sm:$0xf]
      %v6155 = vld [vmem:[%s6147 + $0x1c] sm:$0xf]
      %v6156 = vld [vmem:[%s6147 + $0x20] sm:$0xf]
      %v6157 = vld [vmem:[%s6147 + $0x24] sm:$0xf]
      %v6158 = vld [vmem:[%s6147 + $0x28] sm:$0xf]
      %v6159 = vld [vmem:[%s6147 + $0x2c] sm:$0xf]
      %v6160 = vld [vmem:[%s6147 + $0x30] sm:$0xf]
      %v6161 = vld [vmem:[%s6147 + $0x34] sm:$0xf]
      %v6162 = vld [vmem:[%s6147 + $0x38] sm:$0xf]
      %v6163 = vld [vmem:[%s6147 + $0x3c] sm:$0xf]
      %v6168 = vunpack.c.l.b16 %v6143
      %v6169 = vunpack.c.l.b16 %v6144
      %v6170 = vunpack.c.l.b16 %v6145
      %v6171 = vunpack.c.l.b16 %v6146
      %v6172 = vpack.c.b16 %v6169, %v6168
      %v6173 = vpack.c.b16 %v6171, %v6170
      %v6174 = vrot.slane %v6172, 2
      %v6175 = vrot.slane %v6173, 2
      %v6176 = vsel %vm2008, %v6174, %v6175
      %v6195 = vunpack.c.l.b16 %v6148
      %v6196 = vunpack.c.l.b16 %v6149
      %v6197 = vunpack.c.l.b16 %v6150
      %v6198 = vunpack.c.l.b16 %v6151
      %v6199 = vunpack.c.l.b16 %v6152
      %v6200 = vunpack.c.l.b16 %v6153
      %v6201 = vunpack.c.l.b16 %v6154
      %v6202 = vunpack.c.l.b16 %v6155
      %v6203 = vunpack.c.l.b16 %v6156
      %v6204 = vunpack.c.l.b16 %v6157
      %v6205 = vunpack.c.l.b16 %v6158
      %v6206 = vunpack.c.l.b16 %v6159
      %v6207 = vunpack.c.l.b16 %v6160
      %v6208 = vunpack.c.l.b16 %v6161
      %v6209 = vunpack.c.l.b16 %v6162
      %v6210 = vunpack.c.l.b16 %v6163
      %v6211 = vpack.c.b16 %v6196, %v6195
      %v6212 = vpack.c.b16 %v6198, %v6197
      %v6213 = vpack.c.b16 %v6200, %v6199
      %v6214 = vpack.c.b16 %v6202, %v6201
      %v6215 = vpack.c.b16 %v6204, %v6203
      %v6216 = vpack.c.b16 %v6206, %v6205
      %v6217 = vpack.c.b16 %v6208, %v6207
      %v6218 = vpack.c.b16 %v6210, %v6209
      %6227 = vmatpush.bf16.msra.mxu0 %v6218
      %6228 = vmatpush.bf16.msra.mxu0 %v6217
      %6229 = vmatpush.bf16.msra.mxu0 %v6216
      %6230 = vmatpush.bf16.msra.mxu0 %v6215
      %6231 = vmatpush.bf16.msra.mxu0 %v6214
      %6232 = vmatpush.bf16.msra.mxu0 %v6213
      %6233 = vmatpush.bf16.msra.mxu0 %v6212
      %6234 = vmatpush.bf16.msra.mxu0 %v6211
      %6235 = vmatmul.bf16.gmra.mxu0 %v6176
      %v6236 = vpop.f32.mrf.mxu0
      %v6237 = vadd.f32 0.0, %v6236
      %v6238 = vpop.f32.mrf.mxu0
      %v6239 = vadd.f32 0.0, %v6238
      %6240 = vmatmul.bf16.gmra.mxu0 %v6175
      %v6241 = vpop.f32.mrf.mxu0
      %v6242 = vadd.f32 0.0, %v6241
      %v6243 = vpop.f32.mrf.mxu0
      %6244 = vdwg.mxu0
      %v6245 = vadd.f32 %v6140, %v6237
      %v6246 = vadd.f32 %v6141, %v6239
      %v6247 = vadd.f32 %v6142, %v6242
      %v6248 = vld [vmem:[#allocation3 + $0x10] sm:$0x7]
      %s6249 = scalar_lea.vmem %s1, 1600
      %v6250 = vld [vmem:[%s6249] sm:$0xf]
      %v6251 = vld [vmem:[%s6249 + $0x4] sm:$0xf]
      %v6252 = vld [vmem:[%s6249 + $0x8] sm:$0xf]
      %v6253 = vld [vmem:[%s6249 + $0xc] sm:$0xf]
      %v6254 = vld [vmem:[%s6249 + $0x10] sm:$0xf]
      %v6255 = vld [vmem:[%s6249 + $0x14] sm:$0xf]
      %v6256 = vld [vmem:[%s6249 + $0x18] sm:$0xf]
      %v6257 = vld [vmem:[%s6249 + $0x1c] sm:$0xf]
      %v6258 = vld [vmem:[%s6249 + $0x20] sm:$0xf]
      %v6259 = vld [vmem:[%s6249 + $0x24] sm:$0xf]
      %v6260 = vld [vmem:[%s6249 + $0x28] sm:$0xf]
      %v6261 = vld [vmem:[%s6249 + $0x2c] sm:$0xf]
      %v6262 = vld [vmem:[%s6249 + $0x30] sm:$0xf]
      %v6263 = vld [vmem:[%s6249 + $0x34] sm:$0xf]
      %v6264 = vld [vmem:[%s6249 + $0x38] sm:$0xf]
      %v6265 = vld [vmem:[%s6249 + $0x3c] sm:$0xf]
      %v6267 = vunpack.c.l.b16 %v6248
      %v6268 = vpack.c.b16 %v6267, %v6170
      %v6270 = vshrl.u32 %v6172, 16
      %v6272 = vrot.slane %v6270, 2
      %v6273 = vshll.u32 %v6172, 16
      %v6275 = vrot.slane %v6273, 3
      %v6276 = vor.u32 %v6272, %v6275
      %v6278 = vshrl.u32 %v6268, 16
      %v6280 = vrot.slane %v6278, 2
      %v6281 = vshll.u32 %v6268, 16
      %v6283 = vrot.slane %v6281, 3
      %v6284 = vor.u32 %v6280, %v6283
      %v6285 = vsel %vm2653, %v6276, %v6284
      %v6304 = vunpack.c.l.b16 %v6250
      %v6305 = vunpack.c.l.b16 %v6251
      %v6306 = vunpack.c.l.b16 %v6252
      %v6307 = vunpack.c.l.b16 %v6253
      %v6308 = vunpack.c.l.b16 %v6254
      %v6309 = vunpack.c.l.b16 %v6255
      %v6310 = vunpack.c.l.b16 %v6256
      %v6311 = vunpack.c.l.b16 %v6257
      %v6312 = vunpack.c.l.b16 %v6258
      %v6313 = vunpack.c.l.b16 %v6259
      %v6314 = vunpack.c.l.b16 %v6260
      %v6315 = vunpack.c.l.b16 %v6261
      %v6316 = vunpack.c.l.b16 %v6262
      %v6317 = vunpack.c.l.b16 %v6263
      %v6318 = vunpack.c.l.b16 %v6264
      %v6319 = vunpack.c.l.b16 %v6265
      %v6320 = vpack.c.b16 %v6305, %v6304
      %v6321 = vpack.c.b16 %v6307, %v6306
      %v6322 = vpack.c.b16 %v6309, %v6308
      %v6323 = vpack.c.b16 %v6311, %v6310
      %v6324 = vpack.c.b16 %v6313, %v6312
      %v6325 = vpack.c.b16 %v6315, %v6314
      %v6326 = vpack.c.b16 %v6317, %v6316
      %v6327 = vpack.c.b16 %v6319, %v6318
      %6336 = vmatpush.bf16.msra.mxu0 %v6327
      %6337 = vmatpush.bf16.msra.mxu0 %v6326
      %6338 = vmatpush.bf16.msra.mxu0 %v6325
      %6339 = vmatpush.bf16.msra.mxu0 %v6324
      %6340 = vmatpush.bf16.msra.mxu0 %v6323
      %6341 = vmatpush.bf16.msra.mxu0 %v6322
      %6342 = vmatpush.bf16.msra.mxu0 %v6321
      %6343 = vmatpush.bf16.msra.mxu0 %v6320
      %6344 = vmatmul.bf16.gmra.mxu0 %v6285
      %v6345 = vpop.f32.mrf.mxu0
      %v6346 = vadd.f32 0.0, %v6345
      %v6347 = vpop.f32.mrf.mxu0
      %v6348 = vadd.f32 0.0, %v6347
      %6349 = vmatmul.bf16.gmra.mxu0 %v6284
      %v6350 = vpop.f32.mrf.mxu0
      %v6351 = vadd.f32 0.0, %v6350
      %v6352 = vpop.f32.mrf.mxu0
      %6353 = vdwg.mxu0
      %v6354 = vadd.f32 %v6245, %v6346
      %v6355 = vadd.f32 %v6246, %v6348
      %v6356 = vadd.f32 %v6247, %v6351
      %v6357 = vld [vmem:[#allocation3 + $0x4] sm:$0x8]
      %s6358 = scalar_lea.vmem %s1, 1664
      %v6359 = vld [vmem:[%s6358] sm:$0xf]
      %v6360 = vld [vmem:[%s6358 + $0x4] sm:$0xf]
      %v6361 = vld [vmem:[%s6358 + $0x8] sm:$0xf]
      %v6362 = vld [vmem:[%s6358 + $0xc] sm:$0xf]
      %v6363 = vld [vmem:[%s6358 + $0x10] sm:$0xf]
      %v6364 = vld [vmem:[%s6358 + $0x14] sm:$0xf]
      %v6365 = vld [vmem:[%s6358 + $0x18] sm:$0xf]
      %v6366 = vld [vmem:[%s6358 + $0x1c] sm:$0xf]
      %v6367 = vld [vmem:[%s6358 + $0x20] sm:$0xf]
      %v6368 = vld [vmem:[%s6358 + $0x24] sm:$0xf]
      %v6369 = vld [vmem:[%s6358 + $0x28] sm:$0xf]
      %v6370 = vld [vmem:[%s6358 + $0x2c] sm:$0xf]
      %v6371 = vld [vmem:[%s6358 + $0x30] sm:$0xf]
      %v6372 = vld [vmem:[%s6358 + $0x34] sm:$0xf]
      %v6373 = vld [vmem:[%s6358 + $0x38] sm:$0xf]
      %v6374 = vld [vmem:[%s6358 + $0x3c] sm:$0xf]
      %v6376 = vunpack.c.l.b16 %v6357
      %v6377 = vpack.c.b16 %v6169, %v6376
      %v6378 = vrot.slane %v6377, 3
      %v6379 = vrot.slane %v6268, 3
      %v6380 = vsel %vm3046, %v6378, %v6379
      %v6399 = vunpack.c.l.b16 %v6359
      %v6400 = vunpack.c.l.b16 %v6360
      %v6401 = vunpack.c.l.b16 %v6361
      %v6402 = vunpack.c.l.b16 %v6362
      %v6403 = vunpack.c.l.b16 %v6363
      %v6404 = vunpack.c.l.b16 %v6364
      %v6405 = vunpack.c.l.b16 %v6365
      %v6406 = vunpack.c.l.b16 %v6366
      %v6407 = vunpack.c.l.b16 %v6367
      %v6408 = vunpack.c.l.b16 %v6368
      %v6409 = vunpack.c.l.b16 %v6369
      %v6410 = vunpack.c.l.b16 %v6370
      %v6411 = vunpack.c.l.b16 %v6371
      %v6412 = vunpack.c.l.b16 %v6372
      %v6413 = vunpack.c.l.b16 %v6373
      %v6414 = vunpack.c.l.b16 %v6374
      %v6415 = vpack.c.b16 %v6400, %v6399
      %v6416 = vpack.c.b16 %v6402, %v6401
      %v6417 = vpack.c.b16 %v6404, %v6403
      %v6418 = vpack.c.b16 %v6406, %v6405
      %v6419 = vpack.c.b16 %v6408, %v6407
      %v6420 = vpack.c.b16 %v6410, %v6409
      %v6421 = vpack.c.b16 %v6412, %v6411
      %v6422 = vpack.c.b16 %v6414, %v6413
      %6431 = vmatpush.bf16.msra.mxu0 %v6422
      %6432 = vmatpush.bf16.msra.mxu0 %v6421
      %6433 = vmatpush.bf16.msra.mxu0 %v6420
      %6434 = vmatpush.bf16.msra.mxu0 %v6419
      %6435 = vmatpush.bf16.msra.mxu0 %v6418
      %6436 = vmatpush.bf16.msra.mxu0 %v6417
      %6437 = vmatpush.bf16.msra.mxu0 %v6416
      %6438 = vmatpush.bf16.msra.mxu0 %v6415
      %6439 = vmatmul.bf16.gmra.mxu0 %v6380
      %v6440 = vpop.f32.mrf.mxu0
      %v6441 = vadd.f32 0.0, %v6440
      %v6442 = vpop.f32.mrf.mxu0
      %v6443 = vadd.f32 0.0, %v6442
      %6444 = vmatmul.bf16.gmra.mxu0 %v6379
      %v6445 = vpop.f32.mrf.mxu0
      %v6446 = vadd.f32 0.0, %v6445
      %v6447 = vpop.f32.mrf.mxu0
      %6448 = vdwg.mxu0
      %v6449 = vadd.f32 %v6354, %v6441
      %v6450 = vadd.f32 %v6355, %v6443
      %v6451 = vadd.f32 %v6356, %v6446
      %v6452 = vld [vmem:[%s2 + $0x2] sm:$0x1]
      %v6453 = vperm.slane %v6452, 0
      %v6454 = vadd.f32 %v6449, %v6453
      %v6455 = vadd.f32 %v6450, %v6453
      %v6456 = vadd.f32 %v6451, %v6453
      %v6457 = vmax.f32 %v6454, 0.0
      %v6458 = vmax.f32 %v6455, 0.0
      %v6459 = vmax.f32 %v6456, 0.0
      %v6460 = vpack.c.bf16 %v6458, %v6457
      %v6461 = vpack.c.bf16 %v6459, %v6459
      %v6462 = vld [vmem:[%s5] sm:$0xf]
      %v6463 = vld [vmem:[%s5 + $0x4] sm:$0xf]
      %v6464 = vld [vmem:[%s5 + $0x8] sm:$0xf]
      %v6465 = vld [vmem:[%s5 + $0xc] sm:$0xf]
      %v6466 = vld [vmem:[%s5 + $0x10] sm:$0x7]
      %v6472 = vunpack.c.l.b16 %v6462
      %v6473 = vunpack.c.l.b16 %v6463
      %v6474 = vunpack.c.l.b16 %v6464
      %v6475 = vunpack.c.l.b16 %v6465
      %v6476 = vunpack.c.l.b16 %v6466
      %v6477 = vpack.c.b16 %v6473, %v6472
      %v6478 = vpack.c.b16 %v6475, %v6474
      %v6479 = vpack.c.b16 %v6476, %v6476
      %vm6480 = vcmask 195584
      %v6482 = vsel %vm6480, %v6477, 0
      %v6485 = vsel %vm6480, %v6478, 0
      %v6488 = vsel %vm6480, %v6479, 0
      %vm6490 = vcmask 1043456
      %v6492 = vsel %vm6490, %v6461, 0
      %6494 = vmatpush.bf16.msra.mxu0 0
      %6495 = vmatpush.bf16.msra.mxu0 0
      %6496 = vmatpush.bf16.msra.mxu0 0
      %6497 = vmatpush.bf16.msra.mxu0 0
      %6498 = vmatpush.bf16.msra.mxu0 0
      %6499 = vmatpush.bf16.msra.mxu0 0
      %6500 = vmatpush.bf16.msra.mxu0 %v6492
      %6501 = vmatpush.bf16.msra.mxu0 %v6460
      %6502 = vmatmul.bf16.gmra.mxu0 %v6482
      %v6503 = vpop.f32.mrf.mxu0
      %v6504 = vadd.f32 0.0, %v6503
      %v6505 = vpop.f32.mrf.mxu0
      %v6506 = vadd.f32 0.0, %v6505
      %6507 = vmatmul.bf16.gmra.mxu0 %v6485
      %v6508 = vpop.f32.mrf.mxu0
      %v6509 = vadd.f32 0.0, %v6508
      %v6510 = vpop.f32.mrf.mxu0
      %v6511 = vadd.f32 0.0, %v6510
      %6512 = vmatmul.bf16.gmra.mxu0 %v6488
      %v6513 = vpop.f32.mrf.mxu0
      %v6514 = vadd.f32 0.0, %v6513
      %v6515 = vpop.f32.mrf.mxu0
      %6516 = vdwg.mxu0
      %v6517 = vpack.c.bf16 %v6504, %v6504
      %v6518 = vpack.c.bf16 %v6506, %v6506
      %v6519 = vpack.c.bf16 %v6509, %v6509
      %v6520 = vpack.c.bf16 %v6511, %v6511
      %v6521 = vpack.c.bf16 %v6514, %v6514
      %6522 = vst [vmem:[#allocation4] sm:$0xf] %v6517
      %6523 = vst [vmem:[#allocation4 + $0x4] sm:$0xf] %v6518
      %6524 = vst [vmem:[#allocation4 + $0x8] sm:$0xf] %v6519
      %6525 = vst [vmem:[#allocation4 + $0xc] sm:$0xf] %v6520
      %6526 = vst [vmem:[#allocation4 + $0x10] sm:$0x7] %v6521
      %v6527 = vld [vmem:[#allocation4] sm:$0xf]
      %v6528 = vld [vmem:[#allocation4 + $0x4] sm:$0xf]
      %v6529 = vld [vmem:[#allocation4 + $0x8] sm:$0xf]
      %s6530 = scalar_lea.vmem %s1, 1728
      %v6531 = vld [vmem:[%s6530] sm:$0xf]
      %v6532 = vld [vmem:[%s6530 + $0x4] sm:$0xf]
      %v6533 = vld [vmem:[%s6530 + $0x8] sm:$0xf]
      %v6534 = vld [vmem:[%s6530 + $0xc] sm:$0xf]
      %v6535 = vld [vmem:[%s6530 + $0x10] sm:$0xf]
      %v6536 = vld [vmem:[%s6530 + $0x14] sm:$0xf]
      %v6537 = vld [vmem:[%s6530 + $0x18] sm:$0xf]
      %v6538 = vld [vmem:[%s6530 + $0x1c] sm:$0xf]
      %v6539 = vld [vmem:[%s6530 + $0x20] sm:$0xf]
      %v6540 = vld [vmem:[%s6530 + $0x24] sm:$0xf]
      %v6541 = vld [vmem:[%s6530 + $0x28] sm:$0xf]
      %v6542 = vld [vmem:[%s6530 + $0x2c] sm:$0xf]
      %v6543 = vld [vmem:[%s6530 + $0x30] sm:$0xf]
      %v6544 = vld [vmem:[%s6530 + $0x34] sm:$0xf]
      %v6545 = vld [vmem:[%s6530 + $0x38] sm:$0xf]
      %v6546 = vld [vmem:[%s6530 + $0x3c] sm:$0xf]
      %v6547 = vld [vmem:[#allocation4 + $0xc] sm:$0x1]
      %s6548 = scalar_lea.vmem %s1, 1792
      %v6549 = vld [vmem:[%s6548] sm:$0xf]
      %v6550 = vld [vmem:[%s6548 + $0x4] sm:$0xf]
      %v6551 = vld [vmem:[%s6548 + $0x8] sm:$0xf]
      %v6552 = vld [vmem:[%s6548 + $0xc] sm:$0xf]
      %v6553 = vld [vmem:[%s6548 + $0x10] sm:$0xf]
      %v6554 = vld [vmem:[%s6548 + $0x14] sm:$0xf]
      %v6555 = vld [vmem:[%s6548 + $0x18] sm:$0xf]
      %v6556 = vld [vmem:[%s6548 + $0x1c] sm:$0xf]
      %v6557 = vld [vmem:[%s6548 + $0x20] sm:$0xf]
      %v6558 = vld [vmem:[%s6548 + $0x24] sm:$0xf]
      %v6559 = vld [vmem:[%s6548 + $0x28] sm:$0xf]
      %v6560 = vld [vmem:[%s6548 + $0x2c] sm:$0xf]
      %v6561 = vld [vmem:[%s6548 + $0x30] sm:$0xf]
      %v6562 = vld [vmem:[%s6548 + $0x34] sm:$0xf]
      %v6563 = vld [vmem:[%s6548 + $0x38] sm:$0xf]
      %v6564 = vld [vmem:[%s6548 + $0x3c] sm:$0xf]
      %v6569 = vunpack.c.l.b16 %v6527
      %v6570 = vunpack.c.l.b16 %v6528
      %v6571 = vunpack.c.l.b16 %v6529
      %v6572 = vunpack.c.l.b16 %v6547
      %v6573 = vpack.c.b16 %v6570, %v6569
      %v6574 = vpack.c.b16 %v6572, %v6571
      %v6576 = vshrl.u32 %v6573, 16
      %v6578 = vshll.u32 %v6573, 16
      %v6580 = vrot.slane %v6578, 1
      %v6581 = vor.u32 %v6576, %v6580
      %v6583 = vshll.u32 %v6574, 16
      %v6585 = vrot.slane %v6583, 1
      %v6586 = vsel %vm470, %v6581, %v6585
      %v6587 = vshrl.u32 %v6574, 16
      %v6589 = vor.u32 %v6587, %v6585
      %v6608 = vunpack.c.l.b16 %v6549
      %v6609 = vunpack.c.l.b16 %v6550
      %v6610 = vunpack.c.l.b16 %v6551
      %v6611 = vunpack.c.l.b16 %v6552
      %v6612 = vunpack.c.l.b16 %v6553
      %v6613 = vunpack.c.l.b16 %v6554
      %v6614 = vunpack.c.l.b16 %v6555
      %v6615 = vunpack.c.l.b16 %v6556
      %v6616 = vunpack.c.l.b16 %v6557
      %v6617 = vunpack.c.l.b16 %v6558
      %v6618 = vunpack.c.l.b16 %v6559
      %v6619 = vunpack.c.l.b16 %v6560
      %v6620 = vunpack.c.l.b16 %v6561
      %v6621 = vunpack.c.l.b16 %v6562
      %v6622 = vunpack.c.l.b16 %v6563
      %v6623 = vunpack.c.l.b16 %v6564
      %v6624 = vpack.c.b16 %v6609, %v6608
      %v6625 = vpack.c.b16 %v6611, %v6610
      %v6626 = vpack.c.b16 %v6613, %v6612
      %v6627 = vpack.c.b16 %v6615, %v6614
      %v6628 = vpack.c.b16 %v6617, %v6616
      %v6629 = vpack.c.b16 %v6619, %v6618
      %v6630 = vpack.c.b16 %v6621, %v6620
      %v6631 = vpack.c.b16 %v6623, %v6622
      %6640 = vmatpush.bf16.msra.mxu0 %v6631
      %6641 = vmatpush.bf16.msra.mxu0 %v6630
      %6642 = vmatpush.bf16.msra.mxu0 %v6629
      %6643 = vmatpush.bf16.msra.mxu0 %v6628
      %6644 = vmatpush.bf16.msra.mxu0 %v6627
      %6645 = vmatpush.bf16.msra.mxu0 %v6626
      %6646 = vmatpush.bf16.msra.mxu0 %v6625
      %6647 = vmatpush.bf16.msra.mxu0 %v6624
      %6648 = vmatmul.bf16.gmra.mxu0 %v6586
      %v6649 = vpop.f32.mrf.mxu0
      %v6650 = vadd.f32 0.0, %v6649
      %v6651 = vpop.f32.mrf.mxu0
      %v6652 = vadd.f32 0.0, %v6651
      %6653 = vmatmul.bf16.gmra.mxu0 %v6589
      %v6654 = vpop.f32.mrf.mxu0
      %v6655 = vadd.f32 0.0, %v6654
      %v6656 = vpop.f32.mrf.mxu0
      %6657 = vdwg.mxu0
      %v6658 = vpack.c.b16 %v6571, %v6571
      %v6677 = vunpack.c.l.b16 %v6531
      %v6678 = vunpack.c.l.b16 %v6532
      %v6679 = vunpack.c.l.b16 %v6533
      %v6680 = vunpack.c.l.b16 %v6534
      %v6681 = vunpack.c.l.b16 %v6535
      %v6682 = vunpack.c.l.b16 %v6536
      %v6683 = vunpack.c.l.b16 %v6537
      %v6684 = vunpack.c.l.b16 %v6538
      %v6685 = vunpack.c.l.b16 %v6539
      %v6686 = vunpack.c.l.b16 %v6540
      %v6687 = vunpack.c.l.b16 %v6541
      %v6688 = vunpack.c.l.b16 %v6542
      %v6689 = vunpack.c.l.b16 %v6543
      %v6690 = vunpack.c.l.b16 %v6544
      %v6691 = vunpack.c.l.b16 %v6545
      %v6692 = vunpack.c.l.b16 %v6546
      %v6693 = vpack.c.b16 %v6678, %v6677
      %v6694 = vpack.c.b16 %v6680, %v6679
      %v6695 = vpack.c.b16 %v6682, %v6681
      %v6696 = vpack.c.b16 %v6684, %v6683
      %v6697 = vpack.c.b16 %v6686, %v6685
      %v6698 = vpack.c.b16 %v6688, %v6687
      %v6699 = vpack.c.b16 %v6690, %v6689
      %v6700 = vpack.c.b16 %v6692, %v6691
      %6709 = vmatpush.bf16.msra.mxu0 %v6700
      %6710 = vmatpush.bf16.msra.mxu0 %v6699
      %6711 = vmatpush.bf16.msra.mxu0 %v6698
      %6712 = vmatpush.bf16.msra.mxu0 %v6697
      %6713 = vmatpush.bf16.msra.mxu0 %v6696
      %6714 = vmatpush.bf16.msra.mxu0 %v6695
      %6715 = vmatpush.bf16.msra.mxu0 %v6694
      %6716 = vmatpush.bf16.msra.mxu0 %v6693
      %6717 = vmatmul.bf16.gmra.mxu0 %v6573
      %v6718 = vpop.f32.mrf.mxu0
      %v6719 = vadd.f32 %v6650, %v6718
      %v6720 = vpop.f32.mrf.mxu0
      %v6721 = vadd.f32 %v6652, %v6720
      %6722 = vmatmul.bf16.gmra.mxu0 %v6658
      %v6723 = vpop.f32.mrf.mxu0
      %v6724 = vadd.f32 %v6655, %v6723
      %v6725 = vpop.f32.mrf.mxu0
      %6726 = vdwg.mxu0
      %v6727 = vld [vmem:[#allocation4] sm:$0xe]
      %s6728 = scalar_lea.vmem %s1, 1856
      %v6729 = vld [vmem:[%s6728] sm:$0xf]
      %v6730 = vld [vmem:[%s6728 + $0x4] sm:$0xf]
      %v6731 = vld [vmem:[%s6728 + $0x8] sm:$0xf]
      %v6732 = vld [vmem:[%s6728 + $0xc] sm:$0xf]
      %v6733 = vld [vmem:[%s6728 + $0x10] sm:$0xf]
      %v6734 = vld [vmem:[%s6728 + $0x14] sm:$0xf]
      %v6735 = vld [vmem:[%s6728 + $0x18] sm:$0xf]
      %v6736 = vld [vmem:[%s6728 + $0x1c] sm:$0xf]
      %v6737 = vld [vmem:[%s6728 + $0x20] sm:$0xf]
      %v6738 = vld [vmem:[%s6728 + $0x24] sm:$0xf]
      %v6739 = vld [vmem:[%s6728 + $0x28] sm:$0xf]
      %v6740 = vld [vmem:[%s6728 + $0x2c] sm:$0xf]
      %v6741 = vld [vmem:[%s6728 + $0x30] sm:$0xf]
      %v6742 = vld [vmem:[%s6728 + $0x34] sm:$0xf]
      %v6743 = vld [vmem:[%s6728 + $0x38] sm:$0xf]
      %v6744 = vld [vmem:[%s6728 + $0x3c] sm:$0xf]
      %v6746 = vunpack.c.l.b16 %v6727
      %v6747 = vpack.c.b16 %v6570, %v6746
      %v6748 = vrot.slane %v6747, 1
      %v6749 = vrot.slane %v6574, 1
      %v6750 = vsel %vm970, %v6748, %v6749
      %v6769 = vunpack.c.l.b16 %v6729
      %v6770 = vunpack.c.l.b16 %v6730
      %v6771 = vunpack.c.l.b16 %v6731
      %v6772 = vunpack.c.l.b16 %v6732
      %v6773 = vunpack.c.l.b16 %v6733
      %v6774 = vunpack.c.l.b16 %v6734
      %v6775 = vunpack.c.l.b16 %v6735
      %v6776 = vunpack.c.l.b16 %v6736
      %v6777 = vunpack.c.l.b16 %v6737
      %v6778 = vunpack.c.l.b16 %v6738
      %v6779 = vunpack.c.l.b16 %v6739
      %v6780 = vunpack.c.l.b16 %v6740
      %v6781 = vunpack.c.l.b16 %v6741
      %v6782 = vunpack.c.l.b16 %v6742
      %v6783 = vunpack.c.l.b16 %v6743
      %v6784 = vunpack.c.l.b16 %v6744
      %v6785 = vpack.c.b16 %v6770, %v6769
      %v6786 = vpack.c.b16 %v6772, %v6771
      %v6787 = vpack.c.b16 %v6774, %v6773
      %v6788 = vpack.c.b16 %v6776, %v6775
      %v6789 = vpack.c.b16 %v6778, %v6777
      %v6790 = vpack.c.b16 %v6780, %v6779
      %v6791 = vpack.c.b16 %v6782, %v6781
      %v6792 = vpack.c.b16 %v6784, %v6783
      %6801 = vmatpush.bf16.msra.mxu0 %v6792
      %6802 = vmatpush.bf16.msra.mxu0 %v6791
      %6803 = vmatpush.bf16.msra.mxu0 %v6790
      %6804 = vmatpush.bf16.msra.mxu0 %v6789
      %6805 = vmatpush.bf16.msra.mxu0 %v6788
      %6806 = vmatpush.bf16.msra.mxu0 %v6787
      %6807 = vmatpush.bf16.msra.mxu0 %v6786
      %6808 = vmatpush.bf16.msra.mxu0 %v6785
      %6809 = vmatmul.bf16.gmra.mxu0 %v6750
      %v6810 = vpop.f32.mrf.mxu0
      %v6811 = vadd.f32 0.0, %v6810
      %v6812 = vpop.f32.mrf.mxu0
      %v6813 = vadd.f32 0.0, %v6812
      %6814 = vmatmul.bf16.gmra.mxu0 %v6749
      %v6815 = vpop.f32.mrf.mxu0
      %v6816 = vadd.f32 0.0, %v6815
      %v6817 = vpop.f32.mrf.mxu0
      %6818 = vdwg.mxu0
      %v6819 = vadd.f32 %v6719, %v6811
      %v6820 = vadd.f32 %v6721, %v6813
      %v6821 = vadd.f32 %v6724, %v6816
      %v6822 = vld [vmem:[#allocation4] sm:$0x8]
      %v6823 = vld [vmem:[#allocation4 + $0xc] sm:$0x7]
      %s6824 = scalar_lea.vmem %s1, 1920
      %v6825 = vld [vmem:[%s6824] sm:$0xf]
      %v6826 = vld [vmem:[%s6824 + $0x4] sm:$0xf]
      %v6827 = vld [vmem:[%s6824 + $0x8] sm:$0xf]
      %v6828 = vld [vmem:[%s6824 + $0xc] sm:$0xf]
      %v6829 = vld [vmem:[%s6824 + $0x10] sm:$0xf]
      %v6830 = vld [vmem:[%s6824 + $0x14] sm:$0xf]
      %v6831 = vld [vmem:[%s6824 + $0x18] sm:$0xf]
      %v6832 = vld [vmem:[%s6824 + $0x1c] sm:$0xf]
      %v6833 = vld [vmem:[%s6824 + $0x20] sm:$0xf]
      %v6834 = vld [vmem:[%s6824 + $0x24] sm:$0xf]
      %v6835 = vld [vmem:[%s6824 + $0x28] sm:$0xf]
      %v6836 = vld [vmem:[%s6824 + $0x2c] sm:$0xf]
      %v6837 = vld [vmem:[%s6824 + $0x30] sm:$0xf]
      %v6838 = vld [vmem:[%s6824 + $0x34] sm:$0xf]
      %v6839 = vld [vmem:[%s6824 + $0x38] sm:$0xf]
      %v6840 = vld [vmem:[%s6824 + $0x3c] sm:$0xf]
      %v6843 = vunpack.c.l.b16 %v6822
      %v6844 = vunpack.c.l.b16 %v6823
      %v6845 = vpack.c.b16 %v6570, %v6843
      %v6846 = vpack.c.b16 %v6844, %v6571
      %v6847 = vrot.slane %v6845, 3
      %v6848 = vrot.slane %v6846, 3
      %v6849 = vsel %vm3046, %v6847, %v6848
      %v6868 = vunpack.c.l.b16 %v6825
      %v6869 = vunpack.c.l.b16 %v6826
      %v6870 = vunpack.c.l.b16 %v6827
      %v6871 = vunpack.c.l.b16 %v6828
      %v6872 = vunpack.c.l.b16 %v6829
      %v6873 = vunpack.c.l.b16 %v6830
      %v6874 = vunpack.c.l.b16 %v6831
      %v6875 = vunpack.c.l.b16 %v6832
      %v6876 = vunpack.c.l.b16 %v6833
      %v6877 = vunpack.c.l.b16 %v6834
      %v6878 = vunpack.c.l.b16 %v6835
      %v6879 = vunpack.c.l.b16 %v6836
      %v6880 = vunpack.c.l.b16 %v6837
      %v6881 = vunpack.c.l.b16 %v6838
      %v6882 = vunpack.c.l.b16 %v6839
      %v6883 = vunpack.c.l.b16 %v6840
      %v6884 = vpack.c.b16 %v6869, %v6868
      %v6885 = vpack.c.b16 %v6871, %v6870
      %v6886 = vpack.c.b16 %v6873, %v6872
      %v6887 = vpack.c.b16 %v6875, %v6874
      %v6888 = vpack.c.b16 %v6877, %v6876
      %v6889 = vpack.c.b16 %v6879, %v6878
      %v6890 = vpack.c.b16 %v6881, %v6880
      %v6891 = vpack.c.b16 %v6883, %v6882
      %6900 = vmatpush.bf16.msra.mxu0 %v6891
      %6901 = vmatpush.bf16.msra.mxu0 %v6890
      %6902 = vmatpush.bf16.msra.mxu0 %v6889
      %6903 = vmatpush.bf16.msra.mxu0 %v6888
      %6904 = vmatpush.bf16.msra.mxu0 %v6887
      %6905 = vmatpush.bf16.msra.mxu0 %v6886
      %6906 = vmatpush.bf16.msra.mxu0 %v6885
      %6907 = vmatpush.bf16.msra.mxu0 %v6884
      %6908 = vmatmul.bf16.gmra.mxu0 %v6849
      %v6909 = vpop.f32.mrf.mxu0
      %v6910 = vadd.f32 0.0, %v6909
      %v6911 = vpop.f32.mrf.mxu0
      %v6912 = vadd.f32 0.0, %v6911
      %6913 = vmatmul.bf16.gmra.mxu0 %v6848
      %v6914 = vpop.f32.mrf.mxu0
      %v6915 = vadd.f32 0.0, %v6914
      %v6916 = vpop.f32.mrf.mxu0
      %6917 = vdwg.mxu0
      %v6918 = vadd.f32 %v6819, %v6910
      %v6919 = vadd.f32 %v6820, %v6912
      %v6920 = vadd.f32 %v6821, %v6915
      %v6921 = vld [vmem:[#allocation4 + $0xc] sm:$0xf]
      %s6922 = scalar_lea.vmem %s1, 1984
      %v6923 = vld [vmem:[%s6922] sm:$0xf]
      %v6924 = vld [vmem:[%s6922 + $0x4] sm:$0xf]
      %v6925 = vld [vmem:[%s6922 + $0x8] sm:$0xf]
      %v6926 = vld [vmem:[%s6922 + $0xc] sm:$0xf]
      %v6927 = vld [vmem:[%s6922 + $0x10] sm:$0xf]
      %v6928 = vld [vmem:[%s6922 + $0x14] sm:$0xf]
      %v6929 = vld [vmem:[%s6922 + $0x18] sm:$0xf]
      %v6930 = vld [vmem:[%s6922 + $0x1c] sm:$0xf]
      %v6931 = vld [vmem:[%s6922 + $0x20] sm:$0xf]
      %v6932 = vld [vmem:[%s6922 + $0x24] sm:$0xf]
      %v6933 = vld [vmem:[%s6922 + $0x28] sm:$0xf]
      %v6934 = vld [vmem:[%s6922 + $0x2c] sm:$0xf]
      %v6935 = vld [vmem:[%s6922 + $0x30] sm:$0xf]
      %v6936 = vld [vmem:[%s6922 + $0x34] sm:$0xf]
      %v6937 = vld [vmem:[%s6922 + $0x38] sm:$0xf]
      %v6938 = vld [vmem:[%s6922 + $0x3c] sm:$0xf]
      %v6940 = vunpack.c.l.b16 %v6921
      %v6941 = vpack.c.b16 %v6940, %v6571
      %v6943 = vshrl.u32 %v6845, 16
      %v6945 = vrot.slane %v6943, 3
      %v6946 = vshll.u32 %v6845, 16
      %v6948 = vrot.slane %v6946, 4
      %v6949 = vor.u32 %v6945, %v6948
      %v6951 = vshrl.u32 %v6941, 16
      %v6953 = vrot.slane %v6951, 3
      %v6954 = vshll.u32 %v6941, 16
      %v6956 = vrot.slane %v6954, 4
      %v6957 = vor.u32 %v6953, %v6956
      %v6958 = vsel %vm5964, %v6949, %v6957
      %v6977 = vunpack.c.l.b16 %v6923
      %v6978 = vunpack.c.l.b16 %v6924
      %v6979 = vunpack.c.l.b16 %v6925
      %v6980 = vunpack.c.l.b16 %v6926
      %v6981 = vunpack.c.l.b16 %v6927
      %v6982 = vunpack.c.l.b16 %v6928
      %v6983 = vunpack.c.l.b16 %v6929
      %v6984 = vunpack.c.l.b16 %v6930
      %v6985 = vunpack.c.l.b16 %v6931
      %v6986 = vunpack.c.l.b16 %v6932
      %v6987 = vunpack.c.l.b16 %v6933
      %v6988 = vunpack.c.l.b16 %v6934
      %v6989 = vunpack.c.l.b16 %v6935
      %v6990 = vunpack.c.l.b16 %v6936
      %v6991 = vunpack.c.l.b16 %v6937
      %v6992 = vunpack.c.l.b16 %v6938
      %v6993 = vpack.c.b16 %v6978, %v6977
      %v6994 = vpack.c.b16 %v6980, %v6979
      %v6995 = vpack.c.b16 %v6982, %v6981
      %v6996 = vpack.c.b16 %v6984, %v6983
      %v6997 = vpack.c.b16 %v6986, %v6985
      %v6998 = vpack.c.b16 %v6988, %v6987
      %v6999 = vpack.c.b16 %v6990, %v6989
      %v7000 = vpack.c.b16 %v6992, %v6991
      %7009 = vmatpush.bf16.msra.mxu0 %v7000
      %7010 = vmatpush.bf16.msra.mxu0 %v6999
      %7011 = vmatpush.bf16.msra.mxu0 %v6998
      %7012 = vmatpush.bf16.msra.mxu0 %v6997
      %7013 = vmatpush.bf16.msra.mxu0 %v6996
      %7014 = vmatpush.bf16.msra.mxu0 %v6995
      %7015 = vmatpush.bf16.msra.mxu0 %v6994
      %7016 = vmatpush.bf16.msra.mxu0 %v6993
      %7017 = vmatmul.bf16.gmra.mxu0 %v6958
      %v7018 = vpop.f32.mrf.mxu0
      %v7019 = vadd.f32 0.0, %v7018
      %v7020 = vpop.f32.mrf.mxu0
      %v7021 = vadd.f32 0.0, %v7020
      %7022 = vmatmul.bf16.gmra.mxu0 %v6957
      %v7023 = vpop.f32.mrf.mxu0
      %v7024 = vadd.f32 0.0, %v7023
      %v7025 = vpop.f32.mrf.mxu0
      %7026 = vdwg.mxu0
      %v7027 = vadd.f32 %v6918, %v7019
      %v7028 = vadd.f32 %v6919, %v7021
      %v7029 = vadd.f32 %v6920, %v7024
      %s7030 = scalar_lea.vmem %s1, 2048
      %v7031 = vld [vmem:[%s7030] sm:$0xf]
      %v7032 = vld [vmem:[%s7030 + $0x4] sm:$0xf]
      %v7033 = vld [vmem:[%s7030 + $0x8] sm:$0xf]
      %v7034 = vld [vmem:[%s7030 + $0xc] sm:$0xf]
      %v7035 = vld [vmem:[%s7030 + $0x10] sm:$0xf]
      %v7036 = vld [vmem:[%s7030 + $0x14] sm:$0xf]
      %v7037 = vld [vmem:[%s7030 + $0x18] sm:$0xf]
      %v7038 = vld [vmem:[%s7030 + $0x1c] sm:$0xf]
      %v7039 = vld [vmem:[%s7030 + $0x20] sm:$0xf]
      %v7040 = vld [vmem:[%s7030 + $0x24] sm:$0xf]
      %v7041 = vld [vmem:[%s7030 + $0x28] sm:$0xf]
      %v7042 = vld [vmem:[%s7030 + $0x2c] sm:$0xf]
      %v7043 = vld [vmem:[%s7030 + $0x30] sm:$0xf]
      %v7044 = vld [vmem:[%s7030 + $0x34] sm:$0xf]
      %v7045 = vld [vmem:[%s7030 + $0x38] sm:$0xf]
      %v7046 = vld [vmem:[%s7030 + $0x3c] sm:$0xf]
      %v7047 = vpack.c.b16 %v6571, %v6570
      %v7048 = vpack.c.b16 %v6940, %v6940
      %v7067 = vunpack.c.l.b16 %v7031
      %v7068 = vunpack.c.l.b16 %v7032
      %v7069 = vunpack.c.l.b16 %v7033
      %v7070 = vunpack.c.l.b16 %v7034
      %v7071 = vunpack.c.l.b16 %v7035
      %v7072 = vunpack.c.l.b16 %v7036
      %v7073 = vunpack.c.l.b16 %v7037
      %v7074 = vunpack.c.l.b16 %v7038
      %v7075 = vunpack.c.l.b16 %v7039
      %v7076 = vunpack.c.l.b16 %v7040
      %v7077 = vunpack.c.l.b16 %v7041
      %v7078 = vunpack.c.l.b16 %v7042
      %v7079 = vunpack.c.l.b16 %v7043
      %v7080 = vunpack.c.l.b16 %v7044
      %v7081 = vunpack.c.l.b16 %v7045
      %v7082 = vunpack.c.l.b16 %v7046
      %v7083 = vpack.c.b16 %v7068, %v7067
      %v7084 = vpack.c.b16 %v7070, %v7069
      %v7085 = vpack.c.b16 %v7072, %v7071
      %v7086 = vpack.c.b16 %v7074, %v7073
      %v7087 = vpack.c.b16 %v7076, %v7075
      %v7088 = vpack.c.b16 %v7078, %v7077
      %v7089 = vpack.c.b16 %v7080, %v7079
      %v7090 = vpack.c.b16 %v7082, %v7081
      %7099 = vmatpush.bf16.msra.mxu0 %v7090
      %7100 = vmatpush.bf16.msra.mxu0 %v7089
      %7101 = vmatpush.bf16.msra.mxu0 %v7088
      %7102 = vmatpush.bf16.msra.mxu0 %v7087
      %7103 = vmatpush.bf16.msra.mxu0 %v7086
      %7104 = vmatpush.bf16.msra.mxu0 %v7085
      %7105 = vmatpush.bf16.msra.mxu0 %v7084
      %7106 = vmatpush.bf16.msra.mxu0 %v7083
      %7107 = vmatmul.bf16.gmra.mxu0 %v7047
      %v7108 = vpop.f32.mrf.mxu0
      %v7109 = vadd.f32 0.0, %v7108
      %v7110 = vpop.f32.mrf.mxu0
      %v7111 = vadd.f32 0.0, %v7110
      %7112 = vmatmul.bf16.gmra.mxu0 %v7048
      %v7113 = vpop.f32.mrf.mxu0
      %v7114 = vadd.f32 0.0, %v7113
      %v7115 = vpop.f32.mrf.mxu0
      %7116 = vdwg.mxu0
      %v7117 = vadd.f32 %v7027, %v7109
      %v7118 = vadd.f32 %v7028, %v7111
      %v7119 = vadd.f32 %v7029, %v7114
      %v7120 = vld [vmem:[#allocation4 + $0x4] sm:$0xc]
      %v7121 = vld [vmem:[#allocation4 + $0x8] sm:$0xf]
      %v7122 = vld [vmem:[#allocation4 + $0xc] sm:$0xf]
      %v7123 = vld [vmem:[#allocation4 + $0x10] sm:$0x3]
      %s7124 = scalar_lea.vmem %s1, 2112
      %v7125 = vld [vmem:[%s7124] sm:$0xf]
      %v7126 = vld [vmem:[%s7124 + $0x4] sm:$0xf]
      %v7127 = vld [vmem:[%s7124 + $0x8] sm:$0xf]
      %v7128 = vld [vmem:[%s7124 + $0xc] sm:$0xf]
      %v7129 = vld [vmem:[%s7124 + $0x10] sm:$0xf]
      %v7130 = vld [vmem:[%s7124 + $0x14] sm:$0xf]
      %v7131 = vld [vmem:[%s7124 + $0x18] sm:$0xf]
      %v7132 = vld [vmem:[%s7124 + $0x1c] sm:$0xf]
      %v7133 = vld [vmem:[%s7124 + $0x20] sm:$0xf]
      %v7134 = vld [vmem:[%s7124 + $0x24] sm:$0xf]
      %v7135 = vld [vmem:[%s7124 + $0x28] sm:$0xf]
      %v7136 = vld [vmem:[%s7124 + $0x2c] sm:$0xf]
      %v7137 = vld [vmem:[%s7124 + $0x30] sm:$0xf]
      %v7138 = vld [vmem:[%s7124 + $0x34] sm:$0xf]
      %v7139 = vld [vmem:[%s7124 + $0x38] sm:$0xf]
      %v7140 = vld [vmem:[%s7124 + $0x3c] sm:$0xf]
      %v7145 = vunpack.c.l.b16 %v7120
      %v7146 = vunpack.c.l.b16 %v7121
      %v7147 = vunpack.c.l.b16 %v7122
      %v7148 = vunpack.c.l.b16 %v7123
      %v7149 = vpack.c.b16 %v7146, %v7145
      %v7150 = vpack.c.b16 %v7148, %v7147
      %v7151 = vrot.slane %v7149, 2
      %v7152 = vrot.slane %v7150, 2
      %v7153 = vsel %vm2008, %v7151, %v7152
      %v7172 = vunpack.c.l.b16 %v7125
      %v7173 = vunpack.c.l.b16 %v7126
      %v7174 = vunpack.c.l.b16 %v7127
      %v7175 = vunpack.c.l.b16 %v7128
      %v7176 = vunpack.c.l.b16 %v7129
      %v7177 = vunpack.c.l.b16 %v7130
      %v7178 = vunpack.c.l.b16 %v7131
      %v7179 = vunpack.c.l.b16 %v7132
      %v7180 = vunpack.c.l.b16 %v7133
      %v7181 = vunpack.c.l.b16 %v7134
      %v7182 = vunpack.c.l.b16 %v7135
      %v7183 = vunpack.c.l.b16 %v7136
      %v7184 = vunpack.c.l.b16 %v7137
      %v7185 = vunpack.c.l.b16 %v7138
      %v7186 = vunpack.c.l.b16 %v7139
      %v7187 = vunpack.c.l.b16 %v7140
      %v7188 = vpack.c.b16 %v7173, %v7172
      %v7189 = vpack.c.b16 %v7175, %v7174
      %v7190 = vpack.c.b16 %v7177, %v7176
      %v7191 = vpack.c.b16 %v7179, %v7178
      %v7192 = vpack.c.b16 %v7181, %v7180
      %v7193 = vpack.c.b16 %v7183, %v7182
      %v7194 = vpack.c.b16 %v7185, %v7184
      %v7195 = vpack.c.b16 %v7187, %v7186
      %7204 = vmatpush.bf16.msra.mxu0 %v7195
      %7205 = vmatpush.bf16.msra.mxu0 %v7194
      %7206 = vmatpush.bf16.msra.mxu0 %v7193
      %7207 = vmatpush.bf16.msra.mxu0 %v7192
      %7208 = vmatpush.bf16.msra.mxu0 %v7191
      %7209 = vmatpush.bf16.msra.mxu0 %v7190
      %7210 = vmatpush.bf16.msra.mxu0 %v7189
      %7211 = vmatpush.bf16.msra.mxu0 %v7188
      %7212 = vmatmul.bf16.gmra.mxu0 %v7153
      %v7213 = vpop.f32.mrf.mxu0
      %v7214 = vadd.f32 0.0, %v7213
      %v7215 = vpop.f32.mrf.mxu0
      %v7216 = vadd.f32 0.0, %v7215
      %7217 = vmatmul.bf16.gmra.mxu0 %v7152
      %v7218 = vpop.f32.mrf.mxu0
      %v7219 = vadd.f32 0.0, %v7218
      %v7220 = vpop.f32.mrf.mxu0
      %7221 = vdwg.mxu0
      %v7222 = vadd.f32 %v7117, %v7214
      %v7223 = vadd.f32 %v7118, %v7216
      %v7224 = vadd.f32 %v7119, %v7219
      %v7225 = vld [vmem:[#allocation4 + $0x10] sm:$0x7]
      %s7226 = scalar_lea.vmem %s1, 2176
      %v7227 = vld [vmem:[%s7226] sm:$0xf]
      %v7228 = vld [vmem:[%s7226 + $0x4] sm:$0xf]
      %v7229 = vld [vmem:[%s7226 + $0x8] sm:$0xf]
      %v7230 = vld [vmem:[%s7226 + $0xc] sm:$0xf]
      %v7231 = vld [vmem:[%s7226 + $0x10] sm:$0xf]
      %v7232 = vld [vmem:[%s7226 + $0x14] sm:$0xf]
      %v7233 = vld [vmem:[%s7226 + $0x18] sm:$0xf]
      %v7234 = vld [vmem:[%s7226 + $0x1c] sm:$0xf]
      %v7235 = vld [vmem:[%s7226 + $0x20] sm:$0xf]
      %v7236 = vld [vmem:[%s7226 + $0x24] sm:$0xf]
      %v7237 = vld [vmem:[%s7226 + $0x28] sm:$0xf]
      %v7238 = vld [vmem:[%s7226 + $0x2c] sm:$0xf]
      %v7239 = vld [vmem:[%s7226 + $0x30] sm:$0xf]
      %v7240 = vld [vmem:[%s7226 + $0x34] sm:$0xf]
      %v7241 = vld [vmem:[%s7226 + $0x38] sm:$0xf]
      %v7242 = vld [vmem:[%s7226 + $0x3c] sm:$0xf]
      %v7244 = vunpack.c.l.b16 %v7225
      %v7245 = vpack.c.b16 %v7244, %v7147
      %v7247 = vshrl.u32 %v7149, 16
      %v7249 = vrot.slane %v7247, 2
      %v7250 = vshll.u32 %v7149, 16
      %v7252 = vrot.slane %v7250, 3
      %v7253 = vor.u32 %v7249, %v7252
      %v7255 = vshrl.u32 %v7245, 16
      %v7257 = vrot.slane %v7255, 2
      %v7258 = vshll.u32 %v7245, 16
      %v7260 = vrot.slane %v7258, 3
      %v7261 = vor.u32 %v7257, %v7260
      %v7262 = vsel %vm2653, %v7253, %v7261
      %v7281 = vunpack.c.l.b16 %v7227
      %v7282 = vunpack.c.l.b16 %v7228
      %v7283 = vunpack.c.l.b16 %v7229
      %v7284 = vunpack.c.l.b16 %v7230
      %v7285 = vunpack.c.l.b16 %v7231
      %v7286 = vunpack.c.l.b16 %v7232
      %v7287 = vunpack.c.l.b16 %v7233
      %v7288 = vunpack.c.l.b16 %v7234
      %v7289 = vunpack.c.l.b16 %v7235
      %v7290 = vunpack.c.l.b16 %v7236
      %v7291 = vunpack.c.l.b16 %v7237
      %v7292 = vunpack.c.l.b16 %v7238
      %v7293 = vunpack.c.l.b16 %v7239
      %v7294 = vunpack.c.l.b16 %v7240
      %v7295 = vunpack.c.l.b16 %v7241
      %v7296 = vunpack.c.l.b16 %v7242
      %v7297 = vpack.c.b16 %v7282, %v7281
      %v7298 = vpack.c.b16 %v7284, %v7283
      %v7299 = vpack.c.b16 %v7286, %v7285
      %v7300 = vpack.c.b16 %v7288, %v7287
      %v7301 = vpack.c.b16 %v7290, %v7289
      %v7302 = vpack.c.b16 %v7292, %v7291
      %v7303 = vpack.c.b16 %v7294, %v7293
      %v7304 = vpack.c.b16 %v7296, %v7295
      %7313 = vmatpush.bf16.msra.mxu0 %v7304
      %7314 = vmatpush.bf16.msra.mxu0 %v7303
      %7315 = vmatpush.bf16.msra.mxu0 %v7302
      %7316 = vmatpush.bf16.msra.mxu0 %v7301
      %7317 = vmatpush.bf16.msra.mxu0 %v7300
      %7318 = vmatpush.bf16.msra.mxu0 %v7299
      %7319 = vmatpush.bf16.msra.mxu0 %v7298
      %7320 = vmatpush.bf16.msra.mxu0 %v7297
      %7321 = vmatmul.bf16.gmra.mxu0 %v7262
      %v7322 = vpop.f32.mrf.mxu0
      %v7323 = vadd.f32 0.0, %v7322
      %v7324 = vpop.f32.mrf.mxu0
      %v7325 = vadd.f32 0.0, %v7324
      %7326 = vmatmul.bf16.gmra.mxu0 %v7261
      %v7327 = vpop.f32.mrf.mxu0
      %v7328 = vadd.f32 0.0, %v7327
      %v7329 = vpop.f32.mrf.mxu0
      %7330 = vdwg.mxu0
      %v7331 = vadd.f32 %v7222, %v7323
      %v7332 = vadd.f32 %v7223, %v7325
      %v7333 = vadd.f32 %v7224, %v7328
      %v7334 = vld [vmem:[#allocation4 + $0x4] sm:$0x8]
      %s7335 = scalar_lea.vmem %s1, 2240
      %v7336 = vld [vmem:[%s7335] sm:$0xf]
      %v7337 = vld [vmem:[%s7335 + $0x4] sm:$0xf]
      %v7338 = vld [vmem:[%s7335 + $0x8] sm:$0xf]
      %v7339 = vld [vmem:[%s7335 + $0xc] sm:$0xf]
      %v7340 = vld [vmem:[%s7335 + $0x10] sm:$0xf]
      %v7341 = vld [vmem:[%s7335 + $0x14] sm:$0xf]
      %v7342 = vld [vmem:[%s7335 + $0x18] sm:$0xf]
      %v7343 = vld [vmem:[%s7335 + $0x1c] sm:$0xf]
      %v7344 = vld [vmem:[%s7335 + $0x20] sm:$0xf]
      %v7345 = vld [vmem:[%s7335 + $0x24] sm:$0xf]
      %v7346 = vld [vmem:[%s7335 + $0x28] sm:$0xf]
      %v7347 = vld [vmem:[%s7335 + $0x2c] sm:$0xf]
      %v7348 = vld [vmem:[%s7335 + $0x30] sm:$0xf]
      %v7349 = vld [vmem:[%s7335 + $0x34] sm:$0xf]
      %v7350 = vld [vmem:[%s7335 + $0x38] sm:$0xf]
      %v7351 = vld [vmem:[%s7335 + $0x3c] sm:$0xf]
      %v7353 = vunpack.c.l.b16 %v7334
      %v7354 = vpack.c.b16 %v7146, %v7353
      %v7355 = vrot.slane %v7354, 3
      %v7356 = vrot.slane %v7245, 3
      %v7357 = vsel %vm3046, %v7355, %v7356
      %v7376 = vunpack.c.l.b16 %v7336
      %v7377 = vunpack.c.l.b16 %v7337
      %v7378 = vunpack.c.l.b16 %v7338
      %v7379 = vunpack.c.l.b16 %v7339
      %v7380 = vunpack.c.l.b16 %v7340
      %v7381 = vunpack.c.l.b16 %v7341
      %v7382 = vunpack.c.l.b16 %v7342
      %v7383 = vunpack.c.l.b16 %v7343
      %v7384 = vunpack.c.l.b16 %v7344
      %v7385 = vunpack.c.l.b16 %v7345
      %v7386 = vunpack.c.l.b16 %v7346
      %v7387 = vunpack.c.l.b16 %v7347
      %v7388 = vunpack.c.l.b16 %v7348
      %v7389 = vunpack.c.l.b16 %v7349
      %v7390 = vunpack.c.l.b16 %v7350
      %v7391 = vunpack.c.l.b16 %v7351
      %v7392 = vpack.c.b16 %v7377, %v7376
      %v7393 = vpack.c.b16 %v7379, %v7378
      %v7394 = vpack.c.b16 %v7381, %v7380
      %v7395 = vpack.c.b16 %v7383, %v7382
      %v7396 = vpack.c.b16 %v7385, %v7384
      %v7397 = vpack.c.b16 %v7387, %v7386
      %v7398 = vpack.c.b16 %v7389, %v7388
      %v7399 = vpack.c.b16 %v7391, %v7390
      %7408 = vmatpush.bf16.msra.mxu0 %v7399
      %7409 = vmatpush.bf16.msra.mxu0 %v7398
      %7410 = vmatpush.bf16.msra.mxu0 %v7397
      %7411 = vmatpush.bf16.msra.mxu0 %v7396
      %7412 = vmatpush.bf16.msra.mxu0 %v7395
      %7413 = vmatpush.bf16.msra.mxu0 %v7394
      %7414 = vmatpush.bf16.msra.mxu0 %v7393
      %7415 = vmatpush.bf16.msra.mxu0 %v7392
      %7416 = vmatmul.bf16.gmra.mxu0 %v7357
      %v7417 = vpop.f32.mrf.mxu0
      %v7418 = vadd.f32 0.0, %v7417
      %v7419 = vpop.f32.mrf.mxu0
      %v7420 = vadd.f32 0.0, %v7419
      %7421 = vmatmul.bf16.gmra.mxu0 %v7356
      %v7422 = vpop.f32.mrf.mxu0
      %v7423 = vadd.f32 0.0, %v7422
      %v7424 = vpop.f32.mrf.mxu0
      %7425 = vdwg.mxu0
      %v7426 = vadd.f32 %v7331, %v7418
      %v7427 = vadd.f32 %v7332, %v7420
      %v7428 = vadd.f32 %v7333, %v7423
      %v7429 = vld [vmem:[%s2 + $0x3] sm:$0x1]
      %v7430 = vperm.slane %v7429, 0
      %v7431 = vadd.f32 %v7426, %v7430
      %v7432 = vadd.f32 %v7427, %v7430
      %v7433 = vadd.f32 %v7428, %v7430
      %v7434 = vmax.f32 %v7431, 0.0
      %v7435 = vmax.f32 %v7432, 0.0
      %v7436 = vmax.f32 %v7433, 0.0
      %v7437 = vpack.c.bf16 %v7435, %v7434
      %v7438 = vpack.c.bf16 %v7436, %v7436
      %v7439 = vld [vmem:[%s5] sm:$0xf]
      %v7440 = vld [vmem:[%s5 + $0x4] sm:$0xf]
      %v7441 = vld [vmem:[%s5 + $0x8] sm:$0xf]
      %v7442 = vld [vmem:[%s5 + $0xc] sm:$0xf]
      %v7443 = vld [vmem:[%s5 + $0x10] sm:$0x7]
      %v7449 = vunpack.c.l.b16 %v7439
      %v7450 = vunpack.c.l.b16 %v7440
      %v7451 = vunpack.c.l.b16 %v7441
      %v7452 = vunpack.c.l.b16 %v7442
      %v7453 = vunpack.c.l.b16 %v7443
      %v7454 = vpack.c.b16 %v7450, %v7449
      %v7455 = vpack.c.b16 %v7452, %v7451
      %v7456 = vpack.c.b16 %v7453, %v7453
      %v7458 = vsel %vm6480, %v7454, 0
      %v7461 = vsel %vm6480, %v7455, 0
      %v7464 = vsel %vm6480, %v7456, 0
      %v7467 = vsel %vm6490, %v7438, 0
      %7469 = vmatpush.bf16.msra.mxu0 0
      %7470 = vmatpush.bf16.msra.mxu0 0
      %7471 = vmatpush.bf16.msra.mxu0 0
      %7472 = vmatpush.bf16.msra.mxu0 0
      %7473 = vmatpush.bf16.msra.mxu0 0
      %7474 = vmatpush.bf16.msra.mxu0 0
      %7475 = vmatpush.bf16.msra.mxu0 %v7467
      %7476 = vmatpush.bf16.msra.mxu0 %v7437
      %7477 = vmatmul.bf16.gmra.mxu0 %v7458
      %v7478 = vpop.f32.mrf.mxu0
      %v7479 = vadd.f32 0.0, %v7478
      %v7480 = vpop.f32.mrf.mxu0
      %v7481 = vadd.f32 0.0, %v7480
      %7482 = vmatmul.bf16.gmra.mxu0 %v7461
      %v7483 = vpop.f32.mrf.mxu0
      %v7484 = vadd.f32 0.0, %v7483
      %v7485 = vpop.f32.mrf.mxu0
      %v7486 = vadd.f32 0.0, %v7485
      %7487 = vmatmul.bf16.gmra.mxu0 %v7464
      %v7488 = vpop.f32.mrf.mxu0
      %v7489 = vadd.f32 0.0, %v7488
      %v7490 = vpop.f32.mrf.mxu0
      %7491 = vdwg.mxu0
      %v7492 = vpack.c.bf16 %v7479, %v7479
      %v7493 = vpack.c.bf16 %v7481, %v7481
      %v7494 = vpack.c.bf16 %v7484, %v7484
      %v7495 = vpack.c.bf16 %v7486, %v7486
      %v7496 = vpack.c.bf16 %v7489, %v7489
      %7497 = vst [vmem:[#allocation5] sm:$0xf] %v7492
      %7498 = vst [vmem:[#allocation5 + $0x4] sm:$0xf] %v7493
      %7499 = vst [vmem:[#allocation5 + $0x8] sm:$0xf] %v7494
      %7500 = vst [vmem:[#allocation5 + $0xc] sm:$0xf] %v7495
      %7501 = vst [vmem:[#allocation5 + $0x10] sm:$0x7] %v7496
      %v7502 = vld [vmem:[#allocation5] sm:$0xf]
      %v7503 = vld [vmem:[#allocation5 + $0x4] sm:$0xf]
      %v7504 = vld [vmem:[#allocation5 + $0x8] sm:$0xf]
      %s7505 = scalar_lea.vmem %s1, 2304
      %v7506 = vld [vmem:[%s7505] sm:$0xf]
      %v7507 = vld [vmem:[%s7505 + $0x4] sm:$0xf]
      %v7508 = vld [vmem:[%s7505 + $0x8] sm:$0xf]
      %v7509 = vld [vmem:[%s7505 + $0xc] sm:$0xf]
      %v7510 = vld [vmem:[%s7505 + $0x10] sm:$0xf]
      %v7511 = vld [vmem:[%s7505 + $0x14] sm:$0xf]
      %v7512 = vld [vmem:[%s7505 + $0x18] sm:$0xf]
      %v7513 = vld [vmem:[%s7505 + $0x1c] sm:$0xf]
      %v7514 = vld [vmem:[%s7505 + $0x20] sm:$0xf]
      %v7515 = vld [vmem:[%s7505 + $0x24] sm:$0xf]
      %v7516 = vld [vmem:[%s7505 + $0x28] sm:$0xf]
      %v7517 = vld [vmem:[%s7505 + $0x2c] sm:$0xf]
      %v7518 = vld [vmem:[%s7505 + $0x30] sm:$0xf]
      %v7519 = vld [vmem:[%s7505 + $0x34] sm:$0xf]
      %v7520 = vld [vmem:[%s7505 + $0x38] sm:$0xf]
      %v7521 = vld [vmem:[%s7505 + $0x3c] sm:$0xf]
      %v7522 = vld [vmem:[#allocation5 + $0xc] sm:$0x1]
      %s7523 = scalar_lea.vmem %s1, 2368
      %v7524 = vld [vmem:[%s7523] sm:$0xf]
      %v7525 = vld [vmem:[%s7523 + $0x4] sm:$0xf]
      %v7526 = vld [vmem:[%s7523 + $0x8] sm:$0xf]
      %v7527 = vld [vmem:[%s7523 + $0xc] sm:$0xf]
      %v7528 = vld [vmem:[%s7523 + $0x10] sm:$0xf]
      %v7529 = vld [vmem:[%s7523 + $0x14] sm:$0xf]
      %v7530 = vld [vmem:[%s7523 + $0x18] sm:$0xf]
      %v7531 = vld [vmem:[%s7523 + $0x1c] sm:$0xf]
      %v7532 = vld [vmem:[%s7523 + $0x20] sm:$0xf]
      %v7533 = vld [vmem:[%s7523 + $0x24] sm:$0xf]
      %v7534 = vld [vmem:[%s7523 + $0x28] sm:$0xf]
      %v7535 = vld [vmem:[%s7523 + $0x2c] sm:$0xf]
      %v7536 = vld [vmem:[%s7523 + $0x30] sm:$0xf]
      %v7537 = vld [vmem:[%s7523 + $0x34] sm:$0xf]
      %v7538 = vld [vmem:[%s7523 + $0x38] sm:$0xf]
      %v7539 = vld [vmem:[%s7523 + $0x3c] sm:$0xf]
      %v7544 = vunpack.c.l.b16 %v7502
      %v7545 = vunpack.c.l.b16 %v7503
      %v7546 = vunpack.c.l.b16 %v7504
      %v7547 = vunpack.c.l.b16 %v7522
      %v7548 = vpack.c.b16 %v7545, %v7544
      %v7549 = vpack.c.b16 %v7547, %v7546
      %v7551 = vshrl.u32 %v7548, 16
      %v7553 = vshll.u32 %v7548, 16
      %v7555 = vrot.slane %v7553, 1
      %v7556 = vor.u32 %v7551, %v7555
      %v7558 = vshll.u32 %v7549, 16
      %v7560 = vrot.slane %v7558, 1
      %v7561 = vsel %vm470, %v7556, %v7560
      %v7562 = vshrl.u32 %v7549, 16
      %v7564 = vor.u32 %v7562, %v7560
      %v7583 = vunpack.c.l.b16 %v7524
      %v7584 = vunpack.c.l.b16 %v7525
      %v7585 = vunpack.c.l.b16 %v7526
      %v7586 = vunpack.c.l.b16 %v7527
      %v7587 = vunpack.c.l.b16 %v7528
      %v7588 = vunpack.c.l.b16 %v7529
      %v7589 = vunpack.c.l.b16 %v7530
      %v7590 = vunpack.c.l.b16 %v7531
      %v7591 = vunpack.c.l.b16 %v7532
      %v7592 = vunpack.c.l.b16 %v7533
      %v7593 = vunpack.c.l.b16 %v7534
      %v7594 = vunpack.c.l.b16 %v7535
      %v7595 = vunpack.c.l.b16 %v7536
      %v7596 = vunpack.c.l.b16 %v7537
      %v7597 = vunpack.c.l.b16 %v7538
      %v7598 = vunpack.c.l.b16 %v7539
      %v7599 = vpack.c.b16 %v7584, %v7583
      %v7600 = vpack.c.b16 %v7586, %v7585
      %v7601 = vpack.c.b16 %v7588, %v7587
      %v7602 = vpack.c.b16 %v7590, %v7589
      %v7603 = vpack.c.b16 %v7592, %v7591
      %v7604 = vpack.c.b16 %v7594, %v7593
      %v7605 = vpack.c.b16 %v7596, %v7595
      %v7606 = vpack.c.b16 %v7598, %v7597
      %7615 = vmatpush.bf16.msra.mxu0 %v7606
      %7616 = vmatpush.bf16.msra.mxu0 %v7605
      %7617 = vmatpush.bf16.msra.mxu0 %v7604
      %7618 = vmatpush.bf16.msra.mxu0 %v7603
      %7619 = vmatpush.bf16.msra.mxu0 %v7602
      %7620 = vmatpush.bf16.msra.mxu0 %v7601
      %7621 = vmatpush.bf16.msra.mxu0 %v7600
      %7622 = vmatpush.bf16.msra.mxu0 %v7599
      %7623 = vmatmul.bf16.gmra.mxu0 %v7561
      %v7624 = vpop.f32.mrf.mxu0
      %v7625 = vadd.f32 0.0, %v7624
      %v7626 = vpop.f32.mrf.mxu0
      %v7627 = vadd.f32 0.0, %v7626
      %7628 = vmatmul.bf16.gmra.mxu0 %v7564
      %v7629 = vpop.f32.mrf.mxu0
      %v7630 = vadd.f32 0.0, %v7629
      %v7631 = vpop.f32.mrf.mxu0
      %7632 = vdwg.mxu0
      %v7633 = vpack.c.b16 %v7546, %v7546
      %v7652 = vunpack.c.l.b16 %v7506
      %v7653 = vunpack.c.l.b16 %v7507
      %v7654 = vunpack.c.l.b16 %v7508
      %v7655 = vunpack.c.l.b16 %v7509
      %v7656 = vunpack.c.l.b16 %v7510
      %v7657 = vunpack.c.l.b16 %v7511
      %v7658 = vunpack.c.l.b16 %v7512
      %v7659 = vunpack.c.l.b16 %v7513
      %v7660 = vunpack.c.l.b16 %v7514
      %v7661 = vunpack.c.l.b16 %v7515
      %v7662 = vunpack.c.l.b16 %v7516
      %v7663 = vunpack.c.l.b16 %v7517
      %v7664 = vunpack.c.l.b16 %v7518
      %v7665 = vunpack.c.l.b16 %v7519
      %v7666 = vunpack.c.l.b16 %v7520
      %v7667 = vunpack.c.l.b16 %v7521
      %v7668 = vpack.c.b16 %v7653, %v7652
      %v7669 = vpack.c.b16 %v7655, %v7654
      %v7670 = vpack.c.b16 %v7657, %v7656
      %v7671 = vpack.c.b16 %v7659, %v7658
      %v7672 = vpack.c.b16 %v7661, %v7660
      %v7673 = vpack.c.b16 %v7663, %v7662
      %v7674 = vpack.c.b16 %v7665, %v7664
      %v7675 = vpack.c.b16 %v7667, %v7666
      %7684 = vmatpush.bf16.msra.mxu0 %v7675
      %7685 = vmatpush.bf16.msra.mxu0 %v7674
      %7686 = vmatpush.bf16.msra.mxu0 %v7673
      %7687 = vmatpush.bf16.msra.mxu0 %v7672
      %7688 = vmatpush.bf16.msra.mxu0 %v7671
      %7689 = vmatpush.bf16.msra.mxu0 %v7670
      %7690 = vmatpush.bf16.msra.mxu0 %v7669
      %7691 = vmatpush.bf16.msra.mxu0 %v7668
      %7692 = vmatmul.bf16.gmra.mxu0 %v7548
      %v7693 = vpop.f32.mrf.mxu0
      %v7694 = vadd.f32 %v7625, %v7693
      %v7695 = vpop.f32.mrf.mxu0
      %v7696 = vadd.f32 %v7627, %v7695
      %7697 = vmatmul.bf16.gmra.mxu0 %v7633
      %v7698 = vpop.f32.mrf.mxu0
      %v7699 = vadd.f32 %v7630, %v7698
      %v7700 = vpop.f32.mrf.mxu0
      %7701 = vdwg.mxu0
      %v7702 = vld [vmem:[#allocation5] sm:$0xe]
      %s7703 = scalar_lea.vmem %s1, 2432
      %v7704 = vld [vmem:[%s7703] sm:$0xf]
      %v7705 = vld [vmem:[%s7703 + $0x4] sm:$0xf]
      %v7706 = vld [vmem:[%s7703 + $0x8] sm:$0xf]
      %v7707 = vld [vmem:[%s7703 + $0xc] sm:$0xf]
      %v7708 = vld [vmem:[%s7703 + $0x10] sm:$0xf]
      %v7709 = vld [vmem:[%s7703 + $0x14] sm:$0xf]
      %v7710 = vld [vmem:[%s7703 + $0x18] sm:$0xf]
      %v7711 = vld [vmem:[%s7703 + $0x1c] sm:$0xf]
      %v7712 = vld [vmem:[%s7703 + $0x20] sm:$0xf]
      %v7713 = vld [vmem:[%s7703 + $0x24] sm:$0xf]
      %v7714 = vld [vmem:[%s7703 + $0x28] sm:$0xf]
      %v7715 = vld [vmem:[%s7703 + $0x2c] sm:$0xf]
      %v7716 = vld [vmem:[%s7703 + $0x30] sm:$0xf]
      %v7717 = vld [vmem:[%s7703 + $0x34] sm:$0xf]
      %v7718 = vld [vmem:[%s7703 + $0x38] sm:$0xf]
      %v7719 = vld [vmem:[%s7703 + $0x3c] sm:$0xf]
      %v7721 = vunpack.c.l.b16 %v7702
      %v7722 = vpack.c.b16 %v7545, %v7721
      %v7723 = vrot.slane %v7722, 1
      %v7724 = vrot.slane %v7549, 1
      %v7725 = vsel %vm970, %v7723, %v7724
      %v7744 = vunpack.c.l.b16 %v7704
      %v7745 = vunpack.c.l.b16 %v7705
      %v7746 = vunpack.c.l.b16 %v7706
      %v7747 = vunpack.c.l.b16 %v7707
      %v7748 = vunpack.c.l.b16 %v7708
      %v7749 = vunpack.c.l.b16 %v7709
      %v7750 = vunpack.c.l.b16 %v7710
      %v7751 = vunpack.c.l.b16 %v7711
      %v7752 = vunpack.c.l.b16 %v7712
      %v7753 = vunpack.c.l.b16 %v7713
      %v7754 = vunpack.c.l.b16 %v7714
      %v7755 = vunpack.c.l.b16 %v7715
      %v7756 = vunpack.c.l.b16 %v7716
      %v7757 = vunpack.c.l.b16 %v7717
      %v7758 = vunpack.c.l.b16 %v7718
      %v7759 = vunpack.c.l.b16 %v7719
      %v7760 = vpack.c.b16 %v7745, %v7744
      %v7761 = vpack.c.b16 %v7747, %v7746
      %v7762 = vpack.c.b16 %v7749, %v7748
      %v7763 = vpack.c.b16 %v7751, %v7750
      %v7764 = vpack.c.b16 %v7753, %v7752
      %v7765 = vpack.c.b16 %v7755, %v7754
      %v7766 = vpack.c.b16 %v7757, %v7756
      %v7767 = vpack.c.b16 %v7759, %v7758
      %7776 = vmatpush.bf16.msra.mxu0 %v7767
      %7777 = vmatpush.bf16.msra.mxu0 %v7766
      %7778 = vmatpush.bf16.msra.mxu0 %v7765
      %7779 = vmatpush.bf16.msra.mxu0 %v7764
      %7780 = vmatpush.bf16.msra.mxu0 %v7763
      %7781 = vmatpush.bf16.msra.mxu0 %v7762
      %7782 = vmatpush.bf16.msra.mxu0 %v7761
      %7783 = vmatpush.bf16.msra.mxu0 %v7760
      %7784 = vmatmul.bf16.gmra.mxu0 %v7725
      %v7785 = vpop.f32.mrf.mxu0
      %v7786 = vadd.f32 0.0, %v7785
      %v7787 = vpop.f32.mrf.mxu0
      %v7788 = vadd.f32 0.0, %v7787
      %7789 = vmatmul.bf16.gmra.mxu0 %v7724
      %v7790 = vpop.f32.mrf.mxu0
      %v7791 = vadd.f32 0.0, %v7790
      %v7792 = vpop.f32.mrf.mxu0
      %7793 = vdwg.mxu0
      %v7794 = vadd.f32 %v7694, %v7786
      %v7795 = vadd.f32 %v7696, %v7788
      %v7796 = vadd.f32 %v7699, %v7791
      %v7797 = vld [vmem:[#allocation5] sm:$0x8]
      %v7798 = vld [vmem:[#allocation5 + $0xc] sm:$0x7]
      %s7799 = scalar_lea.vmem %s1, 2496
      %v7800 = vld [vmem:[%s7799] sm:$0xf]
      %v7801 = vld [vmem:[%s7799 + $0x4] sm:$0xf]
      %v7802 = vld [vmem:[%s7799 + $0x8] sm:$0xf]
      %v7803 = vld [vmem:[%s7799 + $0xc] sm:$0xf]
      %v7804 = vld [vmem:[%s7799 + $0x10] sm:$0xf]
      %v7805 = vld [vmem:[%s7799 + $0x14] sm:$0xf]
      %v7806 = vld [vmem:[%s7799 + $0x18] sm:$0xf]
      %v7807 = vld [vmem:[%s7799 + $0x1c] sm:$0xf]
      %v7808 = vld [vmem:[%s7799 + $0x20] sm:$0xf]
      %v7809 = vld [vmem:[%s7799 + $0x24] sm:$0xf]
      %v7810 = vld [vmem:[%s7799 + $0x28] sm:$0xf]
      %v7811 = vld [vmem:[%s7799 + $0x2c] sm:$0xf]
      %v7812 = vld [vmem:[%s7799 + $0x30] sm:$0xf]
      %v7813 = vld [vmem:[%s7799 + $0x34] sm:$0xf]
      %v7814 = vld [vmem:[%s7799 + $0x38] sm:$0xf]
      %v7815 = vld [vmem:[%s7799 + $0x3c] sm:$0xf]
      %v7818 = vunpack.c.l.b16 %v7797
      %v7819 = vunpack.c.l.b16 %v7798
      %v7820 = vpack.c.b16 %v7545, %v7818
      %v7821 = vpack.c.b16 %v7819, %v7546
      %v7822 = vrot.slane %v7820, 3
      %v7823 = vrot.slane %v7821, 3
      %v7824 = vsel %vm3046, %v7822, %v7823
      %v7843 = vunpack.c.l.b16 %v7800
      %v7844 = vunpack.c.l.b16 %v7801
      %v7845 = vunpack.c.l.b16 %v7802
      %v7846 = vunpack.c.l.b16 %v7803
      %v7847 = vunpack.c.l.b16 %v7804
      %v7848 = vunpack.c.l.b16 %v7805
      %v7849 = vunpack.c.l.b16 %v7806
      %v7850 = vunpack.c.l.b16 %v7807
      %v7851 = vunpack.c.l.b16 %v7808
      %v7852 = vunpack.c.l.b16 %v7809
      %v7853 = vunpack.c.l.b16 %v7810
      %v7854 = vunpack.c.l.b16 %v7811
      %v7855 = vunpack.c.l.b16 %v7812
      %v7856 = vunpack.c.l.b16 %v7813
      %v7857 = vunpack.c.l.b16 %v7814
      %v7858 = vunpack.c.l.b16 %v7815
      %v7859 = vpack.c.b16 %v7844, %v7843
      %v7860 = vpack.c.b16 %v7846, %v7845
      %v7861 = vpack.c.b16 %v7848, %v7847
      %v7862 = vpack.c.b16 %v7850, %v7849
      %v7863 = vpack.c.b16 %v7852, %v7851
      %v7864 = vpack.c.b16 %v7854, %v7853
      %v7865 = vpack.c.b16 %v7856, %v7855
      %v7866 = vpack.c.b16 %v7858, %v7857
      %7875 = vmatpush.bf16.msra.mxu0 %v7866
      %7876 = vmatpush.bf16.msra.mxu0 %v7865
      %7877 = vmatpush.bf16.msra.mxu0 %v7864
      %7878 = vmatpush.bf16.msra.mxu0 %v7863
      %7879 = vmatpush.bf16.msra.mxu0 %v7862
      %7880 = vmatpush.bf16.msra.mxu0 %v7861
      %7881 = vmatpush.bf16.msra.mxu0 %v7860
      %7882 = vmatpush.bf16.msra.mxu0 %v7859
      %7883 = vmatmul.bf16.gmra.mxu0 %v7824
      %v7884 = vpop.f32.mrf.mxu0
      %v7885 = vadd.f32 0.0, %v7884
      %v7886 = vpop.f32.mrf.mxu0
      %v7887 = vadd.f32 0.0, %v7886
      %7888 = vmatmul.bf16.gmra.mxu0 %v7823
      %v7889 = vpop.f32.mrf.mxu0
      %v7890 = vadd.f32 0.0, %v7889
      %v7891 = vpop.f32.mrf.mxu0
      %7892 = vdwg.mxu0
      %v7893 = vadd.f32 %v7794, %v7885
      %v7894 = vadd.f32 %v7795, %v7887
      %v7895 = vadd.f32 %v7796, %v7890
      %v7896 = vld [vmem:[#allocation5 + $0xc] sm:$0xf]
      %s7897 = scalar_lea.vmem %s1, 2560
      %v7898 = vld [vmem:[%s7897] sm:$0xf]
      %v7899 = vld [vmem:[%s7897 + $0x4] sm:$0xf]
      %v7900 = vld [vmem:[%s7897 + $0x8] sm:$0xf]
      %v7901 = vld [vmem:[%s7897 + $0xc] sm:$0xf]
      %v7902 = vld [vmem:[%s7897 + $0x10] sm:$0xf]
      %v7903 = vld [vmem:[%s7897 + $0x14] sm:$0xf]
      %v7904 = vld [vmem:[%s7897 + $0x18] sm:$0xf]
      %v7905 = vld [vmem:[%s7897 + $0x1c] sm:$0xf]
      %v7906 = vld [vmem:[%s7897 + $0x20] sm:$0xf]
      %v7907 = vld [vmem:[%s7897 + $0x24] sm:$0xf]
      %v7908 = vld [vmem:[%s7897 + $0x28] sm:$0xf]
      %v7909 = vld [vmem:[%s7897 + $0x2c] sm:$0xf]
      %v7910 = vld [vmem:[%s7897 + $0x30] sm:$0xf]
      %v7911 = vld [vmem:[%s7897 + $0x34] sm:$0xf]
      %v7912 = vld [vmem:[%s7897 + $0x38] sm:$0xf]
      %v7913 = vld [vmem:[%s7897 + $0x3c] sm:$0xf]
      %v7915 = vunpack.c.l.b16 %v7896
      %v7916 = vpack.c.b16 %v7915, %v7546
      %v7918 = vshrl.u32 %v7820, 16
      %v7920 = vrot.slane %v7918, 3
      %v7921 = vshll.u32 %v7820, 16
      %v7923 = vrot.slane %v7921, 4
      %v7924 = vor.u32 %v7920, %v7923
      %v7926 = vshrl.u32 %v7916, 16
      %v7928 = vrot.slane %v7926, 3
      %v7929 = vshll.u32 %v7916, 16
      %v7931 = vrot.slane %v7929, 4
      %v7932 = vor.u32 %v7928, %v7931
      %v7933 = vsel %vm5964, %v7924, %v7932
      %v7952 = vunpack.c.l.b16 %v7898
      %v7953 = vunpack.c.l.b16 %v7899
      %v7954 = vunpack.c.l.b16 %v7900
      %v7955 = vunpack.c.l.b16 %v7901
      %v7956 = vunpack.c.l.b16 %v7902
      %v7957 = vunpack.c.l.b16 %v7903
      %v7958 = vunpack.c.l.b16 %v7904
      %v7959 = vunpack.c.l.b16 %v7905
      %v7960 = vunpack.c.l.b16 %v7906
      %v7961 = vunpack.c.l.b16 %v7907
      %v7962 = vunpack.c.l.b16 %v7908
      %v7963 = vunpack.c.l.b16 %v7909
      %v7964 = vunpack.c.l.b16 %v7910
      %v7965 = vunpack.c.l.b16 %v7911
      %v7966 = vunpack.c.l.b16 %v7912
      %v7967 = vunpack.c.l.b16 %v7913
      %v7968 = vpack.c.b16 %v7953, %v7952
      %v7969 = vpack.c.b16 %v7955, %v7954
      %v7970 = vpack.c.b16 %v7957, %v7956
      %v7971 = vpack.c.b16 %v7959, %v7958
      %v7972 = vpack.c.b16 %v7961, %v7960
      %v7973 = vpack.c.b16 %v7963, %v7962
      %v7974 = vpack.c.b16 %v7965, %v7964
      %v7975 = vpack.c.b16 %v7967, %v7966
      %7984 = vmatpush.bf16.msra.mxu0 %v7975
      %7985 = vmatpush.bf16.msra.mxu0 %v7974
      %7986 = vmatpush.bf16.msra.mxu0 %v7973
      %7987 = vmatpush.bf16.msra.mxu0 %v7972
      %7988 = vmatpush.bf16.msra.mxu0 %v7971
      %7989 = vmatpush.bf16.msra.mxu0 %v7970
      %7990 = vmatpush.bf16.msra.mxu0 %v7969
      %7991 = vmatpush.bf16.msra.mxu0 %v7968
      %7992 = vmatmul.bf16.gmra.mxu0 %v7933
      %v7993 = vpop.f32.mrf.mxu0
      %v7994 = vadd.f32 0.0, %v7993
      %v7995 = vpop.f32.mrf.mxu0
      %v7996 = vadd.f32 0.0, %v7995
      %7997 = vmatmul.bf16.gmra.mxu0 %v7932
      %v7998 = vpop.f32.mrf.mxu0
      %v7999 = vadd.f32 0.0, %v7998
      %v8000 = vpop.f32.mrf.mxu0
      %8001 = vdwg.mxu0
      %v8002 = vadd.f32 %v7893, %v7994
      %v8003 = vadd.f32 %v7894, %v7996
      %v8004 = vadd.f32 %v7895, %v7999
      %s8005 = scalar_lea.vmem %s1, 2624
      %v8006 = vld [vmem:[%s8005] sm:$0xf]
      %v8007 = vld [vmem:[%s8005 + $0x4] sm:$0xf]
      %v8008 = vld [vmem:[%s8005 + $0x8] sm:$0xf]
      %v8009 = vld [vmem:[%s8005 + $0xc] sm:$0xf]
      %v8010 = vld [vmem:[%s8005 + $0x10] sm:$0xf]
      %v8011 = vld [vmem:[%s8005 + $0x14] sm:$0xf]
      %v8012 = vld [vmem:[%s8005 + $0x18] sm:$0xf]
      %v8013 = vld [vmem:[%s8005 + $0x1c] sm:$0xf]
      %v8014 = vld [vmem:[%s8005 + $0x20] sm:$0xf]
      %v8015 = vld [vmem:[%s8005 + $0x24] sm:$0xf]
      %v8016 = vld [vmem:[%s8005 + $0x28] sm:$0xf]
      %v8017 = vld [vmem:[%s8005 + $0x2c] sm:$0xf]
      %v8018 = vld [vmem:[%s8005 + $0x30] sm:$0xf]
      %v8019 = vld [vmem:[%s8005 + $0x34] sm:$0xf]
      %v8020 = vld [vmem:[%s8005 + $0x38] sm:$0xf]
      %v8021 = vld [vmem:[%s8005 + $0x3c] sm:$0xf]
      %v8022 = vpack.c.b16 %v7546, %v7545
      %v8023 = vpack.c.b16 %v7915, %v7915
      %v8042 = vunpack.c.l.b16 %v8006
      %v8043 = vunpack.c.l.b16 %v8007
      %v8044 = vunpack.c.l.b16 %v8008
      %v8045 = vunpack.c.l.b16 %v8009
      %v8046 = vunpack.c.l.b16 %v8010
      %v8047 = vunpack.c.l.b16 %v8011
      %v8048 = vunpack.c.l.b16 %v8012
      %v8049 = vunpack.c.l.b16 %v8013
      %v8050 = vunpack.c.l.b16 %v8014
      %v8051 = vunpack.c.l.b16 %v8015
      %v8052 = vunpack.c.l.b16 %v8016
      %v8053 = vunpack.c.l.b16 %v8017
      %v8054 = vunpack.c.l.b16 %v8018
      %v8055 = vunpack.c.l.b16 %v8019
      %v8056 = vunpack.c.l.b16 %v8020
      %v8057 = vunpack.c.l.b16 %v8021
      %v8058 = vpack.c.b16 %v8043, %v8042
      %v8059 = vpack.c.b16 %v8045, %v8044
      %v8060 = vpack.c.b16 %v8047, %v8046
      %v8061 = vpack.c.b16 %v8049, %v8048
      %v8062 = vpack.c.b16 %v8051, %v8050
      %v8063 = vpack.c.b16 %v8053, %v8052
      %v8064 = vpack.c.b16 %v8055, %v8054
      %v8065 = vpack.c.b16 %v8057, %v8056
      %8074 = vmatpush.bf16.msra.mxu0 %v8065
      %8075 = vmatpush.bf16.msra.mxu0 %v8064
      %8076 = vmatpush.bf16.msra.mxu0 %v8063
      %8077 = vmatpush.bf16.msra.mxu0 %v8062
      %8078 = vmatpush.bf16.msra.mxu0 %v8061
      %8079 = vmatpush.bf16.msra.mxu0 %v8060
      %8080 = vmatpush.bf16.msra.mxu0 %v8059
      %8081 = vmatpush.bf16.msra.mxu0 %v8058
      %8082 = vmatmul.bf16.gmra.mxu0 %v8022
      %v8083 = vpop.f32.mrf.mxu0
      %v8084 = vadd.f32 0.0, %v8083
      %v8085 = vpop.f32.mrf.mxu0
      %v8086 = vadd.f32 0.0, %v8085
      %8087 = vmatmul.bf16.gmra.mxu0 %v8023
      %v8088 = vpop.f32.mrf.mxu0
      %v8089 = vadd.f32 0.0, %v8088
      %v8090 = vpop.f32.mrf.mxu0
      %8091 = vdwg.mxu0
      %v8092 = vadd.f32 %v8002, %v8084
      %v8093 = vadd.f32 %v8003, %v8086
      %v8094 = vadd.f32 %v8004, %v8089
      %v8095 = vld [vmem:[#allocation5 + $0x4] sm:$0xc]
      %v8096 = vld [vmem:[#allocation5 + $0x8] sm:$0xf]
      %v8097 = vld [vmem:[#allocation5 + $0xc] sm:$0xf]
      %v8098 = vld [vmem:[#allocation5 + $0x10] sm:$0x3]
      %s8099 = scalar_lea.vmem %s1, 2688
      %v8100 = vld [vmem:[%s8099] sm:$0xf]
      %v8101 = vld [vmem:[%s8099 + $0x4] sm:$0xf]
      %v8102 = vld [vmem:[%s8099 + $0x8] sm:$0xf]
      %v8103 = vld [vmem:[%s8099 + $0xc] sm:$0xf]
      %v8104 = vld [vmem:[%s8099 + $0x10] sm:$0xf]
      %v8105 = vld [vmem:[%s8099 + $0x14] sm:$0xf]
      %v8106 = vld [vmem:[%s8099 + $0x18] sm:$0xf]
      %v8107 = vld [vmem:[%s8099 + $0x1c] sm:$0xf]
      %v8108 = vld [vmem:[%s8099 + $0x20] sm:$0xf]
      %v8109 = vld [vmem:[%s8099 + $0x24] sm:$0xf]
      %v8110 = vld [vmem:[%s8099 + $0x28] sm:$0xf]
      %v8111 = vld [vmem:[%s8099 + $0x2c] sm:$0xf]
      %v8112 = vld [vmem:[%s8099 + $0x30] sm:$0xf]
      %v8113 = vld [vmem:[%s8099 + $0x34] sm:$0xf]
      %v8114 = vld [vmem:[%s8099 + $0x38] sm:$0xf]
      %v8115 = vld [vmem:[%s8099 + $0x3c] sm:$0xf]
      %v8120 = vunpack.c.l.b16 %v8095
      %v8121 = vunpack.c.l.b16 %v8096
      %v8122 = vunpack.c.l.b16 %v8097
      %v8123 = vunpack.c.l.b16 %v8098
      %v8124 = vpack.c.b16 %v8121, %v8120
      %v8125 = vpack.c.b16 %v8123, %v8122
      %v8126 = vrot.slane %v8124, 2
      %v8127 = vrot.slane %v8125, 2
      %v8128 = vsel %vm2008, %v8126, %v8127
      %v8147 = vunpack.c.l.b16 %v8100
      %v8148 = vunpack.c.l.b16 %v8101
      %v8149 = vunpack.c.l.b16 %v8102
      %v8150 = vunpack.c.l.b16 %v8103
      %v8151 = vunpack.c.l.b16 %v8104
      %v8152 = vunpack.c.l.b16 %v8105
      %v8153 = vunpack.c.l.b16 %v8106
      %v8154 = vunpack.c.l.b16 %v8107
      %v8155 = vunpack.c.l.b16 %v8108
      %v8156 = vunpack.c.l.b16 %v8109
      %v8157 = vunpack.c.l.b16 %v8110
      %v8158 = vunpack.c.l.b16 %v8111
      %v8159 = vunpack.c.l.b16 %v8112
      %v8160 = vunpack.c.l.b16 %v8113
      %v8161 = vunpack.c.l.b16 %v8114
      %v8162 = vunpack.c.l.b16 %v8115
      %v8163 = vpack.c.b16 %v8148, %v8147
      %v8164 = vpack.c.b16 %v8150, %v8149
      %v8165 = vpack.c.b16 %v8152, %v8151
      %v8166 = vpack.c.b16 %v8154, %v8153
      %v8167 = vpack.c.b16 %v8156, %v8155
      %v8168 = vpack.c.b16 %v8158, %v8157
      %v8169 = vpack.c.b16 %v8160, %v8159
      %v8170 = vpack.c.b16 %v8162, %v8161
      %8179 = vmatpush.bf16.msra.mxu0 %v8170
      %8180 = vmatpush.bf16.msra.mxu0 %v8169
      %8181 = vmatpush.bf16.msra.mxu0 %v8168
      %8182 = vmatpush.bf16.msra.mxu0 %v8167
      %8183 = vmatpush.bf16.msra.mxu0 %v8166
      %8184 = vmatpush.bf16.msra.mxu0 %v8165
      %8185 = vmatpush.bf16.msra.mxu0 %v8164
      %8186 = vmatpush.bf16.msra.mxu0 %v8163
      %8187 = vmatmul.bf16.gmra.mxu0 %v8128
      %v8188 = vpop.f32.mrf.mxu0
      %v8189 = vadd.f32 0.0, %v8188
      %v8190 = vpop.f32.mrf.mxu0
      %v8191 = vadd.f32 0.0, %v8190
      %8192 = vmatmul.bf16.gmra.mxu0 %v8127
      %v8193 = vpop.f32.mrf.mxu0
      %v8194 = vadd.f32 0.0, %v8193
      %v8195 = vpop.f32.mrf.mxu0
      %8196 = vdwg.mxu0
      %v8197 = vadd.f32 %v8092, %v8189
      %v8198 = vadd.f32 %v8093, %v8191
      %v8199 = vadd.f32 %v8094, %v8194
      %v8200 = vld [vmem:[#allocation5 + $0x10] sm:$0x7]
      %s8201 = scalar_lea.vmem %s1, 2752
      %v8202 = vld [vmem:[%s8201] sm:$0xf]
      %v8203 = vld [vmem:[%s8201 + $0x4] sm:$0xf]
      %v8204 = vld [vmem:[%s8201 + $0x8] sm:$0xf]
      %v8205 = vld [vmem:[%s8201 + $0xc] sm:$0xf]
      %v8206 = vld [vmem:[%s8201 + $0x10] sm:$0xf]
      %v8207 = vld [vmem:[%s8201 + $0x14] sm:$0xf]
      %v8208 = vld [vmem:[%s8201 + $0x18] sm:$0xf]
      %v8209 = vld [vmem:[%s8201 + $0x1c] sm:$0xf]
      %v8210 = vld [vmem:[%s8201 + $0x20] sm:$0xf]
      %v8211 = vld [vmem:[%s8201 + $0x24] sm:$0xf]
      %v8212 = vld [vmem:[%s8201 + $0x28] sm:$0xf]
      %v8213 = vld [vmem:[%s8201 + $0x2c] sm:$0xf]
      %v8214 = vld [vmem:[%s8201 + $0x30] sm:$0xf]
      %v8215 = vld [vmem:[%s8201 + $0x34] sm:$0xf]
      %v8216 = vld [vmem:[%s8201 + $0x38] sm:$0xf]
      %v8217 = vld [vmem:[%s8201 + $0x3c] sm:$0xf]
      %v8219 = vunpack.c.l.b16 %v8200
      %v8220 = vpack.c.b16 %v8219, %v8122
      %v8222 = vshrl.u32 %v8124, 16
      %v8224 = vrot.slane %v8222, 2
      %v8225 = vshll.u32 %v8124, 16
      %v8227 = vrot.slane %v8225, 3
      %v8228 = vor.u32 %v8224, %v8227
      %v8230 = vshrl.u32 %v8220, 16
      %v8232 = vrot.slane %v8230, 2
      %v8233 = vshll.u32 %v8220, 16
      %v8235 = vrot.slane %v8233, 3
      %v8236 = vor.u32 %v8232, %v8235
      %v8237 = vsel %vm2653, %v8228, %v8236
      %v8256 = vunpack.c.l.b16 %v8202
      %v8257 = vunpack.c.l.b16 %v8203
      %v8258 = vunpack.c.l.b16 %v8204
      %v8259 = vunpack.c.l.b16 %v8205
      %v8260 = vunpack.c.l.b16 %v8206
      %v8261 = vunpack.c.l.b16 %v8207
      %v8262 = vunpack.c.l.b16 %v8208
      %v8263 = vunpack.c.l.b16 %v8209
      %v8264 = vunpack.c.l.b16 %v8210
      %v8265 = vunpack.c.l.b16 %v8211
      %v8266 = vunpack.c.l.b16 %v8212
      %v8267 = vunpack.c.l.b16 %v8213
      %v8268 = vunpack.c.l.b16 %v8214
      %v8269 = vunpack.c.l.b16 %v8215
      %v8270 = vunpack.c.l.b16 %v8216
      %v8271 = vunpack.c.l.b16 %v8217
      %v8272 = vpack.c.b16 %v8257, %v8256
      %v8273 = vpack.c.b16 %v8259, %v8258
      %v8274 = vpack.c.b16 %v8261, %v8260
      %v8275 = vpack.c.b16 %v8263, %v8262
      %v8276 = vpack.c.b16 %v8265, %v8264
      %v8277 = vpack.c.b16 %v8267, %v8266
      %v8278 = vpack.c.b16 %v8269, %v8268
      %v8279 = vpack.c.b16 %v8271, %v8270
      %8288 = vmatpush.bf16.msra.mxu0 %v8279
      %8289 = vmatpush.bf16.msra.mxu0 %v8278
      %8290 = vmatpush.bf16.msra.mxu0 %v8277
      %8291 = vmatpush.bf16.msra.mxu0 %v8276
      %8292 = vmatpush.bf16.msra.mxu0 %v8275
      %8293 = vmatpush.bf16.msra.mxu0 %v8274
      %8294 = vmatpush.bf16.msra.mxu0 %v8273
      %8295 = vmatpush.bf16.msra.mxu0 %v8272
      %8296 = vmatmul.bf16.gmra.mxu0 %v8237
      %v8297 = vpop.f32.mrf.mxu0
      %v8298 = vadd.f32 0.0, %v8297
      %v8299 = vpop.f32.mrf.mxu0
      %v8300 = vadd.f32 0.0, %v8299
      %8301 = vmatmul.bf16.gmra.mxu0 %v8236
      %v8302 = vpop.f32.mrf.mxu0
      %v8303 = vadd.f32 0.0, %v8302
      %v8304 = vpop.f32.mrf.mxu0
      %8305 = vdwg.mxu0
      %v8306 = vadd.f32 %v8197, %v8298
      %v8307 = vadd.f32 %v8198, %v8300
      %v8308 = vadd.f32 %v8199, %v8303
      %v8309 = vld [vmem:[#allocation5 + $0x4] sm:$0x8]
      %s8310 = scalar_lea.vmem %s1, 2816
      %v8311 = vld [vmem:[%s8310] sm:$0xf]
      %v8312 = vld [vmem:[%s8310 + $0x4] sm:$0xf]
      %v8313 = vld [vmem:[%s8310 + $0x8] sm:$0xf]
      %v8314 = vld [vmem:[%s8310 + $0xc] sm:$0xf]
      %v8315 = vld [vmem:[%s8310 + $0x10] sm:$0xf]
      %v8316 = vld [vmem:[%s8310 + $0x14] sm:$0xf]
      %v8317 = vld [vmem:[%s8310 + $0x18] sm:$0xf]
      %v8318 = vld [vmem:[%s8310 + $0x1c] sm:$0xf]
      %v8319 = vld [vmem:[%s8310 + $0x20] sm:$0xf]
      %v8320 = vld [vmem:[%s8310 + $0x24] sm:$0xf]
      %v8321 = vld [vmem:[%s8310 + $0x28] sm:$0xf]
      %v8322 = vld [vmem:[%s8310 + $0x2c] sm:$0xf]
      %v8323 = vld [vmem:[%s8310 + $0x30] sm:$0xf]
      %v8324 = vld [vmem:[%s8310 + $0x34] sm:$0xf]
      %v8325 = vld [vmem:[%s8310 + $0x38] sm:$0xf]
      %v8326 = vld [vmem:[%s8310 + $0x3c] sm:$0xf]
      %v8328 = vunpack.c.l.b16 %v8309
      %v8329 = vpack.c.b16 %v8121, %v8328
      %v8330 = vrot.slane %v8329, 3
      %v8331 = vrot.slane %v8220, 3
      %v8332 = vsel %vm3046, %v8330, %v8331
      %v8351 = vunpack.c.l.b16 %v8311
      %v8352 = vunpack.c.l.b16 %v8312
      %v8353 = vunpack.c.l.b16 %v8313
      %v8354 = vunpack.c.l.b16 %v8314
      %v8355 = vunpack.c.l.b16 %v8315
      %v8356 = vunpack.c.l.b16 %v8316
      %v8357 = vunpack.c.l.b16 %v8317
      %v8358 = vunpack.c.l.b16 %v8318
      %v8359 = vunpack.c.l.b16 %v8319
      %v8360 = vunpack.c.l.b16 %v8320
      %v8361 = vunpack.c.l.b16 %v8321
      %v8362 = vunpack.c.l.b16 %v8322
      %v8363 = vunpack.c.l.b16 %v8323
      %v8364 = vunpack.c.l.b16 %v8324
      %v8365 = vunpack.c.l.b16 %v8325
      %v8366 = vunpack.c.l.b16 %v8326
      %v8367 = vpack.c.b16 %v8352, %v8351
      %v8368 = vpack.c.b16 %v8354, %v8353
      %v8369 = vpack.c.b16 %v8356, %v8355
      %v8370 = vpack.c.b16 %v8358, %v8357
      %v8371 = vpack.c.b16 %v8360, %v8359
      %v8372 = vpack.c.b16 %v8362, %v8361
      %v8373 = vpack.c.b16 %v8364, %v8363
      %v8374 = vpack.c.b16 %v8366, %v8365
      %8383 = vmatpush.bf16.msra.mxu0 %v8374
      %8384 = vmatpush.bf16.msra.mxu0 %v8373
      %8385 = vmatpush.bf16.msra.mxu0 %v8372
      %8386 = vmatpush.bf16.msra.mxu0 %v8371
      %8387 = vmatpush.bf16.msra.mxu0 %v8370
      %8388 = vmatpush.bf16.msra.mxu0 %v8369
      %8389 = vmatpush.bf16.msra.mxu0 %v8368
      %8390 = vmatpush.bf16.msra.mxu0 %v8367
      %8391 = vmatmul.bf16.gmra.mxu0 %v8332
      %v8392 = vpop.f32.mrf.mxu0
      %v8393 = vadd.f32 0.0, %v8392
      %v8394 = vpop.f32.mrf.mxu0
      %v8395 = vadd.f32 0.0, %v8394
      %8396 = vmatmul.bf16.gmra.mxu0 %v8331
      %v8397 = vpop.f32.mrf.mxu0
      %v8398 = vadd.f32 0.0, %v8397
      %v8399 = vpop.f32.mrf.mxu0
      %8400 = vdwg.mxu0
      %v8401 = vadd.f32 %v8306, %v8393
      %v8402 = vadd.f32 %v8307, %v8395
      %v8403 = vadd.f32 %v8308, %v8398
      %v8404 = vld [vmem:[%s2 + $0x4] sm:$0x1]
      %v8405 = vperm.slane %v8404, 0
      %v8406 = vadd.f32 %v8401, %v8405
      %v8407 = vadd.f32 %v8402, %v8405
      %v8408 = vadd.f32 %v8403, %v8405
      %v8409 = vmax.f32 %v8406, 0.0
      %v8410 = vmax.f32 %v8407, 0.0
      %v8411 = vmax.f32 %v8408, 0.0
      %v8412 = vpack.c.bf16 %v8410, %v8409
      %v8413 = vpack.c.bf16 %v8411, %v8411
      %v8414 = vld [vmem:[%s6] sm:$0xf]
      %v8415 = vld [vmem:[%s6 + $0x4] sm:$0xf]
      %v8416 = vld [vmem:[%s6 + $0x8] sm:$0xf]
      %v8417 = vld [vmem:[%s6 + $0xc] sm:$0xf]
      %v8418 = vld [vmem:[%s6 + $0x10] sm:$0xf]
      %v8419 = vld [vmem:[%s6 + $0x14] sm:$0xf]
      %v8420 = vld [vmem:[%s6 + $0x18] sm:$0xf]
      %v8421 = vld [vmem:[%s6 + $0x1c] sm:$0xf]
      %v8422 = vld [vmem:[%s6 + $0x20] sm:$0xf]
      %v8423 = vld [vmem:[%s6 + $0x24] sm:$0xf]
      %v8424 = vld [vmem:[%s6 + $0x28] sm:$0xf]
      %v8425 = vld [vmem:[%s6 + $0x2c] sm:$0xf]
      %v8426 = vld [vmem:[%s6 + $0x30] sm:$0x7]
      %v8440 = vunpack.c.l.b16 %v8414
      %v8441 = vunpack.c.l.b16 %v8415
      %v8442 = vunpack.c.l.b16 %v8416
      %v8443 = vunpack.c.l.b16 %v8417
      %v8444 = vunpack.c.l.b16 %v8418
      %v8445 = vunpack.c.l.b16 %v8419
      %v8446 = vunpack.c.l.b16 %v8420
      %v8447 = vunpack.c.l.b16 %v8421
      %v8448 = vunpack.c.l.b16 %v8422
      %v8449 = vunpack.c.l.b16 %v8423
      %v8450 = vunpack.c.l.b16 %v8424
      %v8451 = vunpack.c.l.b16 %v8425
      %v8452 = vunpack.c.l.b16 %v8426
      %v8453 = vpack.c.b16 %v8441, %v8440
      %v8454 = vpack.c.b16 %v8443, %v8442
      %v8455 = vpack.c.b16 %v8445, %v8444
      %v8456 = vpack.c.b16 %v8447, %v8446
      %v8457 = vpack.c.b16 %v8449, %v8448
      %v8458 = vpack.c.b16 %v8451, %v8450
      %v8459 = vpack.c.b16 %v8452, %v8452
      %v8461 = vsel %vm6480, %v8453, 0
      %v8464 = vsel %vm6480, %v8454, 0
      %v8467 = vsel %vm6480, %v8455, 0
      %v8470 = vsel %vm6480, %v8456, 0
      %v8473 = vsel %vm6480, %v8457, 0
      %v8476 = vsel %vm6480, %v8458, 0
      %v8479 = vsel %vm6480, %v8459, 0
      %v8482 = vsel %vm6490, %v8413, 0
      %8484 = vmatpush.bf16.msra.mxu0 0
      %8485 = vmatpush.bf16.msra.mxu0 0
      %8486 = vmatpush.bf16.msra.mxu0 0
      %8487 = vmatpush.bf16.msra.mxu0 0
      %8488 = vmatpush.bf16.msra.mxu0 0
      %8489 = vmatpush.bf16.msra.mxu0 0
      %8490 = vmatpush.bf16.msra.mxu0 %v8482
      %8491 = vmatpush.bf16.msra.mxu0 %v8412
      %8492 = vmatmul.bf16.gmra.mxu0 %v8461
      %v8493 = vpop.f32.mrf.mxu0
      %v8494 = vadd.f32 0.0, %v8493
      %v8495 = vpop.f32.mrf.mxu0
      %v8496 = vadd.f32 0.0, %v8495
      %8497 = vmatmul.bf16.gmra.mxu0 %v8464
      %v8498 = vpop.f32.mrf.mxu0
      %v8499 = vadd.f32 0.0, %v8498
      %v8500 = vpop.f32.mrf.mxu0
      %v8501 = vadd.f32 0.0, %v8500
      %8502 = vmatmul.bf16.gmra.mxu0 %v8467
      %v8503 = vpop.f32.mrf.mxu0
      %v8504 = vadd.f32 0.0, %v8503
      %v8505 = vpop.f32.mrf.mxu0
      %v8506 = vadd.f32 0.0, %v8505
      %8507 = vmatmul.bf16.gmra.mxu0 %v8470
      %v8508 = vpop.f32.mrf.mxu0
      %v8509 = vadd.f32 0.0, %v8508
      %v8510 = vpop.f32.mrf.mxu0
      %v8511 = vadd.f32 0.0, %v8510
      %8512 = vmatmul.bf16.gmra.mxu0 %v8473
      %v8513 = vpop.f32.mrf.mxu0
      %v8514 = vadd.f32 0.0, %v8513
      %v8515 = vpop.f32.mrf.mxu0
      %v8516 = vadd.f32 0.0, %v8515
      %8517 = vmatmul.bf16.gmra.mxu0 %v8476
      %v8518 = vpop.f32.mrf.mxu0
      %v8519 = vadd.f32 0.0, %v8518
      %v8520 = vpop.f32.mrf.mxu0
      %v8521 = vadd.f32 0.0, %v8520
      %8522 = vmatmul.bf16.gmra.mxu0 %v8479
      %v8523 = vpop.f32.mrf.mxu0
      %v8524 = vadd.f32 0.0, %v8523
      %v8525 = vpop.f32.mrf.mxu0
      %8526 = vdwg.mxu0
      %v8527 = vpack.c.bf16 %v8494, %v8494
      %v8528 = vpack.c.bf16 %v8496, %v8496
      %v8529 = vpack.c.bf16 %v8499, %v8499
      %v8530 = vpack.c.bf16 %v8501, %v8501
      %v8531 = vpack.c.bf16 %v8504, %v8504
      %v8532 = vpack.c.bf16 %v8506, %v8506
      %v8533 = vpack.c.bf16 %v8509, %v8509
      %v8534 = vpack.c.bf16 %v8511, %v8511
      %v8535 = vpack.c.bf16 %v8514, %v8514
      %v8536 = vpack.c.bf16 %v8516, %v8516
      %v8537 = vpack.c.bf16 %v8519, %v8519
      %v8538 = vpack.c.bf16 %v8521, %v8521
      %v8539 = vpack.c.bf16 %v8524, %v8524
      %8540 = vst [vmem:[#allocation6] sm:$0xf] %v8527
      %8541 = vst [vmem:[#allocation6 + $0x4] sm:$0xf] %v8528
      %8542 = vst [vmem:[#allocation6 + $0x8] sm:$0xf] %v8529
      %8543 = vst [vmem:[#allocation6 + $0xc] sm:$0xf] %v8530
      %8544 = vst [vmem:[#allocation6 + $0x10] sm:$0xf] %v8531
      %8545 = vst [vmem:[#allocation6 + $0x14] sm:$0xf] %v8532
      %8546 = vst [vmem:[#allocation6 + $0x18] sm:$0xf] %v8533
      %8547 = vst [vmem:[#allocation6 + $0x1c] sm:$0xf] %v8534
      %8548 = vst [vmem:[#allocation6 + $0x20] sm:$0xf] %v8535
      %8549 = vst [vmem:[#allocation6 + $0x24] sm:$0xf] %v8536
      %8550 = vst [vmem:[#allocation6 + $0x28] sm:$0xf] %v8537
      %8551 = vst [vmem:[#allocation6 + $0x2c] sm:$0xf] %v8538
      %8552 = vst [vmem:[#allocation6 + $0x30] sm:$0x7] %v8539
      %v8553 = vld [vmem:[#allocation6] sm:$0xf]
      %v8554 = vld [vmem:[#allocation6 + $0x4] sm:$0xf]
      %v8555 = vld [vmem:[#allocation6 + $0x8] sm:$0xf]
      %v8556 = vld [vmem:[#allocation6 + $0xc] sm:$0xf]
      %v8557 = vld [vmem:[#allocation6 + $0x10] sm:$0xf]
      %v8558 = vld [vmem:[#allocation6 + $0x14] sm:$0xf]
      %v8559 = vld [vmem:[#allocation6 + $0x18] sm:$0xf]
      %v8560 = vld [vmem:[#allocation6 + $0x1c] sm:$0xf]
      %v8561 = vld [vmem:[#allocation6 + $0x20] sm:$0xf]
      %v8562 = vld [vmem:[#allocation6 + $0x24] sm:$0xf]
      %s8563 = scalar_lea.vmem %s1, 2880
      %v8564 = vld [vmem:[%s8563] sm:$0xf]
      %v8565 = vld [vmem:[%s8563 + $0x4] sm:$0xf]
      %v8566 = vld [vmem:[%s8563 + $0x8] sm:$0xf]
      %v8567 = vld [vmem:[%s8563 + $0xc] sm:$0xf]
      %v8568 = vld [vmem:[%s8563 + $0x10] sm:$0xf]
      %v8569 = vld [vmem:[%s8563 + $0x14] sm:$0xf]
      %v8570 = vld [vmem:[%s8563 + $0x18] sm:$0xf]
      %v8571 = vld [vmem:[%s8563 + $0x1c] sm:$0xf]
      %v8572 = vld [vmem:[%s8563 + $0x20] sm:$0xf]
      %v8573 = vld [vmem:[%s8563 + $0x24] sm:$0xf]
      %v8574 = vld [vmem:[%s8563 + $0x28] sm:$0xf]
      %v8575 = vld [vmem:[%s8563 + $0x2c] sm:$0xf]
      %v8576 = vld [vmem:[%s8563 + $0x30] sm:$0xf]
      %v8577 = vld [vmem:[%s8563 + $0x34] sm:$0xf]
      %v8578 = vld [vmem:[%s8563 + $0x38] sm:$0xf]
      %v8579 = vld [vmem:[%s8563 + $0x3c] sm:$0xf]
      %v8580 = vld [vmem:[#allocation6 + $0x28] sm:$0x1]
      %s8581 = scalar_lea.vmem %s1, 2944
      %v8582 = vld [vmem:[%s8581] sm:$0xf]
      %v8583 = vld [vmem:[%s8581 + $0x4] sm:$0xf]
      %v8584 = vld [vmem:[%s8581 + $0x8] sm:$0xf]
      %v8585 = vld [vmem:[%s8581 + $0xc] sm:$0xf]
      %v8586 = vld [vmem:[%s8581 + $0x10] sm:$0xf]
      %v8587 = vld [vmem:[%s8581 + $0x14] sm:$0xf]
      %v8588 = vld [vmem:[%s8581 + $0x18] sm:$0xf]
      %v8589 = vld [vmem:[%s8581 + $0x1c] sm:$0xf]
      %v8590 = vld [vmem:[%s8581 + $0x20] sm:$0xf]
      %v8591 = vld [vmem:[%s8581 + $0x24] sm:$0xf]
      %v8592 = vld [vmem:[%s8581 + $0x28] sm:$0xf]
      %v8593 = vld [vmem:[%s8581 + $0x2c] sm:$0xf]
      %v8594 = vld [vmem:[%s8581 + $0x30] sm:$0xf]
      %v8595 = vld [vmem:[%s8581 + $0x34] sm:$0xf]
      %v8596 = vld [vmem:[%s8581 + $0x38] sm:$0xf]
      %v8597 = vld [vmem:[%s8581 + $0x3c] sm:$0xf]
      %v8609 = vunpack.c.l.b16 %v8553
      %v8610 = vunpack.c.l.b16 %v8554
      %v8611 = vunpack.c.l.b16 %v8555
      %v8612 = vunpack.c.l.b16 %v8556
      %v8613 = vunpack.c.l.b16 %v8557
      %v8614 = vunpack.c.l.b16 %v8558
      %v8615 = vunpack.c.l.b16 %v8559
      %v8616 = vunpack.c.l.b16 %v8560
      %v8617 = vunpack.c.l.b16 %v8561
      %v8618 = vunpack.c.l.b16 %v8562
      %v8619 = vunpack.c.l.b16 %v8580
      %v8620 = vpack.c.b16 %v8610, %v8609
      %v8621 = vpack.c.b16 %v8612, %v8611
      %v8622 = vpack.c.b16 %v8614, %v8613
      %v8623 = vpack.c.b16 %v8616, %v8615
      %v8624 = vpack.c.b16 %v8618, %v8617
      %v8625 = vpack.c.b16 %v8619, %v8619
      %v8627 = vshrl.u32 %v8620, 16
      %v8629 = vshll.u32 %v8620, 16
      %v8631 = vrot.slane %v8629, 1
      %v8632 = vor.u32 %v8627, %v8631
      %v8634 = vshll.u32 %v8621, 16
      %v8636 = vrot.slane %v8634, 1
      %v8637 = vsel %vm470, %v8632, %v8636
      %v8638 = vshrl.u32 %v8621, 16
      %v8640 = vor.u32 %v8638, %v8636
      %v8642 = vshll.u32 %v8622, 16
      %v8644 = vrot.slane %v8642, 1
      %v8645 = vsel %vm470, %v8640, %v8644
      %v8646 = vshrl.u32 %v8622, 16
      %v8648 = vor.u32 %v8646, %v8644
      %v8650 = vshll.u32 %v8623, 16
      %v8652 = vrot.slane %v8650, 1
      %v8653 = vsel %vm470, %v8648, %v8652
      %v8654 = vshrl.u32 %v8623, 16
      %v8656 = vor.u32 %v8654, %v8652
      %v8658 = vshll.u32 %v8624, 16
      %v8660 = vrot.slane %v8658, 1
      %v8661 = vsel %vm470, %v8656, %v8660
      %v8662 = vshrl.u32 %v8624, 16
      %v8664 = vor.u32 %v8662, %v8660
      %v8666 = vshll.u32 %v8625, 16
      %v8668 = vrot.slane %v8666, 1
      %v8669 = vsel %vm470, %v8664, %v8668
      %v8691 = vunpack.c.l.b16 %v8582
      %v8692 = vunpack.c.l.b16 %v8583
      %v8693 = vunpack.c.l.b16 %v8584
      %v8694 = vunpack.c.l.b16 %v8585
      %v8695 = vunpack.c.l.b16 %v8586
      %v8696 = vunpack.c.l.b16 %v8587
      %v8697 = vunpack.c.l.b16 %v8588
      %v8698 = vunpack.c.l.b16 %v8589
      %v8699 = vunpack.c.l.b16 %v8590
      %v8700 = vunpack.c.l.b16 %v8591
      %v8701 = vunpack.c.l.b16 %v8592
      %v8702 = vunpack.c.l.b16 %v8593
      %v8703 = vunpack.c.l.b16 %v8594
      %v8704 = vunpack.c.l.b16 %v8595
      %v8705 = vunpack.c.l.b16 %v8596
      %v8706 = vunpack.c.l.b16 %v8597
      %v8707 = vpack.c.b16 %v8692, %v8691
      %v8708 = vpack.c.b16 %v8694, %v8693
      %v8709 = vpack.c.b16 %v8696, %v8695
      %v8710 = vpack.c.b16 %v8698, %v8697
      %v8711 = vpack.c.b16 %v8700, %v8699
      %v8712 = vpack.c.b16 %v8702, %v8701
      %v8713 = vpack.c.b16 %v8704, %v8703
      %v8714 = vpack.c.b16 %v8706, %v8705
      %8723 = vmatpush.bf16.msra.mxu0 %v8714
      %8724 = vmatpush.bf16.msra.mxu0 %v8713
      %8725 = vmatpush.bf16.msra.mxu0 %v8712
      %8726 = vmatpush.bf16.msra.mxu0 %v8711
      %8727 = vmatpush.bf16.msra.mxu0 %v8710
      %8728 = vmatpush.bf16.msra.mxu0 %v8709
      %8729 = vmatpush.bf16.msra.mxu0 %v8708
      %8730 = vmatpush.bf16.msra.mxu0 %v8707
      %8731 = vmatmul.bf16.gmra.mxu0 %v8637
      %v8732 = vpop.f32.mrf.mxu0
      %v8733 = vadd.f32 0.0, %v8732
      %v8734 = vpop.f32.mrf.mxu0
      %v8735 = vadd.f32 0.0, %v8734
      %8736 = vmatmul.bf16.gmra.mxu0 %v8645
      %v8737 = vpop.f32.mrf.mxu0
      %v8738 = vadd.f32 0.0, %v8737
      %v8739 = vpop.f32.mrf.mxu0
      %v8740 = vadd.f32 0.0, %v8739
      %8741 = vmatmul.bf16.gmra.mxu0 %v8653
      %v8742 = vpop.f32.mrf.mxu0
      %v8743 = vadd.f32 0.0, %v8742
      %v8744 = vpop.f32.mrf.mxu0
      %v8745 = vadd.f32 0.0, %v8744
      %8746 = vmatmul.bf16.gmra.mxu0 %v8661
      %v8747 = vpop.f32.mrf.mxu0
      %v8748 = vadd.f32 0.0, %v8747
      %v8749 = vpop.f32.mrf.mxu0
      %v8750 = vadd.f32 0.0, %v8749
      %8751 = vmatmul.bf16.gmra.mxu0 %v8669
      %v8752 = vpop.f32.mrf.mxu0
      %v8753 = vadd.f32 0.0, %v8752
      %v8754 = vpop.f32.mrf.mxu0
      %v8755 = vadd.f32 0.0, %v8754
      %8756 = vdwg.mxu0
      %v8778 = vunpack.c.l.b16 %v8564
      %v8779 = vunpack.c.l.b16 %v8565
      %v8780 = vunpack.c.l.b16 %v8566
      %v8781 = vunpack.c.l.b16 %v8567
      %v8782 = vunpack.c.l.b16 %v8568
      %v8783 = vunpack.c.l.b16 %v8569
      %v8784 = vunpack.c.l.b16 %v8570
      %v8785 = vunpack.c.l.b16 %v8571
      %v8786 = vunpack.c.l.b16 %v8572
      %v8787 = vunpack.c.l.b16 %v8573
      %v8788 = vunpack.c.l.b16 %v8574
      %v8789 = vunpack.c.l.b16 %v8575
      %v8790 = vunpack.c.l.b16 %v8576
      %v8791 = vunpack.c.l.b16 %v8577
      %v8792 = vunpack.c.l.b16 %v8578
      %v8793 = vunpack.c.l.b16 %v8579
      %v8794 = vpack.c.b16 %v8779, %v8778
      %v8795 = vpack.c.b16 %v8781, %v8780
      %v8796 = vpack.c.b16 %v8783, %v8782
      %v8797 = vpack.c.b16 %v8785, %v8784
      %v8798 = vpack.c.b16 %v8787, %v8786
      %v8799 = vpack.c.b16 %v8789, %v8788
      %v8800 = vpack.c.b16 %v8791, %v8790
      %v8801 = vpack.c.b16 %v8793, %v8792
      %8810 = vmatpush.bf16.msra.mxu0 %v8801
      %8811 = vmatpush.bf16.msra.mxu0 %v8800
      %8812 = vmatpush.bf16.msra.mxu0 %v8799
      %8813 = vmatpush.bf16.msra.mxu0 %v8798
      %8814 = vmatpush.bf16.msra.mxu0 %v8797
      %8815 = vmatpush.bf16.msra.mxu0 %v8796
      %8816 = vmatpush.bf16.msra.mxu0 %v8795
      %8817 = vmatpush.bf16.msra.mxu0 %v8794
      %8818 = vmatmul.bf16.gmra.mxu0 %v8620
      %v8819 = vpop.f32.mrf.mxu0
      %v8820 = vadd.f32 %v8733, %v8819
      %v8821 = vpop.f32.mrf.mxu0
      %v8822 = vadd.f32 %v8735, %v8821
      %8823 = vmatmul.bf16.gmra.mxu0 %v8621
      %v8824 = vpop.f32.mrf.mxu0
      %v8825 = vadd.f32 %v8738, %v8824
      %v8826 = vpop.f32.mrf.mxu0
      %v8827 = vadd.f32 %v8740, %v8826
      %8828 = vmatmul.bf16.gmra.mxu0 %v8622
      %v8829 = vpop.f32.mrf.mxu0
      %v8830 = vadd.f32 %v8743, %v8829
      %v8831 = vpop.f32.mrf.mxu0
      %v8832 = vadd.f32 %v8745, %v8831
      %8833 = vmatmul.bf16.gmra.mxu0 %v8623
      %v8834 = vpop.f32.mrf.mxu0
      %v8835 = vadd.f32 %v8748, %v8834
      %v8836 = vpop.f32.mrf.mxu0
      %v8837 = vadd.f32 %v8750, %v8836
      %8838 = vmatmul.bf16.gmra.mxu0 %v8624
      %v8839 = vpop.f32.mrf.mxu0
      %v8840 = vadd.f32 %v8753, %v8839
      %v8841 = vpop.f32.mrf.mxu0
      %v8842 = vadd.f32 %v8755, %v8841
      %8843 = vdwg.mxu0
      %v8844 = vld [vmem:[#allocation6] sm:$0xe]
      %s8845 = scalar_lea.vmem %s1, 3008
      %v8846 = vld [vmem:[%s8845] sm:$0xf]
      %v8847 = vld [vmem:[%s8845 + $0x4] sm:$0xf]
      %v8848 = vld [vmem:[%s8845 + $0x8] sm:$0xf]
      %v8849 = vld [vmem:[%s8845 + $0xc] sm:$0xf]
      %v8850 = vld [vmem:[%s8845 + $0x10] sm:$0xf]
      %v8851 = vld [vmem:[%s8845 + $0x14] sm:$0xf]
      %v8852 = vld [vmem:[%s8845 + $0x18] sm:$0xf]
      %v8853 = vld [vmem:[%s8845 + $0x1c] sm:$0xf]
      %v8854 = vld [vmem:[%s8845 + $0x20] sm:$0xf]
      %v8855 = vld [vmem:[%s8845 + $0x24] sm:$0xf]
      %v8856 = vld [vmem:[%s8845 + $0x28] sm:$0xf]
      %v8857 = vld [vmem:[%s8845 + $0x2c] sm:$0xf]
      %v8858 = vld [vmem:[%s8845 + $0x30] sm:$0xf]
      %v8859 = vld [vmem:[%s8845 + $0x34] sm:$0xf]
      %v8860 = vld [vmem:[%s8845 + $0x38] sm:$0xf]
      %v8861 = vld [vmem:[%s8845 + $0x3c] sm:$0xf]
      %v8863 = vunpack.c.l.b16 %v8844
      %v8864 = vpack.c.b16 %v8610, %v8863
      %v8865 = vrot.slane %v8864, 1
      %v8866 = vrot.slane %v8621, 1
      %v8867 = vsel %vm970, %v8865, %v8866
      %v8868 = vrot.slane %v8622, 1
      %v8869 = vsel %vm970, %v8866, %v8868
      %v8870 = vrot.slane %v8623, 1
      %v8871 = vsel %vm970, %v8868, %v8870
      %v8872 = vrot.slane %v8624, 1
      %v8873 = vsel %vm970, %v8870, %v8872
      %v8874 = vrot.slane %v8625, 1
      %v8875 = vsel %vm970, %v8872, %v8874
      %v8897 = vunpack.c.l.b16 %v8846
      %v8898 = vunpack.c.l.b16 %v8847
      %v8899 = vunpack.c.l.b16 %v8848
      %v8900 = vunpack.c.l.b16 %v8849
      %v8901 = vunpack.c.l.b16 %v8850
      %v8902 = vunpack.c.l.b16 %v8851
      %v8903 = vunpack.c.l.b16 %v8852
      %v8904 = vunpack.c.l.b16 %v8853
      %v8905 = vunpack.c.l.b16 %v8854
      %v8906 = vunpack.c.l.b16 %v8855
      %v8907 = vunpack.c.l.b16 %v8856
      %v8908 = vunpack.c.l.b16 %v8857
      %v8909 = vunpack.c.l.b16 %v8858
      %v8910 = vunpack.c.l.b16 %v8859
      %v8911 = vunpack.c.l.b16 %v8860
      %v8912 = vunpack.c.l.b16 %v8861
      %v8913 = vpack.c.b16 %v8898, %v8897
      %v8914 = vpack.c.b16 %v8900, %v8899
      %v8915 = vpack.c.b16 %v8902, %v8901
      %v8916 = vpack.c.b16 %v8904, %v8903
      %v8917 = vpack.c.b16 %v8906, %v8905
      %v8918 = vpack.c.b16 %v8908, %v8907
      %v8919 = vpack.c.b16 %v8910, %v8909
      %v8920 = vpack.c.b16 %v8912, %v8911
      %8929 = vmatpush.bf16.msra.mxu0 %v8920
      %8930 = vmatpush.bf16.msra.mxu0 %v8919
      %8931 = vmatpush.bf16.msra.mxu0 %v8918
      %8932 = vmatpush.bf16.msra.mxu0 %v8917
      %8933 = vmatpush.bf16.msra.mxu0 %v8916
      %8934 = vmatpush.bf16.msra.mxu0 %v8915
      %8935 = vmatpush.bf16.msra.mxu0 %v8914
      %8936 = vmatpush.bf16.msra.mxu0 %v8913
      %8937 = vmatmul.bf16.gmra.mxu0 %v8867
      %v8938 = vpop.f32.mrf.mxu0
      %v8939 = vadd.f32 0.0, %v8938
      %v8940 = vpop.f32.mrf.mxu0
      %v8941 = vadd.f32 0.0, %v8940
      %8942 = vmatmul.bf16.gmra.mxu0 %v8869
      %v8943 = vpop.f32.mrf.mxu0
      %v8944 = vadd.f32 0.0, %v8943
      %v8945 = vpop.f32.mrf.mxu0
      %v8946 = vadd.f32 0.0, %v8945
      %8947 = vmatmul.bf16.gmra.mxu0 %v8871
      %v8948 = vpop.f32.mrf.mxu0
      %v8949 = vadd.f32 0.0, %v8948
      %v8950 = vpop.f32.mrf.mxu0
      %v8951 = vadd.f32 0.0, %v8950
      %8952 = vmatmul.bf16.gmra.mxu0 %v8873
      %v8953 = vpop.f32.mrf.mxu0
      %v8954 = vadd.f32 0.0, %v8953
      %v8955 = vpop.f32.mrf.mxu0
      %v8956 = vadd.f32 0.0, %v8955
      %8957 = vmatmul.bf16.gmra.mxu0 %v8875
      %v8958 = vpop.f32.mrf.mxu0
      %v8959 = vadd.f32 0.0, %v8958
      %v8960 = vpop.f32.mrf.mxu0
      %v8961 = vadd.f32 0.0, %v8960
      %8962 = vdwg.mxu0
      %v8963 = vadd.f32 %v8820, %v8939
      %v8964 = vadd.f32 %v8822, %v8941
      %v8965 = vadd.f32 %v8825, %v8944
      %v8966 = vadd.f32 %v8827, %v8946
      %v8967 = vadd.f32 %v8830, %v8949
      %v8968 = vadd.f32 %v8832, %v8951
      %v8969 = vadd.f32 %v8835, %v8954
      %v8970 = vadd.f32 %v8837, %v8956
      %v8971 = vadd.f32 %v8840, %v8959
      %v8972 = vadd.f32 %v8842, %v8961
      %v8973 = vld [vmem:[#allocation6 + $0x4] sm:$0xe]
      %v8974 = vld [vmem:[#allocation6 + $0x8] sm:$0xf]
      %v8975 = vld [vmem:[#allocation6 + $0xc] sm:$0xf]
      %v8976 = vld [vmem:[#allocation6 + $0x10] sm:$0xf]
      %v8977 = vld [vmem:[#allocation6 + $0x14] sm:$0xf]
      %v8978 = vld [vmem:[#allocation6 + $0x18] sm:$0xf]
      %v8979 = vld [vmem:[#allocation6 + $0x1c] sm:$0xf]
      %v8980 = vld [vmem:[#allocation6 + $0x20] sm:$0xf]
      %v8981 = vld [vmem:[#allocation6 + $0x24] sm:$0xf]
      %v8982 = vld [vmem:[#allocation6 + $0x28] sm:$0xf]
      %v8983 = vld [vmem:[#allocation6 + $0x2c] sm:$0x1]
      %s8984 = scalar_lea.vmem %s1, 3072
      %v8985 = vld [vmem:[%s8984] sm:$0xf]
      %v8986 = vld [vmem:[%s8984 + $0x4] sm:$0xf]
      %v8987 = vld [vmem:[%s8984 + $0x8] sm:$0xf]
      %v8988 = vld [vmem:[%s8984 + $0xc] sm:$0xf]
      %v8989 = vld [vmem:[%s8984 + $0x10] sm:$0xf]
      %v8990 = vld [vmem:[%s8984 + $0x14] sm:$0xf]
      %v8991 = vld [vmem:[%s8984 + $0x18] sm:$0xf]
      %v8992 = vld [vmem:[%s8984 + $0x1c] sm:$0xf]
      %v8993 = vld [vmem:[%s8984 + $0x20] sm:$0xf]
      %v8994 = vld [vmem:[%s8984 + $0x24] sm:$0xf]
      %v8995 = vld [vmem:[%s8984 + $0x28] sm:$0xf]
      %v8996 = vld [vmem:[%s8984 + $0x2c] sm:$0xf]
      %v8997 = vld [vmem:[%s8984 + $0x30] sm:$0xf]
      %v8998 = vld [vmem:[%s8984 + $0x34] sm:$0xf]
      %v8999 = vld [vmem:[%s8984 + $0x38] sm:$0xf]
      %v9000 = vld [vmem:[%s8984 + $0x3c] sm:$0xf]
      %v9012 = vunpack.c.l.b16 %v8973
      %v9013 = vunpack.c.l.b16 %v8974
      %v9014 = vunpack.c.l.b16 %v8975
      %v9015 = vunpack.c.l.b16 %v8976
      %v9016 = vunpack.c.l.b16 %v8977
      %v9017 = vunpack.c.l.b16 %v8978
      %v9018 = vunpack.c.l.b16 %v8979
      %v9019 = vunpack.c.l.b16 %v8980
      %v9020 = vunpack.c.l.b16 %v8981
      %v9021 = vunpack.c.l.b16 %v8982
      %v9022 = vunpack.c.l.b16 %v8983
      %v9023 = vpack.c.b16 %v9013, %v9012
      %v9024 = vpack.c.b16 %v9015, %v9014
      %v9025 = vpack.c.b16 %v9017, %v9016
      %v9026 = vpack.c.b16 %v9019, %v9018
      %v9027 = vpack.c.b16 %v9021, %v9020
      %v9028 = vpack.c.b16 %v9022, %v9022
      %v9029 = vrot.slane %v9023, 1
      %v9030 = vrot.slane %v9024, 1
      %v9031 = vsel %vm970, %v9029, %v9030
      %v9032 = vrot.slane %v9025, 1
      %v9033 = vsel %vm970, %v9030, %v9032
      %v9034 = vrot.slane %v9026, 1
      %v9035 = vsel %vm970, %v9032, %v9034
      %v9036 = vrot.slane %v9027, 1
      %v9037 = vsel %vm970, %v9034, %v9036
      %v9038 = vrot.slane %v9028, 1
      %v9039 = vsel %vm970, %v9036, %v9038
      %v9061 = vunpack.c.l.b16 %v8985
      %v9062 = vunpack.c.l.b16 %v8986
      %v9063 = vunpack.c.l.b16 %v8987
      %v9064 = vunpack.c.l.b16 %v8988
      %v9065 = vunpack.c.l.b16 %v8989
      %v9066 = vunpack.c.l.b16 %v8990
      %v9067 = vunpack.c.l.b16 %v8991
      %v9068 = vunpack.c.l.b16 %v8992
      %v9069 = vunpack.c.l.b16 %v8993
      %v9070 = vunpack.c.l.b16 %v8994
      %v9071 = vunpack.c.l.b16 %v8995
      %v9072 = vunpack.c.l.b16 %v8996
      %v9073 = vunpack.c.l.b16 %v8997
      %v9074 = vunpack.c.l.b16 %v8998
      %v9075 = vunpack.c.l.b16 %v8999
      %v9076 = vunpack.c.l.b16 %v9000
      %v9077 = vpack.c.b16 %v9062, %v9061
      %v9078 = vpack.c.b16 %v9064, %v9063
      %v9079 = vpack.c.b16 %v9066, %v9065
      %v9080 = vpack.c.b16 %v9068, %v9067
      %v9081 = vpack.c.b16 %v9070, %v9069
      %v9082 = vpack.c.b16 %v9072, %v9071
      %v9083 = vpack.c.b16 %v9074, %v9073
      %v9084 = vpack.c.b16 %v9076, %v9075
      %9093 = vmatpush.bf16.msra.mxu0 %v9084
      %9094 = vmatpush.bf16.msra.mxu0 %v9083
      %9095 = vmatpush.bf16.msra.mxu0 %v9082
      %9096 = vmatpush.bf16.msra.mxu0 %v9081
      %9097 = vmatpush.bf16.msra.mxu0 %v9080
      %9098 = vmatpush.bf16.msra.mxu0 %v9079
      %9099 = vmatpush.bf16.msra.mxu0 %v9078
      %9100 = vmatpush.bf16.msra.mxu0 %v9077
      %9101 = vmatmul.bf16.gmra.mxu0 %v9031
      %v9102 = vpop.f32.mrf.mxu0
      %v9103 = vadd.f32 0.0, %v9102
      %v9104 = vpop.f32.mrf.mxu0
      %v9105 = vadd.f32 0.0, %v9104
      %9106 = vmatmul.bf16.gmra.mxu0 %v9033
      %v9107 = vpop.f32.mrf.mxu0
      %v9108 = vadd.f32 0.0, %v9107
      %v9109 = vpop.f32.mrf.mxu0
      %v9110 = vadd.f32 0.0, %v9109
      %9111 = vmatmul.bf16.gmra.mxu0 %v9035
      %v9112 = vpop.f32.mrf.mxu0
      %v9113 = vadd.f32 0.0, %v9112
      %v9114 = vpop.f32.mrf.mxu0
      %v9115 = vadd.f32 0.0, %v9114
      %9116 = vmatmul.bf16.gmra.mxu0 %v9037
      %v9117 = vpop.f32.mrf.mxu0
      %v9118 = vadd.f32 0.0, %v9117
      %v9119 = vpop.f32.mrf.mxu0
      %v9120 = vadd.f32 0.0, %v9119
      %9121 = vmatmul.bf16.gmra.mxu0 %v9039
      %v9122 = vpop.f32.mrf.mxu0
      %v9123 = vadd.f32 0.0, %v9122
      %v9124 = vpop.f32.mrf.mxu0
      %v9125 = vadd.f32 0.0, %v9124
      %9126 = vdwg.mxu0
      %v9127 = vadd.f32 %v8963, %v9103
      %v9128 = vadd.f32 %v8964, %v9105
      %v9129 = vadd.f32 %v8965, %v9108
      %v9130 = vadd.f32 %v8966, %v9110
      %v9131 = vadd.f32 %v8967, %v9113
      %v9132 = vadd.f32 %v8968, %v9115
      %v9133 = vadd.f32 %v8969, %v9118
      %v9134 = vadd.f32 %v8970, %v9120
      %v9135 = vadd.f32 %v8971, %v9123
      %v9136 = vadd.f32 %v8972, %v9125
      %v9137 = vld [vmem:[#allocation6 + $0x2c] sm:$0x3]
      %s9138 = scalar_lea.vmem %s1, 3136
      %v9139 = vld [vmem:[%s9138] sm:$0xf]
      %v9140 = vld [vmem:[%s9138 + $0x4] sm:$0xf]
      %v9141 = vld [vmem:[%s9138 + $0x8] sm:$0xf]
      %v9142 = vld [vmem:[%s9138 + $0xc] sm:$0xf]
      %v9143 = vld [vmem:[%s9138 + $0x10] sm:$0xf]
      %v9144 = vld [vmem:[%s9138 + $0x14] sm:$0xf]
      %v9145 = vld [vmem:[%s9138 + $0x18] sm:$0xf]
      %v9146 = vld [vmem:[%s9138 + $0x1c] sm:$0xf]
      %v9147 = vld [vmem:[%s9138 + $0x20] sm:$0xf]
      %v9148 = vld [vmem:[%s9138 + $0x24] sm:$0xf]
      %v9149 = vld [vmem:[%s9138 + $0x28] sm:$0xf]
      %v9150 = vld [vmem:[%s9138 + $0x2c] sm:$0xf]
      %v9151 = vld [vmem:[%s9138 + $0x30] sm:$0xf]
      %v9152 = vld [vmem:[%s9138 + $0x34] sm:$0xf]
      %v9153 = vld [vmem:[%s9138 + $0x38] sm:$0xf]
      %v9154 = vld [vmem:[%s9138 + $0x3c] sm:$0xf]
      %v9156 = vunpack.c.l.b16 %v9137
      %v9157 = vpack.c.b16 %v9156, %v9156
      %v9159 = vshrl.u32 %v9023, 16
      %v9161 = vrot.slane %v9159, 1
      %v9162 = vshll.u32 %v9023, 16
      %v9164 = vrot.slane %v9162, 2
      %v9165 = vor.u32 %v9161, %v9164
      %v9167 = vshrl.u32 %v9024, 16
      %v9169 = vrot.slane %v9167, 1
      %v9170 = vshll.u32 %v9024, 16
      %v9172 = vrot.slane %v9170, 2
      %v9173 = vor.u32 %v9169, %v9172
      %v9174 = vsel %vm1615, %v9165, %v9173
      %v9176 = vshrl.u32 %v9025, 16
      %v9178 = vrot.slane %v9176, 1
      %v9179 = vshll.u32 %v9025, 16
      %v9181 = vrot.slane %v9179, 2
      %v9182 = vor.u32 %v9178, %v9181
      %v9183 = vsel %vm1615, %v9173, %v9182
      %v9185 = vshrl.u32 %v9026, 16
      %v9187 = vrot.slane %v9185, 1
      %v9188 = vshll.u32 %v9026, 16
      %v9190 = vrot.slane %v9188, 2
      %v9191 = vor.u32 %v9187, %v9190
      %v9192 = vsel %vm1615, %v9182, %v9191
      %v9194 = vshrl.u32 %v9027, 16
      %v9196 = vrot.slane %v9194, 1
      %v9197 = vshll.u32 %v9027, 16
      %v9199 = vrot.slane %v9197, 2
      %v9200 = vor.u32 %v9196, %v9199
      %v9201 = vsel %vm1615, %v9191, %v9200
      %v9203 = vshrl.u32 %v9157, 16
      %v9205 = vrot.slane %v9203, 1
      %v9206 = vshll.u32 %v9157, 16
      %v9208 = vrot.slane %v9206, 2
      %v9209 = vor.u32 %v9205, %v9208
      %v9210 = vsel %vm1615, %v9200, %v9209
      %v9232 = vunpack.c.l.b16 %v9139
      %v9233 = vunpack.c.l.b16 %v9140
      %v9234 = vunpack.c.l.b16 %v9141
      %v9235 = vunpack.c.l.b16 %v9142
      %v9236 = vunpack.c.l.b16 %v9143
      %v9237 = vunpack.c.l.b16 %v9144
      %v9238 = vunpack.c.l.b16 %v9145
      %v9239 = vunpack.c.l.b16 %v9146
      %v9240 = vunpack.c.l.b16 %v9147
      %v9241 = vunpack.c.l.b16 %v9148
      %v9242 = vunpack.c.l.b16 %v9149
      %v9243 = vunpack.c.l.b16 %v9150
      %v9244 = vunpack.c.l.b16 %v9151
      %v9245 = vunpack.c.l.b16 %v9152
      %v9246 = vunpack.c.l.b16 %v9153
      %v9247 = vunpack.c.l.b16 %v9154
      %v9248 = vpack.c.b16 %v9233, %v9232
      %v9249 = vpack.c.b16 %v9235, %v9234
      %v9250 = vpack.c.b16 %v9237, %v9236
      %v9251 = vpack.c.b16 %v9239, %v9238
      %v9252 = vpack.c.b16 %v9241, %v9240
      %v9253 = vpack.c.b16 %v9243, %v9242
      %v9254 = vpack.c.b16 %v9245, %v9244
      %v9255 = vpack.c.b16 %v9247, %v9246
      %9264 = vmatpush.bf16.msra.mxu0 %v9255
      %9265 = vmatpush.bf16.msra.mxu0 %v9254
      %9266 = vmatpush.bf16.msra.mxu0 %v9253
      %9267 = vmatpush.bf16.msra.mxu0 %v9252
      %9268 = vmatpush.bf16.msra.mxu0 %v9251
      %9269 = vmatpush.bf16.msra.mxu0 %v9250
      %9270 = vmatpush.bf16.msra.mxu0 %v9249
      %9271 = vmatpush.bf16.msra.mxu0 %v9248
      %9272 = vmatmul.bf16.gmra.mxu0 %v9174
      %v9273 = vpop.f32.mrf.mxu0
      %v9274 = vadd.f32 0.0, %v9273
      %v9275 = vpop.f32.mrf.mxu0
      %v9276 = vadd.f32 0.0, %v9275
      %9277 = vmatmul.bf16.gmra.mxu0 %v9183
      %v9278 = vpop.f32.mrf.mxu0
      %v9279 = vadd.f32 0.0, %v9278
      %v9280 = vpop.f32.mrf.mxu0
      %v9281 = vadd.f32 0.0, %v9280
      %9282 = vmatmul.bf16.gmra.mxu0 %v9192
      %v9283 = vpop.f32.mrf.mxu0
      %v9284 = vadd.f32 0.0, %v9283
      %v9285 = vpop.f32.mrf.mxu0
      %v9286 = vadd.f32 0.0, %v9285
      %9287 = vmatmul.bf16.gmra.mxu0 %v9201
      %v9288 = vpop.f32.mrf.mxu0
      %v9289 = vadd.f32 0.0, %v9288
      %v9290 = vpop.f32.mrf.mxu0
      %v9291 = vadd.f32 0.0, %v9290
      %9292 = vmatmul.bf16.gmra.mxu0 %v9210
      %v9293 = vpop.f32.mrf.mxu0
      %v9294 = vadd.f32 0.0, %v9293
      %v9295 = vpop.f32.mrf.mxu0
      %v9296 = vadd.f32 0.0, %v9295
      %9297 = vdwg.mxu0
      %v9298 = vadd.f32 %v9127, %v9274
      %v9299 = vadd.f32 %v9128, %v9276
      %v9300 = vadd.f32 %v9129, %v9279
      %v9301 = vadd.f32 %v9130, %v9281
      %v9302 = vadd.f32 %v9131, %v9284
      %v9303 = vadd.f32 %v9132, %v9286
      %v9304 = vadd.f32 %v9133, %v9289
      %v9305 = vadd.f32 %v9134, %v9291
      %v9306 = vadd.f32 %v9135, %v9294
      %v9307 = vadd.f32 %v9136, %v9296
      %v9308 = vld [vmem:[#allocation6 + $0x4] sm:$0xc]
      %s9309 = scalar_lea.vmem %s1, 3200
      %v9310 = vld [vmem:[%s9309] sm:$0xf]
      %v9311 = vld [vmem:[%s9309 + $0x4] sm:$0xf]
      %v9312 = vld [vmem:[%s9309 + $0x8] sm:$0xf]
      %v9313 = vld [vmem:[%s9309 + $0xc] sm:$0xf]
      %v9314 = vld [vmem:[%s9309 + $0x10] sm:$0xf]
      %v9315 = vld [vmem:[%s9309 + $0x14] sm:$0xf]
      %v9316 = vld [vmem:[%s9309 + $0x18] sm:$0xf]
      %v9317 = vld [vmem:[%s9309 + $0x1c] sm:$0xf]
      %v9318 = vld [vmem:[%s9309 + $0x20] sm:$0xf]
      %v9319 = vld [vmem:[%s9309 + $0x24] sm:$0xf]
      %v9320 = vld [vmem:[%s9309 + $0x28] sm:$0xf]
      %v9321 = vld [vmem:[%s9309 + $0x2c] sm:$0xf]
      %v9322 = vld [vmem:[%s9309 + $0x30] sm:$0xf]
      %v9323 = vld [vmem:[%s9309 + $0x34] sm:$0xf]
      %v9324 = vld [vmem:[%s9309 + $0x38] sm:$0xf]
      %v9325 = vld [vmem:[%s9309 + $0x3c] sm:$0xf]
      %v9327 = vunpack.c.l.b16 %v9308
      %v9328 = vpack.c.b16 %v9013, %v9327
      %v9329 = vrot.slane %v9328, 2
      %v9330 = vrot.slane %v9024, 2
      %v9331 = vsel %vm2008, %v9329, %v9330
      %v9332 = vrot.slane %v9025, 2
      %v9333 = vsel %vm2008, %v9330, %v9332
      %v9334 = vrot.slane %v9026, 2
      %v9335 = vsel %vm2008, %v9332, %v9334
      %v9336 = vrot.slane %v9027, 2
      %v9337 = vsel %vm2008, %v9334, %v9336
      %v9338 = vrot.slane %v9157, 2
      %v9339 = vsel %vm2008, %v9336, %v9338
      %v9361 = vunpack.c.l.b16 %v9310
      %v9362 = vunpack.c.l.b16 %v9311
      %v9363 = vunpack.c.l.b16 %v9312
      %v9364 = vunpack.c.l.b16 %v9313
      %v9365 = vunpack.c.l.b16 %v9314
      %v9366 = vunpack.c.l.b16 %v9315
      %v9367 = vunpack.c.l.b16 %v9316
      %v9368 = vunpack.c.l.b16 %v9317
      %v9369 = vunpack.c.l.b16 %v9318
      %v9370 = vunpack.c.l.b16 %v9319
      %v9371 = vunpack.c.l.b16 %v9320
      %v9372 = vunpack.c.l.b16 %v9321
      %v9373 = vunpack.c.l.b16 %v9322
      %v9374 = vunpack.c.l.b16 %v9323
      %v9375 = vunpack.c.l.b16 %v9324
      %v9376 = vunpack.c.l.b16 %v9325
      %v9377 = vpack.c.b16 %v9362, %v9361
      %v9378 = vpack.c.b16 %v9364, %v9363
      %v9379 = vpack.c.b16 %v9366, %v9365
      %v9380 = vpack.c.b16 %v9368, %v9367
      %v9381 = vpack.c.b16 %v9370, %v9369
      %v9382 = vpack.c.b16 %v9372, %v9371
      %v9383 = vpack.c.b16 %v9374, %v9373
      %v9384 = vpack.c.b16 %v9376, %v9375
      %9393 = vmatpush.bf16.msra.mxu0 %v9384
      %9394 = vmatpush.bf16.msra.mxu0 %v9383
      %9395 = vmatpush.bf16.msra.mxu0 %v9382
      %9396 = vmatpush.bf16.msra.mxu0 %v9381
      %9397 = vmatpush.bf16.msra.mxu0 %v9380
      %9398 = vmatpush.bf16.msra.mxu0 %v9379
      %9399 = vmatpush.bf16.msra.mxu0 %v9378
      %9400 = vmatpush.bf16.msra.mxu0 %v9377
      %9401 = vmatmul.bf16.gmra.mxu0 %v9331
      %v9402 = vpop.f32.mrf.mxu0
      %v9403 = vadd.f32 0.0, %v9402
      %v9404 = vpop.f32.mrf.mxu0
      %v9405 = vadd.f32 0.0, %v9404
      %9406 = vmatmul.bf16.gmra.mxu0 %v9333
      %v9407 = vpop.f32.mrf.mxu0
      %v9408 = vadd.f32 0.0, %v9407
      %v9409 = vpop.f32.mrf.mxu0
      %v9410 = vadd.f32 0.0, %v9409
      %9411 = vmatmul.bf16.gmra.mxu0 %v9335
      %v9412 = vpop.f32.mrf.mxu0
      %v9413 = vadd.f32 0.0, %v9412
      %v9414 = vpop.f32.mrf.mxu0
      %v9415 = vadd.f32 0.0, %v9414
      %9416 = vmatmul.bf16.gmra.mxu0 %v9337
      %v9417 = vpop.f32.mrf.mxu0
      %v9418 = vadd.f32 0.0, %v9417
      %v9419 = vpop.f32.mrf.mxu0
      %v9420 = vadd.f32 0.0, %v9419
      %9421 = vmatmul.bf16.gmra.mxu0 %v9339
      %v9422 = vpop.f32.mrf.mxu0
      %v9423 = vadd.f32 0.0, %v9422
      %v9424 = vpop.f32.mrf.mxu0
      %v9425 = vadd.f32 0.0, %v9424
      %9426 = vdwg.mxu0
      %v9427 = vadd.f32 %v9298, %v9403
      %v9428 = vadd.f32 %v9299, %v9405
      %v9429 = vadd.f32 %v9300, %v9408
      %v9430 = vadd.f32 %v9301, %v9410
      %v9431 = vadd.f32 %v9302, %v9413
      %v9432 = vadd.f32 %v9303, %v9415
      %v9433 = vadd.f32 %v9304, %v9418
      %v9434 = vadd.f32 %v9305, %v9420
      %v9435 = vadd.f32 %v9306, %v9423
      %v9436 = vadd.f32 %v9307, %v9425
      %v9437 = vld [vmem:[#allocation6 + $0x8] sm:$0xc]
      %v9438 = vld [vmem:[#allocation6 + $0xc] sm:$0xf]
      %v9439 = vld [vmem:[#allocation6 + $0x10] sm:$0xf]
      %v9440 = vld [vmem:[#allocation6 + $0x14] sm:$0xf]
      %v9441 = vld [vmem:[#allocation6 + $0x18] sm:$0xf]
      %v9442 = vld [vmem:[#allocation6 + $0x1c] sm:$0xf]
      %v9443 = vld [vmem:[#allocation6 + $0x20] sm:$0xf]
      %v9444 = vld [vmem:[#allocation6 + $0x24] sm:$0xf]
      %v9445 = vld [vmem:[#allocation6 + $0x28] sm:$0xf]
      %v9446 = vld [vmem:[#allocation6 + $0x2c] sm:$0xf]
      %v9447 = vld [vmem:[#allocation6 + $0x30] sm:$0x3]
      %s9448 = scalar_lea.vmem %s1, 3264
      %v9449 = vld [vmem:[%s9448] sm:$0xf]
      %v9450 = vld [vmem:[%s9448 + $0x4] sm:$0xf]
      %v9451 = vld [vmem:[%s9448 + $0x8] sm:$0xf]
      %v9452 = vld [vmem:[%s9448 + $0xc] sm:$0xf]
      %v9453 = vld [vmem:[%s9448 + $0x10] sm:$0xf]
      %v9454 = vld [vmem:[%s9448 + $0x14] sm:$0xf]
      %v9455 = vld [vmem:[%s9448 + $0x18] sm:$0xf]
      %v9456 = vld [vmem:[%s9448 + $0x1c] sm:$0xf]
      %v9457 = vld [vmem:[%s9448 + $0x20] sm:$0xf]
      %v9458 = vld [vmem:[%s9448 + $0x24] sm:$0xf]
      %v9459 = vld [vmem:[%s9448 + $0x28] sm:$0xf]
      %v9460 = vld [vmem:[%s9448 + $0x2c] sm:$0xf]
      %v9461 = vld [vmem:[%s9448 + $0x30] sm:$0xf]
      %v9462 = vld [vmem:[%s9448 + $0x34] sm:$0xf]
      %v9463 = vld [vmem:[%s9448 + $0x38] sm:$0xf]
      %v9464 = vld [vmem:[%s9448 + $0x3c] sm:$0xf]
      %v9476 = vunpack.c.l.b16 %v9437
      %v9477 = vunpack.c.l.b16 %v9438
      %v9478 = vunpack.c.l.b16 %v9439
      %v9479 = vunpack.c.l.b16 %v9440
      %v9480 = vunpack.c.l.b16 %v9441
      %v9481 = vunpack.c.l.b16 %v9442
      %v9482 = vunpack.c.l.b16 %v9443
      %v9483 = vunpack.c.l.b16 %v9444
      %v9484 = vunpack.c.l.b16 %v9445
      %v9485 = vunpack.c.l.b16 %v9446
      %v9486 = vunpack.c.l.b16 %v9447
      %v9487 = vpack.c.b16 %v9477, %v9476
      %v9488 = vpack.c.b16 %v9479, %v9478
      %v9489 = vpack.c.b16 %v9481, %v9480
      %v9490 = vpack.c.b16 %v9483, %v9482
      %v9491 = vpack.c.b16 %v9485, %v9484
      %v9492 = vpack.c.b16 %v9486, %v9486
      %v9493 = vrot.slane %v9487, 2
      %v9494 = vrot.slane %v9488, 2
      %v9495 = vsel %vm2008, %v9493, %v9494
      %v9496 = vrot.slane %v9489, 2
      %v9497 = vsel %vm2008, %v9494, %v9496
      %v9498 = vrot.slane %v9490, 2
      %v9499 = vsel %vm2008, %v9496, %v9498
      %v9500 = vrot.slane %v9491, 2
      %v9501 = vsel %vm2008, %v9498, %v9500
      %v9502 = vrot.slane %v9492, 2
      %v9503 = vsel %vm2008, %v9500, %v9502
      %v9525 = vunpack.c.l.b16 %v9449
      %v9526 = vunpack.c.l.b16 %v9450
      %v9527 = vunpack.c.l.b16 %v9451
      %v9528 = vunpack.c.l.b16 %v9452
      %v9529 = vunpack.c.l.b16 %v9453
      %v9530 = vunpack.c.l.b16 %v9454
      %v9531 = vunpack.c.l.b16 %v9455
      %v9532 = vunpack.c.l.b16 %v9456
      %v9533 = vunpack.c.l.b16 %v9457
      %v9534 = vunpack.c.l.b16 %v9458
      %v9535 = vunpack.c.l.b16 %v9459
      %v9536 = vunpack.c.l.b16 %v9460
      %v9537 = vunpack.c.l.b16 %v9461
      %v9538 = vunpack.c.l.b16 %v9462
      %v9539 = vunpack.c.l.b16 %v9463
      %v9540 = vunpack.c.l.b16 %v9464
      %v9541 = vpack.c.b16 %v9526, %v9525
      %v9542 = vpack.c.b16 %v9528, %v9527
      %v9543 = vpack.c.b16 %v9530, %v9529
      %v9544 = vpack.c.b16 %v9532, %v9531
      %v9545 = vpack.c.b16 %v9534, %v9533
      %v9546 = vpack.c.b16 %v9536, %v9535
      %v9547 = vpack.c.b16 %v9538, %v9537
      %v9548 = vpack.c.b16 %v9540, %v9539
      %9557 = vmatpush.bf16.msra.mxu0 %v9548
      %9558 = vmatpush.bf16.msra.mxu0 %v9547
      %9559 = vmatpush.bf16.msra.mxu0 %v9546
      %9560 = vmatpush.bf16.msra.mxu0 %v9545
      %9561 = vmatpush.bf16.msra.mxu0 %v9544
      %9562 = vmatpush.bf16.msra.mxu0 %v9543
      %9563 = vmatpush.bf16.msra.mxu0 %v9542
      %9564 = vmatpush.bf16.msra.mxu0 %v9541
      %9565 = vmatmul.bf16.gmra.mxu0 %v9495
      %v9566 = vpop.f32.mrf.mxu0
      %v9567 = vadd.f32 0.0, %v9566
      %v9568 = vpop.f32.mrf.mxu0
      %v9569 = vadd.f32 0.0, %v9568
      %9570 = vmatmul.bf16.gmra.mxu0 %v9497
      %v9571 = vpop.f32.mrf.mxu0
      %v9572 = vadd.f32 0.0, %v9571
      %v9573 = vpop.f32.mrf.mxu0
      %v9574 = vadd.f32 0.0, %v9573
      %9575 = vmatmul.bf16.gmra.mxu0 %v9499
      %v9576 = vpop.f32.mrf.mxu0
      %v9577 = vadd.f32 0.0, %v9576
      %v9578 = vpop.f32.mrf.mxu0
      %v9579 = vadd.f32 0.0, %v9578
      %9580 = vmatmul.bf16.gmra.mxu0 %v9501
      %v9581 = vpop.f32.mrf.mxu0
      %v9582 = vadd.f32 0.0, %v9581
      %v9583 = vpop.f32.mrf.mxu0
      %v9584 = vadd.f32 0.0, %v9583
      %9585 = vmatmul.bf16.gmra.mxu0 %v9503
      %v9586 = vpop.f32.mrf.mxu0
      %v9587 = vadd.f32 0.0, %v9586
      %v9588 = vpop.f32.mrf.mxu0
      %v9589 = vadd.f32 0.0, %v9588
      %9590 = vdwg.mxu0
      %v9591 = vadd.f32 %v9427, %v9567
      %v9592 = vadd.f32 %v9428, %v9569
      %v9593 = vadd.f32 %v9429, %v9572
      %v9594 = vadd.f32 %v9430, %v9574
      %v9595 = vadd.f32 %v9431, %v9577
      %v9596 = vadd.f32 %v9432, %v9579
      %v9597 = vadd.f32 %v9433, %v9582
      %v9598 = vadd.f32 %v9434, %v9584
      %v9599 = vadd.f32 %v9435, %v9587
      %v9600 = vadd.f32 %v9436, %v9589
      %v9601 = vld [vmem:[#allocation6 + $0x30] sm:$0x7]
      %s9602 = scalar_lea.vmem %s1, 3328
      %v9603 = vld [vmem:[%s9602] sm:$0xf]
      %v9604 = vld [vmem:[%s9602 + $0x4] sm:$0xf]
      %v9605 = vld [vmem:[%s9602 + $0x8] sm:$0xf]
      %v9606 = vld [vmem:[%s9602 + $0xc] sm:$0xf]
      %v9607 = vld [vmem:[%s9602 + $0x10] sm:$0xf]
      %v9608 = vld [vmem:[%s9602 + $0x14] sm:$0xf]
      %v9609 = vld [vmem:[%s9602 + $0x18] sm:$0xf]
      %v9610 = vld [vmem:[%s9602 + $0x1c] sm:$0xf]
      %v9611 = vld [vmem:[%s9602 + $0x20] sm:$0xf]
      %v9612 = vld [vmem:[%s9602 + $0x24] sm:$0xf]
      %v9613 = vld [vmem:[%s9602 + $0x28] sm:$0xf]
      %v9614 = vld [vmem:[%s9602 + $0x2c] sm:$0xf]
      %v9615 = vld [vmem:[%s9602 + $0x30] sm:$0xf]
      %v9616 = vld [vmem:[%s9602 + $0x34] sm:$0xf]
      %v9617 = vld [vmem:[%s9602 + $0x38] sm:$0xf]
      %v9618 = vld [vmem:[%s9602 + $0x3c] sm:$0xf]
      %v9620 = vunpack.c.l.b16 %v9601
      %v9621 = vpack.c.b16 %v9620, %v9620
      %v9623 = vshrl.u32 %v9487, 16
      %v9625 = vrot.slane %v9623, 2
      %v9626 = vshll.u32 %v9487, 16
      %v9628 = vrot.slane %v9626, 3
      %v9629 = vor.u32 %v9625, %v9628
      %v9631 = vshrl.u32 %v9488, 16
      %v9633 = vrot.slane %v9631, 2
      %v9634 = vshll.u32 %v9488, 16
      %v9636 = vrot.slane %v9634, 3
      %v9637 = vor.u32 %v9633, %v9636
      %v9638 = vsel %vm2653, %v9629, %v9637
      %v9640 = vshrl.u32 %v9489, 16
      %v9642 = vrot.slane %v9640, 2
      %v9643 = vshll.u32 %v9489, 16
      %v9645 = vrot.slane %v9643, 3
      %v9646 = vor.u32 %v9642, %v9645
      %v9647 = vsel %vm2653, %v9637, %v9646
      %v9649 = vshrl.u32 %v9490, 16
      %v9651 = vrot.slane %v9649, 2
      %v9652 = vshll.u32 %v9490, 16
      %v9654 = vrot.slane %v9652, 3
      %v9655 = vor.u32 %v9651, %v9654
      %v9656 = vsel %vm2653, %v9646, %v9655
      %v9658 = vshrl.u32 %v9491, 16
      %v9660 = vrot.slane %v9658, 2
      %v9661 = vshll.u32 %v9491, 16
      %v9663 = vrot.slane %v9661, 3
      %v9664 = vor.u32 %v9660, %v9663
      %v9665 = vsel %vm2653, %v9655, %v9664
      %v9667 = vshrl.u32 %v9621, 16
      %v9669 = vrot.slane %v9667, 2
      %v9670 = vshll.u32 %v9621, 16
      %v9672 = vrot.slane %v9670, 3
      %v9673 = vor.u32 %v9669, %v9672
      %v9674 = vsel %vm2653, %v9664, %v9673
      %v9696 = vunpack.c.l.b16 %v9603
      %v9697 = vunpack.c.l.b16 %v9604
      %v9698 = vunpack.c.l.b16 %v9605
      %v9699 = vunpack.c.l.b16 %v9606
      %v9700 = vunpack.c.l.b16 %v9607
      %v9701 = vunpack.c.l.b16 %v9608
      %v9702 = vunpack.c.l.b16 %v9609
      %v9703 = vunpack.c.l.b16 %v9610
      %v9704 = vunpack.c.l.b16 %v9611
      %v9705 = vunpack.c.l.b16 %v9612
      %v9706 = vunpack.c.l.b16 %v9613
      %v9707 = vunpack.c.l.b16 %v9614
      %v9708 = vunpack.c.l.b16 %v9615
      %v9709 = vunpack.c.l.b16 %v9616
      %v9710 = vunpack.c.l.b16 %v9617
      %v9711 = vunpack.c.l.b16 %v9618
      %v9712 = vpack.c.b16 %v9697, %v9696
      %v9713 = vpack.c.b16 %v9699, %v9698
      %v9714 = vpack.c.b16 %v9701, %v9700
      %v9715 = vpack.c.b16 %v9703, %v9702
      %v9716 = vpack.c.b16 %v9705, %v9704
      %v9717 = vpack.c.b16 %v9707, %v9706
      %v9718 = vpack.c.b16 %v9709, %v9708
      %v9719 = vpack.c.b16 %v9711, %v9710
      %9728 = vmatpush.bf16.msra.mxu0 %v9719
      %9729 = vmatpush.bf16.msra.mxu0 %v9718
      %9730 = vmatpush.bf16.msra.mxu0 %v9717
      %9731 = vmatpush.bf16.msra.mxu0 %v9716
      %9732 = vmatpush.bf16.msra.mxu0 %v9715
      %9733 = vmatpush.bf16.msra.mxu0 %v9714
      %9734 = vmatpush.bf16.msra.mxu0 %v9713
      %9735 = vmatpush.bf16.msra.mxu0 %v9712
      %9736 = vmatmul.bf16.gmra.mxu0 %v9638
      %v9737 = vpop.f32.mrf.mxu0
      %v9738 = vadd.f32 0.0, %v9737
      %v9739 = vpop.f32.mrf.mxu0
      %v9740 = vadd.f32 0.0, %v9739
      %9741 = vmatmul.bf16.gmra.mxu0 %v9647
      %v9742 = vpop.f32.mrf.mxu0
      %v9743 = vadd.f32 0.0, %v9742
      %v9744 = vpop.f32.mrf.mxu0
      %v9745 = vadd.f32 0.0, %v9744
      %9746 = vmatmul.bf16.gmra.mxu0 %v9656
      %v9747 = vpop.f32.mrf.mxu0
      %v9748 = vadd.f32 0.0, %v9747
      %v9749 = vpop.f32.mrf.mxu0
      %v9750 = vadd.f32 0.0, %v9749
      %9751 = vmatmul.bf16.gmra.mxu0 %v9665
      %v9752 = vpop.f32.mrf.mxu0
      %v9753 = vadd.f32 0.0, %v9752
      %v9754 = vpop.f32.mrf.mxu0
      %v9755 = vadd.f32 0.0, %v9754
      %9756 = vmatmul.bf16.gmra.mxu0 %v9674
      %v9757 = vpop.f32.mrf.mxu0
      %v9758 = vadd.f32 0.0, %v9757
      %v9759 = vpop.f32.mrf.mxu0
      %v9760 = vadd.f32 0.0, %v9759
      %9761 = vdwg.mxu0
      %v9762 = vadd.f32 %v9591, %v9738
      %v9763 = vadd.f32 %v9592, %v9740
      %v9764 = vadd.f32 %v9593, %v9743
      %v9765 = vadd.f32 %v9594, %v9745
      %v9766 = vadd.f32 %v9595, %v9748
      %v9767 = vadd.f32 %v9596, %v9750
      %v9768 = vadd.f32 %v9597, %v9753
      %v9769 = vadd.f32 %v9598, %v9755
      %v9770 = vadd.f32 %v9599, %v9758
      %v9771 = vadd.f32 %v9600, %v9760
      %v9772 = vld [vmem:[#allocation6 + $0x8] sm:$0x8]
      %s9773 = scalar_lea.vmem %s1, 3392
      %v9774 = vld [vmem:[%s9773] sm:$0xf]
      %v9775 = vld [vmem:[%s9773 + $0x4] sm:$0xf]
      %v9776 = vld [vmem:[%s9773 + $0x8] sm:$0xf]
      %v9777 = vld [vmem:[%s9773 + $0xc] sm:$0xf]
      %v9778 = vld [vmem:[%s9773 + $0x10] sm:$0xf]
      %v9779 = vld [vmem:[%s9773 + $0x14] sm:$0xf]
      %v9780 = vld [vmem:[%s9773 + $0x18] sm:$0xf]
      %v9781 = vld [vmem:[%s9773 + $0x1c] sm:$0xf]
      %v9782 = vld [vmem:[%s9773 + $0x20] sm:$0xf]
      %v9783 = vld [vmem:[%s9773 + $0x24] sm:$0xf]
      %v9784 = vld [vmem:[%s9773 + $0x28] sm:$0xf]
      %v9785 = vld [vmem:[%s9773 + $0x2c] sm:$0xf]
      %v9786 = vld [vmem:[%s9773 + $0x30] sm:$0xf]
      %v9787 = vld [vmem:[%s9773 + $0x34] sm:$0xf]
      %v9788 = vld [vmem:[%s9773 + $0x38] sm:$0xf]
      %v9789 = vld [vmem:[%s9773 + $0x3c] sm:$0xf]
      %v9791 = vunpack.c.l.b16 %v9772
      %v9792 = vpack.c.b16 %v9477, %v9791
      %v9793 = vrot.slane %v9792, 3
      %v9794 = vrot.slane %v9488, 3
      %v9795 = vsel %vm3046, %v9793, %v9794
      %v9796 = vrot.slane %v9489, 3
      %v9797 = vsel %vm3046, %v9794, %v9796
      %v9798 = vrot.slane %v9490, 3
      %v9799 = vsel %vm3046, %v9796, %v9798
      %v9800 = vrot.slane %v9491, 3
      %v9801 = vsel %vm3046, %v9798, %v9800
      %v9802 = vrot.slane %v9621, 3
      %v9803 = vsel %vm3046, %v9800, %v9802
      %v9825 = vunpack.c.l.b16 %v9774
      %v9826 = vunpack.c.l.b16 %v9775
      %v9827 = vunpack.c.l.b16 %v9776
      %v9828 = vunpack.c.l.b16 %v9777
      %v9829 = vunpack.c.l.b16 %v9778
      %v9830 = vunpack.c.l.b16 %v9779
      %v9831 = vunpack.c.l.b16 %v9780
      %v9832 = vunpack.c.l.b16 %v9781
      %v9833 = vunpack.c.l.b16 %v9782
      %v9834 = vunpack.c.l.b16 %v9783
      %v9835 = vunpack.c.l.b16 %v9784
      %v9836 = vunpack.c.l.b16 %v9785
      %v9837 = vunpack.c.l.b16 %v9786
      %v9838 = vunpack.c.l.b16 %v9787
      %v9839 = vunpack.c.l.b16 %v9788
      %v9840 = vunpack.c.l.b16 %v9789
      %v9841 = vpack.c.b16 %v9826, %v9825
      %v9842 = vpack.c.b16 %v9828, %v9827
      %v9843 = vpack.c.b16 %v9830, %v9829
      %v9844 = vpack.c.b16 %v9832, %v9831
      %v9845 = vpack.c.b16 %v9834, %v9833
      %v9846 = vpack.c.b16 %v9836, %v9835
      %v9847 = vpack.c.b16 %v9838, %v9837
      %v9848 = vpack.c.b16 %v9840, %v9839
      %9857 = vmatpush.bf16.msra.mxu0 %v9848
      %9858 = vmatpush.bf16.msra.mxu0 %v9847
      %9859 = vmatpush.bf16.msra.mxu0 %v9846
      %9860 = vmatpush.bf16.msra.mxu0 %v9845
      %9861 = vmatpush.bf16.msra.mxu0 %v9844
      %9862 = vmatpush.bf16.msra.mxu0 %v9843
      %9863 = vmatpush.bf16.msra.mxu0 %v9842
      %9864 = vmatpush.bf16.msra.mxu0 %v9841
      %9865 = vmatmul.bf16.gmra.mxu0 %v9795
      %v9866 = vpop.f32.mrf.mxu0
      %v9867 = vadd.f32 0.0, %v9866
      %v9868 = vpop.f32.mrf.mxu0
      %v9869 = vadd.f32 0.0, %v9868
      %9870 = vmatmul.bf16.gmra.mxu0 %v9797
      %v9871 = vpop.f32.mrf.mxu0
      %v9872 = vadd.f32 0.0, %v9871
      %v9873 = vpop.f32.mrf.mxu0
      %v9874 = vadd.f32 0.0, %v9873
      %9875 = vmatmul.bf16.gmra.mxu0 %v9799
      %v9876 = vpop.f32.mrf.mxu0
      %v9877 = vadd.f32 0.0, %v9876
      %v9878 = vpop.f32.mrf.mxu0
      %v9879 = vadd.f32 0.0, %v9878
      %9880 = vmatmul.bf16.gmra.mxu0 %v9801
      %v9881 = vpop.f32.mrf.mxu0
      %v9882 = vadd.f32 0.0, %v9881
      %v9883 = vpop.f32.mrf.mxu0
      %v9884 = vadd.f32 0.0, %v9883
      %9885 = vmatmul.bf16.gmra.mxu0 %v9803
      %v9886 = vpop.f32.mrf.mxu0
      %v9887 = vadd.f32 0.0, %v9886
      %v9888 = vpop.f32.mrf.mxu0
      %v9889 = vadd.f32 0.0, %v9888
      %9890 = vdwg.mxu0
      %v9891 = vadd.f32 %v9762, %v9867
      %v9892 = vadd.f32 %v9763, %v9869
      %v9893 = vadd.f32 %v9764, %v9872
      %v9894 = vadd.f32 %v9765, %v9874
      %v9895 = vadd.f32 %v9766, %v9877
      %v9896 = vadd.f32 %v9767, %v9879
      %v9897 = vadd.f32 %v9768, %v9882
      %v9898 = vadd.f32 %v9769, %v9884
      %v9899 = vadd.f32 %v9770, %v9887
      %v9900 = vadd.f32 %v9771, %v9889
      %v9901 = vld [vmem:[%s2 + $0x5] sm:$0x1]
      %v9902 = vperm.slane %v9901, 0
      %v9903 = vadd.f32 %v9891, %v9902
      %v9904 = vadd.f32 %v9892, %v9902
      %v9905 = vadd.f32 %v9893, %v9902
      %v9906 = vadd.f32 %v9894, %v9902
      %v9907 = vadd.f32 %v9895, %v9902
      %v9908 = vadd.f32 %v9896, %v9902
      %v9909 = vadd.f32 %v9897, %v9902
      %v9910 = vadd.f32 %v9898, %v9902
      %v9911 = vadd.f32 %v9899, %v9902
      %v9912 = vadd.f32 %v9900, %v9902
      %v9913 = vmax.f32 %v9903, 0.0
      %v9914 = vmax.f32 %v9904, 0.0
      %v9915 = vmax.f32 %v9905, 0.0
      %v9916 = vmax.f32 %v9906, 0.0
      %v9917 = vmax.f32 %v9907, 0.0
      %v9918 = vmax.f32 %v9908, 0.0
      %v9919 = vmax.f32 %v9909, 0.0
      %v9920 = vmax.f32 %v9910, 0.0
      %v9921 = vmax.f32 %v9911, 0.0
      %v9922 = vmax.f32 %v9912, 0.0
      %v9923 = vpack.c.bf16 %v9914, %v9913
      %v9924 = vpack.c.bf16 %v9916, %v9915
      %v9925 = vpack.c.bf16 %v9918, %v9917
      %v9926 = vpack.c.bf16 %v9920, %v9919
      %v9927 = vpack.c.bf16 %v9922, %v9921
      %v9928 = vld [vmem:[%s7] sm:$0xf]
      %v9929 = vld [vmem:[%s7 + $0x4] sm:$0xf]
      %v9930 = vld [vmem:[%s7 + $0x8] sm:$0xf]
      %v9931 = vld [vmem:[%s7 + $0xc] sm:$0xf]
      %v9932 = vld [vmem:[%s7 + $0x10] sm:$0xf]
      %v9933 = vld [vmem:[%s7 + $0x14] sm:$0xf]
      %v9934 = vld [vmem:[%s7 + $0x18] sm:$0xf]
      %v9935 = vld [vmem:[%s7 + $0x1c] sm:$0xf]
      %v9936 = vld [vmem:[%s7 + $0x20] sm:$0xf]
      %v9937 = vld [vmem:[%s7 + $0x24] sm:$0xf]
      %v9938 = vld [vmem:[%s7 + $0x28] sm:$0xf]
      %v9939 = vld [vmem:[%s7 + $0x2c] sm:$0xf]
      %v9940 = vld [vmem:[%s7 + $0x30] sm:$0xf]
      %v9941 = vld [vmem:[%s7 + $0x34] sm:$0xf]
      %v9942 = vld [vmem:[%s7 + $0x38] sm:$0xf]
      %v9943 = vld [vmem:[%s7 + $0x3c] sm:$0xf]
      %v9944 = vld [vmem:[%s7 + $0x40] sm:$0xf]
      %v9945 = vld [vmem:[%s7 + $0x44] sm:$0xf]
      %v9946 = vld [vmem:[%s7 + $0x48] sm:$0xf]
      %v9947 = vld [vmem:[%s7 + $0x4c] sm:$0xf]
      %v9948 = vld [vmem:[%s7 + $0x50] sm:$0xf]
      %v9949 = vld [vmem:[%s7 + $0x54] sm:$0xf]
      %v9950 = vld [vmem:[%s7 + $0x58] sm:$0xf]
      %v9951 = vld [vmem:[%s7 + $0x5c] sm:$0xf]
      %v9952 = vld [vmem:[%s7 + $0x60] sm:$0xf]
      %v9953 = vld [vmem:[%s7 + $0x64] sm:$0xf]
      %v9954 = vld [vmem:[%s7 + $0x68] sm:$0xf]
      %v9955 = vld [vmem:[%s7 + $0x6c] sm:$0xf]
      %v9956 = vld [vmem:[%s7 + $0x70] sm:$0xf]
      %v9957 = vld [vmem:[%s7 + $0x74] sm:$0xf]
      %v9958 = vld [vmem:[%s7 + $0x78] sm:$0xf]
      %v9959 = vld [vmem:[%s7 + $0x7c] sm:$0xf]
      %v9992 = vunpack.c.l.b16 %v9928
      %v9993 = vunpack.c.l.b16 %v9929
      %v9994 = vunpack.c.l.b16 %v9930
      %v9995 = vunpack.c.l.b16 %v9931
      %v9996 = vunpack.c.l.b16 %v9932
      %v9997 = vunpack.c.l.b16 %v9933
      %v9998 = vunpack.c.l.b16 %v9934
      %v9999 = vunpack.c.l.b16 %v9935
      %v10000 = vunpack.c.l.b16 %v9936
      %v10001 = vunpack.c.l.b16 %v9937
      %v10002 = vunpack.c.l.b16 %v9938
      %v10003 = vunpack.c.l.b16 %v9939
      %v10004 = vunpack.c.l.b16 %v9940
      %v10005 = vunpack.c.l.b16 %v9941
      %v10006 = vunpack.c.l.b16 %v9942
      %v10007 = vunpack.c.l.b16 %v9943
      %v10008 = vunpack.c.l.b16 %v9944
      %v10009 = vunpack.c.l.b16 %v9945
      %v10010 = vunpack.c.l.b16 %v9946
      %v10011 = vunpack.c.l.b16 %v9947
      %v10012 = vunpack.c.l.b16 %v9948
      %v10013 = vunpack.c.l.b16 %v9949
      %v10014 = vunpack.c.l.b16 %v9950
      %v10015 = vunpack.c.l.b16 %v9951
      %v10016 = vunpack.c.l.b16 %v9952
      %v10017 = vunpack.c.l.b16 %v9953
      %v10018 = vunpack.c.l.b16 %v9954
      %v10019 = vunpack.c.l.b16 %v9955
      %v10020 = vunpack.c.l.b16 %v9956
      %v10021 = vunpack.c.l.b16 %v9957
      %v10022 = vunpack.c.l.b16 %v9958
      %v10023 = vunpack.c.l.b16 %v9959
      %v10024 = vpack.c.b16 %v9993, %v9992
      %v10025 = vpack.c.b16 %v9995, %v9994
      %v10026 = vpack.c.b16 %v9997, %v9996
      %v10027 = vpack.c.b16 %v9999, %v9998
      %v10028 = vpack.c.b16 %v10001, %v10000
      %v10029 = vpack.c.b16 %v10003, %v10002
      %v10030 = vpack.c.b16 %v10005, %v10004
      %v10031 = vpack.c.b16 %v10007, %v10006
      %v10032 = vpack.c.b16 %v10009, %v10008
      %v10033 = vpack.c.b16 %v10011, %v10010
      %v10034 = vpack.c.b16 %v10013, %v10012
      %v10035 = vpack.c.b16 %v10015, %v10014
      %v10036 = vpack.c.b16 %v10017, %v10016
      %v10037 = vpack.c.b16 %v10019, %v10018
      %v10038 = vpack.c.b16 %v10021, %v10020
      %v10039 = vpack.c.b16 %v10023, %v10022
      %vm10040 = vcmask 654336
      %v10042 = vsel %vm10040, %v10024, 0
      %v10045 = vsel %vm10040, %v10025, 0
      %v10048 = vsel %vm10040, %v10026, 0
      %v10051 = vsel %vm10040, %v10027, 0
      %v10054 = vsel %vm10040, %v10028, 0
      %v10057 = vsel %vm10040, %v10029, 0
      %v10060 = vsel %vm10040, %v10030, 0
      %v10063 = vsel %vm10040, %v10031, 0
      %v10066 = vsel %vm10040, %v10032, 0
      %v10069 = vsel %vm10040, %v10033, 0
      %v10072 = vsel %vm10040, %v10034, 0
      %v10075 = vsel %vm10040, %v10035, 0
      %v10078 = vsel %vm10040, %v10036, 0
      %v10081 = vsel %vm10040, %v10037, 0
      %v10084 = vsel %vm10040, %v10038, 0
      %v10087 = vsel %vm10040, %v10039, 0
      %10089 = vmatpush.bf16.msra.mxu0 0
      %10090 = vmatpush.bf16.msra.mxu0 0
      %10091 = vmatpush.bf16.msra.mxu0 0
      %10092 = vmatpush.bf16.msra.mxu0 %v9927
      %10093 = vmatpush.bf16.msra.mxu0 %v9926
      %10094 = vmatpush.bf16.msra.mxu0 %v9925
      %10095 = vmatpush.bf16.msra.mxu0 %v9924
      %10096 = vmatpush.bf16.msra.mxu0 %v9923
      %10097 = vmatmul.bf16.gmra.mxu0 %v10042
      %v10098 = vpop.f32.mrf.mxu0
      %v10099 = vadd.f32 0.0, %v10098
      %v10100 = vpop.f32.mrf.mxu0
      %v10101 = vadd.f32 0.0, %v10100
      %10102 = vmatmul.bf16.gmra.mxu0 %v10045
      %v10103 = vpop.f32.mrf.mxu0
      %v10104 = vadd.f32 0.0, %v10103
      %v10105 = vpop.f32.mrf.mxu0
      %v10106 = vadd.f32 0.0, %v10105
      %10107 = vmatmul.bf16.gmra.mxu0 %v10048
      %v10108 = vpop.f32.mrf.mxu0
      %v10109 = vadd.f32 0.0, %v10108
      %v10110 = vpop.f32.mrf.mxu0
      %v10111 = vadd.f32 0.0, %v10110
      %10112 = vmatmul.bf16.gmra.mxu0 %v10051
      %v10113 = vpop.f32.mrf.mxu0
      %v10114 = vadd.f32 0.0, %v10113
      %v10115 = vpop.f32.mrf.mxu0
      %v10116 = vadd.f32 0.0, %v10115
      %10117 = vmatmul.bf16.gmra.mxu0 %v10054
      %v10118 = vpop.f32.mrf.mxu0
      %v10119 = vadd.f32 0.0, %v10118
      %v10120 = vpop.f32.mrf.mxu0
      %v10121 = vadd.f32 0.0, %v10120
      %10122 = vmatmul.bf16.gmra.mxu0 %v10057
      %v10123 = vpop.f32.mrf.mxu0
      %v10124 = vadd.f32 0.0, %v10123
      %v10125 = vpop.f32.mrf.mxu0
      %v10126 = vadd.f32 0.0, %v10125
      %10127 = vmatmul.bf16.gmra.mxu0 %v10060
      %v10128 = vpop.f32.mrf.mxu0
      %v10129 = vadd.f32 0.0, %v10128
      %v10130 = vpop.f32.mrf.mxu0
      %v10131 = vadd.f32 0.0, %v10130
      %10132 = vmatmul.bf16.gmra.mxu0 %v10063
      %v10133 = vpop.f32.mrf.mxu0
      %v10134 = vadd.f32 0.0, %v10133
      %v10135 = vpop.f32.mrf.mxu0
      %v10136 = vadd.f32 0.0, %v10135
      %10137 = vmatmul.bf16.gmra.mxu0 %v10066
      %v10138 = vpop.f32.mrf.mxu0
      %v10139 = vadd.f32 0.0, %v10138
      %v10140 = vpop.f32.mrf.mxu0
      %v10141 = vadd.f32 0.0, %v10140
      %10142 = vmatmul.bf16.gmra.mxu0 %v10069
      %v10143 = vpop.f32.mrf.mxu0
      %v10144 = vadd.f32 0.0, %v10143
      %v10145 = vpop.f32.mrf.mxu0
      %v10146 = vadd.f32 0.0, %v10145
      %10147 = vmatmul.bf16.gmra.mxu0 %v10072
      %v10148 = vpop.f32.mrf.mxu0
      %v10149 = vadd.f32 0.0, %v10148
      %v10150 = vpop.f32.mrf.mxu0
      %v10151 = vadd.f32 0.0, %v10150
      %10152 = vmatmul.bf16.gmra.mxu0 %v10075
      %v10153 = vpop.f32.mrf.mxu0
      %v10154 = vadd.f32 0.0, %v10153
      %v10155 = vpop.f32.mrf.mxu0
      %v10156 = vadd.f32 0.0, %v10155
      %10157 = vmatmul.bf16.gmra.mxu0 %v10078
      %v10158 = vpop.f32.mrf.mxu0
      %v10159 = vadd.f32 0.0, %v10158
      %v10160 = vpop.f32.mrf.mxu0
      %v10161 = vadd.f32 0.0, %v10160
      %10162 = vmatmul.bf16.gmra.mxu0 %v10081
      %v10163 = vpop.f32.mrf.mxu0
      %v10164 = vadd.f32 0.0, %v10163
      %v10165 = vpop.f32.mrf.mxu0
      %v10166 = vadd.f32 0.0, %v10165
      %10167 = vmatmul.bf16.gmra.mxu0 %v10084
      %v10168 = vpop.f32.mrf.mxu0
      %v10169 = vadd.f32 0.0, %v10168
      %v10170 = vpop.f32.mrf.mxu0
      %v10171 = vadd.f32 0.0, %v10170
      %10172 = vmatmul.bf16.gmra.mxu0 %v10087
      %v10173 = vpop.f32.mrf.mxu0
      %v10174 = vadd.f32 0.0, %v10173
      %v10175 = vpop.f32.mrf.mxu0
      %v10176 = vadd.f32 0.0, %v10175
      %10177 = vdwg.mxu0
      %v10178 = vpack.c.bf16 %v10099, %v10099
      %v10179 = vpack.c.bf16 %v10101, %v10101
      %v10180 = vpack.c.bf16 %v10104, %v10104
      %v10181 = vpack.c.bf16 %v10106, %v10106
      %v10182 = vpack.c.bf16 %v10109, %v10109
      %v10183 = vpack.c.bf16 %v10111, %v10111
      %v10184 = vpack.c.bf16 %v10114, %v10114
      %v10185 = vpack.c.bf16 %v10116, %v10116
      %v10186 = vpack.c.bf16 %v10119, %v10119
      %v10187 = vpack.c.bf16 %v10121, %v10121
      %v10188 = vpack.c.bf16 %v10124, %v10124
      %v10189 = vpack.c.bf16 %v10126, %v10126
      %v10190 = vpack.c.bf16 %v10129, %v10129
      %v10191 = vpack.c.bf16 %v10131, %v10131
      %v10192 = vpack.c.bf16 %v10134, %v10134
      %v10193 = vpack.c.bf16 %v10136, %v10136
      %v10194 = vpack.c.bf16 %v10139, %v10139
      %v10195 = vpack.c.bf16 %v10141, %v10141
      %v10196 = vpack.c.bf16 %v10144, %v10144
      %v10197 = vpack.c.bf16 %v10146, %v10146
      %v10198 = vpack.c.bf16 %v10149, %v10149
      %v10199 = vpack.c.bf16 %v10151, %v10151
      %v10200 = vpack.c.bf16 %v10154, %v10154
      %v10201 = vpack.c.bf16 %v10156, %v10156
      %v10202 = vpack.c.bf16 %v10159, %v10159
      %v10203 = vpack.c.bf16 %v10161, %v10161
      %v10204 = vpack.c.bf16 %v10164, %v10164
      %v10205 = vpack.c.bf16 %v10166, %v10166
      %v10206 = vpack.c.bf16 %v10169, %v10169
      %v10207 = vpack.c.bf16 %v10171, %v10171
      %v10208 = vpack.c.bf16 %v10174, %v10174
      %v10209 = vpack.c.bf16 %v10176, %v10176
      %10210 = vst [vmem:[#allocation7] sm:$0xf] %v10178
      %10211 = vst [vmem:[#allocation7 + $0x4] sm:$0xf] %v10179
      %10212 = vst [vmem:[#allocation7 + $0x8] sm:$0xf] %v10180
      %10213 = vst [vmem:[#allocation7 + $0xc] sm:$0xf] %v10181
      %10214 = vst [vmem:[#allocation7 + $0x10] sm:$0xf] %v10182
      %10215 = vst [vmem:[#allocation7 + $0x14] sm:$0xf] %v10183
      %10216 = vst [vmem:[#allocation7 + $0x18] sm:$0xf] %v10184
      %10217 = vst [vmem:[#allocation7 + $0x1c] sm:$0xf] %v10185
      %10218 = vst [vmem:[#allocation7 + $0x20] sm:$0xf] %v10186
      %10219 = vst [vmem:[#allocation7 + $0x24] sm:$0xf] %v10187
      %10220 = vst [vmem:[#allocation7 + $0x28] sm:$0xf] %v10188
      %10221 = vst [vmem:[#allocation7 + $0x2c] sm:$0xf] %v10189
      %10222 = vst [vmem:[#allocation7 + $0x30] sm:$0xf] %v10190
      %10223 = vst [vmem:[#allocation7 + $0x34] sm:$0xf] %v10191
      %10224 = vst [vmem:[#allocation7 + $0x38] sm:$0xf] %v10192
      %10225 = vst [vmem:[#allocation7 + $0x3c] sm:$0xf] %v10193
      %10226 = vst [vmem:[#allocation7 + $0x40] sm:$0xf] %v10194
      %10227 = vst [vmem:[#allocation7 + $0x44] sm:$0xf] %v10195
      %10228 = vst [vmem:[#allocation7 + $0x48] sm:$0xf] %v10196
      %10229 = vst [vmem:[#allocation7 + $0x4c] sm:$0xf] %v10197
      %10230 = vst [vmem:[#allocation7 + $0x50] sm:$0xf] %v10198
      %10231 = vst [vmem:[#allocation7 + $0x54] sm:$0xf] %v10199
      %10232 = vst [vmem:[#allocation7 + $0x58] sm:$0xf] %v10200
      %10233 = vst [vmem:[#allocation7 + $0x5c] sm:$0xf] %v10201
      %10234 = vst [vmem:[#allocation7 + $0x60] sm:$0xf] %v10202
      %10235 = vst [vmem:[#allocation7 + $0x64] sm:$0xf] %v10203
      %10236 = vst [vmem:[#allocation7 + $0x68] sm:$0xf] %v10204
      %10237 = vst [vmem:[#allocation7 + $0x6c] sm:$0xf] %v10205
      %10238 = vst [vmem:[#allocation7 + $0x70] sm:$0xf] %v10206
      %10239 = vst [vmem:[#allocation7 + $0x74] sm:$0xf] %v10207
      %10240 = vst [vmem:[#allocation7 + $0x78] sm:$0xf] %v10208
      %10241 = vst [vmem:[#allocation7 + $0x7c] sm:$0xf] %v10209
      %v10242 = vld [vmem:[#allocation7] sm:$0xf]
      %v10243 = vld [vmem:[#allocation7 + $0x4] sm:$0xf]
      %v10244 = vld [vmem:[#allocation7 + $0x8] sm:$0xf]
      %v10245 = vld [vmem:[#allocation7 + $0xc] sm:$0xf]
      %v10246 = vld [vmem:[#allocation7 + $0x10] sm:$0xf]
      %v10247 = vld [vmem:[#allocation7 + $0x14] sm:$0xf]
      %v10248 = vld [vmem:[#allocation7 + $0x18] sm:$0xf]
      %v10249 = vld [vmem:[#allocation7 + $0x1c] sm:$0xf]
      %v10250 = vld [vmem:[#allocation7 + $0x20] sm:$0xf]
      %v10251 = vld [vmem:[#allocation7 + $0x24] sm:$0xf]
      %v10252 = vld [vmem:[#allocation7 + $0x28] sm:$0xf]
      %v10253 = vld [vmem:[#allocation7 + $0x2c] sm:$0xf]
      %v10254 = vld [vmem:[#allocation7 + $0x30] sm:$0xf]
      %v10255 = vld [vmem:[#allocation7 + $0x34] sm:$0xf]
      %v10256 = vld [vmem:[#allocation7 + $0x38] sm:$0xf]
      %v10257 = vld [vmem:[#allocation7 + $0x3c] sm:$0xf]
      %v10258 = vld [vmem:[#allocation7 + $0x40] sm:$0xf]
      %v10259 = vld [vmem:[#allocation7 + $0x44] sm:$0xf]
      %v10260 = vld [vmem:[#allocation7 + $0x48] sm:$0xf]
      %v10261 = vld [vmem:[#allocation7 + $0x4c] sm:$0xf]
      %v10262 = vld [vmem:[#allocation7 + $0x50] sm:$0xf]
      %v10263 = vld [vmem:[#allocation7 + $0x54] sm:$0xf]
      %v10264 = vld [vmem:[#allocation7 + $0x58] sm:$0xf]
      %v10265 = vld [vmem:[#allocation7 + $0x5c] sm:$0xf]
      %v10266 = vld [vmem:[#allocation7 + $0x60] sm:$0xf]
      %v10267 = vld [vmem:[#allocation7 + $0x64] sm:$0xf]
      %v10268 = vld [vmem:[#allocation7 + $0x68] sm:$0xf]
      %v10269 = vld [vmem:[#allocation7 + $0x6c] sm:$0xf]
      %v10270 = vld [vmem:[#allocation7 + $0x70] sm:$0xf]
      %v10271 = vld [vmem:[#allocation7 + $0x74] sm:$0xf]
      %v10272 = vld [vmem:[#allocation7 + $0x78] sm:$0xf]
      %v10273 = vld [vmem:[#allocation7 + $0x7c] sm:$0xf]
      %s10274 = scalar_lea.vmem %s1, 3456
      %v10275 = vld [vmem:[%s10274] sm:$0xf]
      %v10276 = vld [vmem:[%s10274 + $0x4] sm:$0xf]
      %v10277 = vld [vmem:[%s10274 + $0x8] sm:$0xf]
      %v10278 = vld [vmem:[%s10274 + $0xc] sm:$0xf]
      %v10279 = vld [vmem:[%s10274 + $0x10] sm:$0xf]
      %v10280 = vld [vmem:[%s10274 + $0x14] sm:$0xf]
      %v10281 = vld [vmem:[%s10274 + $0x18] sm:$0xf]
      %v10282 = vld [vmem:[%s10274 + $0x1c] sm:$0xf]
      %v10283 = vld [vmem:[%s10274 + $0x20] sm:$0xf]
      %v10284 = vld [vmem:[%s10274 + $0x24] sm:$0xf]
      %v10285 = vld [vmem:[%s10274 + $0x28] sm:$0xf]
      %v10286 = vld [vmem:[%s10274 + $0x2c] sm:$0xf]
      %v10287 = vld [vmem:[%s10274 + $0x30] sm:$0xf]
      %v10288 = vld [vmem:[%s10274 + $0x34] sm:$0xf]
      %v10289 = vld [vmem:[%s10274 + $0x38] sm:$0xf]
      %v10290 = vld [vmem:[%s10274 + $0x3c] sm:$0xf]
      %v10291 = vld [vmem:[%s2 + $0x6] sm:$0x1]
      %v10292 = vperm.slane %v10291, 0
      %v10325 = vunpack.c.l.b16 %v10242
      %v10326 = vunpack.c.l.b16 %v10243
      %v10327 = vunpack.c.l.b16 %v10244
      %v10328 = vunpack.c.l.b16 %v10245
      %v10329 = vunpack.c.l.b16 %v10246
      %v10330 = vunpack.c.l.b16 %v10247
      %v10331 = vunpack.c.l.b16 %v10248
      %v10332 = vunpack.c.l.b16 %v10249
      %v10333 = vunpack.c.l.b16 %v10250
      %v10334 = vunpack.c.l.b16 %v10251
      %v10335 = vunpack.c.l.b16 %v10252
      %v10336 = vunpack.c.l.b16 %v10253
      %v10337 = vunpack.c.l.b16 %v10254
      %v10338 = vunpack.c.l.b16 %v10255
      %v10339 = vunpack.c.l.b16 %v10256
      %v10340 = vunpack.c.l.b16 %v10257
      %v10341 = vunpack.c.l.b16 %v10258
      %v10342 = vunpack.c.l.b16 %v10259
      %v10343 = vunpack.c.l.b16 %v10260
      %v10344 = vunpack.c.l.b16 %v10261
      %v10345 = vunpack.c.l.b16 %v10262
      %v10346 = vunpack.c.l.b16 %v10263
      %v10347 = vunpack.c.l.b16 %v10264
      %v10348 = vunpack.c.l.b16 %v10265
      %v10349 = vunpack.c.l.b16 %v10266
      %v10350 = vunpack.c.l.b16 %v10267
      %v10351 = vunpack.c.l.b16 %v10268
      %v10352 = vunpack.c.l.b16 %v10269
      %v10353 = vunpack.c.l.b16 %v10270
      %v10354 = vunpack.c.l.b16 %v10271
      %v10355 = vunpack.c.l.b16 %v10272
      %v10356 = vunpack.c.l.b16 %v10273
      %v10357 = vpack.c.b16 %v10326, %v10325
      %v10358 = vpack.c.b16 %v10328, %v10327
      %v10359 = vpack.c.b16 %v10330, %v10329
      %v10360 = vpack.c.b16 %v10332, %v10331
      %v10361 = vpack.c.b16 %v10334, %v10333
      %v10362 = vpack.c.b16 %v10336, %v10335
      %v10363 = vpack.c.b16 %v10338, %v10337
      %v10364 = vpack.c.b16 %v10340, %v10339
      %v10365 = vpack.c.b16 %v10342, %v10341
      %v10366 = vpack.c.b16 %v10344, %v10343
      %v10367 = vpack.c.b16 %v10346, %v10345
      %v10368 = vpack.c.b16 %v10348, %v10347
      %v10369 = vpack.c.b16 %v10350, %v10349
      %v10370 = vpack.c.b16 %v10352, %v10351
      %v10371 = vpack.c.b16 %v10354, %v10353
      %v10372 = vpack.c.b16 %v10356, %v10355
      %v10405 = vunpack.c.l.b16 %v10275
      %v10406 = vunpack.c.l.b16 %v10276
      %v10407 = vunpack.c.l.b16 %v10277
      %v10408 = vunpack.c.l.b16 %v10278
      %v10409 = vunpack.c.l.b16 %v10279
      %v10410 = vunpack.c.l.b16 %v10280
      %v10411 = vunpack.c.l.b16 %v10281
      %v10412 = vunpack.c.l.b16 %v10282
      %v10413 = vunpack.c.l.b16 %v10283
      %v10414 = vunpack.c.l.b16 %v10284
      %v10415 = vunpack.c.l.b16 %v10285
      %v10416 = vunpack.c.l.b16 %v10286
      %v10417 = vunpack.c.l.b16 %v10287
      %v10418 = vunpack.c.l.b16 %v10288
      %v10419 = vunpack.c.l.b16 %v10289
      %v10420 = vunpack.c.l.b16 %v10290
      %v10421 = vpack.c.b16 %v10406, %v10405
      %v10422 = vpack.c.b16 %v10408, %v10407
      %v10423 = vpack.c.b16 %v10410, %v10409
      %v10424 = vpack.c.b16 %v10412, %v10411
      %v10425 = vpack.c.b16 %v10414, %v10413
      %v10426 = vpack.c.b16 %v10416, %v10415
      %v10427 = vpack.c.b16 %v10418, %v10417
      %v10428 = vpack.c.b16 %v10420, %v10419
      %10437 = vmatpush.bf16.msra.mxu0 %v10428
      %10438 = vmatpush.bf16.msra.mxu0 %v10427
      %10439 = vmatpush.bf16.msra.mxu0 %v10426
      %10440 = vmatpush.bf16.msra.mxu0 %v10425
      %10441 = vmatpush.bf16.msra.mxu0 %v10424
      %10442 = vmatpush.bf16.msra.mxu0 %v10423
      %10443 = vmatpush.bf16.msra.mxu0 %v10422
      %10444 = vmatpush.bf16.msra.mxu0 %v10421
      %10445 = vmatmul.bf16.gmra.mxu0 %v10357
      %v10446 = vpop.f32.mrf.mxu0
      %v10447 = vadd.f32 %v10292, %v10446
      %v10448 = vpop.f32.mrf.mxu0
      %v10449 = vadd.f32 %v10292, %v10448
      %10450 = vmatmul.bf16.gmra.mxu0 %v10358
      %v10451 = vpop.f32.mrf.mxu0
      %v10452 = vadd.f32 %v10292, %v10451
      %v10453 = vpop.f32.mrf.mxu0
      %v10454 = vadd.f32 %v10292, %v10453
      %10455 = vmatmul.bf16.gmra.mxu0 %v10359
      %v10456 = vpop.f32.mrf.mxu0
      %v10457 = vadd.f32 %v10292, %v10456
      %v10458 = vpop.f32.mrf.mxu0
      %v10459 = vadd.f32 %v10292, %v10458
      %10460 = vmatmul.bf16.gmra.mxu0 %v10360
      %v10461 = vpop.f32.mrf.mxu0
      %v10462 = vadd.f32 %v10292, %v10461
      %v10463 = vpop.f32.mrf.mxu0
      %v10464 = vadd.f32 %v10292, %v10463
      %10465 = vmatmul.bf16.gmra.mxu0 %v10361
      %v10466 = vpop.f32.mrf.mxu0
      %v10467 = vadd.f32 %v10292, %v10466
      %v10468 = vpop.f32.mrf.mxu0
      %v10469 = vadd.f32 %v10292, %v10468
      %10470 = vmatmul.bf16.gmra.mxu0 %v10362
      %v10471 = vpop.f32.mrf.mxu0
      %v10472 = vadd.f32 %v10292, %v10471
      %v10473 = vpop.f32.mrf.mxu0
      %v10474 = vadd.f32 %v10292, %v10473
      %10475 = vmatmul.bf16.gmra.mxu0 %v10363
      %v10476 = vpop.f32.mrf.mxu0
      %v10477 = vadd.f32 %v10292, %v10476
      %v10478 = vpop.f32.mrf.mxu0
      %v10479 = vadd.f32 %v10292, %v10478
      %10480 = vmatmul.bf16.gmra.mxu0 %v10364
      %v10481 = vpop.f32.mrf.mxu0
      %v10482 = vadd.f32 %v10292, %v10481
      %v10483 = vpop.f32.mrf.mxu0
      %v10484 = vadd.f32 %v10292, %v10483
      %10485 = vmatmul.bf16.gmra.mxu0 %v10365
      %v10486 = vpop.f32.mrf.mxu0
      %v10487 = vadd.f32 %v10292, %v10486
      %v10488 = vpop.f32.mrf.mxu0
      %v10489 = vadd.f32 %v10292, %v10488
      %10490 = vmatmul.bf16.gmra.mxu0 %v10366
      %v10491 = vpop.f32.mrf.mxu0
      %v10492 = vadd.f32 %v10292, %v10491
      %v10493 = vpop.f32.mrf.mxu0
      %v10494 = vadd.f32 %v10292, %v10493
      %10495 = vmatmul.bf16.gmra.mxu0 %v10367
      %v10496 = vpop.f32.mrf.mxu0
      %v10497 = vadd.f32 %v10292, %v10496
      %v10498 = vpop.f32.mrf.mxu0
      %v10499 = vadd.f32 %v10292, %v10498
      %10500 = vmatmul.bf16.gmra.mxu0 %v10368
      %v10501 = vpop.f32.mrf.mxu0
      %v10502 = vadd.f32 %v10292, %v10501
      %v10503 = vpop.f32.mrf.mxu0
      %v10504 = vadd.f32 %v10292, %v10503
      %10505 = vmatmul.bf16.gmra.mxu0 %v10369
      %v10506 = vpop.f32.mrf.mxu0
      %v10507 = vadd.f32 %v10292, %v10506
      %v10508 = vpop.f32.mrf.mxu0
      %v10509 = vadd.f32 %v10292, %v10508
      %10510 = vmatmul.bf16.gmra.mxu0 %v10370
      %v10511 = vpop.f32.mrf.mxu0
      %v10512 = vadd.f32 %v10292, %v10511
      %v10513 = vpop.f32.mrf.mxu0
      %v10514 = vadd.f32 %v10292, %v10513
      %10515 = vmatmul.bf16.gmra.mxu0 %v10371
      %v10516 = vpop.f32.mrf.mxu0
      %v10517 = vadd.f32 %v10292, %v10516
      %v10518 = vpop.f32.mrf.mxu0
      %v10519 = vadd.f32 %v10292, %v10518
      %10520 = vmatmul.bf16.gmra.mxu0 %v10372
      %v10521 = vpop.f32.mrf.mxu0
      %v10522 = vadd.f32 %v10292, %v10521
      %v10523 = vpop.f32.mrf.mxu0
      %v10524 = vadd.f32 %v10292, %v10523
      %10525 = vdwg.mxu0
      %v10526 = vxor.u32 %v10447, 2147483648
      %v10527 = vxor.u32 %v10449, 2147483648
      %v10528 = vxor.u32 %v10452, 2147483648
      %v10529 = vxor.u32 %v10454, 2147483648
      %v10530 = vxor.u32 %v10457, 2147483648
      %v10531 = vxor.u32 %v10459, 2147483648
      %v10532 = vxor.u32 %v10462, 2147483648
      %v10533 = vxor.u32 %v10464, 2147483648
      %v10534 = vxor.u32 %v10467, 2147483648
      %v10535 = vxor.u32 %v10469, 2147483648
      %v10536 = vxor.u32 %v10472, 2147483648
      %v10537 = vxor.u32 %v10474, 2147483648
      %v10538 = vxor.u32 %v10477, 2147483648
      %v10539 = vxor.u32 %v10479, 2147483648
      %v10540 = vxor.u32 %v10482, 2147483648
      %v10541 = vxor.u32 %v10484, 2147483648
      %v10542 = vxor.u32 %v10487, 2147483648
      %v10543 = vxor.u32 %v10489, 2147483648
      %v10544 = vxor.u32 %v10492, 2147483648
      %v10545 = vxor.u32 %v10494, 2147483648
      %v10546 = vxor.u32 %v10497, 2147483648
      %v10547 = vxor.u32 %v10499, 2147483648
      %v10548 = vxor.u32 %v10502, 2147483648
      %v10549 = vxor.u32 %v10504, 2147483648
      %v10550 = vxor.u32 %v10507, 2147483648
      %v10551 = vxor.u32 %v10509, 2147483648
      %v10552 = vxor.u32 %v10512, 2147483648
      %v10553 = vxor.u32 %v10514, 2147483648
      %v10554 = vxor.u32 %v10517, 2147483648
      %v10555 = vxor.u32 %v10519, 2147483648
      %v10556 = vxor.u32 %v10522, 2147483648
      %v10557 = vxor.u32 %v10524, 2147483648
      %v10558 = vmul.f32 %v10526, 1.442695
      %v10559 = vpow.pop %v10558
      %v10560 = vmul.f32 %v10527, 1.442695
      %v10561 = vpow.pop %v10560
      %v10562 = vmul.f32 %v10528, 1.442695
      %v10563 = vpow.pop %v10562
      %v10564 = vmul.f32 %v10529, 1.442695
      %v10565 = vpow.pop %v10564
      %v10566 = vmul.f32 %v10530, 1.442695
      %v10567 = vpow.pop %v10566
      %v10568 = vmul.f32 %v10531, 1.442695
      %v10569 = vpow.pop %v10568
      %v10570 = vmul.f32 %v10532, 1.442695
      %v10571 = vpow.pop %v10570
      %v10572 = vmul.f32 %v10533, 1.442695
      %v10573 = vpow.pop %v10572
      %v10574 = vmul.f32 %v10534, 1.442695
      %v10575 = vpow.pop %v10574
      %v10576 = vmul.f32 %v10535, 1.442695
      %v10577 = vpow.pop %v10576
      %v10578 = vmul.f32 %v10536, 1.442695
      %v10579 = vpow.pop %v10578
      %v10580 = vmul.f32 %v10537, 1.442695
      %v10581 = vpow.pop %v10580
      %v10582 = vmul.f32 %v10538, 1.442695
      %v10583 = vpow.pop %v10582
      %v10584 = vmul.f32 %v10539, 1.442695
      %v10585 = vpow.pop %v10584
      %v10586 = vmul.f32 %v10540, 1.442695
      %v10587 = vpow.pop %v10586
      %v10588 = vmul.f32 %v10541, 1.442695
      %v10589 = vpow.pop %v10588
      %v10590 = vmul.f32 %v10542, 1.442695
      %v10591 = vpow.pop %v10590
      %v10592 = vmul.f32 %v10543, 1.442695
      %v10593 = vpow.pop %v10592
      %v10594 = vmul.f32 %v10544, 1.442695
      %v10595 = vpow.pop %v10594
      %v10596 = vmul.f32 %v10545, 1.442695
      %v10597 = vpow.pop %v10596
      %v10598 = vmul.f32 %v10546, 1.442695
      %v10599 = vpow.pop %v10598
      %v10600 = vmul.f32 %v10547, 1.442695
      %v10601 = vpow.pop %v10600
      %v10602 = vmul.f32 %v10548, 1.442695
      %v10603 = vpow.pop %v10602
      %v10604 = vmul.f32 %v10549, 1.442695
      %v10605 = vpow.pop %v10604
      %v10606 = vmul.f32 %v10550, 1.442695
      %v10607 = vpow.pop %v10606
      %v10608 = vmul.f32 %v10551, 1.442695
      %v10609 = vpow.pop %v10608
      %v10610 = vmul.f32 %v10552, 1.442695
      %v10611 = vpow.pop %v10610
      %v10612 = vmul.f32 %v10553, 1.442695
      %v10613 = vpow.pop %v10612
      %v10614 = vmul.f32 %v10554, 1.442695
      %v10615 = vpow.pop %v10614
      %v10616 = vmul.f32 %v10555, 1.442695
      %v10617 = vpow.pop %v10616
      %v10618 = vmul.f32 %v10556, 1.442695
      %v10619 = vpow.pop %v10618
      %v10620 = vmul.f32 %v10557, 1.442695
      %v10621 = vpow.pop %v10620
      %v10622 = vadd.f32 %v10559, 1.0
      %v10623 = vadd.f32 %v10561, 1.0
      %v10624 = vadd.f32 %v10563, 1.0
      %v10625 = vadd.f32 %v10565, 1.0
      %v10626 = vadd.f32 %v10567, 1.0
      %v10627 = vadd.f32 %v10569, 1.0
      %v10628 = vadd.f32 %v10571, 1.0
      %v10629 = vadd.f32 %v10573, 1.0
      %v10630 = vadd.f32 %v10575, 1.0
      %v10631 = vadd.f32 %v10577, 1.0
      %v10632 = vadd.f32 %v10579, 1.0
      %v10633 = vadd.f32 %v10581, 1.0
      %v10634 = vadd.f32 %v10583, 1.0
      %v10635 = vadd.f32 %v10585, 1.0
      %v10636 = vadd.f32 %v10587, 1.0
      %v10637 = vadd.f32 %v10589, 1.0
      %v10638 = vadd.f32 %v10591, 1.0
      %v10639 = vadd.f32 %v10593, 1.0
      %v10640 = vadd.f32 %v10595, 1.0
      %v10641 = vadd.f32 %v10597, 1.0
      %v10642 = vadd.f32 %v10599, 1.0
      %v10643 = vadd.f32 %v10601, 1.0
      %v10644 = vadd.f32 %v10603, 1.0
      %v10645 = vadd.f32 %v10605, 1.0
      %v10646 = vadd.f32 %v10607, 1.0
      %v10647 = vadd.f32 %v10609, 1.0
      %v10648 = vadd.f32 %v10611, 1.0
      %v10649 = vadd.f32 %v10613, 1.0
      %v10650 = vadd.f32 %v10615, 1.0
      %v10651 = vadd.f32 %v10617, 1.0
      %v10652 = vadd.f32 %v10619, 1.0
      %v10653 = vadd.f32 %v10621, 1.0
      %v10654 = vrcp.pop %v10622
      %v10655 = vmul.f32 %v10622, %v10654
      %v10656 = vsub.f32 1.0, %v10655
      %v10657 = vmul.f32 %v10654, %v10656
      %v10658 = vadd.f32 %v10654, %v10657
      %vm10659 = vweird.f32 %v10622
      %vm10660 = vweird.f32 %v10654
      %vm10661 = vmor %vm10659, %vm10660
      %v10662 = vsel %vm10661, %v10654, %v10658
      %v10663 = vand.u32 2147483647, %v10622
      %vm10664 = vcmp.eq.f32.partialorder %v10663, 8.507059e+37
      %v10665 = vand.u32 %v10622, 2147483648
      %v10666 = vor.u32 1.1754944e-38, %v10665
      %v10667 = vsel %vm10664, %v10666, %v10662
      %v10668 = vmul.f32 1.0, %v10667
      %v10669 = vrcp.pop %v10623
      %v10670 = vmul.f32 %v10623, %v10669
      %v10671 = vsub.f32 1.0, %v10670
      %v10672 = vmul.f32 %v10669, %v10671
      %v10673 = vadd.f32 %v10669, %v10672
      %vm10674 = vweird.f32 %v10623
      %vm10675 = vweird.f32 %v10669
      %vm10676 = vmor %vm10674, %vm10675
      %v10677 = vsel %vm10676, %v10669, %v10673
      %v10678 = vand.u32 2147483647, %v10623
      %vm10679 = vcmp.eq.f32.partialorder %v10678, 8.507059e+37
      %v10680 = vand.u32 %v10623, 2147483648
      %v10681 = vor.u32 1.1754944e-38, %v10680
      %v10682 = vsel %vm10679, %v10681, %v10677
      %v10683 = vmul.f32 1.0, %v10682
      %v10684 = vrcp.pop %v10624
      %v10685 = vmul.f32 %v10624, %v10684
      %v10686 = vsub.f32 1.0, %v10685
      %v10687 = vmul.f32 %v10684, %v10686
      %v10688 = vadd.f32 %v10684, %v10687
      %vm10689 = vweird.f32 %v10624
      %vm10690 = vweird.f32 %v10684
      %vm10691 = vmor %vm10689, %vm10690
      %v10692 = vsel %vm10691, %v10684, %v10688
      %v10693 = vand.u32 2147483647, %v10624
      %vm10694 = vcmp.eq.f32.partialorder %v10693, 8.507059e+37
      %v10695 = vand.u32 %v10624, 2147483648
      %v10696 = vor.u32 1.1754944e-38, %v10695
      %v10697 = vsel %vm10694, %v10696, %v10692
      %v10698 = vmul.f32 1.0, %v10697
      %v10699 = vrcp.pop %v10625
      %v10700 = vmul.f32 %v10625, %v10699
      %v10701 = vsub.f32 1.0, %v10700
      %v10702 = vmul.f32 %v10699, %v10701
      %v10703 = vadd.f32 %v10699, %v10702
      %vm10704 = vweird.f32 %v10625
      %vm10705 = vweird.f32 %v10699
      %vm10706 = vmor %vm10704, %vm10705
      %v10707 = vsel %vm10706, %v10699, %v10703
      %v10708 = vand.u32 2147483647, %v10625
      %vm10709 = vcmp.eq.f32.partialorder %v10708, 8.507059e+37
      %v10710 = vand.u32 %v10625, 2147483648
      %v10711 = vor.u32 1.1754944e-38, %v10710
      %v10712 = vsel %vm10709, %v10711, %v10707
      %v10713 = vmul.f32 1.0, %v10712
      %v10714 = vrcp.pop %v10626
      %v10715 = vmul.f32 %v10626, %v10714
      %v10716 = vsub.f32 1.0, %v10715
      %v10717 = vmul.f32 %v10714, %v10716
      %v10718 = vadd.f32 %v10714, %v10717
      %vm10719 = vweird.f32 %v10626
      %vm10720 = vweird.f32 %v10714
      %vm10721 = vmor %vm10719, %vm10720
      %v10722 = vsel %vm10721, %v10714, %v10718
      %v10723 = vand.u32 2147483647, %v10626
      %vm10724 = vcmp.eq.f32.partialorder %v10723, 8.507059e+37
      %v10725 = vand.u32 %v10626, 2147483648
      %v10726 = vor.u32 1.1754944e-38, %v10725
      %v10727 = vsel %vm10724, %v10726, %v10722
      %v10728 = vmul.f32 1.0, %v10727
      %v10729 = vrcp.pop %v10627
      %v10730 = vmul.f32 %v10627, %v10729
      %v10731 = vsub.f32 1.0, %v10730
      %v10732 = vmul.f32 %v10729, %v10731
      %v10733 = vadd.f32 %v10729, %v10732
      %vm10734 = vweird.f32 %v10627
      %vm10735 = vweird.f32 %v10729
      %vm10736 = vmor %vm10734, %vm10735
      %v10737 = vsel %vm10736, %v10729, %v10733
      %v10738 = vand.u32 2147483647, %v10627
      %vm10739 = vcmp.eq.f32.partialorder %v10738, 8.507059e+37
      %v10740 = vand.u32 %v10627, 2147483648
      %v10741 = vor.u32 1.1754944e-38, %v10740
      %v10742 = vsel %vm10739, %v10741, %v10737
      %v10743 = vmul.f32 1.0, %v10742
      %v10744 = vrcp.pop %v10628
      %v10745 = vmul.f32 %v10628, %v10744
      %v10746 = vsub.f32 1.0, %v10745
      %v10747 = vmul.f32 %v10744, %v10746
      %v10748 = vadd.f32 %v10744, %v10747
      %vm10749 = vweird.f32 %v10628
      %vm10750 = vweird.f32 %v10744
      %vm10751 = vmor %vm10749, %vm10750
      %v10752 = vsel %vm10751, %v10744, %v10748
      %v10753 = vand.u32 2147483647, %v10628
      %vm10754 = vcmp.eq.f32.partialorder %v10753, 8.507059e+37
      %v10755 = vand.u32 %v10628, 2147483648
      %v10756 = vor.u32 1.1754944e-38, %v10755
      %v10757 = vsel %vm10754, %v10756, %v10752
      %v10758 = vmul.f32 1.0, %v10757
      %v10759 = vrcp.pop %v10629
      %v10760 = vmul.f32 %v10629, %v10759
      %v10761 = vsub.f32 1.0, %v10760
      %v10762 = vmul.f32 %v10759, %v10761
      %v10763 = vadd.f32 %v10759, %v10762
      %vm10764 = vweird.f32 %v10629
      %vm10765 = vweird.f32 %v10759
      %vm10766 = vmor %vm10764, %vm10765
      %v10767 = vsel %vm10766, %v10759, %v10763
      %v10768 = vand.u32 2147483647, %v10629
      %vm10769 = vcmp.eq.f32.partialorder %v10768, 8.507059e+37
      %v10770 = vand.u32 %v10629, 2147483648
      %v10771 = vor.u32 1.1754944e-38, %v10770
      %v10772 = vsel %vm10769, %v10771, %v10767
      %v10773 = vmul.f32 1.0, %v10772
      %v10774 = vrcp.pop %v10630
      %v10775 = vmul.f32 %v10630, %v10774
      %v10776 = vsub.f32 1.0, %v10775
      %v10777 = vmul.f32 %v10774, %v10776
      %v10778 = vadd.f32 %v10774, %v10777
      %vm10779 = vweird.f32 %v10630
      %vm10780 = vweird.f32 %v10774
      %vm10781 = vmor %vm10779, %vm10780
      %v10782 = vsel %vm10781, %v10774, %v10778
      %v10783 = vand.u32 2147483647, %v10630
      %vm10784 = vcmp.eq.f32.partialorder %v10783, 8.507059e+37
      %v10785 = vand.u32 %v10630, 2147483648
      %v10786 = vor.u32 1.1754944e-38, %v10785
      %v10787 = vsel %vm10784, %v10786, %v10782
      %v10788 = vmul.f32 1.0, %v10787
      %v10789 = vrcp.pop %v10631
      %v10790 = vmul.f32 %v10631, %v10789
      %v10791 = vsub.f32 1.0, %v10790
      %v10792 = vmul.f32 %v10789, %v10791
      %v10793 = vadd.f32 %v10789, %v10792
      %vm10794 = vweird.f32 %v10631
      %vm10795 = vweird.f32 %v10789
      %vm10796 = vmor %vm10794, %vm10795
      %v10797 = vsel %vm10796, %v10789, %v10793
      %v10798 = vand.u32 2147483647, %v10631
      %vm10799 = vcmp.eq.f32.partialorder %v10798, 8.507059e+37
      %v10800 = vand.u32 %v10631, 2147483648
      %v10801 = vor.u32 1.1754944e-38, %v10800
      %v10802 = vsel %vm10799, %v10801, %v10797
      %v10803 = vmul.f32 1.0, %v10802
      %v10804 = vrcp.pop %v10632
      %v10805 = vmul.f32 %v10632, %v10804
      %v10806 = vsub.f32 1.0, %v10805
      %v10807 = vmul.f32 %v10804, %v10806
      %v10808 = vadd.f32 %v10804, %v10807
      %vm10809 = vweird.f32 %v10632
      %vm10810 = vweird.f32 %v10804
      %vm10811 = vmor %vm10809, %vm10810
      %v10812 = vsel %vm10811, %v10804, %v10808
      %v10813 = vand.u32 2147483647, %v10632
      %vm10814 = vcmp.eq.f32.partialorder %v10813, 8.507059e+37
      %v10815 = vand.u32 %v10632, 2147483648
      %v10816 = vor.u32 1.1754944e-38, %v10815
      %v10817 = vsel %vm10814, %v10816, %v10812
      %v10818 = vmul.f32 1.0, %v10817
      %v10819 = vrcp.pop %v10633
      %v10820 = vmul.f32 %v10633, %v10819
      %v10821 = vsub.f32 1.0, %v10820
      %v10822 = vmul.f32 %v10819, %v10821
      %v10823 = vadd.f32 %v10819, %v10822
      %vm10824 = vweird.f32 %v10633
      %vm10825 = vweird.f32 %v10819
      %vm10826 = vmor %vm10824, %vm10825
      %v10827 = vsel %vm10826, %v10819, %v10823
      %v10828 = vand.u32 2147483647, %v10633
      %vm10829 = vcmp.eq.f32.partialorder %v10828, 8.507059e+37
      %v10830 = vand.u32 %v10633, 2147483648
      %v10831 = vor.u32 1.1754944e-38, %v10830
      %v10832 = vsel %vm10829, %v10831, %v10827
      %v10833 = vmul.f32 1.0, %v10832
      %v10834 = vrcp.pop %v10634
      %v10835 = vmul.f32 %v10634, %v10834
      %v10836 = vsub.f32 1.0, %v10835
      %v10837 = vmul.f32 %v10834, %v10836
      %v10838 = vadd.f32 %v10834, %v10837
      %vm10839 = vweird.f32 %v10634
      %vm10840 = vweird.f32 %v10834
      %vm10841 = vmor %vm10839, %vm10840
      %v10842 = vsel %vm10841, %v10834, %v10838
      %v10843 = vand.u32 2147483647, %v10634
      %vm10844 = vcmp.eq.f32.partialorder %v10843, 8.507059e+37
      %v10845 = vand.u32 %v10634, 2147483648
      %v10846 = vor.u32 1.1754944e-38, %v10845
      %v10847 = vsel %vm10844, %v10846, %v10842
      %v10848 = vmul.f32 1.0, %v10847
      %v10849 = vrcp.pop %v10635
      %v10850 = vmul.f32 %v10635, %v10849
      %v10851 = vsub.f32 1.0, %v10850
      %v10852 = vmul.f32 %v10849, %v10851
      %v10853 = vadd.f32 %v10849, %v10852
      %vm10854 = vweird.f32 %v10635
      %vm10855 = vweird.f32 %v10849
      %vm10856 = vmor %vm10854, %vm10855
      %v10857 = vsel %vm10856, %v10849, %v10853
      %v10858 = vand.u32 2147483647, %v10635
      %vm10859 = vcmp.eq.f32.partialorder %v10858, 8.507059e+37
      %v10860 = vand.u32 %v10635, 2147483648
      %v10861 = vor.u32 1.1754944e-38, %v10860
      %v10862 = vsel %vm10859, %v10861, %v10857
      %v10863 = vmul.f32 1.0, %v10862
      %v10864 = vrcp.pop %v10636
      %v10865 = vmul.f32 %v10636, %v10864
      %v10866 = vsub.f32 1.0, %v10865
      %v10867 = vmul.f32 %v10864, %v10866
      %v10868 = vadd.f32 %v10864, %v10867
      %vm10869 = vweird.f32 %v10636
      %vm10870 = vweird.f32 %v10864
      %vm10871 = vmor %vm10869, %vm10870
      %v10872 = vsel %vm10871, %v10864, %v10868
      %v10873 = vand.u32 2147483647, %v10636
      %vm10874 = vcmp.eq.f32.partialorder %v10873, 8.507059e+37
      %v10875 = vand.u32 %v10636, 2147483648
      %v10876 = vor.u32 1.1754944e-38, %v10875
      %v10877 = vsel %vm10874, %v10876, %v10872
      %v10878 = vmul.f32 1.0, %v10877
      %v10879 = vrcp.pop %v10637
      %v10880 = vmul.f32 %v10637, %v10879
      %v10881 = vsub.f32 1.0, %v10880
      %v10882 = vmul.f32 %v10879, %v10881
      %v10883 = vadd.f32 %v10879, %v10882
      %vm10884 = vweird.f32 %v10637
      %vm10885 = vweird.f32 %v10879
      %vm10886 = vmor %vm10884, %vm10885
      %v10887 = vsel %vm10886, %v10879, %v10883
      %v10888 = vand.u32 2147483647, %v10637
      %vm10889 = vcmp.eq.f32.partialorder %v10888, 8.507059e+37
      %v10890 = vand.u32 %v10637, 2147483648
      %v10891 = vor.u32 1.1754944e-38, %v10890
      %v10892 = vsel %vm10889, %v10891, %v10887
      %v10893 = vmul.f32 1.0, %v10892
      %v10894 = vrcp.pop %v10638
      %v10895 = vmul.f32 %v10638, %v10894
      %v10896 = vsub.f32 1.0, %v10895
      %v10897 = vmul.f32 %v10894, %v10896
      %v10898 = vadd.f32 %v10894, %v10897
      %vm10899 = vweird.f32 %v10638
      %vm10900 = vweird.f32 %v10894
      %vm10901 = vmor %vm10899, %vm10900
      %v10902 = vsel %vm10901, %v10894, %v10898
      %v10903 = vand.u32 2147483647, %v10638
      %vm10904 = vcmp.eq.f32.partialorder %v10903, 8.507059e+37
      %v10905 = vand.u32 %v10638, 2147483648
      %v10906 = vor.u32 1.1754944e-38, %v10905
      %v10907 = vsel %vm10904, %v10906, %v10902
      %v10908 = vmul.f32 1.0, %v10907
      %v10909 = vrcp.pop %v10639
      %v10910 = vmul.f32 %v10639, %v10909
      %v10911 = vsub.f32 1.0, %v10910
      %v10912 = vmul.f32 %v10909, %v10911
      %v10913 = vadd.f32 %v10909, %v10912
      %vm10914 = vweird.f32 %v10639
      %vm10915 = vweird.f32 %v10909
      %vm10916 = vmor %vm10914, %vm10915
      %v10917 = vsel %vm10916, %v10909, %v10913
      %v10918 = vand.u32 2147483647, %v10639
      %vm10919 = vcmp.eq.f32.partialorder %v10918, 8.507059e+37
      %v10920 = vand.u32 %v10639, 2147483648
      %v10921 = vor.u32 1.1754944e-38, %v10920
      %v10922 = vsel %vm10919, %v10921, %v10917
      %v10923 = vmul.f32 1.0, %v10922
      %v10924 = vrcp.pop %v10640
      %v10925 = vmul.f32 %v10640, %v10924
      %v10926 = vsub.f32 1.0, %v10925
      %v10927 = vmul.f32 %v10924, %v10926
      %v10928 = vadd.f32 %v10924, %v10927
      %vm10929 = vweird.f32 %v10640
      %vm10930 = vweird.f32 %v10924
      %vm10931 = vmor %vm10929, %vm10930
      %v10932 = vsel %vm10931, %v10924, %v10928
      %v10933 = vand.u32 2147483647, %v10640
      %vm10934 = vcmp.eq.f32.partialorder %v10933, 8.507059e+37
      %v10935 = vand.u32 %v10640, 2147483648
      %v10936 = vor.u32 1.1754944e-38, %v10935
      %v10937 = vsel %vm10934, %v10936, %v10932
      %v10938 = vmul.f32 1.0, %v10937
      %v10939 = vrcp.pop %v10641
      %v10940 = vmul.f32 %v10641, %v10939
      %v10941 = vsub.f32 1.0, %v10940
      %v10942 = vmul.f32 %v10939, %v10941
      %v10943 = vadd.f32 %v10939, %v10942
      %vm10944 = vweird.f32 %v10641
      %vm10945 = vweird.f32 %v10939
      %vm10946 = vmor %vm10944, %vm10945
      %v10947 = vsel %vm10946, %v10939, %v10943
      %v10948 = vand.u32 2147483647, %v10641
      %vm10949 = vcmp.eq.f32.partialorder %v10948, 8.507059e+37
      %v10950 = vand.u32 %v10641, 2147483648
      %v10951 = vor.u32 1.1754944e-38, %v10950
      %v10952 = vsel %vm10949, %v10951, %v10947
      %v10953 = vmul.f32 1.0, %v10952
      %v10954 = vrcp.pop %v10642
      %v10955 = vmul.f32 %v10642, %v10954
      %v10956 = vsub.f32 1.0, %v10955
      %v10957 = vmul.f32 %v10954, %v10956
      %v10958 = vadd.f32 %v10954, %v10957
      %vm10959 = vweird.f32 %v10642
      %vm10960 = vweird.f32 %v10954
      %vm10961 = vmor %vm10959, %vm10960
      %v10962 = vsel %vm10961, %v10954, %v10958
      %v10963 = vand.u32 2147483647, %v10642
      %vm10964 = vcmp.eq.f32.partialorder %v10963, 8.507059e+37
      %v10965 = vand.u32 %v10642, 2147483648
      %v10966 = vor.u32 1.1754944e-38, %v10965
      %v10967 = vsel %vm10964, %v10966, %v10962
      %v10968 = vmul.f32 1.0, %v10967
      %v10969 = vrcp.pop %v10643
      %v10970 = vmul.f32 %v10643, %v10969
      %v10971 = vsub.f32 1.0, %v10970
      %v10972 = vmul.f32 %v10969, %v10971
      %v10973 = vadd.f32 %v10969, %v10972
      %vm10974 = vweird.f32 %v10643
      %vm10975 = vweird.f32 %v10969
      %vm10976 = vmor %vm10974, %vm10975
      %v10977 = vsel %vm10976, %v10969, %v10973
      %v10978 = vand.u32 2147483647, %v10643
      %vm10979 = vcmp.eq.f32.partialorder %v10978, 8.507059e+37
      %v10980 = vand.u32 %v10643, 2147483648
      %v10981 = vor.u32 1.1754944e-38, %v10980
      %v10982 = vsel %vm10979, %v10981, %v10977
      %v10983 = vmul.f32 1.0, %v10982
      %v10984 = vrcp.pop %v10644
      %v10985 = vmul.f32 %v10644, %v10984
      %v10986 = vsub.f32 1.0, %v10985
      %v10987 = vmul.f32 %v10984, %v10986
      %v10988 = vadd.f32 %v10984, %v10987
      %vm10989 = vweird.f32 %v10644
      %vm10990 = vweird.f32 %v10984
      %vm10991 = vmor %vm10989, %vm10990
      %v10992 = vsel %vm10991, %v10984, %v10988
      %v10993 = vand.u32 2147483647, %v10644
      %vm10994 = vcmp.eq.f32.partialorder %v10993, 8.507059e+37
      %v10995 = vand.u32 %v10644, 2147483648
      %v10996 = vor.u32 1.1754944e-38, %v10995
      %v10997 = vsel %vm10994, %v10996, %v10992
      %v10998 = vmul.f32 1.0, %v10997
      %v10999 = vrcp.pop %v10645
      %v11000 = vmul.f32 %v10645, %v10999
      %v11001 = vsub.f32 1.0, %v11000
      %v11002 = vmul.f32 %v10999, %v11001
      %v11003 = vadd.f32 %v10999, %v11002
      %vm11004 = vweird.f32 %v10645
      %vm11005 = vweird.f32 %v10999
      %vm11006 = vmor %vm11004, %vm11005
      %v11007 = vsel %vm11006, %v10999, %v11003
      %v11008 = vand.u32 2147483647, %v10645
      %vm11009 = vcmp.eq.f32.partialorder %v11008, 8.507059e+37
      %v11010 = vand.u32 %v10645, 2147483648
      %v11011 = vor.u32 1.1754944e-38, %v11010
      %v11012 = vsel %vm11009, %v11011, %v11007
      %v11013 = vmul.f32 1.0, %v11012
      %v11014 = vrcp.pop %v10646
      %v11015 = vmul.f32 %v10646, %v11014
      %v11016 = vsub.f32 1.0, %v11015
      %v11017 = vmul.f32 %v11014, %v11016
      %v11018 = vadd.f32 %v11014, %v11017
      %vm11019 = vweird.f32 %v10646
      %vm11020 = vweird.f32 %v11014
      %vm11021 = vmor %vm11019, %vm11020
      %v11022 = vsel %vm11021, %v11014, %v11018
      %v11023 = vand.u32 2147483647, %v10646
      %vm11024 = vcmp.eq.f32.partialorder %v11023, 8.507059e+37
      %v11025 = vand.u32 %v10646, 2147483648
      %v11026 = vor.u32 1.1754944e-38, %v11025
      %v11027 = vsel %vm11024, %v11026, %v11022
      %v11028 = vmul.f32 1.0, %v11027
      %v11029 = vrcp.pop %v10647
      %v11030 = vmul.f32 %v10647, %v11029
      %v11031 = vsub.f32 1.0, %v11030
      %v11032 = vmul.f32 %v11029, %v11031
      %v11033 = vadd.f32 %v11029, %v11032
      %vm11034 = vweird.f32 %v10647
      %vm11035 = vweird.f32 %v11029
      %vm11036 = vmor %vm11034, %vm11035
      %v11037 = vsel %vm11036, %v11029, %v11033
      %v11038 = vand.u32 2147483647, %v10647
      %vm11039 = vcmp.eq.f32.partialorder %v11038, 8.507059e+37
      %v11040 = vand.u32 %v10647, 2147483648
      %v11041 = vor.u32 1.1754944e-38, %v11040
      %v11042 = vsel %vm11039, %v11041, %v11037
      %v11043 = vmul.f32 1.0, %v11042
      %v11044 = vrcp.pop %v10648
      %v11045 = vmul.f32 %v10648, %v11044
      %v11046 = vsub.f32 1.0, %v11045
      %v11047 = vmul.f32 %v11044, %v11046
      %v11048 = vadd.f32 %v11044, %v11047
      %vm11049 = vweird.f32 %v10648
      %vm11050 = vweird.f32 %v11044
      %vm11051 = vmor %vm11049, %vm11050
      %v11052 = vsel %vm11051, %v11044, %v11048
      %v11053 = vand.u32 2147483647, %v10648
      %vm11054 = vcmp.eq.f32.partialorder %v11053, 8.507059e+37
      %v11055 = vand.u32 %v10648, 2147483648
      %v11056 = vor.u32 1.1754944e-38, %v11055
      %v11057 = vsel %vm11054, %v11056, %v11052
      %v11058 = vmul.f32 1.0, %v11057
      %v11059 = vrcp.pop %v10649
      %v11060 = vmul.f32 %v10649, %v11059
      %v11061 = vsub.f32 1.0, %v11060
      %v11062 = vmul.f32 %v11059, %v11061
      %v11063 = vadd.f32 %v11059, %v11062
      %vm11064 = vweird.f32 %v10649
      %vm11065 = vweird.f32 %v11059
      %vm11066 = vmor %vm11064, %vm11065
      %v11067 = vsel %vm11066, %v11059, %v11063
      %v11068 = vand.u32 2147483647, %v10649
      %vm11069 = vcmp.eq.f32.partialorder %v11068, 8.507059e+37
      %v11070 = vand.u32 %v10649, 2147483648
      %v11071 = vor.u32 1.1754944e-38, %v11070
      %v11072 = vsel %vm11069, %v11071, %v11067
      %v11073 = vmul.f32 1.0, %v11072
      %v11074 = vrcp.pop %v10650
      %v11075 = vmul.f32 %v10650, %v11074
      %v11076 = vsub.f32 1.0, %v11075
      %v11077 = vmul.f32 %v11074, %v11076
      %v11078 = vadd.f32 %v11074, %v11077
      %vm11079 = vweird.f32 %v10650
      %vm11080 = vweird.f32 %v11074
      %vm11081 = vmor %vm11079, %vm11080
      %v11082 = vsel %vm11081, %v11074, %v11078
      %v11083 = vand.u32 2147483647, %v10650
      %vm11084 = vcmp.eq.f32.partialorder %v11083, 8.507059e+37
      %v11085 = vand.u32 %v10650, 2147483648
      %v11086 = vor.u32 1.1754944e-38, %v11085
      %v11087 = vsel %vm11084, %v11086, %v11082
      %v11088 = vmul.f32 1.0, %v11087
      %v11089 = vrcp.pop %v10651
      %v11090 = vmul.f32 %v10651, %v11089
      %v11091 = vsub.f32 1.0, %v11090
      %v11092 = vmul.f32 %v11089, %v11091
      %v11093 = vadd.f32 %v11089, %v11092
      %vm11094 = vweird.f32 %v10651
      %vm11095 = vweird.f32 %v11089
      %vm11096 = vmor %vm11094, %vm11095
      %v11097 = vsel %vm11096, %v11089, %v11093
      %v11098 = vand.u32 2147483647, %v10651
      %vm11099 = vcmp.eq.f32.partialorder %v11098, 8.507059e+37
      %v11100 = vand.u32 %v10651, 2147483648
      %v11101 = vor.u32 1.1754944e-38, %v11100
      %v11102 = vsel %vm11099, %v11101, %v11097
      %v11103 = vmul.f32 1.0, %v11102
      %v11104 = vrcp.pop %v10652
      %v11105 = vmul.f32 %v10652, %v11104
      %v11106 = vsub.f32 1.0, %v11105
      %v11107 = vmul.f32 %v11104, %v11106
      %v11108 = vadd.f32 %v11104, %v11107
      %vm11109 = vweird.f32 %v10652
      %vm11110 = vweird.f32 %v11104
      %vm11111 = vmor %vm11109, %vm11110
      %v11112 = vsel %vm11111, %v11104, %v11108
      %v11113 = vand.u32 2147483647, %v10652
      %vm11114 = vcmp.eq.f32.partialorder %v11113, 8.507059e+37
      %v11115 = vand.u32 %v10652, 2147483648
      %v11116 = vor.u32 1.1754944e-38, %v11115
      %v11117 = vsel %vm11114, %v11116, %v11112
      %v11118 = vmul.f32 1.0, %v11117
      %v11119 = vrcp.pop %v10653
      %v11120 = vmul.f32 %v10653, %v11119
      %v11121 = vsub.f32 1.0, %v11120
      %v11122 = vmul.f32 %v11119, %v11121
      %v11123 = vadd.f32 %v11119, %v11122
      %vm11124 = vweird.f32 %v10653
      %vm11125 = vweird.f32 %v11119
      %vm11126 = vmor %vm11124, %vm11125
      %v11127 = vsel %vm11126, %v11119, %v11123
      %v11128 = vand.u32 2147483647, %v10653
      %vm11129 = vcmp.eq.f32.partialorder %v11128, 8.507059e+37
      %v11130 = vand.u32 %v10653, 2147483648
      %v11131 = vor.u32 1.1754944e-38, %v11130
      %v11132 = vsel %vm11129, %v11131, %v11127
      %v11133 = vmul.f32 1.0, %v11132
      %11134 = vst [vmem:[%s305] sm:$0xff] %v10668
      %11135 = vst [vmem:[%s305 + $0x8] sm:$0xff] %v10683
      %11136 = vst [vmem:[%s305 + $0x10] sm:$0xff] %v10698
      %11137 = vst [vmem:[%s305 + $0x18] sm:$0xff] %v10713
      %11138 = vst [vmem:[%s305 + $0x20] sm:$0xff] %v10728
      %11139 = vst [vmem:[%s305 + $0x28] sm:$0xff] %v10743
      %11140 = vst [vmem:[%s305 + $0x30] sm:$0xff] %v10758
      %11141 = vst [vmem:[%s305 + $0x38] sm:$0xff] %v10773
      %11142 = vst [vmem:[%s305 + $0x40] sm:$0xff] %v10788
      %11143 = vst [vmem:[%s305 + $0x48] sm:$0xff] %v10803
      %11144 = vst [vmem:[%s305 + $0x50] sm:$0xff] %v10818
      %11145 = vst [vmem:[%s305 + $0x58] sm:$0xff] %v10833
      %11146 = vst [vmem:[%s305 + $0x60] sm:$0xff] %v10848
      %11147 = vst [vmem:[%s305 + $0x68] sm:$0xff] %v10863
      %11148 = vst [vmem:[%s305 + $0x70] sm:$0xff] %v10878
      %11149 = vst [vmem:[%s305 + $0x78] sm:$0xff] %v10893
      %11150 = vst [vmem:[%s305 + $0x80] sm:$0xff] %v10908
      %11151 = vst [vmem:[%s305 + $0x88] sm:$0xff] %v10923
      %11152 = vst [vmem:[%s305 + $0x90] sm:$0xff] %v10938
      %11153 = vst [vmem:[%s305 + $0x98] sm:$0xff] %v10953
      %11154 = vst [vmem:[%s305 + $0xa0] sm:$0xff] %v10968
      %11155 = vst [vmem:[%s305 + $0xa8] sm:$0xff] %v10983
      %11156 = vst [vmem:[%s305 + $0xb0] sm:$0xff] %v10998
      %11157 = vst [vmem:[%s305 + $0xb8] sm:$0xff] %v11013
      %11158 = vst [vmem:[%s305 + $0xc0] sm:$0xff] %v11028
      %11159 = vst [vmem:[%s305 + $0xc8] sm:$0xff] %v11043
      %11160 = vst [vmem:[%s305 + $0xd0] sm:$0xff] %v11058
      %11161 = vst [vmem:[%s305 + $0xd8] sm:$0xff] %v11073
      %11162 = vst [vmem:[%s305 + $0xe0] sm:$0xff] %v11088
      %11163 = vst [vmem:[%s305 + $0xe8] sm:$0xff] %v11103
      %11164 = vst [vmem:[%s305 + $0xf0] sm:$0xff] %v11118
      %11165 = vst [vmem:[%s305 + $0xf8] sm:$0xff] %v11133
      %p11166 = scmp.lt.s32.totalorder %s19, 1
      %s11167 = scalar_select %p11166, %s19, 1
      %s11168 = smul.addr %s11167, 32
      %s11169 = smul.addr %s11168, 8
      %s11170 = scalar_lea.vmem %s8, %s11169
      // Predicated region
      $region53: #{cnn_forward.1} parent=51 // pred_check
        %p11171 = pneg %p210
      $region54: #{cnn_forward.1} parent=51 // pred_check_branch
        %11173 = sbr.rel (%p11171) target = $region56
      $region55: #{cnn_forward.1} parent=51 // pred_region
        _
      $region56: #{cnn_forward.1} parent=51 // pred_fallthru
        _
    $region52: #{cnn_forward.1} parent=5 // pred_fallthru
      _
    %p11174 = scmp.le.s32.totalorder 2, %s14
    // Predicated region
    $region57: #{cnn_forward.1} parent=5 // pred_check
      %p11175 = pneg %p11174
    $region58: #{cnn_forward.1} parent=5 // pred_check_branch
      %11177 = sbr.rel (%p11175) target = $region60
    $region59: #{cnn_forward.1} parent=5 // pred_region
      %s11178 = ssub.s32 %s14, 2
      // Predicated region
      $region61: #{cnn_forward.1} parent=59 // pred_check
        %p11179 = pneg %p216
      $region62: #{cnn_forward.1} parent=59 // pred_check_branch
        %11181 = sbr.rel (%p11179) target = $region64
      $region63: #{cnn_forward.1} parent=59 // pred_region
        %p11182 = scmp.lt.s32.totalorder %s20, 1
        %s11183 = scalar_select %p11182, %s20, 1
        %s11184 = smul.addr %s11183, 32
        %s11185 = smul.addr %s11184, 8
        %s11186 = scalar_lea.vmem %s8, %s11185
      $region64: #{cnn_forward.1} parent=59 // pred_fallthru
        _
    $region60: #{cnn_forward.1} parent=5 // pred_fallthru
      _
  $region6: #{cnn_forward.1} parent=0 // loop_footer
    %s18 = sadd.s32 1, %s14
  $region7: #{cnn_forward.1} parent=0 // loop_footer_branch
    %13 = sbr.rel target = $region3
  $region8: #{cnn_forward.1} parent=0 // loop_exit
    _

</llo_original>
